<compile_context>
chip_gen: v6e
topology: v6e:2x2x1
jax: 0.10.0
libtpu: 0.0.40
codegen_flags: <defaults>
</compile_context>

<pallas_src>
import jax
import jax.numpy as jnp
import numpy as np
from jax import lax
from jax.experimental import pallas as pl
from jax.experimental.pallas import tpu as pltpu

LANDMARKS = 5
RESIZE = 8
POOL = (2 * 8) // RESIZE          # = 2
C_IN = 3
C_OUT = 32
H = W = 64                        # Linear(32*32*32, .) + MaxPool(2) => 64x64 input
HP, WP = H // POOL, W // POOL     # 32, 32
NPOS = HP * WP                    # 1024 pooled positions per image
NGRP = POOL * POOL                # 4 pool offsets
NCOLS = NGRP * NPOS               # 4096 pre-pool positions, grouped by pool offset
FC_IN = C_OUT * NPOS              # 32768 (matches Linear in_features)
FC_OUT = LANDMARKS * 2
BN_EPS = 1e-5
KTAPS = 3 * 3 * C_IN              # 27 im2col taps per output pixel
KPAD = 32                         # taps padded to a sublane-aligned K


# ---------------------------------------------------------------------------
# Kernel 1: Conv2d(3->32, 3x3, pad=1) + bias + MaxPool2d(2) + Tanh, fused.
# Columns of the patch matrix are grouped by pooling offset (i, j); the 2x2
# max-pool is a running max over four per-offset (cb,32)@(32,1024) MXU dots.
# Bias-add and tanh run after the max (per-channel constant bias + monotone
# activation -> identical result, 4x less VPU/EUP work).  The output block
# (1, cb, 1024) is lane-dense and already in NCHW flatten order for the FC.
# ---------------------------------------------------------------------------
def conv_pool_kernel(p_ref, w_ref, b_ref, o_ref):
    # p_ref: (1, KPAD, NCOLS) bf16; w_ref: (cb, KPAD) bf16
    # b_ref: (cb, 1) bf16;          o_ref: (1, cb, NPOS) bf16
    w = w_ref[...]
    m = jnp.dot(w, p_ref[0, :, 0:NPOS], preferred_element_type=jnp.float32)
    for g in range(1, NGRP):
        y = jnp.dot(w, p_ref[0, :, g * NPOS:(g + 1) * NPOS],
                    preferred_element_type=jnp.float32)
        m = jnp.maximum(m, y)
    o_ref[0] = jnp.tanh(m + b_ref[...]).astype(o_ref.dtype)


# ---------------------------------------------------------------------------
# Kernel 2: Linear(32768 -> 2*landmarks), single step.  The lane-dense
# (FC_OUT, FC_IN) bf16 weight is fully resident; contract the lane axis of
# both operands (x @ w.T), accumulate in f32, add the f32 bias.
# ---------------------------------------------------------------------------
def fc_kernel(x_ref, w_ref, b_ref, o_ref):
    acc = lax.dot_general(x_ref[...], w_ref[...],
                          dimension_numbers=(((1,), (1,)), ((), ())),
                          preferred_element_type=jnp.float32)
    o_ref[...] = acc + b_ref[...]


# ---------------------------------------------------------------------------
# One-time (outside jit) repack of PyTorch-layout parameters into kernel layout.
# ---------------------------------------------------------------------------
def prepare_params(params):
    conv_w = params["conv_w"]                                     # (O, I, kh, kw)
    # kernel-matrix column order = kh*9 + kw*3 + cin (matches tap construction)
    w_kern = conv_w.transpose(0, 2, 3, 1).reshape(C_OUT, KTAPS)
    w_kern = jnp.pad(w_kern, ((0, 0), (0, KPAD - KTAPS)))          # (C_OUT, KPAD)
    return dict(
        gamma=params["gamma"],
        beta=params["beta"],
        w_kern=w_kern.astype(jnp.bfloat16),
        b_kern=params["conv_b"].reshape(C_OUT, 1).astype(jnp.bfloat16),
        fc_w=params["fc_w"].astype(jnp.bfloat16),                  # (FC_OUT, FC_IN), lane-dense
        fc_b=params["fc_b"].reshape(1, FC_OUT),                    # f32, added post-dot
    )


# ---------------------------------------------------------------------------
# Forward pass: XLA glue for BN / pad / im2col, Pallas kernels for the matmuls.
# ---------------------------------------------------------------------------
@jax.jit
def cnn_landmarks_forward(x_nchw, prep):
    B = x_nchw.shape[0]
    x = x_nchw.astype(jnp.float32)                                 # keep NCHW

    # BatchNorm2d(3), training-mode batch stats (biased var, eps=1e-5), folded
    # into the elementwise glue; cast to bf16 so everything downstream is bf16.
    mean = jnp.mean(x, axis=(0, 2, 3))
    var = jnp.mean((x - mean[None, :, None, None]) ** 2, axis=(0, 2, 3))
    scale = prep["gamma"] / jnp.sqrt(var + BN_EPS)
    shift = prep["beta"] - mean * scale
    x_bn = (x * scale[None, :, None, None]
            + shift[None, :, None, None]).astype(jnp.bfloat16)

    # padding=1 + im2col built directly in kernel layout with strided slices
    # (no 6-D transpose pass).  K axis = (kh, kw, cin), padded 27 -> 32 with
    # zero rows inside the same concat; columns grouped by pool offset (i, j)
    # major, pooled position (h', w') minor -> NCHW raster after the pool.
    xp = jnp.pad(x_bn, ((0, 0), (0, 0), (1, 1), (1, 1)))           # (B, 3, 66, 66)
    zpad = jnp.zeros((B, KPAD - KTAPS, NPOS), jnp.bfloat16)
    groups = []
    for i in range(POOL):
        for j in range(POOL):
            taps = [xp[:, :, dy + i: dy + i + POOL * HP: POOL,
                           dx + j: dx + j + POOL * WP: POOL].reshape(B, C_IN, NPOS)
                    for dy in range(3) for dx in range(3)]
            groups.append(jnp.concatenate(taps + [zpad], axis=1))  # (B, KPAD, NPOS)
    patches = jnp.concatenate(groups, axis=2)                      # (B, KPAD, NCOLS) bf16

    # v7x has 2 TensorCores: for B == 1 split C_OUT over a second parallel axis
    # so both cores get work; for B >= 2 the per-image axis already provides it.
    ncb = 2 if B == 1 else 1
    cb = C_OUT // ncb

    pooled = pl.pallas_call(
        conv_pool_kernel,
        out_shape=jax.ShapeDtypeStruct((B, C_OUT, NPOS), jnp.bfloat16),
        grid_spec=pltpu.PrefetchScalarGridSpec(
            num_scalar_prefetch=0,
            grid=(B, ncb),
            in_specs=[
                pl.BlockSpec((1, KPAD, NCOLS), lambda b, c: (b, 0, 0)),
                pl.BlockSpec((cb, KPAD), lambda b, c: (c, 0)),
                pl.BlockSpec((cb, 1), lambda b, c: (c, 0)),
            ],
            out_specs=pl.BlockSpec((1, cb, NPOS), lambda b, c: (b, c, 0)),
        ),
        compiler_params=pltpu.CompilerParams(
            dimension_semantics=("parallel", "parallel")),
    )(patches, prep["w_kern"], prep["b_kern"])

    # (B, 32, 1024) bf16 is already NCHW flatten order -> free reshape.
    fc_in = pooled.reshape(B, FC_IN)

    out = pl.pallas_call(
        fc_kernel,
        out_shape=jax.ShapeDtypeStruct((B, FC_OUT), jnp.float32),
        grid_spec=pltpu.PrefetchScalarGridSpec(
            num_scalar_prefetch=0,
            grid=(1,),
            in_specs=[
                pl.BlockSpec((B, FC_IN), lambda k: (0, 0)),
                pl.BlockSpec((FC_OUT, FC_IN), lambda k: (0, 0)),
                pl.BlockSpec((1, FC_OUT), lambda k: (0, 0)),
            ],
            out_specs=pl.BlockSpec((B, FC_OUT), lambda k: (0, 0)),
        ),
    )(fc_in, prep["fc_w"], prep["fc_b"])
    return out


# ---------------------------------------------------------------------------
# Pure-JAX reference (f32 HIGHEST precision ground truth for correctness check)
# ---------------------------------------------------------------------------
def reference_forward(x_nchw, params):
    gamma, beta = params["gamma"], params["beta"]
    conv_w, conv_b = params["conv_w"], params["conv_b"]
    fc_w, fc_b = params["fc_w"], params["fc_b"]
    B = x_nchw.shape[0]

    x = x_nchw.astype(jnp.float32)
    mean = jnp.mean(x, axis=(0, 2, 3), keepdims=True)
    var = jnp.mean((x - mean) ** 2, axis=(0, 2, 3), keepdims=True)
    xbn = (x - mean) / jnp.sqrt(var + BN_EPS) * gamma[None, :, None, None] \
          + beta[None, :, None, None]

    y = lax.conv_general_dilated(xbn, conv_w, (1, 1), "SAME",
                                 dimension_numbers=("NCHW", "OIHW", "NCHW"),
                                 precision=lax.Precision.HIGHEST)
    y = jnp.tanh(y + conv_b[None, :, None, None])
    p = y.reshape(B, C_OUT, HP, POOL, WP, POOL).max(axis=(3, 5))
    fc_in = p.reshape(B, FC_IN)
    return jnp.dot(fc_in, fc_w.T, precision=lax.Precision.HIGHEST) + fc_b


if __name__ == "__main__":
    key = jax.random.PRNGKey(0)
    ks = jax.random.split(key, 7)
    B = 2
    x = jax.random.normal(ks[0], (B, C_IN, H, W), dtype=jnp.float32)

    params = dict(
        gamma=1.0 + 0.1 * jax.random.normal(ks[1], (C_IN,), jnp.float32),
        beta=0.1 * jax.random.normal(ks[2], (C_IN,), jnp.float32),
        conv_w=0.1 * jax.random.normal(ks[3], (C_OUT, C_IN, 3, 3), jnp.float32),
        conv_b=0.1 * jax.random.normal(ks[4], (C_OUT,), jnp.float32),
        fc_w=0.01 * jax.random.normal(ks[5], (FC_OUT, FC_IN), jnp.float32),
        fc_b=0.01 * jax.random.normal(ks[6], (FC_OUT,), jnp.float32),
    )

    prep = prepare_params(params)   # one-time weight repack, outside jit
    out = jax.block_until_ready(cnn_landmarks_forward(x, prep))
    ref = jax.block_until_ready(reference_forward(x, params))

    assert out.shape == (B, FC_OUT), out.shape
    # Kernels run bf16 inputs / f32 accumulate (the MXU truncated to bf16 under
    # DEFAULT precision already); compare against the f32 reference at
    # bf16-level tolerance.
    np.testing.assert_allclose(np.asarray(out), np.asarray(ref), rtol=2e-2, atol=2e-2)
    print("KERNEL_OK")
</pallas_src>

<mosaic_0001>
module attributes {stable_mosaic.version = 11 : i64} {
  func.func @conv_pool_kernel(%arg0: i32, %arg1: i32, %arg2: memref<1x32x4096xbf16, #tpu.memory_space<vmem>>, %arg3: memref<32x32xbf16, #tpu.memory_space<vmem>>, %arg4: memref<32x1xbf16, #tpu.memory_space<vmem>>, %arg5: memref<1x32x1024xbf16, #tpu.memory_space<vmem>>) attributes {dimension_semantics = [#tpu.dimension_semantics<parallel>, #tpu.dimension_semantics<parallel>], iteration_bounds = array<i64: 2, 1>, scalar_prefetch = 0 : i64, scratch_operands = 0 : i64, tpu.core_type = #tpu.core_type<tc>, window_params = [{transform_indices = @transform_0, window_bounds = array<i64: 1, 32, 4096>}, {transform_indices = @transform_1, window_bounds = array<i64: 32, 32>}, {transform_indices = @transform_2, window_bounds = array<i64: 32, 1>}, {transform_indices = @transform_3, window_bounds = array<i64: 1, 32, 1024>}]} {
    %c0 = arith.constant 0 : index
    %c0_0 = arith.constant 0 : index
    %0 = vector.load %arg3[%c0, %c0_0] : memref<32x32xbf16, #tpu.memory_space<vmem>>, vector<32x32xbf16>
    %c0_1 = arith.constant 0 : index
    %c0_2 = arith.constant 0 : index
    %c0_3 = arith.constant 0 : index
    %1 = vector.load %arg2[%c0_1, %c0_2, %c0_3] : memref<1x32x4096xbf16, #tpu.memory_space<vmem>>, vector<1x32x1024xbf16>
    %2 = vector.shape_cast %1 : vector<1x32x1024xbf16> to vector<32x1024xbf16>
    %cst = arith.constant dense<0.000000e+00> : vector<32x1024xf32>
    %3 = tpu.matmul %0, %2, %cst {dimension_numbers = #tpu.dot_dimension_numbers<[1], [0], [0], [1], [0, 0, 1, 1], [], []>} : vector<32x32xbf16>, vector<32x1024xbf16>, vector<32x1024xf32> -> vector<32x1024xf32>
    %c0_4 = arith.constant 0 : index
    %c0_5 = arith.constant 0 : index
    %c1024 = arith.constant 1024 : index
    %4 = vector.load %arg2[%c0_4, %c0_5, %c1024] : memref<1x32x4096xbf16, #tpu.memory_space<vmem>>, vector<1x32x1024xbf16>
    %5 = vector.shape_cast %4 : vector<1x32x1024xbf16> to vector<32x1024xbf16>
    %cst_6 = arith.constant dense<0.000000e+00> : vector<32x1024xf32>
    %6 = tpu.matmul %0, %5, %cst_6 {dimension_numbers = #tpu.dot_dimension_numbers<[1], [0], [0], [1], [0, 0, 1, 1], [], []>} : vector<32x32xbf16>, vector<32x1024xbf16>, vector<32x1024xf32> -> vector<32x1024xf32>
    %7 = arith.maximumf %3, %6 : vector<32x1024xf32>
    %c0_7 = arith.constant 0 : index
    %c0_8 = arith.constant 0 : index
    %c2048 = arith.constant 2048 : index
    %8 = vector.load %arg2[%c0_7, %c0_8, %c2048] : memref<1x32x4096xbf16, #tpu.memory_space<vmem>>, vector<1x32x1024xbf16>
    %9 = vector.shape_cast %8 : vector<1x32x1024xbf16> to vector<32x1024xbf16>
    %cst_9 = arith.constant dense<0.000000e+00> : vector<32x1024xf32>
    %10 = tpu.matmul %0, %9, %cst_9 {dimension_numbers = #tpu.dot_dimension_numbers<[1], [0], [0], [1], [0, 0, 1, 1], [], []>} : vector<32x32xbf16>, vector<32x1024xbf16>, vector<32x1024xf32> -> vector<32x1024xf32>
    %11 = arith.maximumf %7, %10 : vector<32x1024xf32>
    %c0_10 = arith.constant 0 : index
    %c0_11 = arith.constant 0 : index
    %c3072 = arith.constant 3072 : index
    %12 = vector.load %arg2[%c0_10, %c0_11, %c3072] : memref<1x32x4096xbf16, #tpu.memory_space<vmem>>, vector<1x32x1024xbf16>
    %13 = vector.shape_cast %12 : vector<1x32x1024xbf16> to vector<32x1024xbf16>
    %cst_12 = arith.constant dense<0.000000e+00> : vector<32x1024xf32>
    %14 = tpu.matmul %0, %13, %cst_12 {dimension_numbers = #tpu.dot_dimension_numbers<[1], [0], [0], [1], [0, 0, 1, 1], [], []>} : vector<32x32xbf16>, vector<32x1024xbf16>, vector<32x1024xf32> -> vector<32x1024xf32>
    %15 = arith.maximumf %11, %14 : vector<32x1024xf32>
    %c0_13 = arith.constant 0 : index
    %c0_14 = arith.constant 0 : index
    %16 = vector.load %arg4[%c0_13, %c0_14] : memref<32x1xbf16, #tpu.memory_space<vmem>>, vector<32x1xbf16>
    %17 = arith.extf %16 : vector<32x1xbf16> to vector<32x1xf32>
    %18 = vector.broadcast %17 : vector<32x1xf32> to vector<32x1024xf32>
    %19 = arith.addf %15, %18 : vector<32x1024xf32>
    %20 = math.tanh %19 : vector<32x1024xf32>
    %21 = arith.truncf %20 : vector<32x1024xf32> to vector<32x1024xbf16>
    %c0_15 = arith.constant 0 : index
    %c0_16 = arith.constant 0 : index
    %c0_17 = arith.constant 0 : index
    %22 = vector.load %arg5[%c0_15, %c0_16, %c0_17] : memref<1x32x1024xbf16, #tpu.memory_space<vmem>>, vector<1x32x1024xbf16>
    %23 = vector.shape_cast %22 : vector<1x32x1024xbf16> to vector<32x1024xbf16>
    %24 = vector.shape_cast %21 : vector<32x1024xbf16> to vector<1x32x1024xbf16>
    tpu.vector_store %arg5[%c0_15, %c0_16, %c0_17], %24 {strides = array<i32>} : memref<1x32x1024xbf16, #tpu.memory_space<vmem>>, vector<1x32x1024xbf16>,
    return
  }
  func.func @transform_0(%arg0: i32, %arg1: i32) -> (i32, i32, i32) {
    %c0_i32 = arith.constant 0 : i32
    %c0_i32_0 = arith.constant 0 : i32
    %c0_i32_1 = arith.constant 0 : i32
    return %arg0, %c0_i32, %c0_i32_0 : i32, i32, i32
  }
  func.func @transform_1(%arg0: i32, %arg1: i32) -> (i32, i32) {
    %c0_i32 = arith.constant 0 : i32
    %c0_i32_0 = arith.constant 0 : i32
    return %arg1, %c0_i32 : i32, i32
  }
  func.func @transform_2(%arg0: i32, %arg1: i32) -> (i32, i32) {
    %c0_i32 = arith.constant 0 : i32
    %c0_i32_0 = arith.constant 0 : i32
    return %arg1, %c0_i32 : i32, i32
  }
  func.func @transform_3(%arg0: i32, %arg1: i32) -> (i32, i32, i32) {
    %c0_i32 = arith.constant 0 : i32
    %c0_i32_0 = arith.constant 0 : i32
    return %arg0, %arg1, %c0_i32 : i32, i32, i32
  }
}

module attributes {stable_mosaic.version = 11 : i64} {
  func.func @fc_kernel(%arg0: i32, %arg1: memref<2x32768xbf16, #tpu.memory_space<vmem>>, %arg2: memref<10x32768xbf16, #tpu.memory_space<vmem>>, %arg3: memref<1x10xf32, #tpu.memory_space<vmem>>, %arg4: memref<2x10xf32, #tpu.memory_space<vmem>>) attributes {dimension_semantics = [#tpu.dimension_semantics<arbitrary>], iteration_bounds = array<i64: 1>, scalar_prefetch = 0 : i64, scratch_operands = 0 : i64, tpu.core_type = #tpu.core_type<tc>, window_params = [{pipeline_mode = #tpu.pipeline_mode<synchronous>, transform_indices = @transform_0, window_bounds = array<i64: 2, 32768>}, {pipeline_mode = #tpu.pipeline_mode<synchronous>, transform_indices = @transform_1, window_bounds = array<i64: 10, 32768>}, {pipeline_mode = #tpu.pipeline_mode<synchronous>, transform_indices = @transform_2, window_bounds = array<i64: 1, 10>}, {pipeline_mode = #tpu.pipeline_mode<synchronous>, transform_indices = @transform_3, window_bounds = array<i64: 2, 10>}]} {
    %c0 = arith.constant 0 : index
    %c0_0 = arith.constant 0 : index
    %0 = vector.load %arg1[%c0, %c0_0] : memref<2x32768xbf16, #tpu.memory_space<vmem>>, vector<2x32768xbf16>
    %c0_1 = arith.constant 0 : index
    %c0_2 = arith.constant 0 : index
    %1 = vector.load %arg2[%c0_1, %c0_2] : memref<10x32768xbf16, #tpu.memory_space<vmem>>, vector<10x32768xbf16>
    %cst = arith.constant dense<0.000000e+00> : vector<2x10xf32>
    %2 = tpu.matmul %0, %1, %cst {dimension_numbers = #tpu.dot_dimension_numbers<[1], [1], [0], [0], [0, 0, 1, 0], [], []>} : vector<2x32768xbf16>, vector<10x32768xbf16>, vector<2x10xf32> -> vector<2x10xf32>
    %c0_3 = arith.constant 0 : index
    %c0_4 = arith.constant 0 : index
    %3 = vector.load %arg3[%c0_3, %c0_4] : memref<1x10xf32, #tpu.memory_space<vmem>>, vector<1x10xf32>
    %4 = vector.broadcast %3 : vector<1x10xf32> to vector<2x10xf32>
    %5 = arith.addf %2, %4 : vector<2x10xf32>
    %c0_5 = arith.constant 0 : index
    %c0_6 = arith.constant 0 : index
    %6 = vector.load %arg4[%c0_5, %c0_6] : memref<2x10xf32, #tpu.memory_space<vmem>>, vector<2x10xf32>
    tpu.vector_store %arg4[%c0_5, %c0_6], %5 {strides = array<i32>} : memref<2x10xf32, #tpu.memory_space<vmem>>, vector<2x10xf32>,
    return
  }
  func.func @transform_0(%arg0: i32) -> (i32, i32) {
    %c0_i32 = arith.constant 0 : i32
    %c0_i32_0 = arith.constant 0 : i32
    %c0_i32_1 = arith.constant 0 : i32
    return %c0_i32, %c0_i32_0 : i32, i32
  }
  func.func @transform_1(%arg0: i32) -> (i32, i32) {
    %c0_i32 = arith.constant 0 : i32
    %c0_i32_0 = arith.constant 0 : i32
    %c0_i32_1 = arith.constant 0 : i32
    return %c0_i32, %c0_i32_0 : i32, i32
  }
  func.func @transform_2(%arg0: i32) -> (i32, i32) {
    %c0_i32 = arith.constant 0 : i32
    %c0_i32_0 = arith.constant 0 : i32
    %c0_i32_1 = arith.constant 0 : i32
    return %c0_i32, %c0_i32_0 : i32, i32
  }
  func.func @transform_3(%arg0: i32) -> (i32, i32) {
    %c0_i32 = arith.constant 0 : i32
    %c0_i32_0 = arith.constant 0 : i32
    %c0_i32_1 = arith.constant 0 : i32
    return %c0_i32, %c0_i32_0 : i32, i32
  }
}

</mosaic_0001>

<llo_original>
// kernel: cnn_landmarks_forward.2
$region0: #{cnn_landmarks_forward.2}
  #allocation0 [shape = 'u32[]', space=smem, size = 0x4, offset = 0x4, fixed_abs, tag = 'smem constant byte address 0x4 - core index']
  #allocation1 [shape = 'u32[144,128]{1,0:T(1,128)}', space=vmem, size = 0x12000, scoped, tag = 'internal scratch']
  %s0 = inlined_call_operand.vmem [shape: bf16[2,32,4096], index: 0, kind: input, shape index: {}]
  %s1 = inlined_call_operand.vmem [shape: bf16[32,32], index: 1, kind: input, shape index: {}]
  %s2 = inlined_call_operand.vmem [shape: bf16[32,1], index: 2, kind: input, shape index: {}]
  %s3 = inlined_call_operand.vmem [shape: bf16[2,32,1024], index: 3, kind: output, shape index: {}]
  %s4 = sld [smem:[#allocation0]]
  $region45: #{cnn_landmarks_forward.2} parent=0
    _
  %s6 = ssub.s32 1, %s4
  %s7 = scalar_select 0, %s6, %s4
  loop: start=0, step=1, limit=4
  $region2: #{cnn_landmarks_forward.2} parent=0 // loop_pre_header
    _
  $region3: #{cnn_landmarks_forward.2} parent=0 // loop_header
    %s9 = sphi 0, %s13
    %p10 = scmp.ge.s32.totalorder %s9, 4
    %s16 = sphi 0, %s28
    %s17 = sphi 0, %s24
    %s18 = sphi 0, %s16
    %s19 = sphi 0, %s17
    %s20 = sphi 0, %s18
    %s21 = sphi 0, %s19
    %s31 = sphi 0, %s33
    %s34 = sphi 0, %s31
    %s35 = sphi 0, %s34
    %s51 = sphi 0, %s35
    %s57 = sphi 0, %s59
    %s60 = sphi 0, %s57
    %s61 = sphi 0, %s60
    %s77 = sphi 0, %s61
    %s83 = sphi 0, %s85
    %s86 = sphi 0, %s83
    %s87 = sphi 0, %s86
    %s103 = sphi 0, %s87
    %s111 = sphi 0, %s113
    %s114 = sphi 0, %s111
    %s115 = sphi 0, %s114
    %s131 = sphi 0, %s115
  $region4: #{cnn_landmarks_forward.2} parent=0 // loop_header_branch
    %12 = sbr.rel (%p10) target = $region8
  $region5: #{cnn_landmarks_forward.2} parent=0 // loop_body
    %s14 = ssub.s32 %s9, 1
    %s15 = ssub.s32 %s9, 2
    %s22 = sadd.s32 1, %s17
    %p23 = scmp.ge.s32.totalorder %s22, 1
    %s24 = scalar_select %p23, 0, %s22
    %s25 = sadd.s32 1, %s16
    %s26 = scalar_select %p23, %s25, %s16
    %p27 = scmp.ge.s32.totalorder %s26, 2
    %s28 = scalar_select %p27, 0, %s26
    %s29 = ssub.s32 %s16, %s28
    %p30 = scmp.eq.s32.totalorder %s29, 0
    %s32 = sadd.s32 %s31, 1
    %s33 = scalar_select %p30, %s31, %s32
    %p36 = pneg %p30
    %p37 = scmp.eq.s32.totalorder %s9, 1
    %p38 = por %p36, %p37
    %p39 = scmp.ne.s32.totalorder %s31, %s34
    %p40 = scmp.eq.s32.totalorder %s9, 0
    %p41 = por %p39, %p40
    %p42 = scmp.ne.s32.totalorder %s31, %s34
    %p43 = scmp.eq.s32.totalorder %s14, 1
    %p44 = por %p42, %p43
    %p45 = scmp.ne.s32.totalorder %s34, %s35
    %p46 = scmp.eq.s32.totalorder %s14, 0
    %p47 = por %p45, %p46
    %p48 = scmp.ne.s32.totalorder %s34, %s35
    %p49 = scmp.eq.s32.totalorder %s15, 1
    %p50 = por %p48, %p49
    %p52 = scmp.ne.s32.totalorder %s35, %s51
    %p53 = scmp.eq.s32.totalorder %s15, 0
    %p54 = por %p52, %p53
    %s55 = ssub.s32 %s17, %s24
    %p56 = scmp.eq.s32.totalorder %s55, 0
    %s58 = sadd.s32 %s57, 1
    %s59 = scalar_select %p56, %s57, %s58
    %p62 = pneg %p56
    %p63 = scmp.eq.s32.totalorder %s9, 1
    %p64 = por %p62, %p63
    %p65 = scmp.ne.s32.totalorder %s57, %s60
    %p66 = scmp.eq.s32.totalorder %s9, 0
    %p67 = por %p65, %p66
    %p68 = scmp.ne.s32.totalorder %s57, %s60
    %p69 = scmp.eq.s32.totalorder %s14, 1
    %p70 = por %p68, %p69
    %p71 = scmp.ne.s32.totalorder %s60, %s61
    %p72 = scmp.eq.s32.totalorder %s14, 0
    %p73 = por %p71, %p72
    %p74 = scmp.ne.s32.totalorder %s60, %s61
    %p75 = scmp.eq.s32.totalorder %s15, 1
    %p76 = por %p74, %p75
    %p78 = scmp.ne.s32.totalorder %s61, %s77
    %p79 = scmp.eq.s32.totalorder %s15, 0
    %p80 = por %p78, %p79
    %s81 = ssub.s32 %s17, %s24
    %p82 = scmp.eq.s32.totalorder %s81, 0
    %s84 = sadd.s32 %s83, 1
    %s85 = scalar_select %p82, %s83, %s84
    %p88 = pneg %p82
    %p89 = scmp.eq.s32.totalorder %s9, 1
    %p90 = por %p88, %p89
    %p91 = scmp.ne.s32.totalorder %s83, %s86
    %p92 = scmp.eq.s32.totalorder %s9, 0
    %p93 = por %p91, %p92
    %p94 = scmp.ne.s32.totalorder %s83, %s86
    %p95 = scmp.eq.s32.totalorder %s14, 1
    %p96 = por %p94, %p95
    %p97 = scmp.ne.s32.totalorder %s86, %s87
    %p98 = scmp.eq.s32.totalorder %s14, 0
    %p99 = por %p97, %p98
    %p100 = scmp.ne.s32.totalorder %s86, %s87
    %p101 = scmp.eq.s32.totalorder %s15, 1
    %p102 = por %p100, %p101
    %p104 = scmp.ne.s32.totalorder %s87, %s103
    %p105 = scmp.eq.s32.totalorder %s15, 0
    %p106 = por %p104, %p105
    %s107 = ssub.s32 %s16, %s28
    %s108 = ssub.s32 %s17, %s24
    %s109 = sor.u32 %s107, %s108
    %p110 = scmp.eq.s32.totalorder %s109, 0
    %s112 = sadd.s32 %s111, 1
    %s113 = scalar_select %p110, %s111, %s112
    %p116 = pneg %p110
    %p117 = scmp.eq.s32.totalorder %s9, 1
    %p118 = por %p116, %p117
    %p119 = scmp.ne.s32.totalorder %s111, %s114
    %p120 = scmp.eq.s32.totalorder %s9, 0
    %p121 = por %p119, %p120
    %p122 = scmp.ne.s32.totalorder %s111, %s114
    %p123 = scmp.eq.s32.totalorder %s14, 1
    %p124 = por %p122, %p123
    %p125 = scmp.ne.s32.totalorder %s114, %s115
    %p126 = scmp.eq.s32.totalorder %s14, 0
    %p127 = por %p125, %p126
    %p128 = scmp.ne.s32.totalorder %s114, %s115
    %p129 = scmp.eq.s32.totalorder %s15, 1
    %p130 = por %p128, %p129
    %p132 = scmp.ne.s32.totalorder %s115, %s131
    %p133 = scmp.eq.s32.totalorder %s15, 0
    %p134 = por %p132, %p133
    %p135 = scmp.le.s32.totalorder 1, %s9
    %p136 = scmp.lt.s32.totalorder %s9, 3
    %p137 = pnand %p135, %p136
    %p138 = pneg %p137
    // Predicated region
    $region9: #{cnn_landmarks_forward.2} parent=5 // pred_check
      _
    $region10: #{cnn_landmarks_forward.2} parent=5 // pred_check_branch
      %140 = sbr.rel (%p137) target = $region12
    $region11: #{cnn_landmarks_forward.2} parent=5 // pred_region
      %s141 = ssub.s32 %s9, 1
      // Predicated region
      $region13: #{cnn_landmarks_forward.2} parent=11 // pred_check
        %p142 = pneg %p73
      $region14: #{cnn_landmarks_forward.2} parent=11 // pred_check_branch
        %144 = sbr.rel (%p142) target = $region16
      $region15: #{cnn_landmarks_forward.2} parent=11 // pred_region
        %s145 = smul.u32 4, %s19
        %p146 = scmp.lt.s32.totalorder %s145, 3
        %s147 = scalar_select %p146, %s145, 3
        %s148 = smul.addr %s147, 4
        %s149 = scalar_lea.vmem %s1, %s148
        %s150 = smul.u32 4, %s19
      $region16: #{cnn_landmarks_forward.2} parent=11 // pred_fallthru
        _
      // Predicated region
      $region17: #{cnn_landmarks_forward.2} parent=11 // pred_check
        %p151 = pneg %p99
      $region18: #{cnn_landmarks_forward.2} parent=11 // pred_check_branch
        %153 = sbr.rel (%p151) target = $region20
      $region19: #{cnn_landmarks_forward.2} parent=11 // pred_region
        %s154 = smul.u32 4, %s19
        %p155 = scmp.lt.s32.totalorder %s154, 3
        %s156 = scalar_select %p155, %s154, 3
        %s157 = smul.addr %s156, 4
        %s158 = scalar_lea.vmem %s2, %s157
        %s159 = smul.u32 4, %s19
      $region20: #{cnn_landmarks_forward.2} parent=11 // pred_fallthru
        _
    $region12: #{cnn_landmarks_forward.2} parent=5 // pred_fallthru
      _
    %p160 = scmp.lt.s32.totalorder %s9, 2
    // Predicated region
    $region21: #{cnn_landmarks_forward.2} parent=5 // pred_check
      %p161 = pneg %p160
    $region22: #{cnn_landmarks_forward.2} parent=5 // pred_check_branch
      %163 = sbr.rel (%p161) target = $region24
    $region23: #{cnn_landmarks_forward.2} parent=5 // pred_region
      // Predicated region
      $region25: #{cnn_landmarks_forward.2} parent=23 // pred_check
        %p164 = pneg %p41
      $region26: #{cnn_landmarks_forward.2} parent=23 // pred_check_branch
        %166 = sbr.rel (%p164) target = $region28
      $region27: #{cnn_landmarks_forward.2} parent=23 // pred_region
        %p167 = scmp.lt.s32.totalorder %s16, 1
        %s168 = scalar_select %p167, %s16, 1
        %s169 = smul.addr %s168, 128
        %s170 = smul.addr %s169, 4
        %s171 = scalar_lea.vmem %s0, %s170
      $region28: #{cnn_landmarks_forward.2} parent=23 // pred_fallthru
        _
    $region24: #{cnn_landmarks_forward.2} parent=5 // pred_fallthru
      _
    %p172 = scmp.le.s32.totalorder 1, %s9
    %p173 = scmp.lt.s32.totalorder %s9, 3
    %p174 = pnand %p172, %p173
    %p175 = pneg %p174
    // Predicated region
    $region29: #{cnn_landmarks_forward.2} parent=5 // pred_check
      _
    $region30: #{cnn_landmarks_forward.2} parent=5 // pred_check_branch
      %177 = sbr.rel (%p174) target = $region32
    $region31: #{cnn_landmarks_forward.2} parent=5 // pred_region
      %s178 = ssub.s32 %s9, 1
      %p179 = scmp.lt.s32.totalorder %s18, 1
      %s180 = scalar_select %p179, %s18, 1
      %s181 = smul.addr %s180, 128
      %s182 = smul.addr %s181, 4
      %s183 = scalar_lea.vmem %s0, %s182
      %p184 = pneg %p47
      %p185 = pneg %p44
      %s186 = smul.u32 4, %s19
      %p187 = scmp.lt.s32.totalorder %s186, 3
      %s188 = scalar_select %p187, %s186, 3
      %s189 = smul.addr %s188, 4
      %s190 = scalar_lea.vmem %s1, %s189
      %p191 = pneg %p73
      %p192 = pneg %p70
      %s193 = smul.u32 4, %s19
      %p194 = scmp.lt.s32.totalorder %s193, 3
      %s195 = scalar_select %p194, %s193, 3
      %s196 = smul.addr %s195, 4
      %s197 = scalar_lea.vmem %s2, %s196
      %p198 = pneg %p99
      %p199 = pneg %p96
      %p200 = pneg %p127
      %p201 = pneg %p124
      %s202 = smul.u32 4, %s19
      %p203 = scmp.lt.s32.totalorder %s18, 1
      %s204 = scalar_select %p203, %s18, 1
      %p205 = scmp.lt.s32.totalorder %s202, 3
      %s206 = scalar_select %p205, %s202, 3
      %s207 = smul.addr %s206, 8
      %s208 = smul.addr %s204, 32
      %s209 = sadd.s32 %s207, %s208
      %s210 = smul.addr %s209, 4
      %s211 = scalar_lea.vmem %s3, %s210
      %p212 = scmp.lt.s32.totalorder %s18, 1
      %s213 = scalar_select %p212, %s18, 1
      %s214 = smul.addr %s213, 128
      %s215 = smul.addr %s214, 4
      %s216 = scalar_lea.vmem %s0, %s215
      %s217 = smul.u32 4, %s19
      %p218 = scmp.lt.s32.totalorder %s217, 3
      %s219 = scalar_select %p218, %s217, 3
      %s220 = smul.addr %s219, 4
      %s221 = scalar_lea.vmem %s1, %s220
      %s222 = smul.u32 4, %s19
      %s223 = smul.u32 4, %s19
      %p224 = scmp.lt.s32.totalorder %s223, 3
      %s225 = scalar_select %p224, %s223, 3
      %s226 = smul.addr %s225, 4
      %s227 = scalar_lea.vmem %s2, %s226
      %s228 = smul.u32 4, %s19
      %s229 = smul.u32 4, %s19
      %p230 = scmp.lt.s32.totalorder %s18, 1
      %s231 = scalar_select %p230, %s18, 1
      %p232 = scmp.lt.s32.totalorder %s229, 3
      %s233 = scalar_select %p232, %s229, 3
      %s234 = smul.addr %s233, 8
      %s235 = smul.addr %s231, 32
      %s236 = sadd.s32 %s234, %s235
      %s237 = smul.addr %s236, 4
      %s238 = scalar_lea.vmem %s3, %s237
      %s239 = smul.u32 4, %s19
      %v241 = vld [vmem:[%s221] sm:$0xf]
      %v242 = vld [vmem:[%s221 + $0x4] sm:$0xf]
      %v243 = vld [vmem:[%s221 + $0x8] sm:$0xf]
      %v244 = vld [vmem:[%s221 + $0xc] sm:$0xf]
      %v245 = vld [vmem:[%s216] sm:$0xff]
      %v246 = vld [vmem:[%s216 + $0x8] sm:$0xff]
      %v247 = vld [vmem:[%s216 + $0x10] sm:$0xff]
      %v248 = vld [vmem:[%s216 + $0x18] sm:$0xff]
      %v249 = vld [vmem:[%s216 + $0x80] sm:$0xff]
      %v250 = vld [vmem:[%s216 + $0x88] sm:$0xff]
      %v251 = vld [vmem:[%s216 + $0x90] sm:$0xff]
      %v252 = vld [vmem:[%s216 + $0x98] sm:$0xff]
      %v253 = vld [vmem:[%s216 + $0x100] sm:$0xff]
      %v254 = vld [vmem:[%s216 + $0x108] sm:$0xff]
      %v255 = vld [vmem:[%s216 + $0x110] sm:$0xff]
      %v256 = vld [vmem:[%s216 + $0x118] sm:$0xff]
      %v257 = vld [vmem:[%s216 + $0x180] sm:$0xff]
      %v258 = vld [vmem:[%s216 + $0x188] sm:$0xff]
      %v259 = vld [vmem:[%s216 + $0x190] sm:$0xff]
      %v260 = vld [vmem:[%s216 + $0x198] sm:$0xff]
      %v265 = vunpack.c.l.b16 %v241
      %v266 = vunpack.c.l.b16 %v242
      %v267 = vunpack.c.l.b16 %v243
      %v268 = vunpack.c.l.b16 %v244
      %v269 = vpack.c.b16 %v266, %v265
      %v270 = vpack.c.b16 %v268, %v267
      %v287 = vunpack.c.l.b16 %v245
      %v288 = vunpack.c.h.b16 %v245
      %v289 = vunpack.c.l.b16 %v246
      %v290 = vunpack.c.h.b16 %v246
      %v291 = vunpack.c.l.b16 %v247
      %v292 = vunpack.c.h.b16 %v247
      %v293 = vunpack.c.l.b16 %v248
      %v294 = vunpack.c.h.b16 %v248
      %v295 = vunpack.c.l.b16 %v249
      %v296 = vunpack.c.h.b16 %v249
      %v297 = vunpack.c.l.b16 %v250
      %v298 = vunpack.c.h.b16 %v250
      %v299 = vunpack.c.l.b16 %v251
      %v300 = vunpack.c.h.b16 %v251
      %v301 = vunpack.c.l.b16 %v252
      %v302 = vunpack.c.h.b16 %v252
      %v303 = vunpack.c.l.b16 %v253
      %v304 = vunpack.c.h.b16 %v253
      %v305 = vunpack.c.l.b16 %v254
      %v306 = vunpack.c.h.b16 %v254
      %v307 = vunpack.c.l.b16 %v255
      %v308 = vunpack.c.h.b16 %v255
      %v309 = vunpack.c.l.b16 %v256
      %v310 = vunpack.c.h.b16 %v256
      %v311 = vunpack.c.l.b16 %v257
      %v312 = vunpack.c.h.b16 %v257
      %v313 = vunpack.c.l.b16 %v258
      %v314 = vunpack.c.h.b16 %v258
      %v315 = vunpack.c.l.b16 %v259
      %v316 = vunpack.c.h.b16 %v259
      %v317 = vunpack.c.l.b16 %v260
      %v318 = vunpack.c.h.b16 %v260
      %v319 = vpack.c.b16 %v295, %v287
      %v320 = vpack.c.b16 %v296, %v288
      %v321 = vpack.c.b16 %v297, %v289
      %v322 = vpack.c.b16 %v298, %v290
      %v323 = vpack.c.b16 %v299, %v291
      %v324 = vpack.c.b16 %v300, %v292
      %v325 = vpack.c.b16 %v301, %v293
      %v326 = vpack.c.b16 %v302, %v294
      %v327 = vpack.c.b16 %v311, %v303
      %v328 = vpack.c.b16 %v312, %v304
      %v329 = vpack.c.b16 %v313, %v305
      %v330 = vpack.c.b16 %v314, %v306
      %v331 = vpack.c.b16 %v315, %v307
      %v332 = vpack.c.b16 %v316, %v308
      %v333 = vpack.c.b16 %v317, %v309
      %v334 = vpack.c.b16 %v318, %v310
      %vm351 = vcmask 261120
      %v353 = vsel %vm351, %v269, 0
      %v356 = vsel %vm351, %v270, 0
      %358 = vmatprep.subr.bf16.mxu0 0
      %359 = vmatpush1.bf16.msra.mxu0 0
      %360 = vmatprep.subr.bf16.mxu0 0
      %361 = vmatpush1.bf16.msra.mxu0 0
      %362 = vmatprep.subr.bf16.mxu0 0
      %363 = vmatpush1.bf16.msra.mxu0 0
      %364 = vmatprep.subr.bf16.mxu0 0
      %365 = vmatpush1.bf16.msra.mxu0 0
      %366 = vmatprep.subr.bf16.mxu0 0
      %367 = vmatpush1.bf16.msra.mxu0 0
      %368 = vmatprep.subr.bf16.mxu0 0
      %369 = vmatpush1.bf16.msra.mxu0 0
      %370 = vmatprep.subr.bf16.mxu0 %v328
      %371 = vmatpush1.bf16.msra.mxu0 %v327
      %372 = vmatprep.subr.bf16.mxu0 %v320
      %373 = vmatpush1.bf16.msra.mxu0 %v319
      %374 = vmatprep.subr.bf16.mxu0 0
      %375 = vmatpush2.bf16.msra.mxu0 0
      %376 = vmatprep.subr.bf16.mxu0 0
      %377 = vmatpush2.bf16.msra.mxu0 0
      %378 = vmatprep.subr.bf16.mxu0 0
      %379 = vmatpush2.bf16.msra.mxu0 0
      %380 = vmatprep.subr.bf16.mxu0 0
      %381 = vmatpush2.bf16.msra.mxu0 0
      %382 = vmatprep.subr.bf16.mxu0 0
      %383 = vmatpush2.bf16.msra.mxu0 0
      %384 = vmatprep.subr.bf16.mxu0 0
      %385 = vmatpush2.bf16.msra.mxu0 0
      %386 = vmatprep.subr.bf16.mxu0 0
      %387 = vmatpush2.bf16.msra.mxu0 0
      %388 = vmatprep.subr.bf16.mxu0 0
      %389 = vmatpush2.bf16.msra.mxu0 0
      %390 = vmatprep.mubr.bf16.mxu0 0
      %391 = vmatmul.mubr.bf16.gmra.mxu0 %v353
      %v392 = vpop.f32.mrf.mxu0
      %v393 = vadd.f32 0.0, %v392
      %v394 = vpop.f32.mrf.mxu0
      %v395 = vadd.f32 0.0, %v394
      %v396 = vpop.f32.mrf.mxu0
      %v397 = vadd.f32 0.0, %v396
      %v398 = vpop.f32.mrf.mxu0
      %v399 = vadd.f32 0.0, %v398
      %400 = vmatprep.mubr.bf16.mxu0 0
      %401 = vmatmul.mubr.bf16.gmra.mxu0 %v356
      %v402 = vpop.f32.mrf.mxu0
      %v403 = vadd.f32 0.0, %v402
      %v404 = vpop.f32.mrf.mxu0
      %v405 = vadd.f32 0.0, %v404
      %v406 = vpop.f32.mrf.mxu0
      %v407 = vadd.f32 0.0, %v406
      %v408 = vpop.f32.mrf.mxu0
      %v409 = vadd.f32 0.0, %v408
      %410 = vdwg.mxu0
      %411 = vmatprep.subr.bf16.mxu0 0
      %412 = vmatpush1.bf16.msra.mxu0 0
      %413 = vmatprep.subr.bf16.mxu0 0
      %414 = vmatpush1.bf16.msra.mxu0 0
      %415 = vmatprep.subr.bf16.mxu0 0
      %416 = vmatpush1.bf16.msra.mxu0 0
      %417 = vmatprep.subr.bf16.mxu0 0
      %418 = vmatpush1.bf16.msra.mxu0 0
      %419 = vmatprep.subr.bf16.mxu0 0
      %420 = vmatpush1.bf16.msra.mxu0 0
      %421 = vmatprep.subr.bf16.mxu0 0
      %422 = vmatpush1.bf16.msra.mxu0 0
      %423 = vmatprep.subr.bf16.mxu0 %v330
      %424 = vmatpush1.bf16.msra.mxu0 %v329
      %425 = vmatprep.subr.bf16.mxu0 %v322
      %426 = vmatpush1.bf16.msra.mxu0 %v321
      %427 = vmatprep.subr.bf16.mxu0 0
      %428 = vmatpush2.bf16.msra.mxu0 0
      %429 = vmatprep.subr.bf16.mxu0 0
      %430 = vmatpush2.bf16.msra.mxu0 0
      %431 = vmatprep.subr.bf16.mxu0 0
      %432 = vmatpush2.bf16.msra.mxu0 0
      %433 = vmatprep.subr.bf16.mxu0 0
      %434 = vmatpush2.bf16.msra.mxu0 0
      %435 = vmatprep.subr.bf16.mxu0 0
      %436 = vmatpush2.bf16.msra.mxu0 0
      %437 = vmatprep.subr.bf16.mxu0 0
      %438 = vmatpush2.bf16.msra.mxu0 0
      %439 = vmatprep.subr.bf16.mxu0 0
      %440 = vmatpush2.bf16.msra.mxu0 0
      %441 = vmatprep.subr.bf16.mxu0 0
      %442 = vmatpush2.bf16.msra.mxu0 0
      %443 = vmatprep.mubr.bf16.mxu0 0
      %444 = vmatmul.mubr.bf16.gmra.mxu0 %v353
      %v445 = vpop.f32.mrf.mxu0
      %v446 = vadd.f32 0.0, %v445
      %v447 = vpop.f32.mrf.mxu0
      %v448 = vadd.f32 0.0, %v447
      %v449 = vpop.f32.mrf.mxu0
      %v450 = vadd.f32 0.0, %v449
      %v451 = vpop.f32.mrf.mxu0
      %v452 = vadd.f32 0.0, %v451
      %453 = vmatprep.mubr.bf16.mxu0 0
      %454 = vmatmul.mubr.bf16.gmra.mxu0 %v356
      %v455 = vpop.f32.mrf.mxu0
      %v456 = vadd.f32 0.0, %v455
      %v457 = vpop.f32.mrf.mxu0
      %v458 = vadd.f32 0.0, %v457
      %v459 = vpop.f32.mrf.mxu0
      %v460 = vadd.f32 0.0, %v459
      %v461 = vpop.f32.mrf.mxu0
      %v462 = vadd.f32 0.0, %v461
      %463 = vdwg.mxu0
      %464 = vmatprep.subr.bf16.mxu0 0
      %465 = vmatpush1.bf16.msra.mxu0 0
      %466 = vmatprep.subr.bf16.mxu0 0
      %467 = vmatpush1.bf16.msra.mxu0 0
      %468 = vmatprep.subr.bf16.mxu0 0
      %469 = vmatpush1.bf16.msra.mxu0 0
      %470 = vmatprep.subr.bf16.mxu0 0
      %471 = vmatpush1.bf16.msra.mxu0 0
      %472 = vmatprep.subr.bf16.mxu0 0
      %473 = vmatpush1.bf16.msra.mxu0 0
      %474 = vmatprep.subr.bf16.mxu0 0
      %475 = vmatpush1.bf16.msra.mxu0 0
      %476 = vmatprep.subr.bf16.mxu0 %v332
      %477 = vmatpush1.bf16.msra.mxu0 %v331
      %478 = vmatprep.subr.bf16.mxu0 %v324
      %479 = vmatpush1.bf16.msra.mxu0 %v323
      %480 = vmatprep.subr.bf16.mxu0 0
      %481 = vmatpush2.bf16.msra.mxu0 0
      %482 = vmatprep.subr.bf16.mxu0 0
      %483 = vmatpush2.bf16.msra.mxu0 0
      %484 = vmatprep.subr.bf16.mxu0 0
      %485 = vmatpush2.bf16.msra.mxu0 0
      %486 = vmatprep.subr.bf16.mxu0 0
      %487 = vmatpush2.bf16.msra.mxu0 0
      %488 = vmatprep.subr.bf16.mxu0 0
      %489 = vmatpush2.bf16.msra.mxu0 0
      %490 = vmatprep.subr.bf16.mxu0 0
      %491 = vmatpush2.bf16.msra.mxu0 0
      %492 = vmatprep.subr.bf16.mxu0 0
      %493 = vmatpush2.bf16.msra.mxu0 0
      %494 = vmatprep.subr.bf16.mxu0 0
      %495 = vmatpush2.bf16.msra.mxu0 0
      %496 = vmatprep.mubr.bf16.mxu0 0
      %497 = vmatmul.mubr.bf16.gmra.mxu0 %v353
      %v498 = vpop.f32.mrf.mxu0
      %v499 = vadd.f32 0.0, %v498
      %v500 = vpop.f32.mrf.mxu0
      %v501 = vadd.f32 0.0, %v500
      %v502 = vpop.f32.mrf.mxu0
      %v503 = vadd.f32 0.0, %v502
      %v504 = vpop.f32.mrf.mxu0
      %v505 = vadd.f32 0.0, %v504
      %506 = vmatprep.mubr.bf16.mxu0 0
      %507 = vmatmul.mubr.bf16.gmra.mxu0 %v356
      %v508 = vpop.f32.mrf.mxu0
      %v509 = vadd.f32 0.0, %v508
      %v510 = vpop.f32.mrf.mxu0
      %v511 = vadd.f32 0.0, %v510
      %v512 = vpop.f32.mrf.mxu0
      %v513 = vadd.f32 0.0, %v512
      %v514 = vpop.f32.mrf.mxu0
      %v515 = vadd.f32 0.0, %v514
      %516 = vdwg.mxu0
      %517 = vmatprep.subr.bf16.mxu0 0
      %518 = vmatpush1.bf16.msra.mxu0 0
      %519 = vmatprep.subr.bf16.mxu0 0
      %520 = vmatpush1.bf16.msra.mxu0 0
      %521 = vmatprep.subr.bf16.mxu0 0
      %522 = vmatpush1.bf16.msra.mxu0 0
      %523 = vmatprep.subr.bf16.mxu0 0
      %524 = vmatpush1.bf16.msra.mxu0 0
      %525 = vmatprep.subr.bf16.mxu0 0
      %526 = vmatpush1.bf16.msra.mxu0 0
      %527 = vmatprep.subr.bf16.mxu0 0
      %528 = vmatpush1.bf16.msra.mxu0 0
      %529 = vmatprep.subr.bf16.mxu0 %v334
      %530 = vmatpush1.bf16.msra.mxu0 %v333
      %531 = vmatprep.subr.bf16.mxu0 %v326
      %532 = vmatpush1.bf16.msra.mxu0 %v325
      %533 = vmatprep.subr.bf16.mxu0 0
      %534 = vmatpush2.bf16.msra.mxu0 0
      %535 = vmatprep.subr.bf16.mxu0 0
      %536 = vmatpush2.bf16.msra.mxu0 0
      %537 = vmatprep.subr.bf16.mxu0 0
      %538 = vmatpush2.bf16.msra.mxu0 0
      %539 = vmatprep.subr.bf16.mxu0 0
      %540 = vmatpush2.bf16.msra.mxu0 0
      %541 = vmatprep.subr.bf16.mxu0 0
      %542 = vmatpush2.bf16.msra.mxu0 0
      %543 = vmatprep.subr.bf16.mxu0 0
      %544 = vmatpush2.bf16.msra.mxu0 0
      %545 = vmatprep.subr.bf16.mxu0 0
      %546 = vmatpush2.bf16.msra.mxu0 0
      %547 = vmatprep.subr.bf16.mxu0 0
      %548 = vmatpush2.bf16.msra.mxu0 0
      %549 = vmatprep.mubr.bf16.mxu0 0
      %550 = vmatmul.mubr.bf16.gmra.mxu0 %v353
      %v551 = vpop.f32.mrf.mxu0
      %v552 = vadd.f32 0.0, %v551
      %v553 = vpop.f32.mrf.mxu0
      %v554 = vadd.f32 0.0, %v553
      %v555 = vpop.f32.mrf.mxu0
      %v556 = vadd.f32 0.0, %v555
      %v557 = vpop.f32.mrf.mxu0
      %v558 = vadd.f32 0.0, %v557
      %559 = vmatprep.mubr.bf16.mxu0 0
      %560 = vmatmul.mubr.bf16.gmra.mxu0 %v356
      %v561 = vpop.f32.mrf.mxu0
      %v562 = vadd.f32 0.0, %v561
      %v563 = vpop.f32.mrf.mxu0
      %v564 = vadd.f32 0.0, %v563
      %v565 = vpop.f32.mrf.mxu0
      %v566 = vadd.f32 0.0, %v565
      %v567 = vpop.f32.mrf.mxu0
      %v568 = vadd.f32 0.0, %v567
      %569 = vdwg.mxu0
      %v570 = vld [vmem:[%s216 + $0x20] sm:$0xff]
      %v571 = vld [vmem:[%s216 + $0x28] sm:$0xff]
      %v572 = vld [vmem:[%s216 + $0x30] sm:$0xff]
      %v573 = vld [vmem:[%s216 + $0x38] sm:$0xff]
      %v574 = vld [vmem:[%s216 + $0xa0] sm:$0xff]
      %v575 = vld [vmem:[%s216 + $0xa8] sm:$0xff]
      %v576 = vld [vmem:[%s216 + $0xb0] sm:$0xff]
      %v577 = vld [vmem:[%s216 + $0xb8] sm:$0xff]
      %v578 = vld [vmem:[%s216 + $0x120] sm:$0xff]
      %v579 = vld [vmem:[%s216 + $0x128] sm:$0xff]
      %v580 = vld [vmem:[%s216 + $0x130] sm:$0xff]
      %v581 = vld [vmem:[%s216 + $0x138] sm:$0xff]
      %v582 = vld [vmem:[%s216 + $0x1a0] sm:$0xff]
      %v583 = vld [vmem:[%s216 + $0x1a8] sm:$0xff]
      %v584 = vld [vmem:[%s216 + $0x1b0] sm:$0xff]
      %v585 = vld [vmem:[%s216 + $0x1b8] sm:$0xff]
      %v602 = vunpack.c.l.b16 %v570
      %v603 = vunpack.c.h.b16 %v570
      %v604 = vunpack.c.l.b16 %v571
      %v605 = vunpack.c.h.b16 %v571
      %v606 = vunpack.c.l.b16 %v572
      %v607 = vunpack.c.h.b16 %v572
      %v608 = vunpack.c.l.b16 %v573
      %v609 = vunpack.c.h.b16 %v573
      %v610 = vunpack.c.l.b16 %v574
      %v611 = vunpack.c.h.b16 %v574
      %v612 = vunpack.c.l.b16 %v575
      %v613 = vunpack.c.h.b16 %v575
      %v614 = vunpack.c.l.b16 %v576
      %v615 = vunpack.c.h.b16 %v576
      %v616 = vunpack.c.l.b16 %v577
      %v617 = vunpack.c.h.b16 %v577
      %v618 = vunpack.c.l.b16 %v578
      %v619 = vunpack.c.h.b16 %v578
      %v620 = vunpack.c.l.b16 %v579
      %v621 = vunpack.c.h.b16 %v579
      %v622 = vunpack.c.l.b16 %v580
      %v623 = vunpack.c.h.b16 %v580
      %v624 = vunpack.c.l.b16 %v581
      %v625 = vunpack.c.h.b16 %v581
      %v626 = vunpack.c.l.b16 %v582
      %v627 = vunpack.c.h.b16 %v582
      %v628 = vunpack.c.l.b16 %v583
      %v629 = vunpack.c.h.b16 %v583
      %v630 = vunpack.c.l.b16 %v584
      %v631 = vunpack.c.h.b16 %v584
      %v632 = vunpack.c.l.b16 %v585
      %v633 = vunpack.c.h.b16 %v585
      %v634 = vpack.c.b16 %v610, %v602
      %v635 = vpack.c.b16 %v611, %v603
      %v636 = vpack.c.b16 %v612, %v604
      %v637 = vpack.c.b16 %v613, %v605
      %v638 = vpack.c.b16 %v614, %v606
      %v639 = vpack.c.b16 %v615, %v607
      %v640 = vpack.c.b16 %v616, %v608
      %v641 = vpack.c.b16 %v617, %v609
      %v642 = vpack.c.b16 %v626, %v618
      %v643 = vpack.c.b16 %v627, %v619
      %v644 = vpack.c.b16 %v628, %v620
      %v645 = vpack.c.b16 %v629, %v621
      %v646 = vpack.c.b16 %v630, %v622
      %v647 = vpack.c.b16 %v631, %v623
      %v648 = vpack.c.b16 %v632, %v624
      %v649 = vpack.c.b16 %v633, %v625
      %666 = vmatprep.subr.bf16.mxu0 0
      %667 = vmatpush1.bf16.msra.mxu0 0
      %668 = vmatprep.subr.bf16.mxu0 0
      %669 = vmatpush1.bf16.msra.mxu0 0
      %670 = vmatprep.subr.bf16.mxu0 0
      %671 = vmatpush1.bf16.msra.mxu0 0
      %672 = vmatprep.subr.bf16.mxu0 0
      %673 = vmatpush1.bf16.msra.mxu0 0
      %674 = vmatprep.subr.bf16.mxu0 0
      %675 = vmatpush1.bf16.msra.mxu0 0
      %676 = vmatprep.subr.bf16.mxu0 0
      %677 = vmatpush1.bf16.msra.mxu0 0
      %678 = vmatprep.subr.bf16.mxu0 %v643
      %679 = vmatpush1.bf16.msra.mxu0 %v642
      %680 = vmatprep.subr.bf16.mxu0 %v635
      %681 = vmatpush1.bf16.msra.mxu0 %v634
      %682 = vmatprep.subr.bf16.mxu0 0
      %683 = vmatpush2.bf16.msra.mxu0 0
      %684 = vmatprep.subr.bf16.mxu0 0
      %685 = vmatpush2.bf16.msra.mxu0 0
      %686 = vmatprep.subr.bf16.mxu0 0
      %687 = vmatpush2.bf16.msra.mxu0 0
      %688 = vmatprep.subr.bf16.mxu0 0
      %689 = vmatpush2.bf16.msra.mxu0 0
      %690 = vmatprep.subr.bf16.mxu0 0
      %691 = vmatpush2.bf16.msra.mxu0 0
      %692 = vmatprep.subr.bf16.mxu0 0
      %693 = vmatpush2.bf16.msra.mxu0 0
      %694 = vmatprep.subr.bf16.mxu0 0
      %695 = vmatpush2.bf16.msra.mxu0 0
      %696 = vmatprep.subr.bf16.mxu0 0
      %697 = vmatpush2.bf16.msra.mxu0 0
      %698 = vmatprep.mubr.bf16.mxu0 0
      %699 = vmatmul.mubr.bf16.gmra.mxu0 %v353
      %v700 = vpop.f32.mrf.mxu0
      %v701 = vadd.f32 0.0, %v700
      %v702 = vpop.f32.mrf.mxu0
      %v703 = vadd.f32 0.0, %v702
      %v704 = vpop.f32.mrf.mxu0
      %v705 = vadd.f32 0.0, %v704
      %v706 = vpop.f32.mrf.mxu0
      %v707 = vadd.f32 0.0, %v706
      %708 = vmatprep.mubr.bf16.mxu0 0
      %709 = vmatmul.mubr.bf16.gmra.mxu0 %v356
      %v710 = vpop.f32.mrf.mxu0
      %v711 = vadd.f32 0.0, %v710
      %v712 = vpop.f32.mrf.mxu0
      %v713 = vadd.f32 0.0, %v712
      %v714 = vpop.f32.mrf.mxu0
      %v715 = vadd.f32 0.0, %v714
      %v716 = vpop.f32.mrf.mxu0
      %v717 = vadd.f32 0.0, %v716
      %718 = vdwg.mxu0
      %719 = vmatprep.subr.bf16.mxu0 0
      %720 = vmatpush1.bf16.msra.mxu0 0
      %721 = vmatprep.subr.bf16.mxu0 0
      %722 = vmatpush1.bf16.msra.mxu0 0
      %723 = vmatprep.subr.bf16.mxu0 0
      %724 = vmatpush1.bf16.msra.mxu0 0
      %725 = vmatprep.subr.bf16.mxu0 0
      %726 = vmatpush1.bf16.msra.mxu0 0
      %727 = vmatprep.subr.bf16.mxu0 0
      %728 = vmatpush1.bf16.msra.mxu0 0
      %729 = vmatprep.subr.bf16.mxu0 0
      %730 = vmatpush1.bf16.msra.mxu0 0
      %731 = vmatprep.subr.bf16.mxu0 %v645
      %732 = vmatpush1.bf16.msra.mxu0 %v644
      %733 = vmatprep.subr.bf16.mxu0 %v637
      %734 = vmatpush1.bf16.msra.mxu0 %v636
      %735 = vmatprep.subr.bf16.mxu0 0
      %736 = vmatpush2.bf16.msra.mxu0 0
      %737 = vmatprep.subr.bf16.mxu0 0
      %738 = vmatpush2.bf16.msra.mxu0 0
      %739 = vmatprep.subr.bf16.mxu0 0
      %740 = vmatpush2.bf16.msra.mxu0 0
      %741 = vmatprep.subr.bf16.mxu0 0
      %742 = vmatpush2.bf16.msra.mxu0 0
      %743 = vmatprep.subr.bf16.mxu0 0
      %744 = vmatpush2.bf16.msra.mxu0 0
      %745 = vmatprep.subr.bf16.mxu0 0
      %746 = vmatpush2.bf16.msra.mxu0 0
      %747 = vmatprep.subr.bf16.mxu0 0
      %748 = vmatpush2.bf16.msra.mxu0 0
      %749 = vmatprep.subr.bf16.mxu0 0
      %750 = vmatpush2.bf16.msra.mxu0 0
      %751 = vmatprep.mubr.bf16.mxu0 0
      %752 = vmatmul.mubr.bf16.gmra.mxu0 %v353
      %v753 = vpop.f32.mrf.mxu0
      %v754 = vadd.f32 0.0, %v753
      %v755 = vpop.f32.mrf.mxu0
      %v756 = vadd.f32 0.0, %v755
      %v757 = vpop.f32.mrf.mxu0
      %v758 = vadd.f32 0.0, %v757
      %v759 = vpop.f32.mrf.mxu0
      %v760 = vadd.f32 0.0, %v759
      %761 = vmatprep.mubr.bf16.mxu0 0
      %762 = vmatmul.mubr.bf16.gmra.mxu0 %v356
      %v763 = vpop.f32.mrf.mxu0
      %v764 = vadd.f32 0.0, %v763
      %v765 = vpop.f32.mrf.mxu0
      %v766 = vadd.f32 0.0, %v765
      %v767 = vpop.f32.mrf.mxu0
      %v768 = vadd.f32 0.0, %v767
      %v769 = vpop.f32.mrf.mxu0
      %v770 = vadd.f32 0.0, %v769
      %771 = vdwg.mxu0
      %772 = vmatprep.subr.bf16.mxu0 0
      %773 = vmatpush1.bf16.msra.mxu0 0
      %774 = vmatprep.subr.bf16.mxu0 0
      %775 = vmatpush1.bf16.msra.mxu0 0
      %776 = vmatprep.subr.bf16.mxu0 0
      %777 = vmatpush1.bf16.msra.mxu0 0
      %778 = vmatprep.subr.bf16.mxu0 0
      %779 = vmatpush1.bf16.msra.mxu0 0
      %780 = vmatprep.subr.bf16.mxu0 0
      %781 = vmatpush1.bf16.msra.mxu0 0
      %782 = vmatprep.subr.bf16.mxu0 0
      %783 = vmatpush1.bf16.msra.mxu0 0
      %784 = vmatprep.subr.bf16.mxu0 %v647
      %785 = vmatpush1.bf16.msra.mxu0 %v646
      %786 = vmatprep.subr.bf16.mxu0 %v639
      %787 = vmatpush1.bf16.msra.mxu0 %v638
      %788 = vmatprep.subr.bf16.mxu0 0
      %789 = vmatpush2.bf16.msra.mxu0 0
      %790 = vmatprep.subr.bf16.mxu0 0
      %791 = vmatpush2.bf16.msra.mxu0 0
      %792 = vmatprep.subr.bf16.mxu0 0
      %793 = vmatpush2.bf16.msra.mxu0 0
      %794 = vmatprep.subr.bf16.mxu0 0
      %795 = vmatpush2.bf16.msra.mxu0 0
      %796 = vmatprep.subr.bf16.mxu0 0
      %797 = vmatpush2.bf16.msra.mxu0 0
      %798 = vmatprep.subr.bf16.mxu0 0
      %799 = vmatpush2.bf16.msra.mxu0 0
      %800 = vmatprep.subr.bf16.mxu0 0
      %801 = vmatpush2.bf16.msra.mxu0 0
      %802 = vmatprep.subr.bf16.mxu0 0
      %803 = vmatpush2.bf16.msra.mxu0 0
      %804 = vmatprep.mubr.bf16.mxu0 0
      %805 = vmatmul.mubr.bf16.gmra.mxu0 %v353
      %v806 = vpop.f32.mrf.mxu0
      %v807 = vadd.f32 0.0, %v806
      %v808 = vpop.f32.mrf.mxu0
      %v809 = vadd.f32 0.0, %v808
      %v810 = vpop.f32.mrf.mxu0
      %v811 = vadd.f32 0.0, %v810
      %v812 = vpop.f32.mrf.mxu0
      %v813 = vadd.f32 0.0, %v812
      %814 = vmatprep.mubr.bf16.mxu0 0
      %815 = vmatmul.mubr.bf16.gmra.mxu0 %v356
      %v816 = vpop.f32.mrf.mxu0
      %v817 = vadd.f32 0.0, %v816
      %v818 = vpop.f32.mrf.mxu0
      %v819 = vadd.f32 0.0, %v818
      %v820 = vpop.f32.mrf.mxu0
      %v821 = vadd.f32 0.0, %v820
      %v822 = vpop.f32.mrf.mxu0
      %v823 = vadd.f32 0.0, %v822
      %824 = vdwg.mxu0
      %825 = vmatprep.subr.bf16.mxu0 0
      %826 = vmatpush1.bf16.msra.mxu0 0
      %827 = vmatprep.subr.bf16.mxu0 0
      %828 = vmatpush1.bf16.msra.mxu0 0
      %829 = vmatprep.subr.bf16.mxu0 0
      %830 = vmatpush1.bf16.msra.mxu0 0
      %831 = vmatprep.subr.bf16.mxu0 0
      %832 = vmatpush1.bf16.msra.mxu0 0
      %833 = vmatprep.subr.bf16.mxu0 0
      %834 = vmatpush1.bf16.msra.mxu0 0
      %835 = vmatprep.subr.bf16.mxu0 0
      %836 = vmatpush1.bf16.msra.mxu0 0
      %837 = vmatprep.subr.bf16.mxu0 %v649
      %838 = vmatpush1.bf16.msra.mxu0 %v648
      %839 = vmatprep.subr.bf16.mxu0 %v641
      %840 = vmatpush1.bf16.msra.mxu0 %v640
      %841 = vmatprep.subr.bf16.mxu0 0
      %842 = vmatpush2.bf16.msra.mxu0 0
      %843 = vmatprep.subr.bf16.mxu0 0
      %844 = vmatpush2.bf16.msra.mxu0 0
      %845 = vmatprep.subr.bf16.mxu0 0
      %846 = vmatpush2.bf16.msra.mxu0 0
      %847 = vmatprep.subr.bf16.mxu0 0
      %848 = vmatpush2.bf16.msra.mxu0 0
      %849 = vmatprep.subr.bf16.mxu0 0
      %850 = vmatpush2.bf16.msra.mxu0 0
      %851 = vmatprep.subr.bf16.mxu0 0
      %852 = vmatpush2.bf16.msra.mxu0 0
      %853 = vmatprep.subr.bf16.mxu0 0
      %854 = vmatpush2.bf16.msra.mxu0 0
      %855 = vmatprep.subr.bf16.mxu0 0
      %856 = vmatpush2.bf16.msra.mxu0 0
      %857 = vmatprep.mubr.bf16.mxu0 0
      %858 = vmatmul.mubr.bf16.gmra.mxu0 %v353
      %v859 = vpop.f32.mrf.mxu0
      %v860 = vadd.f32 0.0, %v859
      %v861 = vpop.f32.mrf.mxu0
      %v862 = vadd.f32 0.0, %v861
      %v863 = vpop.f32.mrf.mxu0
      %v864 = vadd.f32 0.0, %v863
      %v865 = vpop.f32.mrf.mxu0
      %v866 = vadd.f32 0.0, %v865
      %867 = vmatprep.mubr.bf16.mxu0 0
      %868 = vmatmul.mubr.bf16.gmra.mxu0 %v356
      %v869 = vpop.f32.mrf.mxu0
      %v870 = vadd.f32 0.0, %v869
      %v871 = vpop.f32.mrf.mxu0
      %v872 = vadd.f32 0.0, %v871
      %v873 = vpop.f32.mrf.mxu0
      %v874 = vadd.f32 0.0, %v873
      %v875 = vpop.f32.mrf.mxu0
      %v876 = vadd.f32 0.0, %v875
      %877 = vdwg.mxu0
      %v878 = vmax.f32 %v393, %v701
      %v879 = vmax.f32 %v395, %v703
      %v880 = vmax.f32 %v446, %v754
      %v881 = vmax.f32 %v448, %v756
      %v882 = vmax.f32 %v499, %v807
      %v883 = vmax.f32 %v501, %v809
      %v884 = vmax.f32 %v552, %v860
      %v885 = vmax.f32 %v554, %v862
      %v886 = vmax.f32 %v397, %v705
      %v887 = vmax.f32 %v399, %v707
      %v888 = vmax.f32 %v450, %v758
      %v889 = vmax.f32 %v452, %v760
      %v890 = vmax.f32 %v503, %v811
      %v891 = vmax.f32 %v505, %v813
      %v892 = vmax.f32 %v556, %v864
      %v893 = vmax.f32 %v558, %v866
      %v894 = vmax.f32 %v403, %v711
      %v895 = vmax.f32 %v405, %v713
      %v896 = vmax.f32 %v456, %v764
      %v897 = vmax.f32 %v458, %v766
      %v898 = vmax.f32 %v509, %v817
      %v899 = vmax.f32 %v511, %v819
      %v900 = vmax.f32 %v562, %v870
      %v901 = vmax.f32 %v564, %v872
      %v902 = vmax.f32 %v407, %v715
      %v903 = vmax.f32 %v409, %v717
      %v904 = vmax.f32 %v460, %v768
      %v905 = vmax.f32 %v462, %v770
      %v906 = vmax.f32 %v513, %v821
      %v907 = vmax.f32 %v515, %v823
      %v908 = vmax.f32 %v566, %v874
      %v909 = vmax.f32 %v568, %v876
      %v910 = vld [vmem:[%s216 + $0x40] sm:$0xff]
      %v911 = vld [vmem:[%s216 + $0x48] sm:$0xff]
      %v912 = vld [vmem:[%s216 + $0x50] sm:$0xff]
      %v913 = vld [vmem:[%s216 + $0x58] sm:$0xff]
      %v914 = vld [vmem:[%s216 + $0xc0] sm:$0xff]
      %v915 = vld [vmem:[%s216 + $0xc8] sm:$0xff]
      %v916 = vld [vmem:[%s216 + $0xd0] sm:$0xff]
      %v917 = vld [vmem:[%s216 + $0xd8] sm:$0xff]
      %v918 = vld [vmem:[%s216 + $0x140] sm:$0xff]
      %v919 = vld [vmem:[%s216 + $0x148] sm:$0xff]
      %v920 = vld [vmem:[%s216 + $0x150] sm:$0xff]
      %v921 = vld [vmem:[%s216 + $0x158] sm:$0xff]
      %v922 = vld [vmem:[%s216 + $0x1c0] sm:$0xff]
      %v923 = vld [vmem:[%s216 + $0x1c8] sm:$0xff]
      %v924 = vld [vmem:[%s216 + $0x1d0] sm:$0xff]
      %v925 = vld [vmem:[%s216 + $0x1d8] sm:$0xff]
      %v942 = vunpack.c.l.b16 %v910
      %v943 = vunpack.c.h.b16 %v910
      %v944 = vunpack.c.l.b16 %v911
      %v945 = vunpack.c.h.b16 %v911
      %v946 = vunpack.c.l.b16 %v912
      %v947 = vunpack.c.h.b16 %v912
      %v948 = vunpack.c.l.b16 %v913
      %v949 = vunpack.c.h.b16 %v913
      %v950 = vunpack.c.l.b16 %v914
      %v951 = vunpack.c.h.b16 %v914
      %v952 = vunpack.c.l.b16 %v915
      %v953 = vunpack.c.h.b16 %v915
      %v954 = vunpack.c.l.b16 %v916
      %v955 = vunpack.c.h.b16 %v916
      %v956 = vunpack.c.l.b16 %v917
      %v957 = vunpack.c.h.b16 %v917
      %v958 = vunpack.c.l.b16 %v918
      %v959 = vunpack.c.h.b16 %v918
      %v960 = vunpack.c.l.b16 %v919
      %v961 = vunpack.c.h.b16 %v919
      %v962 = vunpack.c.l.b16 %v920
      %v963 = vunpack.c.h.b16 %v920
      %v964 = vunpack.c.l.b16 %v921
      %v965 = vunpack.c.h.b16 %v921
      %v966 = vunpack.c.l.b16 %v922
      %v967 = vunpack.c.h.b16 %v922
      %v968 = vunpack.c.l.b16 %v923
      %v969 = vunpack.c.h.b16 %v923
      %v970 = vunpack.c.l.b16 %v924
      %v971 = vunpack.c.h.b16 %v924
      %v972 = vunpack.c.l.b16 %v925
      %v973 = vunpack.c.h.b16 %v925
      %v974 = vpack.c.b16 %v950, %v942
      %v975 = vpack.c.b16 %v951, %v943
      %v976 = vpack.c.b16 %v952, %v944
      %v977 = vpack.c.b16 %v953, %v945
      %v978 = vpack.c.b16 %v954, %v946
      %v979 = vpack.c.b16 %v955, %v947
      %v980 = vpack.c.b16 %v956, %v948
      %v981 = vpack.c.b16 %v957, %v949
      %v982 = vpack.c.b16 %v966, %v958
      %v983 = vpack.c.b16 %v967, %v959
      %v984 = vpack.c.b16 %v968, %v960
      %v985 = vpack.c.b16 %v969, %v961
      %v986 = vpack.c.b16 %v970, %v962
      %v987 = vpack.c.b16 %v971, %v963
      %v988 = vpack.c.b16 %v972, %v964
      %v989 = vpack.c.b16 %v973, %v965
      %1006 = vmatprep.subr.bf16.mxu0 0
      %1007 = vmatpush1.bf16.msra.mxu0 0
      %1008 = vmatprep.subr.bf16.mxu0 0
      %1009 = vmatpush1.bf16.msra.mxu0 0
      %1010 = vmatprep.subr.bf16.mxu0 0
      %1011 = vmatpush1.bf16.msra.mxu0 0
      %1012 = vmatprep.subr.bf16.mxu0 0
      %1013 = vmatpush1.bf16.msra.mxu0 0
      %1014 = vmatprep.subr.bf16.mxu0 0
      %1015 = vmatpush1.bf16.msra.mxu0 0
      %1016 = vmatprep.subr.bf16.mxu0 0
      %1017 = vmatpush1.bf16.msra.mxu0 0
      %1018 = vmatprep.subr.bf16.mxu0 %v983
      %1019 = vmatpush1.bf16.msra.mxu0 %v982
      %1020 = vmatprep.subr.bf16.mxu0 %v975
      %1021 = vmatpush1.bf16.msra.mxu0 %v974
      %1022 = vmatprep.subr.bf16.mxu0 0
      %1023 = vmatpush2.bf16.msra.mxu0 0
      %1024 = vmatprep.subr.bf16.mxu0 0
      %1025 = vmatpush2.bf16.msra.mxu0 0
      %1026 = vmatprep.subr.bf16.mxu0 0
      %1027 = vmatpush2.bf16.msra.mxu0 0
      %1028 = vmatprep.subr.bf16.mxu0 0
      %1029 = vmatpush2.bf16.msra.mxu0 0
      %1030 = vmatprep.subr.bf16.mxu0 0
      %1031 = vmatpush2.bf16.msra.mxu0 0
      %1032 = vmatprep.subr.bf16.mxu0 0
      %1033 = vmatpush2.bf16.msra.mxu0 0
      %1034 = vmatprep.subr.bf16.mxu0 0
      %1035 = vmatpush2.bf16.msra.mxu0 0
      %1036 = vmatprep.subr.bf16.mxu0 0
      %1037 = vmatpush2.bf16.msra.mxu0 0
      %1038 = vmatprep.mubr.bf16.mxu0 0
      %1039 = vmatmul.mubr.bf16.gmra.mxu0 %v353
      %v1040 = vpop.f32.mrf.mxu0
      %v1041 = vadd.f32 0.0, %v1040
      %v1042 = vpop.f32.mrf.mxu0
      %v1043 = vadd.f32 0.0, %v1042
      %v1044 = vpop.f32.mrf.mxu0
      %v1045 = vadd.f32 0.0, %v1044
      %v1046 = vpop.f32.mrf.mxu0
      %v1047 = vadd.f32 0.0, %v1046
      %1048 = vmatprep.mubr.bf16.mxu0 0
      %1049 = vmatmul.mubr.bf16.gmra.mxu0 %v356
      %v1050 = vpop.f32.mrf.mxu0
      %v1051 = vadd.f32 0.0, %v1050
      %v1052 = vpop.f32.mrf.mxu0
      %v1053 = vadd.f32 0.0, %v1052
      %v1054 = vpop.f32.mrf.mxu0
      %v1055 = vadd.f32 0.0, %v1054
      %v1056 = vpop.f32.mrf.mxu0
      %v1057 = vadd.f32 0.0, %v1056
      %1058 = vdwg.mxu0
      %1059 = vmatprep.subr.bf16.mxu0 0
      %1060 = vmatpush1.bf16.msra.mxu0 0
      %1061 = vmatprep.subr.bf16.mxu0 0
      %1062 = vmatpush1.bf16.msra.mxu0 0
      %1063 = vmatprep.subr.bf16.mxu0 0
      %1064 = vmatpush1.bf16.msra.mxu0 0
      %1065 = vmatprep.subr.bf16.mxu0 0
      %1066 = vmatpush1.bf16.msra.mxu0 0
      %1067 = vmatprep.subr.bf16.mxu0 0
      %1068 = vmatpush1.bf16.msra.mxu0 0
      %1069 = vmatprep.subr.bf16.mxu0 0
      %1070 = vmatpush1.bf16.msra.mxu0 0
      %1071 = vmatprep.subr.bf16.mxu0 %v985
      %1072 = vmatpush1.bf16.msra.mxu0 %v984
      %1073 = vmatprep.subr.bf16.mxu0 %v977
      %1074 = vmatpush1.bf16.msra.mxu0 %v976
      %1075 = vmatprep.subr.bf16.mxu0 0
      %1076 = vmatpush2.bf16.msra.mxu0 0
      %1077 = vmatprep.subr.bf16.mxu0 0
      %1078 = vmatpush2.bf16.msra.mxu0 0
      %1079 = vmatprep.subr.bf16.mxu0 0
      %1080 = vmatpush2.bf16.msra.mxu0 0
      %1081 = vmatprep.subr.bf16.mxu0 0
      %1082 = vmatpush2.bf16.msra.mxu0 0
      %1083 = vmatprep.subr.bf16.mxu0 0
      %1084 = vmatpush2.bf16.msra.mxu0 0
      %1085 = vmatprep.subr.bf16.mxu0 0
      %1086 = vmatpush2.bf16.msra.mxu0 0
      %1087 = vmatprep.subr.bf16.mxu0 0
      %1088 = vmatpush2.bf16.msra.mxu0 0
      %1089 = vmatprep.subr.bf16.mxu0 0
      %1090 = vmatpush2.bf16.msra.mxu0 0
      %1091 = vmatprep.mubr.bf16.mxu0 0
      %1092 = vmatmul.mubr.bf16.gmra.mxu0 %v353
      %v1093 = vpop.f32.mrf.mxu0
      %v1094 = vadd.f32 0.0, %v1093
      %v1095 = vpop.f32.mrf.mxu0
      %v1096 = vadd.f32 0.0, %v1095
      %v1097 = vpop.f32.mrf.mxu0
      %v1098 = vadd.f32 0.0, %v1097
      %v1099 = vpop.f32.mrf.mxu0
      %v1100 = vadd.f32 0.0, %v1099
      %1101 = vmatprep.mubr.bf16.mxu0 0
      %1102 = vmatmul.mubr.bf16.gmra.mxu0 %v356
      %v1103 = vpop.f32.mrf.mxu0
      %v1104 = vadd.f32 0.0, %v1103
      %v1105 = vpop.f32.mrf.mxu0
      %v1106 = vadd.f32 0.0, %v1105
      %v1107 = vpop.f32.mrf.mxu0
      %v1108 = vadd.f32 0.0, %v1107
      %v1109 = vpop.f32.mrf.mxu0
      %v1110 = vadd.f32 0.0, %v1109
      %1111 = vdwg.mxu0
      %1112 = vmatprep.subr.bf16.mxu0 0
      %1113 = vmatpush1.bf16.msra.mxu0 0
      %1114 = vmatprep.subr.bf16.mxu0 0
      %1115 = vmatpush1.bf16.msra.mxu0 0
      %1116 = vmatprep.subr.bf16.mxu0 0
      %1117 = vmatpush1.bf16.msra.mxu0 0
      %1118 = vmatprep.subr.bf16.mxu0 0
      %1119 = vmatpush1.bf16.msra.mxu0 0
      %1120 = vmatprep.subr.bf16.mxu0 0
      %1121 = vmatpush1.bf16.msra.mxu0 0
      %1122 = vmatprep.subr.bf16.mxu0 0
      %1123 = vmatpush1.bf16.msra.mxu0 0
      %1124 = vmatprep.subr.bf16.mxu0 %v987
      %1125 = vmatpush1.bf16.msra.mxu0 %v986
      %1126 = vmatprep.subr.bf16.mxu0 %v979
      %1127 = vmatpush1.bf16.msra.mxu0 %v978
      %1128 = vmatprep.subr.bf16.mxu0 0
      %1129 = vmatpush2.bf16.msra.mxu0 0
      %1130 = vmatprep.subr.bf16.mxu0 0
      %1131 = vmatpush2.bf16.msra.mxu0 0
      %1132 = vmatprep.subr.bf16.mxu0 0
      %1133 = vmatpush2.bf16.msra.mxu0 0
      %1134 = vmatprep.subr.bf16.mxu0 0
      %1135 = vmatpush2.bf16.msra.mxu0 0
      %1136 = vmatprep.subr.bf16.mxu0 0
      %1137 = vmatpush2.bf16.msra.mxu0 0
      %1138 = vmatprep.subr.bf16.mxu0 0
      %1139 = vmatpush2.bf16.msra.mxu0 0
      %1140 = vmatprep.subr.bf16.mxu0 0
      %1141 = vmatpush2.bf16.msra.mxu0 0
      %1142 = vmatprep.subr.bf16.mxu0 0
      %1143 = vmatpush2.bf16.msra.mxu0 0
      %1144 = vmatprep.mubr.bf16.mxu0 0
      %1145 = vmatmul.mubr.bf16.gmra.mxu0 %v353
      %v1146 = vpop.f32.mrf.mxu0
      %v1147 = vadd.f32 0.0, %v1146
      %v1148 = vpop.f32.mrf.mxu0
      %v1149 = vadd.f32 0.0, %v1148
      %v1150 = vpop.f32.mrf.mxu0
      %v1151 = vadd.f32 0.0, %v1150
      %v1152 = vpop.f32.mrf.mxu0
      %v1153 = vadd.f32 0.0, %v1152
      %1154 = vmatprep.mubr.bf16.mxu0 0
      %1155 = vmatmul.mubr.bf16.gmra.mxu0 %v356
      %v1156 = vpop.f32.mrf.mxu0
      %v1157 = vadd.f32 0.0, %v1156
      %v1158 = vpop.f32.mrf.mxu0
      %v1159 = vadd.f32 0.0, %v1158
      %v1160 = vpop.f32.mrf.mxu0
      %v1161 = vadd.f32 0.0, %v1160
      %v1162 = vpop.f32.mrf.mxu0
      %v1163 = vadd.f32 0.0, %v1162
      %1164 = vdwg.mxu0
      %1165 = vmatprep.subr.bf16.mxu0 0
      %1166 = vmatpush1.bf16.msra.mxu0 0
      %1167 = vmatprep.subr.bf16.mxu0 0
      %1168 = vmatpush1.bf16.msra.mxu0 0
      %1169 = vmatprep.subr.bf16.mxu0 0
      %1170 = vmatpush1.bf16.msra.mxu0 0
      %1171 = vmatprep.subr.bf16.mxu0 0
      %1172 = vmatpush1.bf16.msra.mxu0 0
      %1173 = vmatprep.subr.bf16.mxu0 0
      %1174 = vmatpush1.bf16.msra.mxu0 0
      %1175 = vmatprep.subr.bf16.mxu0 0
      %1176 = vmatpush1.bf16.msra.mxu0 0
      %1177 = vmatprep.subr.bf16.mxu0 %v989
      %1178 = vmatpush1.bf16.msra.mxu0 %v988
      %1179 = vmatprep.subr.bf16.mxu0 %v981
      %1180 = vmatpush1.bf16.msra.mxu0 %v980
      %1181 = vmatprep.subr.bf16.mxu0 0
      %1182 = vmatpush2.bf16.msra.mxu0 0
      %1183 = vmatprep.subr.bf16.mxu0 0
      %1184 = vmatpush2.bf16.msra.mxu0 0
      %1185 = vmatprep.subr.bf16.mxu0 0
      %1186 = vmatpush2.bf16.msra.mxu0 0
      %1187 = vmatprep.subr.bf16.mxu0 0
      %1188 = vmatpush2.bf16.msra.mxu0 0
      %1189 = vmatprep.subr.bf16.mxu0 0
      %1190 = vmatpush2.bf16.msra.mxu0 0
      %1191 = vmatprep.subr.bf16.mxu0 0
      %1192 = vmatpush2.bf16.msra.mxu0 0
      %1193 = vmatprep.subr.bf16.mxu0 0
      %1194 = vmatpush2.bf16.msra.mxu0 0
      %1195 = vmatprep.subr.bf16.mxu0 0
      %1196 = vmatpush2.bf16.msra.mxu0 0
      %1197 = vmatprep.mubr.bf16.mxu0 0
      %1198 = vmatmul.mubr.bf16.gmra.mxu0 %v353
      %v1199 = vpop.f32.mrf.mxu0
      %v1200 = vadd.f32 0.0, %v1199
      %v1201 = vpop.f32.mrf.mxu0
      %v1202 = vadd.f32 0.0, %v1201
      %v1203 = vpop.f32.mrf.mxu0
      %v1204 = vadd.f32 0.0, %v1203
      %v1205 = vpop.f32.mrf.mxu0
      %v1206 = vadd.f32 0.0, %v1205
      %1207 = vmatprep.mubr.bf16.mxu0 0
      %1208 = vmatmul.mubr.bf16.gmra.mxu0 %v356
      %v1209 = vpop.f32.mrf.mxu0
      %v1210 = vadd.f32 0.0, %v1209
      %v1211 = vpop.f32.mrf.mxu0
      %v1212 = vadd.f32 0.0, %v1211
      %v1213 = vpop.f32.mrf.mxu0
      %v1214 = vadd.f32 0.0, %v1213
      %v1215 = vpop.f32.mrf.mxu0
      %v1216 = vadd.f32 0.0, %v1215
      %1217 = vdwg.mxu0
      %v1218 = vmax.f32 %v878, %v1041
      %v1219 = vmax.f32 %v879, %v1043
      %v1220 = vmax.f32 %v880, %v1094
      %v1221 = vmax.f32 %v881, %v1096
      %v1222 = vmax.f32 %v882, %v1147
      %v1223 = vmax.f32 %v883, %v1149
      %v1224 = vmax.f32 %v884, %v1200
      %v1225 = vmax.f32 %v885, %v1202
      %v1226 = vmax.f32 %v886, %v1045
      %v1227 = vmax.f32 %v887, %v1047
      %v1228 = vmax.f32 %v888, %v1098
      %v1229 = vmax.f32 %v889, %v1100
      %v1230 = vmax.f32 %v890, %v1151
      %v1231 = vmax.f32 %v891, %v1153
      %v1232 = vmax.f32 %v892, %v1204
      %v1233 = vmax.f32 %v893, %v1206
      %v1234 = vmax.f32 %v894, %v1051
      %v1235 = vmax.f32 %v895, %v1053
      %v1236 = vmax.f32 %v896, %v1104
      %v1237 = vmax.f32 %v897, %v1106
      %v1238 = vmax.f32 %v898, %v1157
      %v1239 = vmax.f32 %v899, %v1159
      %v1240 = vmax.f32 %v900, %v1210
      %v1241 = vmax.f32 %v901, %v1212
      %v1242 = vmax.f32 %v902, %v1055
      %v1243 = vmax.f32 %v903, %v1057
      %v1244 = vmax.f32 %v904, %v1108
      %v1245 = vmax.f32 %v905, %v1110
      %v1246 = vmax.f32 %v906, %v1161
      %v1247 = vmax.f32 %v907, %v1163
      %v1248 = vmax.f32 %v908, %v1214
      %v1249 = vmax.f32 %v909, %v1216
      %v1250 = vld [vmem:[%s216 + $0x60] sm:$0xff]
      %v1251 = vld [vmem:[%s216 + $0x68] sm:$0xff]
      %v1252 = vld [vmem:[%s216 + $0x70] sm:$0xff]
      %v1253 = vld [vmem:[%s216 + $0x78] sm:$0xff]
      %v1254 = vld [vmem:[%s216 + $0xe0] sm:$0xff]
      %v1255 = vld [vmem:[%s216 + $0xe8] sm:$0xff]
      %v1256 = vld [vmem:[%s216 + $0xf0] sm:$0xff]
      %v1257 = vld [vmem:[%s216 + $0xf8] sm:$0xff]
      %v1258 = vld [vmem:[%s216 + $0x160] sm:$0xff]
      %v1259 = vld [vmem:[%s216 + $0x168] sm:$0xff]
      %v1260 = vld [vmem:[%s216 + $0x170] sm:$0xff]
      %v1261 = vld [vmem:[%s216 + $0x178] sm:$0xff]
      %v1262 = vld [vmem:[%s216 + $0x1e0] sm:$0xff]
      %v1263 = vld [vmem:[%s216 + $0x1e8] sm:$0xff]
      %v1264 = vld [vmem:[%s216 + $0x1f0] sm:$0xff]
      %v1265 = vld [vmem:[%s216 + $0x1f8] sm:$0xff]
      %v1282 = vunpack.c.l.b16 %v1250
      %v1283 = vunpack.c.h.b16 %v1250
      %v1284 = vunpack.c.l.b16 %v1251
      %v1285 = vunpack.c.h.b16 %v1251
      %v1286 = vunpack.c.l.b16 %v1252
      %v1287 = vunpack.c.h.b16 %v1252
      %v1288 = vunpack.c.l.b16 %v1253
      %v1289 = vunpack.c.h.b16 %v1253
      %v1290 = vunpack.c.l.b16 %v1254
      %v1291 = vunpack.c.h.b16 %v1254
      %v1292 = vunpack.c.l.b16 %v1255
      %v1293 = vunpack.c.h.b16 %v1255
      %v1294 = vunpack.c.l.b16 %v1256
      %v1295 = vunpack.c.h.b16 %v1256
      %v1296 = vunpack.c.l.b16 %v1257
      %v1297 = vunpack.c.h.b16 %v1257
      %v1298 = vunpack.c.l.b16 %v1258
      %v1299 = vunpack.c.h.b16 %v1258
      %v1300 = vunpack.c.l.b16 %v1259
      %v1301 = vunpack.c.h.b16 %v1259
      %v1302 = vunpack.c.l.b16 %v1260
      %v1303 = vunpack.c.h.b16 %v1260
      %v1304 = vunpack.c.l.b16 %v1261
      %v1305 = vunpack.c.h.b16 %v1261
      %v1306 = vunpack.c.l.b16 %v1262
      %v1307 = vunpack.c.h.b16 %v1262
      %v1308 = vunpack.c.l.b16 %v1263
      %v1309 = vunpack.c.h.b16 %v1263
      %v1310 = vunpack.c.l.b16 %v1264
      %v1311 = vunpack.c.h.b16 %v1264
      %v1312 = vunpack.c.l.b16 %v1265
      %v1313 = vunpack.c.h.b16 %v1265
      %v1314 = vpack.c.b16 %v1290, %v1282
      %v1315 = vpack.c.b16 %v1291, %v1283
      %v1316 = vpack.c.b16 %v1292, %v1284
      %v1317 = vpack.c.b16 %v1293, %v1285
      %v1318 = vpack.c.b16 %v1294, %v1286
      %v1319 = vpack.c.b16 %v1295, %v1287
      %v1320 = vpack.c.b16 %v1296, %v1288
      %v1321 = vpack.c.b16 %v1297, %v1289
      %v1322 = vpack.c.b16 %v1306, %v1298
      %v1323 = vpack.c.b16 %v1307, %v1299
      %v1324 = vpack.c.b16 %v1308, %v1300
      %v1325 = vpack.c.b16 %v1309, %v1301
      %v1326 = vpack.c.b16 %v1310, %v1302
      %v1327 = vpack.c.b16 %v1311, %v1303
      %v1328 = vpack.c.b16 %v1312, %v1304
      %v1329 = vpack.c.b16 %v1313, %v1305
      %1346 = vmatprep.subr.bf16.mxu0 0
      %1347 = vmatpush1.bf16.msra.mxu0 0
      %1348 = vmatprep.subr.bf16.mxu0 0
      %1349 = vmatpush1.bf16.msra.mxu0 0
      %1350 = vmatprep.subr.bf16.mxu0 0
      %1351 = vmatpush1.bf16.msra.mxu0 0
      %1352 = vmatprep.subr.bf16.mxu0 0
      %1353 = vmatpush1.bf16.msra.mxu0 0
      %1354 = vmatprep.subr.bf16.mxu0 0
      %1355 = vmatpush1.bf16.msra.mxu0 0
      %1356 = vmatprep.subr.bf16.mxu0 0
      %1357 = vmatpush1.bf16.msra.mxu0 0
      %1358 = vmatprep.subr.bf16.mxu0 %v1323
      %1359 = vmatpush1.bf16.msra.mxu0 %v1322
      %1360 = vmatprep.subr.bf16.mxu0 %v1315
      %1361 = vmatpush1.bf16.msra.mxu0 %v1314
      %1362 = vmatprep.subr.bf16.mxu0 0
      %1363 = vmatpush2.bf16.msra.mxu0 0
      %1364 = vmatprep.subr.bf16.mxu0 0
      %1365 = vmatpush2.bf16.msra.mxu0 0
      %1366 = vmatprep.subr.bf16.mxu0 0
      %1367 = vmatpush2.bf16.msra.mxu0 0
      %1368 = vmatprep.subr.bf16.mxu0 0
      %1369 = vmatpush2.bf16.msra.mxu0 0
      %1370 = vmatprep.subr.bf16.mxu0 0
      %1371 = vmatpush2.bf16.msra.mxu0 0
      %1372 = vmatprep.subr.bf16.mxu0 0
      %1373 = vmatpush2.bf16.msra.mxu0 0
      %1374 = vmatprep.subr.bf16.mxu0 0
      %1375 = vmatpush2.bf16.msra.mxu0 0
      %1376 = vmatprep.subr.bf16.mxu0 0
      %1377 = vmatpush2.bf16.msra.mxu0 0
      %1378 = vmatprep.mubr.bf16.mxu0 0
      %1379 = vmatmul.mubr.bf16.gmra.mxu0 %v353
      %v1380 = vpop.f32.mrf.mxu0
      %v1381 = vadd.f32 0.0, %v1380
      %v1382 = vpop.f32.mrf.mxu0
      %v1383 = vadd.f32 0.0, %v1382
      %v1384 = vpop.f32.mrf.mxu0
      %v1385 = vadd.f32 0.0, %v1384
      %v1386 = vpop.f32.mrf.mxu0
      %v1387 = vadd.f32 0.0, %v1386
      %1388 = vmatprep.mubr.bf16.mxu0 0
      %1389 = vmatmul.mubr.bf16.gmra.mxu0 %v356
      %v1390 = vpop.f32.mrf.mxu0
      %v1391 = vadd.f32 0.0, %v1390
      %v1392 = vpop.f32.mrf.mxu0
      %v1393 = vadd.f32 0.0, %v1392
      %v1394 = vpop.f32.mrf.mxu0
      %v1395 = vadd.f32 0.0, %v1394
      %v1396 = vpop.f32.mrf.mxu0
      %v1397 = vadd.f32 0.0, %v1396
      %1398 = vdwg.mxu0
      %1399 = vmatprep.subr.bf16.mxu0 0
      %1400 = vmatpush1.bf16.msra.mxu0 0
      %1401 = vmatprep.subr.bf16.mxu0 0
      %1402 = vmatpush1.bf16.msra.mxu0 0
      %1403 = vmatprep.subr.bf16.mxu0 0
      %1404 = vmatpush1.bf16.msra.mxu0 0
      %1405 = vmatprep.subr.bf16.mxu0 0
      %1406 = vmatpush1.bf16.msra.mxu0 0
      %1407 = vmatprep.subr.bf16.mxu0 0
      %1408 = vmatpush1.bf16.msra.mxu0 0
      %1409 = vmatprep.subr.bf16.mxu0 0
      %1410 = vmatpush1.bf16.msra.mxu0 0
      %1411 = vmatprep.subr.bf16.mxu0 %v1325
      %1412 = vmatpush1.bf16.msra.mxu0 %v1324
      %1413 = vmatprep.subr.bf16.mxu0 %v1317
      %1414 = vmatpush1.bf16.msra.mxu0 %v1316
      %1415 = vmatprep.subr.bf16.mxu0 0
      %1416 = vmatpush2.bf16.msra.mxu0 0
      %1417 = vmatprep.subr.bf16.mxu0 0
      %1418 = vmatpush2.bf16.msra.mxu0 0
      %1419 = vmatprep.subr.bf16.mxu0 0
      %1420 = vmatpush2.bf16.msra.mxu0 0
      %1421 = vmatprep.subr.bf16.mxu0 0
      %1422 = vmatpush2.bf16.msra.mxu0 0
      %1423 = vmatprep.subr.bf16.mxu0 0
      %1424 = vmatpush2.bf16.msra.mxu0 0
      %1425 = vmatprep.subr.bf16.mxu0 0
      %1426 = vmatpush2.bf16.msra.mxu0 0
      %1427 = vmatprep.subr.bf16.mxu0 0
      %1428 = vmatpush2.bf16.msra.mxu0 0
      %1429 = vmatprep.subr.bf16.mxu0 0
      %1430 = vmatpush2.bf16.msra.mxu0 0
      %1431 = vmatprep.mubr.bf16.mxu0 0
      %1432 = vmatmul.mubr.bf16.gmra.mxu0 %v353
      %v1433 = vpop.f32.mrf.mxu0
      %v1434 = vadd.f32 0.0, %v1433
      %v1435 = vpop.f32.mrf.mxu0
      %v1436 = vadd.f32 0.0, %v1435
      %v1437 = vpop.f32.mrf.mxu0
      %v1438 = vadd.f32 0.0, %v1437
      %v1439 = vpop.f32.mrf.mxu0
      %v1440 = vadd.f32 0.0, %v1439
      %1441 = vmatprep.mubr.bf16.mxu0 0
      %1442 = vmatmul.mubr.bf16.gmra.mxu0 %v356
      %v1443 = vpop.f32.mrf.mxu0
      %v1444 = vadd.f32 0.0, %v1443
      %v1445 = vpop.f32.mrf.mxu0
      %v1446 = vadd.f32 0.0, %v1445
      %v1447 = vpop.f32.mrf.mxu0
      %v1448 = vadd.f32 0.0, %v1447
      %v1449 = vpop.f32.mrf.mxu0
      %v1450 = vadd.f32 0.0, %v1449
      %1451 = vdwg.mxu0
      %1452 = vmatprep.subr.bf16.mxu0 0
      %1453 = vmatpush1.bf16.msra.mxu0 0
      %1454 = vmatprep.subr.bf16.mxu0 0
      %1455 = vmatpush1.bf16.msra.mxu0 0
      %1456 = vmatprep.subr.bf16.mxu0 0
      %1457 = vmatpush1.bf16.msra.mxu0 0
      %1458 = vmatprep.subr.bf16.mxu0 0
      %1459 = vmatpush1.bf16.msra.mxu0 0
      %1460 = vmatprep.subr.bf16.mxu0 0
      %1461 = vmatpush1.bf16.msra.mxu0 0
      %1462 = vmatprep.subr.bf16.mxu0 0
      %1463 = vmatpush1.bf16.msra.mxu0 0
      %1464 = vmatprep.subr.bf16.mxu0 %v1327
      %1465 = vmatpush1.bf16.msra.mxu0 %v1326
      %1466 = vmatprep.subr.bf16.mxu0 %v1319
      %1467 = vmatpush1.bf16.msra.mxu0 %v1318
      %1468 = vmatprep.subr.bf16.mxu0 0
      %1469 = vmatpush2.bf16.msra.mxu0 0
      %1470 = vmatprep.subr.bf16.mxu0 0
      %1471 = vmatpush2.bf16.msra.mxu0 0
      %1472 = vmatprep.subr.bf16.mxu0 0
      %1473 = vmatpush2.bf16.msra.mxu0 0
      %1474 = vmatprep.subr.bf16.mxu0 0
      %1475 = vmatpush2.bf16.msra.mxu0 0
      %1476 = vmatprep.subr.bf16.mxu0 0
      %1477 = vmatpush2.bf16.msra.mxu0 0
      %1478 = vmatprep.subr.bf16.mxu0 0
      %1479 = vmatpush2.bf16.msra.mxu0 0
      %1480 = vmatprep.subr.bf16.mxu0 0
      %1481 = vmatpush2.bf16.msra.mxu0 0
      %1482 = vmatprep.subr.bf16.mxu0 0
      %1483 = vmatpush2.bf16.msra.mxu0 0
      %1484 = vmatprep.mubr.bf16.mxu0 0
      %1485 = vmatmul.mubr.bf16.gmra.mxu0 %v353
      %v1486 = vpop.f32.mrf.mxu0
      %v1487 = vadd.f32 0.0, %v1486
      %v1488 = vpop.f32.mrf.mxu0
      %v1489 = vadd.f32 0.0, %v1488
      %v1490 = vpop.f32.mrf.mxu0
      %v1491 = vadd.f32 0.0, %v1490
      %v1492 = vpop.f32.mrf.mxu0
      %v1493 = vadd.f32 0.0, %v1492
      %1494 = vmatprep.mubr.bf16.mxu0 0
      %1495 = vmatmul.mubr.bf16.gmra.mxu0 %v356
      %v1496 = vpop.f32.mrf.mxu0
      %v1497 = vadd.f32 0.0, %v1496
      %v1498 = vpop.f32.mrf.mxu0
      %v1499 = vadd.f32 0.0, %v1498
      %v1500 = vpop.f32.mrf.mxu0
      %v1501 = vadd.f32 0.0, %v1500
      %v1502 = vpop.f32.mrf.mxu0
      %v1503 = vadd.f32 0.0, %v1502
      %1504 = vdwg.mxu0
      %1505 = vmatprep.subr.bf16.mxu0 0
      %1506 = vmatpush1.bf16.msra.mxu0 0
      %1507 = vmatprep.subr.bf16.mxu0 0
      %1508 = vmatpush1.bf16.msra.mxu0 0
      %1509 = vmatprep.subr.bf16.mxu0 0
      %1510 = vmatpush1.bf16.msra.mxu0 0
      %1511 = vmatprep.subr.bf16.mxu0 0
      %1512 = vmatpush1.bf16.msra.mxu0 0
      %1513 = vmatprep.subr.bf16.mxu0 0
      %1514 = vmatpush1.bf16.msra.mxu0 0
      %1515 = vmatprep.subr.bf16.mxu0 0
      %1516 = vmatpush1.bf16.msra.mxu0 0
      %1517 = vmatprep.subr.bf16.mxu0 %v1329
      %1518 = vmatpush1.bf16.msra.mxu0 %v1328
      %1519 = vmatprep.subr.bf16.mxu0 %v1321
      %1520 = vmatpush1.bf16.msra.mxu0 %v1320
      %1521 = vmatprep.subr.bf16.mxu0 0
      %1522 = vmatpush2.bf16.msra.mxu0 0
      %1523 = vmatprep.subr.bf16.mxu0 0
      %1524 = vmatpush2.bf16.msra.mxu0 0
      %1525 = vmatprep.subr.bf16.mxu0 0
      %1526 = vmatpush2.bf16.msra.mxu0 0
      %1527 = vmatprep.subr.bf16.mxu0 0
      %1528 = vmatpush2.bf16.msra.mxu0 0
      %1529 = vmatprep.subr.bf16.mxu0 0
      %1530 = vmatpush2.bf16.msra.mxu0 0
      %1531 = vmatprep.subr.bf16.mxu0 0
      %1532 = vmatpush2.bf16.msra.mxu0 0
      %1533 = vmatprep.subr.bf16.mxu0 0
      %1534 = vmatpush2.bf16.msra.mxu0 0
      %1535 = vmatprep.subr.bf16.mxu0 0
      %1536 = vmatpush2.bf16.msra.mxu0 0
      %1537 = vmatprep.mubr.bf16.mxu0 0
      %1538 = vmatmul.mubr.bf16.gmra.mxu0 %v353
      %v1539 = vpop.f32.mrf.mxu0
      %v1540 = vadd.f32 0.0, %v1539
      %v1541 = vpop.f32.mrf.mxu0
      %v1542 = vadd.f32 0.0, %v1541
      %v1543 = vpop.f32.mrf.mxu0
      %v1544 = vadd.f32 0.0, %v1543
      %v1545 = vpop.f32.mrf.mxu0
      %v1546 = vadd.f32 0.0, %v1545
      %1547 = vmatprep.mubr.bf16.mxu0 0
      %1548 = vmatmul.mubr.bf16.gmra.mxu0 %v356
      %v1549 = vpop.f32.mrf.mxu0
      %v1550 = vadd.f32 0.0, %v1549
      %v1551 = vpop.f32.mrf.mxu0
      %v1552 = vadd.f32 0.0, %v1551
      %v1553 = vpop.f32.mrf.mxu0
      %v1554 = vadd.f32 0.0, %v1553
      %v1555 = vpop.f32.mrf.mxu0
      %v1556 = vadd.f32 0.0, %v1555
      %1557 = vdwg.mxu0
      %v1558 = vmax.f32 %v1218, %v1381
      %v1559 = vmax.f32 %v1219, %v1383
      %v1560 = vmax.f32 %v1220, %v1434
      %v1561 = vmax.f32 %v1221, %v1436
      %v1562 = vmax.f32 %v1222, %v1487
      %v1563 = vmax.f32 %v1223, %v1489
      %v1564 = vmax.f32 %v1224, %v1540
      %v1565 = vmax.f32 %v1225, %v1542
      %v1566 = vmax.f32 %v1226, %v1385
      %v1567 = vmax.f32 %v1227, %v1387
      %v1568 = vmax.f32 %v1228, %v1438
      %v1569 = vmax.f32 %v1229, %v1440
      %v1570 = vmax.f32 %v1230, %v1491
      %v1571 = vmax.f32 %v1231, %v1493
      %v1572 = vmax.f32 %v1232, %v1544
      %v1573 = vmax.f32 %v1233, %v1546
      %v1574 = vmax.f32 %v1234, %v1391
      %v1575 = vmax.f32 %v1235, %v1393
      %v1576 = vmax.f32 %v1236, %v1444
      %v1577 = vmax.f32 %v1237, %v1446
      %v1578 = vmax.f32 %v1238, %v1497
      %v1579 = vmax.f32 %v1239, %v1499
      %v1580 = vmax.f32 %v1240, %v1550
      %v1581 = vmax.f32 %v1241, %v1552
      %v1582 = vmax.f32 %v1242, %v1395
      %v1583 = vmax.f32 %v1243, %v1397
      %v1584 = vmax.f32 %v1244, %v1448
      %v1585 = vmax.f32 %v1245, %v1450
      %v1586 = vmax.f32 %v1246, %v1501
      %v1587 = vmax.f32 %v1247, %v1503
      %v1588 = vmax.f32 %v1248, %v1554
      %v1589 = vmax.f32 %v1249, %v1556
      %v1590 = vld [vmem:[%s227] sm:$0xf]
      %v1591 = vld [vmem:[%s227 + $0x4] sm:$0xf]
      %v1592 = vld [vmem:[%s227 + $0x8] sm:$0xf]
      %v1593 = vld [vmem:[%s227 + $0xc] sm:$0xf]
      %v1594 = vunpack.c.l.bf16 %v1590
      %v1595 = vunpack.c.l.bf16 %v1591
      %v1596 = vunpack.c.l.bf16 %v1592
      %v1597 = vunpack.c.l.bf16 %v1593
      %1599 = vset.pattern.permute.xlu0 0
      %1600 = vperm.xlu0 %1599, %v1594
      %v1601 = vpop.permute.xlu0 %1600
      %1604 = vset.pattern.permute.xlu0 0
      %1605 = vperm.xlu0 %1604, %v1595
      %v1606 = vpop.permute.xlu0 %1605
      %1609 = vset.pattern.permute.xlu0 0
      %1610 = vperm.xlu0 %1609, %v1596
      %v1611 = vpop.permute.xlu0 %1610
      %1614 = vset.pattern.permute.xlu0 0
      %1615 = vperm.xlu0 %1614, %v1597
      %v1616 = vpop.permute.xlu0 %1615
      %v1618 = vadd.f32 %v1558, %v1601
      %v1619 = vadd.f32 %v1559, %v1601
      %v1620 = vadd.f32 %v1560, %v1601
      %v1621 = vadd.f32 %v1561, %v1601
      %v1622 = vadd.f32 %v1562, %v1601
      %v1623 = vadd.f32 %v1563, %v1601
      %v1624 = vadd.f32 %v1564, %v1601
      %v1625 = vadd.f32 %v1565, %v1601
      %v1626 = vadd.f32 %v1566, %v1606
      %v1627 = vadd.f32 %v1567, %v1606
      %v1628 = vadd.f32 %v1568, %v1606
      %v1629 = vadd.f32 %v1569, %v1606
      %v1630 = vadd.f32 %v1570, %v1606
      %v1631 = vadd.f32 %v1571, %v1606
      %v1632 = vadd.f32 %v1572, %v1606
      %v1633 = vadd.f32 %v1573, %v1606
      %v1634 = vadd.f32 %v1574, %v1611
      %v1635 = vadd.f32 %v1575, %v1611
      %v1636 = vadd.f32 %v1576, %v1611
      %v1637 = vadd.f32 %v1577, %v1611
      %v1638 = vadd.f32 %v1578, %v1611
      %v1639 = vadd.f32 %v1579, %v1611
      %v1640 = vadd.f32 %v1580, %v1611
      %v1641 = vadd.f32 %v1581, %v1611
      %v1642 = vadd.f32 %v1582, %v1616
      %v1643 = vadd.f32 %v1583, %v1616
      %v1644 = vadd.f32 %v1584, %v1616
      %v1645 = vadd.f32 %v1585, %v1616
      %v1646 = vadd.f32 %v1586, %v1616
      %v1647 = vadd.f32 %v1587, %v1616
      %v1648 = vadd.f32 %v1588, %v1616
      %v1649 = vadd.f32 %v1589, %v1616
      %v1650 = vtanh.pop %v1618
      %v1651 = vtanh.pop %v1619
      %v1652 = vtanh.pop %v1620
      %v1653 = vtanh.pop %v1621
      %v1654 = vtanh.pop %v1622
      %v1655 = vtanh.pop %v1623
      %v1656 = vtanh.pop %v1624
      %v1657 = vtanh.pop %v1625
      %v1658 = vtanh.pop %v1626
      %v1659 = vtanh.pop %v1627
      %v1660 = vtanh.pop %v1628
      %v1661 = vtanh.pop %v1629
      %v1662 = vtanh.pop %v1630
      %v1663 = vtanh.pop %v1631
      %v1664 = vtanh.pop %v1632
      %v1665 = vtanh.pop %v1633
      %v1666 = vtanh.pop %v1634
      %v1667 = vtanh.pop %v1635
      %v1668 = vtanh.pop %v1636
      %v1669 = vtanh.pop %v1637
      %v1670 = vtanh.pop %v1638
      %v1671 = vtanh.pop %v1639
      %v1672 = vtanh.pop %v1640
      %v1673 = vtanh.pop %v1641
      %v1674 = vtanh.pop %v1642
      %v1675 = vtanh.pop %v1643
      %v1676 = vtanh.pop %v1644
      %v1677 = vtanh.pop %v1645
      %v1678 = vtanh.pop %v1646
      %v1679 = vtanh.pop %v1647
      %v1680 = vtanh.pop %v1648
      %v1681 = vtanh.pop %v1649
      %v1682 = vpack.c.bf16 %v1658, %v1650
      %v1683 = vpack.c.bf16 %v1659, %v1651
      %v1684 = vpack.c.bf16 %v1660, %v1652
      %v1685 = vpack.c.bf16 %v1661, %v1653
      %v1686 = vpack.c.bf16 %v1662, %v1654
      %v1687 = vpack.c.bf16 %v1663, %v1655
      %v1688 = vpack.c.bf16 %v1664, %v1656
      %v1689 = vpack.c.bf16 %v1665, %v1657
      %v1690 = vpack.c.bf16 %v1674, %v1666
      %v1691 = vpack.c.bf16 %v1675, %v1667
      %v1692 = vpack.c.bf16 %v1676, %v1668
      %v1693 = vpack.c.bf16 %v1677, %v1669
      %v1694 = vpack.c.bf16 %v1678, %v1670
      %v1695 = vpack.c.bf16 %v1679, %v1671
      %v1696 = vpack.c.bf16 %v1680, %v1672
      %v1697 = vpack.c.bf16 %v1681, %v1673
      %v1714 = vunpack.c.l.b16 %v1682
      %v1715 = vunpack.c.l.b16 %v1683
      %v1716 = vunpack.c.l.b16 %v1684
      %v1717 = vunpack.c.l.b16 %v1685
      %v1718 = vunpack.c.l.b16 %v1686
      %v1719 = vunpack.c.l.b16 %v1687
      %v1720 = vunpack.c.l.b16 %v1688
      %v1721 = vunpack.c.l.b16 %v1689
      %v1722 = vunpack.c.h.b16 %v1682
      %v1723 = vunpack.c.h.b16 %v1683
      %v1724 = vunpack.c.h.b16 %v1684
      %v1725 = vunpack.c.h.b16 %v1685
      %v1726 = vunpack.c.h.b16 %v1686
      %v1727 = vunpack.c.h.b16 %v1687
      %v1728 = vunpack.c.h.b16 %v1688
      %v1729 = vunpack.c.h.b16 %v1689
      %v1730 = vunpack.c.l.b16 %v1690
      %v1731 = vunpack.c.l.b16 %v1691
      %v1732 = vunpack.c.l.b16 %v1692
      %v1733 = vunpack.c.l.b16 %v1693
      %v1734 = vunpack.c.l.b16 %v1694
      %v1735 = vunpack.c.l.b16 %v1695
      %v1736 = vunpack.c.l.b16 %v1696
      %v1737 = vunpack.c.l.b16 %v1697
      %v1738 = vunpack.c.h.b16 %v1690
      %v1739 = vunpack.c.h.b16 %v1691
      %v1740 = vunpack.c.h.b16 %v1692
      %v1741 = vunpack.c.h.b16 %v1693
      %v1742 = vunpack.c.h.b16 %v1694
      %v1743 = vunpack.c.h.b16 %v1695
      %v1744 = vunpack.c.h.b16 %v1696
      %v1745 = vunpack.c.h.b16 %v1697
      %v1746 = vpack.c.b16 %v1715, %v1714
      %v1747 = vpack.c.b16 %v1717, %v1716
      %v1748 = vpack.c.b16 %v1719, %v1718
      %v1749 = vpack.c.b16 %v1721, %v1720
      %v1750 = vpack.c.b16 %v1723, %v1722
      %v1751 = vpack.c.b16 %v1725, %v1724
      %v1752 = vpack.c.b16 %v1727, %v1726
      %v1753 = vpack.c.b16 %v1729, %v1728
      %v1754 = vpack.c.b16 %v1731, %v1730
      %v1755 = vpack.c.b16 %v1733, %v1732
      %v1756 = vpack.c.b16 %v1735, %v1734
      %v1757 = vpack.c.b16 %v1737, %v1736
      %v1758 = vpack.c.b16 %v1739, %v1738
      %v1759 = vpack.c.b16 %v1741, %v1740
      %v1760 = vpack.c.b16 %v1743, %v1742
      %v1761 = vpack.c.b16 %v1745, %v1744
      %1778 = vst [vmem:[%s238] sm:$0xff] %v1746
      %1779 = vst [vmem:[%s238 + $0x8] sm:$0xff] %v1747
      %1780 = vst [vmem:[%s238 + $0x10] sm:$0xff] %v1748
      %1781 = vst [vmem:[%s238 + $0x18] sm:$0xff] %v1749
      %1782 = vst [vmem:[%s238 + $0x20] sm:$0xff] %v1750
      %1783 = vst [vmem:[%s238 + $0x28] sm:$0xff] %v1751
      %1784 = vst [vmem:[%s238 + $0x30] sm:$0xff] %v1752
      %1785 = vst [vmem:[%s238 + $0x38] sm:$0xff] %v1753
      %1786 = vst [vmem:[%s238 + $0x40] sm:$0xff] %v1754
      %1787 = vst [vmem:[%s238 + $0x48] sm:$0xff] %v1755
      %1788 = vst [vmem:[%s238 + $0x50] sm:$0xff] %v1756
      %1789 = vst [vmem:[%s238 + $0x58] sm:$0xff] %v1757
      %1790 = vst [vmem:[%s238 + $0x60] sm:$0xff] %v1758
      %1791 = vst [vmem:[%s238 + $0x68] sm:$0xff] %v1759
      %1792 = vst [vmem:[%s238 + $0x70] sm:$0xff] %v1760
      %1793 = vst [vmem:[%s238 + $0x78] sm:$0xff] %v1761
      %s1794 = smul.u32 4, %s19
      %p1795 = scmp.lt.s32.totalorder %s18, 1
      %s1796 = scalar_select %p1795, %s18, 1
      %p1797 = scmp.lt.s32.totalorder %s1794, 3
      %s1798 = scalar_select %p1797, %s1794, 3
      %s1799 = smul.addr %s1798, 8
      %s1800 = smul.addr %s1796, 32
      %s1801 = sadd.s32 %s1799, %s1800
      %s1802 = smul.addr %s1801, 4
      %s1803 = scalar_lea.vmem %s3, %s1802
      // Predicated region
      $region33: #{cnn_landmarks_forward.2} parent=31 // pred_check
        %p1804 = pneg %p124
      $region34: #{cnn_landmarks_forward.2} parent=31 // pred_check_branch
        %1806 = sbr.rel (%p1804) target = $region36
      $region35: #{cnn_landmarks_forward.2} parent=31 // pred_region
        %s1807 = smul.u32 4, %s19
      $region36: #{cnn_landmarks_forward.2} parent=31 // pred_fallthru
        _
    $region32: #{cnn_landmarks_forward.2} parent=5 // pred_fallthru
      _
    %p1808 = scmp.le.s32.totalorder 2, %s9
    // Predicated region
    $region37: #{cnn_landmarks_forward.2} parent=5 // pred_check
      %p1809 = pneg %p1808
    $region38: #{cnn_landmarks_forward.2} parent=5 // pred_check_branch
      %1811 = sbr.rel (%p1809) target = $region40
    $region39: #{cnn_landmarks_forward.2} parent=5 // pred_region
      %s1812 = ssub.s32 %s9, 2
      // Predicated region
      $region41: #{cnn_landmarks_forward.2} parent=39 // pred_check
        %p1813 = pneg %p130
      $region42: #{cnn_landmarks_forward.2} parent=39 // pred_check_branch
        %1815 = sbr.rel (%p1813) target = $region44
      $region43: #{cnn_landmarks_forward.2} parent=39 // pred_region
        %s1816 = smul.u32 4, %s21
        %p1817 = scmp.lt.s32.totalorder %s20, 1
        %s1818 = scalar_select %p1817, %s20, 1
        %p1819 = scmp.lt.s32.totalorder %s1816, 3
        %s1820 = scalar_select %p1819, %s1816, 3
        %s1821 = smul.addr %s1820, 8
        %s1822 = smul.addr %s1818, 32
        %s1823 = sadd.s32 %s1821, %s1822
        %s1824 = smul.addr %s1823, 4
        %s1825 = scalar_lea.vmem %s3, %s1824
      $region44: #{cnn_landmarks_forward.2} parent=39 // pred_fallthru
        _
    $region40: #{cnn_landmarks_forward.2} parent=5 // pred_fallthru
      _
  $region6: #{cnn_landmarks_forward.2} parent=0 // loop_footer
    %s13 = sadd.s32 1, %s9
  $region7: #{cnn_landmarks_forward.2} parent=0 // loop_footer_branch
    %8 = sbr.rel target = $region3
  $region8: #{cnn_landmarks_forward.2} parent=0 // loop_exit
    _

// kernel: cnn_landmarks_forward.3
$region0: #{cnn_landmarks_forward.3}
  #allocation0 [shape = 'u32[]', space=smem, size = 0x4, offset = 0x4, fixed_abs, tag = 'smem constant byte address 0x4 - core index']
  #allocation1 [shape = 'u32[144,128]{1,0:T(1,128)}', space=vmem, size = 0x12000, scoped, tag = 'internal scratch']
  %s0 = inlined_call_operand.vmem [shape: bf16[2,32768], index: 0, kind: input, shape index: {}]
  %s1 = inlined_call_operand.vmem [shape: bf16[10,32768], index: 1, kind: input, shape index: {}]
  %s2 = inlined_call_operand.vmem [shape: f32[1,10], index: 2, kind: input, shape index: {}]
  %s3 = inlined_call_operand.hbm [shape: f32[2,10], index: 3, kind: output, shape index: {}]
  %s4 = sld [smem:[#allocation0]]
  $region22: #{cnn_landmarks_forward.3} parent=0
    _
  %s6 = ssub.s32 1, %s4
  %s7 = scalar_select 0, %s6, %s4
  $region1: #{cnn_landmarks_forward.3} parent=0
    #allocation2 [shape = 'u8[1024]{0}', space=vmem, size = 0x400, scoped, tag = 'output window, operand 0, single buffered']
    #allocation3 [shape = 's32[1]{0}', space=sflag, size = 0x4, scoped, tag = 'scoped memory for cnn_landmarks_forward.3']
    %8 = vsyncpa [#allocation3], 0
    // Predicated region
    $region2: #{cnn_landmarks_forward.3} parent=1 // pred_check
      _
    $region3: #{cnn_landmarks_forward.3} parent=1 // pred_check_branch
      %10 = sbr.rel (0) target = $region5
    $region4: #{cnn_landmarks_forward.3} parent=1 // pred_region
      _
    $region5: #{cnn_landmarks_forward.3} parent=1 // pred_fallthru
      _
    // Predicated region
    $region6: #{cnn_landmarks_forward.3} parent=1 // pred_check
      _
    $region7: #{cnn_landmarks_forward.3} parent=1 // pred_check_branch
      %12 = sbr.rel (0) target = $region9
    $region8: #{cnn_landmarks_forward.3} parent=1 // pred_region
      _
    $region9: #{cnn_landmarks_forward.3} parent=1 // pred_fallthru
      _
    // Predicated region
    $region10: #{cnn_landmarks_forward.3} parent=1 // pred_check
      _
    $region11: #{cnn_landmarks_forward.3} parent=1 // pred_check_branch
      %14 = sbr.rel (0) target = $region13
    $region12: #{cnn_landmarks_forward.3} parent=1 // pred_region
      _
    $region13: #{cnn_landmarks_forward.3} parent=1 // pred_fallthru
      _
    %v16 = vld [vmem:[%s0] sm:$0xff]
    %v17 = vld [vmem:[%s0 + $0x8] sm:$0xff]
    %v18 = vld [vmem:[%s0 + $0x10] sm:$0xff]
    %v19 = vld [vmem:[%s0 + $0x18] sm:$0xff]
    %v20 = vld [vmem:[%s0 + $0x20] sm:$0xff]
    %v21 = vld [vmem:[%s0 + $0x28] sm:$0xff]
    %v22 = vld [vmem:[%s0 + $0x30] sm:$0xff]
    %v23 = vld [vmem:[%s0 + $0x38] sm:$0xff]
    %v24 = vld [vmem:[%s0 + $0x40] sm:$0xff]
    %v25 = vld [vmem:[%s0 + $0x48] sm:$0xff]
    %v26 = vld [vmem:[%s0 + $0x50] sm:$0xff]
    %v27 = vld [vmem:[%s0 + $0x58] sm:$0xff]
    %v28 = vld [vmem:[%s0 + $0x60] sm:$0xff]
    %v29 = vld [vmem:[%s0 + $0x68] sm:$0xff]
    %v30 = vld [vmem:[%s0 + $0x70] sm:$0xff]
    %v31 = vld [vmem:[%s0 + $0x78] sm:$0xff]
    %v32 = vld [vmem:[%s0 + $0x80] sm:$0xff]
    %v33 = vld [vmem:[%s0 + $0x88] sm:$0xff]
    %v34 = vld [vmem:[%s0 + $0x90] sm:$0xff]
    %v35 = vld [vmem:[%s0 + $0x98] sm:$0xff]
    %v36 = vld [vmem:[%s0 + $0xa0] sm:$0xff]
    %v37 = vld [vmem:[%s0 + $0xa8] sm:$0xff]
    %v38 = vld [vmem:[%s0 + $0xb0] sm:$0xff]
    %v39 = vld [vmem:[%s0 + $0xb8] sm:$0xff]
    %v40 = vld [vmem:[%s0 + $0xc0] sm:$0xff]
    %v41 = vld [vmem:[%s0 + $0xc8] sm:$0xff]
    %v42 = vld [vmem:[%s0 + $0xd0] sm:$0xff]
    %v43 = vld [vmem:[%s0 + $0xd8] sm:$0xff]
    %v44 = vld [vmem:[%s0 + $0xe0] sm:$0xff]
    %v45 = vld [vmem:[%s0 + $0xe8] sm:$0xff]
    %v46 = vld [vmem:[%s0 + $0xf0] sm:$0xff]
    %v47 = vld [vmem:[%s0 + $0xf8] sm:$0xff]
    %v48 = vld [vmem:[%s1] sm:$0xff]
    %v49 = vld [vmem:[%s1 + $0x8] sm:$0xff]
    %v50 = vld [vmem:[%s1 + $0x10] sm:$0xff]
    %v51 = vld [vmem:[%s1 + $0x18] sm:$0xff]
    %v52 = vld [vmem:[%s1 + $0x20] sm:$0xff]
    %v53 = vld [vmem:[%s1 + $0x28] sm:$0xff]
    %v54 = vld [vmem:[%s1 + $0x30] sm:$0xff]
    %v55 = vld [vmem:[%s1 + $0x38] sm:$0xff]
    %v56 = vld [vmem:[%s1 + $0x40] sm:$0xff]
    %v57 = vld [vmem:[%s1 + $0x48] sm:$0xff]
    %v58 = vld [vmem:[%s1 + $0x50] sm:$0xff]
    %v59 = vld [vmem:[%s1 + $0x58] sm:$0xff]
    %v60 = vld [vmem:[%s1 + $0x60] sm:$0xff]
    %v61 = vld [vmem:[%s1 + $0x68] sm:$0xff]
    %v62 = vld [vmem:[%s1 + $0x70] sm:$0xff]
    %v63 = vld [vmem:[%s1 + $0x78] sm:$0xff]
    %v64 = vld [vmem:[%s1 + $0x80] sm:$0xff]
    %v65 = vld [vmem:[%s1 + $0x88] sm:$0xff]
    %v66 = vld [vmem:[%s1 + $0x90] sm:$0xff]
    %v67 = vld [vmem:[%s1 + $0x98] sm:$0xff]
    %v68 = vld [vmem:[%s1 + $0xa0] sm:$0xff]
    %v69 = vld [vmem:[%s1 + $0xa8] sm:$0xff]
    %v70 = vld [vmem:[%s1 + $0xb0] sm:$0xff]
    %v71 = vld [vmem:[%s1 + $0xb8] sm:$0xff]
    %v72 = vld [vmem:[%s1 + $0xc0] sm:$0xff]
    %v73 = vld [vmem:[%s1 + $0xc8] sm:$0xff]
    %v74 = vld [vmem:[%s1 + $0xd0] sm:$0xff]
    %v75 = vld [vmem:[%s1 + $0xd8] sm:$0xff]
    %v76 = vld [vmem:[%s1 + $0xe0] sm:$0xff]
    %v77 = vld [vmem:[%s1 + $0xe8] sm:$0xff]
    %v78 = vld [vmem:[%s1 + $0xf0] sm:$0xff]
    %v79 = vld [vmem:[%s1 + $0xf8] sm:$0xff]
    %v80 = vld [vmem:[%s1 + $0x100] sm:$0xff]
    %v81 = vld [vmem:[%s1 + $0x108] sm:$0xff]
    %v82 = vld [vmem:[%s1 + $0x110] sm:$0xff]
    %v83 = vld [vmem:[%s1 + $0x118] sm:$0xff]
    %v84 = vld [vmem:[%s1 + $0x120] sm:$0xff]
    %v85 = vld [vmem:[%s1 + $0x128] sm:$0xff]
    %v86 = vld [vmem:[%s1 + $0x130] sm:$0xff]
    %v87 = vld [vmem:[%s1 + $0x138] sm:$0xff]
    %v88 = vld [vmem:[%s1 + $0x140] sm:$0xff]
    %v89 = vld [vmem:[%s1 + $0x148] sm:$0xff]
    %v90 = vld [vmem:[%s1 + $0x150] sm:$0xff]
    %v91 = vld [vmem:[%s1 + $0x158] sm:$0xff]
    %v92 = vld [vmem:[%s1 + $0x160] sm:$0xff]
    %v93 = vld [vmem:[%s1 + $0x168] sm:$0xff]
    %v94 = vld [vmem:[%s1 + $0x170] sm:$0xff]
    %v95 = vld [vmem:[%s1 + $0x178] sm:$0xff]
    %v96 = vld [vmem:[%s1 + $0x180] sm:$0xff]
    %v97 = vld [vmem:[%s1 + $0x188] sm:$0xff]
    %v98 = vld [vmem:[%s1 + $0x190] sm:$0xff]
    %v99 = vld [vmem:[%s1 + $0x198] sm:$0xff]
    %v100 = vld [vmem:[%s1 + $0x1a0] sm:$0xff]
    %v101 = vld [vmem:[%s1 + $0x1a8] sm:$0xff]
    %v102 = vld [vmem:[%s1 + $0x1b0] sm:$0xff]
    %v103 = vld [vmem:[%s1 + $0x1b8] sm:$0xff]
    %v104 = vld [vmem:[%s1 + $0x1c0] sm:$0xff]
    %v105 = vld [vmem:[%s1 + $0x1c8] sm:$0xff]
    %v106 = vld [vmem:[%s1 + $0x1d0] sm:$0xff]
    %v107 = vld [vmem:[%s1 + $0x1d8] sm:$0xff]
    %v108 = vld [vmem:[%s1 + $0x1e0] sm:$0xff]
    %v109 = vld [vmem:[%s1 + $0x1e8] sm:$0xff]
    %v110 = vld [vmem:[%s1 + $0x1f0] sm:$0xff]
    %v111 = vld [vmem:[%s1 + $0x1f8] sm:$0xff]
    %v112 = vld [vmem:[%s1 + $0x200] sm:$0xff]
    %v113 = vld [vmem:[%s1 + $0x208] sm:$0xff]
    %v114 = vld [vmem:[%s1 + $0x210] sm:$0xff]
    %v115 = vld [vmem:[%s1 + $0x218] sm:$0xff]
    %v116 = vld [vmem:[%s1 + $0x220] sm:$0xff]
    %v117 = vld [vmem:[%s1 + $0x228] sm:$0xff]
    %v118 = vld [vmem:[%s1 + $0x230] sm:$0xff]
    %v119 = vld [vmem:[%s1 + $0x238] sm:$0xff]
    %v120 = vld [vmem:[%s1 + $0x240] sm:$0xff]
    %v121 = vld [vmem:[%s1 + $0x248] sm:$0xff]
    %v122 = vld [vmem:[%s1 + $0x250] sm:$0xff]
    %v123 = vld [vmem:[%s1 + $0x258] sm:$0xff]
    %v124 = vld [vmem:[%s1 + $0x260] sm:$0xff]
    %v125 = vld [vmem:[%s1 + $0x268] sm:$0xff]
    %v126 = vld [vmem:[%s1 + $0x270] sm:$0xff]
    %v127 = vld [vmem:[%s1 + $0x278] sm:$0xff]
    %v128 = vld [vmem:[%s1 + $0x280] sm:$0xff]
    %v129 = vld [vmem:[%s1 + $0x288] sm:$0xff]
    %v130 = vld [vmem:[%s1 + $0x290] sm:$0xff]
    %v131 = vld [vmem:[%s1 + $0x298] sm:$0xff]
    %v132 = vld [vmem:[%s1 + $0x2a0] sm:$0xff]
    %v133 = vld [vmem:[%s1 + $0x2a8] sm:$0xff]
    %v134 = vld [vmem:[%s1 + $0x2b0] sm:$0xff]
    %v135 = vld [vmem:[%s1 + $0x2b8] sm:$0xff]
    %v136 = vld [vmem:[%s1 + $0x2c0] sm:$0xff]
    %v137 = vld [vmem:[%s1 + $0x2c8] sm:$0xff]
    %v138 = vld [vmem:[%s1 + $0x2d0] sm:$0xff]
    %v139 = vld [vmem:[%s1 + $0x2d8] sm:$0xff]
    %v140 = vld [vmem:[%s1 + $0x2e0] sm:$0xff]
    %v141 = vld [vmem:[%s1 + $0x2e8] sm:$0xff]
    %v142 = vld [vmem:[%s1 + $0x2f0] sm:$0xff]
    %v143 = vld [vmem:[%s1 + $0x2f8] sm:$0xff]
    %v144 = vld [vmem:[%s1 + $0x300] sm:$0xff]
    %v145 = vld [vmem:[%s1 + $0x308] sm:$0xff]
    %v146 = vld [vmem:[%s1 + $0x310] sm:$0xff]
    %v147 = vld [vmem:[%s1 + $0x318] sm:$0xff]
    %v148 = vld [vmem:[%s1 + $0x320] sm:$0xff]
    %v149 = vld [vmem:[%s1 + $0x328] sm:$0xff]
    %v150 = vld [vmem:[%s1 + $0x330] sm:$0xff]
    %v151 = vld [vmem:[%s1 + $0x338] sm:$0xff]
    %v152 = vld [vmem:[%s1 + $0x340] sm:$0xff]
    %v153 = vld [vmem:[%s1 + $0x348] sm:$0xff]
    %v154 = vld [vmem:[%s1 + $0x350] sm:$0xff]
    %v155 = vld [vmem:[%s1 + $0x358] sm:$0xff]
    %v156 = vld [vmem:[%s1 + $0x360] sm:$0xff]
    %v157 = vld [vmem:[%s1 + $0x368] sm:$0xff]
    %v158 = vld [vmem:[%s1 + $0x370] sm:$0xff]
    %v159 = vld [vmem:[%s1 + $0x378] sm:$0xff]
    %v160 = vld [vmem:[%s1 + $0x380] sm:$0xff]
    %v161 = vld [vmem:[%s1 + $0x388] sm:$0xff]
    %v162 = vld [vmem:[%s1 + $0x390] sm:$0xff]
    %v163 = vld [vmem:[%s1 + $0x398] sm:$0xff]
    %v164 = vld [vmem:[%s1 + $0x3a0] sm:$0xff]
    %v165 = vld [vmem:[%s1 + $0x3a8] sm:$0xff]
    %v166 = vld [vmem:[%s1 + $0x3b0] sm:$0xff]
    %v167 = vld [vmem:[%s1 + $0x3b8] sm:$0xff]
    %v168 = vld [vmem:[%s1 + $0x3c0] sm:$0xff]
    %v169 = vld [vmem:[%s1 + $0x3c8] sm:$0xff]
    %v170 = vld [vmem:[%s1 + $0x3d0] sm:$0xff]
    %v171 = vld [vmem:[%s1 + $0x3d8] sm:$0xff]
    %v172 = vld [vmem:[%s1 + $0x3e0] sm:$0xff]
    %v173 = vld [vmem:[%s1 + $0x3e8] sm:$0xff]
    %v174 = vld [vmem:[%s1 + $0x3f0] sm:$0xff]
    %v175 = vld [vmem:[%s1 + $0x3f8] sm:$0xff]
    %v176 = vld [vmem:[%s1 + $0x400] sm:$0x11]
    %v177 = vld [vmem:[%s1 + $0x408] sm:$0x11]
    %v178 = vld [vmem:[%s1 + $0x410] sm:$0x11]
    %v179 = vld [vmem:[%s1 + $0x418] sm:$0x11]
    %v180 = vld [vmem:[%s1 + $0x420] sm:$0x11]
    %v181 = vld [vmem:[%s1 + $0x428] sm:$0x11]
    %v182 = vld [vmem:[%s1 + $0x430] sm:$0x11]
    %v183 = vld [vmem:[%s1 + $0x438] sm:$0x11]
    %v184 = vld [vmem:[%s1 + $0x440] sm:$0x11]
    %v185 = vld [vmem:[%s1 + $0x448] sm:$0x11]
    %v186 = vld [vmem:[%s1 + $0x450] sm:$0x11]
    %v187 = vld [vmem:[%s1 + $0x458] sm:$0x11]
    %v188 = vld [vmem:[%s1 + $0x460] sm:$0x11]
    %v189 = vld [vmem:[%s1 + $0x468] sm:$0x11]
    %v190 = vld [vmem:[%s1 + $0x470] sm:$0x11]
    %v191 = vld [vmem:[%s1 + $0x478] sm:$0x11]
    %v192 = vld [vmem:[%s1 + $0x480] sm:$0x11]
    %v193 = vld [vmem:[%s1 + $0x488] sm:$0x11]
    %v194 = vld [vmem:[%s1 + $0x490] sm:$0x11]
    %v195 = vld [vmem:[%s1 + $0x498] sm:$0x11]
    %v196 = vld [vmem:[%s1 + $0x4a0] sm:$0x11]
    %v197 = vld [vmem:[%s1 + $0x4a8] sm:$0x11]
    %v198 = vld [vmem:[%s1 + $0x4b0] sm:$0x11]
    %v199 = vld [vmem:[%s1 + $0x4b8] sm:$0x11]
    %v200 = vld [vmem:[%s1 + $0x4c0] sm:$0x11]
    %v201 = vld [vmem:[%s1 + $0x4c8] sm:$0x11]
    %v202 = vld [vmem:[%s1 + $0x4d0] sm:$0x11]
    %v203 = vld [vmem:[%s1 + $0x4d8] sm:$0x11]
    %v204 = vld [vmem:[%s1 + $0x4e0] sm:$0x11]
    %v205 = vld [vmem:[%s1 + $0x4e8] sm:$0x11]
    %v206 = vld [vmem:[%s1 + $0x4f0] sm:$0x11]
    %v207 = vld [vmem:[%s1 + $0x4f8] sm:$0x11]
    %v208 = vld [vmem:[%s1 + $0x500] sm:$0x11]
    %v209 = vld [vmem:[%s1 + $0x508] sm:$0x11]
    %v210 = vld [vmem:[%s1 + $0x510] sm:$0x11]
    %v211 = vld [vmem:[%s1 + $0x518] sm:$0x11]
    %v212 = vld [vmem:[%s1 + $0x520] sm:$0x11]
    %v213 = vld [vmem:[%s1 + $0x528] sm:$0x11]
    %v214 = vld [vmem:[%s1 + $0x530] sm:$0x11]
    %v215 = vld [vmem:[%s1 + $0x538] sm:$0x11]
    %v216 = vld [vmem:[%s1 + $0x540] sm:$0x11]
    %v217 = vld [vmem:[%s1 + $0x548] sm:$0x11]
    %v218 = vld [vmem:[%s1 + $0x550] sm:$0x11]
    %v219 = vld [vmem:[%s1 + $0x558] sm:$0x11]
    %v220 = vld [vmem:[%s1 + $0x560] sm:$0x11]
    %v221 = vld [vmem:[%s1 + $0x568] sm:$0x11]
    %v222 = vld [vmem:[%s1 + $0x570] sm:$0x11]
    %v223 = vld [vmem:[%s1 + $0x578] sm:$0x11]
    %v224 = vld [vmem:[%s1 + $0x580] sm:$0x11]
    %v225 = vld [vmem:[%s1 + $0x588] sm:$0x11]
    %v226 = vld [vmem:[%s1 + $0x590] sm:$0x11]
    %v227 = vld [vmem:[%s1 + $0x598] sm:$0x11]
    %v228 = vld [vmem:[%s1 + $0x5a0] sm:$0x11]
    %v229 = vld [vmem:[%s1 + $0x5a8] sm:$0x11]
    %v230 = vld [vmem:[%s1 + $0x5b0] sm:$0x11]
    %v231 = vld [vmem:[%s1 + $0x5b8] sm:$0x11]
    %v232 = vld [vmem:[%s1 + $0x5c0] sm:$0x11]
    %v233 = vld [vmem:[%s1 + $0x5c8] sm:$0x11]
    %v234 = vld [vmem:[%s1 + $0x5d0] sm:$0x11]
    %v235 = vld [vmem:[%s1 + $0x5d8] sm:$0x11]
    %v236 = vld [vmem:[%s1 + $0x5e0] sm:$0x11]
    %v237 = vld [vmem:[%s1 + $0x5e8] sm:$0x11]
    %v238 = vld [vmem:[%s1 + $0x5f0] sm:$0x11]
    %v239 = vld [vmem:[%s1 + $0x5f8] sm:$0x11]
    %v240 = vld [vmem:[%s1 + $0x600] sm:$0x11]
    %v241 = vld [vmem:[%s1 + $0x608] sm:$0x11]
    %v242 = vld [vmem:[%s1 + $0x610] sm:$0x11]
    %v243 = vld [vmem:[%s1 + $0x618] sm:$0x11]
    %v244 = vld [vmem:[%s1 + $0x620] sm:$0x11]
    %v245 = vld [vmem:[%s1 + $0x628] sm:$0x11]
    %v246 = vld [vmem:[%s1 + $0x630] sm:$0x11]
    %v247 = vld [vmem:[%s1 + $0x638] sm:$0x11]
    %v248 = vld [vmem:[%s1 + $0x640] sm:$0x11]
    %v249 = vld [vmem:[%s1 + $0x648] sm:$0x11]
    %v250 = vld [vmem:[%s1 + $0x650] sm:$0x11]
    %v251 = vld [vmem:[%s1 + $0x658] sm:$0x11]
    %v252 = vld [vmem:[%s1 + $0x660] sm:$0x11]
    %v253 = vld [vmem:[%s1 + $0x668] sm:$0x11]
    %v254 = vld [vmem:[%s1 + $0x670] sm:$0x11]
    %v255 = vld [vmem:[%s1 + $0x678] sm:$0x11]
    %v256 = vld [vmem:[%s1 + $0x680] sm:$0x11]
    %v257 = vld [vmem:[%s1 + $0x688] sm:$0x11]
    %v258 = vld [vmem:[%s1 + $0x690] sm:$0x11]
    %v259 = vld [vmem:[%s1 + $0x698] sm:$0x11]
    %v260 = vld [vmem:[%s1 + $0x6a0] sm:$0x11]
    %v261 = vld [vmem:[%s1 + $0x6a8] sm:$0x11]
    %v262 = vld [vmem:[%s1 + $0x6b0] sm:$0x11]
    %v263 = vld [vmem:[%s1 + $0x6b8] sm:$0x11]
    %v264 = vld [vmem:[%s1 + $0x6c0] sm:$0x11]
    %v265 = vld [vmem:[%s1 + $0x6c8] sm:$0x11]
    %v266 = vld [vmem:[%s1 + $0x6d0] sm:$0x11]
    %v267 = vld [vmem:[%s1 + $0x6d8] sm:$0x11]
    %v268 = vld [vmem:[%s1 + $0x6e0] sm:$0x11]
    %v269 = vld [vmem:[%s1 + $0x6e8] sm:$0x11]
    %v270 = vld [vmem:[%s1 + $0x6f0] sm:$0x11]
    %v271 = vld [vmem:[%s1 + $0x6f8] sm:$0x11]
    %v272 = vld [vmem:[%s1 + $0x700] sm:$0x11]
    %v273 = vld [vmem:[%s1 + $0x708] sm:$0x11]
    %v274 = vld [vmem:[%s1 + $0x710] sm:$0x11]
    %v275 = vld [vmem:[%s1 + $0x718] sm:$0x11]
    %v276 = vld [vmem:[%s1 + $0x720] sm:$0x11]
    %v277 = vld [vmem:[%s1 + $0x728] sm:$0x11]
    %v278 = vld [vmem:[%s1 + $0x730] sm:$0x11]
    %v279 = vld [vmem:[%s1 + $0x738] sm:$0x11]
    %v280 = vld [vmem:[%s1 + $0x740] sm:$0x11]
    %v281 = vld [vmem:[%s1 + $0x748] sm:$0x11]
    %v282 = vld [vmem:[%s1 + $0x750] sm:$0x11]
    %v283 = vld [vmem:[%s1 + $0x758] sm:$0x11]
    %v284 = vld [vmem:[%s1 + $0x760] sm:$0x11]
    %v285 = vld [vmem:[%s1 + $0x768] sm:$0x11]
    %v286 = vld [vmem:[%s1 + $0x770] sm:$0x11]
    %v287 = vld [vmem:[%s1 + $0x778] sm:$0x11]
    %v288 = vld [vmem:[%s1 + $0x780] sm:$0x11]
    %v289 = vld [vmem:[%s1 + $0x788] sm:$0x11]
    %v290 = vld [vmem:[%s1 + $0x790] sm:$0x11]
    %v291 = vld [vmem:[%s1 + $0x798] sm:$0x11]
    %v292 = vld [vmem:[%s1 + $0x7a0] sm:$0x11]
    %v293 = vld [vmem:[%s1 + $0x7a8] sm:$0x11]
    %v294 = vld [vmem:[%s1 + $0x7b0] sm:$0x11]
    %v295 = vld [vmem:[%s1 + $0x7b8] sm:$0x11]
    %v296 = vld [vmem:[%s1 + $0x7c0] sm:$0x11]
    %v297 = vld [vmem:[%s1 + $0x7c8] sm:$0x11]
    %v298 = vld [vmem:[%s1 + $0x7d0] sm:$0x11]
    %v299 = vld [vmem:[%s1 + $0x7d8] sm:$0x11]
    %v300 = vld [vmem:[%s1 + $0x7e0] sm:$0x11]
    %v301 = vld [vmem:[%s1 + $0x7e8] sm:$0x11]
    %v302 = vld [vmem:[%s1 + $0x7f0] sm:$0x11]
    %v303 = vld [vmem:[%s1 + $0x7f8] sm:$0x11]
    %v304 = vld [vmem:[%s2] sm:$0x1]
    %v306 = vlaneseq
    %v307 = vshrl.u32 %v306, 7
    %v308 = vsub.s32 0, %v307
    %v309 = vrot.slane %v304, %v308
    %v343 = vcombine.high %v16, %v16
    %v345 = vunpack.c.l.s4 1966171168
    %v346 = vunpack.c.0.s8 %v345
    %v347 = vlaneseq
    %v348 = vshrl.u32 %v347, 7
    %v349 = vsub.s32 %v346, %v348
    %v350 = vrot.slane %v16, %v349
    %v352 = vunpack.c.l.s4 1966171168
    %v353 = vunpack.c.0.s8 %v352
    %v354 = vlaneseq
    %v355 = vshrl.u32 %v354, 7
    %v356 = vsub.s32 %v353, %v355
    %v357 = vrot.slane %v343, %v356
    %v358 = vcombine.high %v350, %v350
    %v359 = vcombine.high %v357, %v357
    %v361 = vunpack.c.l.s4 1966171168
    %v362 = vunpack.c.0.s8 %v361
    %v363 = vlaneseq
    %v364 = vshrl.u32 %v363, 7
    %v365 = vsub.s32 %v362, %v364
    %v366 = vrot.slane %v350, %v365
    %v368 = vunpack.c.l.s4 1966171168
    %v369 = vunpack.c.0.s8 %v368
    %v370 = vlaneseq
    %v371 = vshrl.u32 %v370, 7
    %v372 = vsub.s32 %v369, %v371
    %v373 = vrot.slane %v357, %v372
    %v375 = vunpack.c.l.s4 1966171168
    %v376 = vunpack.c.0.s8 %v375
    %v377 = vlaneseq
    %v378 = vshrl.u32 %v377, 7
    %v379 = vsub.s32 %v376, %v378
    %v380 = vrot.slane %v358, %v379
    %v382 = vunpack.c.l.s4 1966171168
    %v383 = vunpack.c.0.s8 %v382
    %v384 = vlaneseq
    %v385 = vshrl.u32 %v384, 7
    %v386 = vsub.s32 %v383, %v385
    %v387 = vrot.slane %v359, %v386
    %v388 = vcombine.high %v366, %v366
    %v389 = vcombine.high %v373, %v373
    %v390 = vcombine.high %v380, %v380
    %v391 = vcombine.high %v387, %v387
    %v392 = vcombine.high %v17, %v17
    %v394 = vunpack.c.l.s4 1966171168
    %v395 = vunpack.c.0.s8 %v394
    %v396 = vlaneseq
    %v397 = vshrl.u32 %v396, 7
    %v398 = vsub.s32 %v395, %v397
    %v399 = vrot.slane %v17, %v398
    %v401 = vunpack.c.l.s4 1966171168
    %v402 = vunpack.c.0.s8 %v401
    %v403 = vlaneseq
    %v404 = vshrl.u32 %v403, 7
    %v405 = vsub.s32 %v402, %v404
    %v406 = vrot.slane %v392, %v405
    %v407 = vcombine.high %v399, %v399
    %v408 = vcombine.high %v406, %v406
    %v410 = vunpack.c.l.s4 1966171168
    %v411 = vunpack.c.0.s8 %v410
    %v412 = vlaneseq
    %v413 = vshrl.u32 %v412, 7
    %v414 = vsub.s32 %v411, %v413
    %v415 = vrot.slane %v399, %v414
    %v417 = vunpack.c.l.s4 1966171168
    %v418 = vunpack.c.0.s8 %v417
    %v419 = vlaneseq
    %v420 = vshrl.u32 %v419, 7
    %v421 = vsub.s32 %v418, %v420
    %v422 = vrot.slane %v406, %v421
    %v424 = vunpack.c.l.s4 1966171168
    %v425 = vunpack.c.0.s8 %v424
    %v426 = vlaneseq
    %v427 = vshrl.u32 %v426, 7
    %v428 = vsub.s32 %v425, %v427
    %v429 = vrot.slane %v407, %v428
    %v431 = vunpack.c.l.s4 1966171168
    %v432 = vunpack.c.0.s8 %v431
    %v433 = vlaneseq
    %v434 = vshrl.u32 %v433, 7
    %v435 = vsub.s32 %v432, %v434
    %v436 = vrot.slane %v408, %v435
    %v437 = vcombine.high %v415, %v415
    %v438 = vcombine.high %v422, %v422
    %v439 = vcombine.high %v429, %v429
    %v440 = vcombine.high %v436, %v436
    %v441 = vcombine.high %v18, %v18
    %v443 = vunpack.c.l.s4 1966171168
    %v444 = vunpack.c.0.s8 %v443
    %v445 = vlaneseq
    %v446 = vshrl.u32 %v445, 7
    %v447 = vsub.s32 %v444, %v446
    %v448 = vrot.slane %v18, %v447
    %v450 = vunpack.c.l.s4 1966171168
    %v451 = vunpack.c.0.s8 %v450
    %v452 = vlaneseq
    %v453 = vshrl.u32 %v452, 7
    %v454 = vsub.s32 %v451, %v453
    %v455 = vrot.slane %v441, %v454
    %v456 = vcombine.high %v448, %v448
    %v457 = vcombine.high %v455, %v455
    %v459 = vunpack.c.l.s4 1966171168
    %v460 = vunpack.c.0.s8 %v459
    %v461 = vlaneseq
    %v462 = vshrl.u32 %v461, 7
    %v463 = vsub.s32 %v460, %v462
    %v464 = vrot.slane %v448, %v463
    %v466 = vunpack.c.l.s4 1966171168
    %v467 = vunpack.c.0.s8 %v466
    %v468 = vlaneseq
    %v469 = vshrl.u32 %v468, 7
    %v470 = vsub.s32 %v467, %v469
    %v471 = vrot.slane %v455, %v470
    %v473 = vunpack.c.l.s4 1966171168
    %v474 = vunpack.c.0.s8 %v473
    %v475 = vlaneseq
    %v476 = vshrl.u32 %v475, 7
    %v477 = vsub.s32 %v474, %v476
    %v478 = vrot.slane %v456, %v477
    %v480 = vunpack.c.l.s4 1966171168
    %v481 = vunpack.c.0.s8 %v480
    %v482 = vlaneseq
    %v483 = vshrl.u32 %v482, 7
    %v484 = vsub.s32 %v481, %v483
    %v485 = vrot.slane %v457, %v484
    %v486 = vcombine.high %v464, %v464
    %v487 = vcombine.high %v471, %v471
    %v488 = vcombine.high %v478, %v478
    %v489 = vcombine.high %v485, %v485
    %v490 = vcombine.high %v19, %v19
    %v492 = vunpack.c.l.s4 1966171168
    %v493 = vunpack.c.0.s8 %v492
    %v494 = vlaneseq
    %v495 = vshrl.u32 %v494, 7
    %v496 = vsub.s32 %v493, %v495
    %v497 = vrot.slane %v19, %v496
    %v499 = vunpack.c.l.s4 1966171168
    %v500 = vunpack.c.0.s8 %v499
    %v501 = vlaneseq
    %v502 = vshrl.u32 %v501, 7
    %v503 = vsub.s32 %v500, %v502
    %v504 = vrot.slane %v490, %v503
    %v505 = vcombine.high %v497, %v497
    %v506 = vcombine.high %v504, %v504
    %v508 = vunpack.c.l.s4 1966171168
    %v509 = vunpack.c.0.s8 %v508
    %v510 = vlaneseq
    %v511 = vshrl.u32 %v510, 7
    %v512 = vsub.s32 %v509, %v511
    %v513 = vrot.slane %v497, %v512
    %v515 = vunpack.c.l.s4 1966171168
    %v516 = vunpack.c.0.s8 %v515
    %v517 = vlaneseq
    %v518 = vshrl.u32 %v517, 7
    %v519 = vsub.s32 %v516, %v518
    %v520 = vrot.slane %v504, %v519
    %v522 = vunpack.c.l.s4 1966171168
    %v523 = vunpack.c.0.s8 %v522
    %v524 = vlaneseq
    %v525 = vshrl.u32 %v524, 7
    %v526 = vsub.s32 %v523, %v525
    %v527 = vrot.slane %v505, %v526
    %v529 = vunpack.c.l.s4 1966171168
    %v530 = vunpack.c.0.s8 %v529
    %v531 = vlaneseq
    %v532 = vshrl.u32 %v531, 7
    %v533 = vsub.s32 %v530, %v532
    %v534 = vrot.slane %v506, %v533
    %v535 = vcombine.high %v513, %v513
    %v536 = vcombine.high %v520, %v520
    %v537 = vcombine.high %v527, %v527
    %v538 = vcombine.high %v534, %v534
    %v539 = vcombine.high %v20, %v20
    %v541 = vunpack.c.l.s4 1966171168
    %v542 = vunpack.c.0.s8 %v541
    %v543 = vlaneseq
    %v544 = vshrl.u32 %v543, 7
    %v545 = vsub.s32 %v542, %v544
    %v546 = vrot.slane %v20, %v545
    %v548 = vunpack.c.l.s4 1966171168
    %v549 = vunpack.c.0.s8 %v548
    %v550 = vlaneseq
    %v551 = vshrl.u32 %v550, 7
    %v552 = vsub.s32 %v549, %v551
    %v553 = vrot.slane %v539, %v552
    %v554 = vcombine.high %v546, %v546
    %v555 = vcombine.high %v553, %v553
    %v557 = vunpack.c.l.s4 1966171168
    %v558 = vunpack.c.0.s8 %v557
    %v559 = vlaneseq
    %v560 = vshrl.u32 %v559, 7
    %v561 = vsub.s32 %v558, %v560
    %v562 = vrot.slane %v546, %v561
    %v564 = vunpack.c.l.s4 1966171168
    %v565 = vunpack.c.0.s8 %v564
    %v566 = vlaneseq
    %v567 = vshrl.u32 %v566, 7
    %v568 = vsub.s32 %v565, %v567
    %v569 = vrot.slane %v553, %v568
    %v571 = vunpack.c.l.s4 1966171168
    %v572 = vunpack.c.0.s8 %v571
    %v573 = vlaneseq
    %v574 = vshrl.u32 %v573, 7
    %v575 = vsub.s32 %v572, %v574
    %v576 = vrot.slane %v554, %v575
    %v578 = vunpack.c.l.s4 1966171168
    %v579 = vunpack.c.0.s8 %v578
    %v580 = vlaneseq
    %v581 = vshrl.u32 %v580, 7
    %v582 = vsub.s32 %v579, %v581
    %v583 = vrot.slane %v555, %v582
    %v584 = vcombine.high %v562, %v562
    %v585 = vcombine.high %v569, %v569
    %v586 = vcombine.high %v576, %v576
    %v587 = vcombine.high %v583, %v583
    %v588 = vcombine.high %v21, %v21
    %v590 = vunpack.c.l.s4 1966171168
    %v591 = vunpack.c.0.s8 %v590
    %v592 = vlaneseq
    %v593 = vshrl.u32 %v592, 7
    %v594 = vsub.s32 %v591, %v593
    %v595 = vrot.slane %v21, %v594
    %v597 = vunpack.c.l.s4 1966171168
    %v598 = vunpack.c.0.s8 %v597
    %v599 = vlaneseq
    %v600 = vshrl.u32 %v599, 7
    %v601 = vsub.s32 %v598, %v600
    %v602 = vrot.slane %v588, %v601
    %v603 = vcombine.high %v595, %v595
    %v604 = vcombine.high %v602, %v602
    %v606 = vunpack.c.l.s4 1966171168
    %v607 = vunpack.c.0.s8 %v606
    %v608 = vlaneseq
    %v609 = vshrl.u32 %v608, 7
    %v610 = vsub.s32 %v607, %v609
    %v611 = vrot.slane %v595, %v610
    %v613 = vunpack.c.l.s4 1966171168
    %v614 = vunpack.c.0.s8 %v613
    %v615 = vlaneseq
    %v616 = vshrl.u32 %v615, 7
    %v617 = vsub.s32 %v614, %v616
    %v618 = vrot.slane %v602, %v617
    %v620 = vunpack.c.l.s4 1966171168
    %v621 = vunpack.c.0.s8 %v620
    %v622 = vlaneseq
    %v623 = vshrl.u32 %v622, 7
    %v624 = vsub.s32 %v621, %v623
    %v625 = vrot.slane %v603, %v624
    %v627 = vunpack.c.l.s4 1966171168
    %v628 = vunpack.c.0.s8 %v627
    %v629 = vlaneseq
    %v630 = vshrl.u32 %v629, 7
    %v631 = vsub.s32 %v628, %v630
    %v632 = vrot.slane %v604, %v631
    %v633 = vcombine.high %v611, %v611
    %v634 = vcombine.high %v618, %v618
    %v635 = vcombine.high %v625, %v625
    %v636 = vcombine.high %v632, %v632
    %v637 = vcombine.high %v22, %v22
    %v639 = vunpack.c.l.s4 1966171168
    %v640 = vunpack.c.0.s8 %v639
    %v641 = vlaneseq
    %v642 = vshrl.u32 %v641, 7
    %v643 = vsub.s32 %v640, %v642
    %v644 = vrot.slane %v22, %v643
    %v646 = vunpack.c.l.s4 1966171168
    %v647 = vunpack.c.0.s8 %v646
    %v648 = vlaneseq
    %v649 = vshrl.u32 %v648, 7
    %v650 = vsub.s32 %v647, %v649
    %v651 = vrot.slane %v637, %v650
    %v652 = vcombine.high %v644, %v644
    %v653 = vcombine.high %v651, %v651
    %v655 = vunpack.c.l.s4 1966171168
    %v656 = vunpack.c.0.s8 %v655
    %v657 = vlaneseq
    %v658 = vshrl.u32 %v657, 7
    %v659 = vsub.s32 %v656, %v658
    %v660 = vrot.slane %v644, %v659
    %v662 = vunpack.c.l.s4 1966171168
    %v663 = vunpack.c.0.s8 %v662
    %v664 = vlaneseq
    %v665 = vshrl.u32 %v664, 7
    %v666 = vsub.s32 %v663, %v665
    %v667 = vrot.slane %v651, %v666
    %v669 = vunpack.c.l.s4 1966171168
    %v670 = vunpack.c.0.s8 %v669
    %v671 = vlaneseq
    %v672 = vshrl.u32 %v671, 7
    %v673 = vsub.s32 %v670, %v672
    %v674 = vrot.slane %v652, %v673
    %v676 = vunpack.c.l.s4 1966171168
    %v677 = vunpack.c.0.s8 %v676
    %v678 = vlaneseq
    %v679 = vshrl.u32 %v678, 7
    %v680 = vsub.s32 %v677, %v679
    %v681 = vrot.slane %v653, %v680
    %v682 = vcombine.high %v660, %v660
    %v683 = vcombine.high %v667, %v667
    %v684 = vcombine.high %v674, %v674
    %v685 = vcombine.high %v681, %v681
    %v686 = vcombine.high %v23, %v23
    %v688 = vunpack.c.l.s4 1966171168
    %v689 = vunpack.c.0.s8 %v688
    %v690 = vlaneseq
    %v691 = vshrl.u32 %v690, 7
    %v692 = vsub.s32 %v689, %v691
    %v693 = vrot.slane %v23, %v692
    %v695 = vunpack.c.l.s4 1966171168
    %v696 = vunpack.c.0.s8 %v695
    %v697 = vlaneseq
    %v698 = vshrl.u32 %v697, 7
    %v699 = vsub.s32 %v696, %v698
    %v700 = vrot.slane %v686, %v699
    %v701 = vcombine.high %v693, %v693
    %v702 = vcombine.high %v700, %v700
    %v704 = vunpack.c.l.s4 1966171168
    %v705 = vunpack.c.0.s8 %v704
    %v706 = vlaneseq
    %v707 = vshrl.u32 %v706, 7
    %v708 = vsub.s32 %v705, %v707
    %v709 = vrot.slane %v693, %v708
    %v711 = vunpack.c.l.s4 1966171168
    %v712 = vunpack.c.0.s8 %v711
    %v713 = vlaneseq
    %v714 = vshrl.u32 %v713, 7
    %v715 = vsub.s32 %v712, %v714
    %v716 = vrot.slane %v700, %v715
    %v718 = vunpack.c.l.s4 1966171168
    %v719 = vunpack.c.0.s8 %v718
    %v720 = vlaneseq
    %v721 = vshrl.u32 %v720, 7
    %v722 = vsub.s32 %v719, %v721
    %v723 = vrot.slane %v701, %v722
    %v725 = vunpack.c.l.s4 1966171168
    %v726 = vunpack.c.0.s8 %v725
    %v727 = vlaneseq
    %v728 = vshrl.u32 %v727, 7
    %v729 = vsub.s32 %v726, %v728
    %v730 = vrot.slane %v702, %v729
    %v731 = vcombine.high %v709, %v709
    %v732 = vcombine.high %v716, %v716
    %v733 = vcombine.high %v723, %v723
    %v734 = vcombine.high %v730, %v730
    %v735 = vcombine.high %v24, %v24
    %v737 = vunpack.c.l.s4 1966171168
    %v738 = vunpack.c.0.s8 %v737
    %v739 = vlaneseq
    %v740 = vshrl.u32 %v739, 7
    %v741 = vsub.s32 %v738, %v740
    %v742 = vrot.slane %v24, %v741
    %v744 = vunpack.c.l.s4 1966171168
    %v745 = vunpack.c.0.s8 %v744
    %v746 = vlaneseq
    %v747 = vshrl.u32 %v746, 7
    %v748 = vsub.s32 %v745, %v747
    %v749 = vrot.slane %v735, %v748
    %v750 = vcombine.high %v742, %v742
    %v751 = vcombine.high %v749, %v749
    %v753 = vunpack.c.l.s4 1966171168
    %v754 = vunpack.c.0.s8 %v753
    %v755 = vlaneseq
    %v756 = vshrl.u32 %v755, 7
    %v757 = vsub.s32 %v754, %v756
    %v758 = vrot.slane %v742, %v757
    %v760 = vunpack.c.l.s4 1966171168
    %v761 = vunpack.c.0.s8 %v760
    %v762 = vlaneseq
    %v763 = vshrl.u32 %v762, 7
    %v764 = vsub.s32 %v761, %v763
    %v765 = vrot.slane %v749, %v764
    %v767 = vunpack.c.l.s4 1966171168
    %v768 = vunpack.c.0.s8 %v767
    %v769 = vlaneseq
    %v770 = vshrl.u32 %v769, 7
    %v771 = vsub.s32 %v768, %v770
    %v772 = vrot.slane %v750, %v771
    %v774 = vunpack.c.l.s4 1966171168
    %v775 = vunpack.c.0.s8 %v774
    %v776 = vlaneseq
    %v777 = vshrl.u32 %v776, 7
    %v778 = vsub.s32 %v775, %v777
    %v779 = vrot.slane %v751, %v778
    %v780 = vcombine.high %v758, %v758
    %v781 = vcombine.high %v765, %v765
    %v782 = vcombine.high %v772, %v772
    %v783 = vcombine.high %v779, %v779
    %v784 = vcombine.high %v25, %v25
    %v786 = vunpack.c.l.s4 1966171168
    %v787 = vunpack.c.0.s8 %v786
    %v788 = vlaneseq
    %v789 = vshrl.u32 %v788, 7
    %v790 = vsub.s32 %v787, %v789
    %v791 = vrot.slane %v25, %v790
    %v793 = vunpack.c.l.s4 1966171168
    %v794 = vunpack.c.0.s8 %v793
    %v795 = vlaneseq
    %v796 = vshrl.u32 %v795, 7
    %v797 = vsub.s32 %v794, %v796
    %v798 = vrot.slane %v784, %v797
    %v799 = vcombine.high %v791, %v791
    %v800 = vcombine.high %v798, %v798
    %v802 = vunpack.c.l.s4 1966171168
    %v803 = vunpack.c.0.s8 %v802
    %v804 = vlaneseq
    %v805 = vshrl.u32 %v804, 7
    %v806 = vsub.s32 %v803, %v805
    %v807 = vrot.slane %v791, %v806
    %v809 = vunpack.c.l.s4 1966171168
    %v810 = vunpack.c.0.s8 %v809
    %v811 = vlaneseq
    %v812 = vshrl.u32 %v811, 7
    %v813 = vsub.s32 %v810, %v812
    %v814 = vrot.slane %v798, %v813
    %v816 = vunpack.c.l.s4 1966171168
    %v817 = vunpack.c.0.s8 %v816
    %v818 = vlaneseq
    %v819 = vshrl.u32 %v818, 7
    %v820 = vsub.s32 %v817, %v819
    %v821 = vrot.slane %v799, %v820
    %v823 = vunpack.c.l.s4 1966171168
    %v824 = vunpack.c.0.s8 %v823
    %v825 = vlaneseq
    %v826 = vshrl.u32 %v825, 7
    %v827 = vsub.s32 %v824, %v826
    %v828 = vrot.slane %v800, %v827
    %v829 = vcombine.high %v807, %v807
    %v830 = vcombine.high %v814, %v814
    %v831 = vcombine.high %v821, %v821
    %v832 = vcombine.high %v828, %v828
    %v833 = vcombine.high %v26, %v26
    %v835 = vunpack.c.l.s4 1966171168
    %v836 = vunpack.c.0.s8 %v835
    %v837 = vlaneseq
    %v838 = vshrl.u32 %v837, 7
    %v839 = vsub.s32 %v836, %v838
    %v840 = vrot.slane %v26, %v839
    %v842 = vunpack.c.l.s4 1966171168
    %v843 = vunpack.c.0.s8 %v842
    %v844 = vlaneseq
    %v845 = vshrl.u32 %v844, 7
    %v846 = vsub.s32 %v843, %v845
    %v847 = vrot.slane %v833, %v846
    %v848 = vcombine.high %v840, %v840
    %v849 = vcombine.high %v847, %v847
    %v851 = vunpack.c.l.s4 1966171168
    %v852 = vunpack.c.0.s8 %v851
    %v853 = vlaneseq
    %v854 = vshrl.u32 %v853, 7
    %v855 = vsub.s32 %v852, %v854
    %v856 = vrot.slane %v840, %v855
    %v858 = vunpack.c.l.s4 1966171168
    %v859 = vunpack.c.0.s8 %v858
    %v860 = vlaneseq
    %v861 = vshrl.u32 %v860, 7
    %v862 = vsub.s32 %v859, %v861
    %v863 = vrot.slane %v847, %v862
    %v865 = vunpack.c.l.s4 1966171168
    %v866 = vunpack.c.0.s8 %v865
    %v867 = vlaneseq
    %v868 = vshrl.u32 %v867, 7
    %v869 = vsub.s32 %v866, %v868
    %v870 = vrot.slane %v848, %v869
    %v872 = vunpack.c.l.s4 1966171168
    %v873 = vunpack.c.0.s8 %v872
    %v874 = vlaneseq
    %v875 = vshrl.u32 %v874, 7
    %v876 = vsub.s32 %v873, %v875
    %v877 = vrot.slane %v849, %v876
    %v878 = vcombine.high %v856, %v856
    %v879 = vcombine.high %v863, %v863
    %v880 = vcombine.high %v870, %v870
    %v881 = vcombine.high %v877, %v877
    %v882 = vcombine.high %v27, %v27
    %v884 = vunpack.c.l.s4 1966171168
    %v885 = vunpack.c.0.s8 %v884
    %v886 = vlaneseq
    %v887 = vshrl.u32 %v886, 7
    %v888 = vsub.s32 %v885, %v887
    %v889 = vrot.slane %v27, %v888
    %v891 = vunpack.c.l.s4 1966171168
    %v892 = vunpack.c.0.s8 %v891
    %v893 = vlaneseq
    %v894 = vshrl.u32 %v893, 7
    %v895 = vsub.s32 %v892, %v894
    %v896 = vrot.slane %v882, %v895
    %v897 = vcombine.high %v889, %v889
    %v898 = vcombine.high %v896, %v896
    %v900 = vunpack.c.l.s4 1966171168
    %v901 = vunpack.c.0.s8 %v900
    %v902 = vlaneseq
    %v903 = vshrl.u32 %v902, 7
    %v904 = vsub.s32 %v901, %v903
    %v905 = vrot.slane %v889, %v904
    %v907 = vunpack.c.l.s4 1966171168
    %v908 = vunpack.c.0.s8 %v907
    %v909 = vlaneseq
    %v910 = vshrl.u32 %v909, 7
    %v911 = vsub.s32 %v908, %v910
    %v912 = vrot.slane %v896, %v911
    %v914 = vunpack.c.l.s4 1966171168
    %v915 = vunpack.c.0.s8 %v914
    %v916 = vlaneseq
    %v917 = vshrl.u32 %v916, 7
    %v918 = vsub.s32 %v915, %v917
    %v919 = vrot.slane %v897, %v918
    %v921 = vunpack.c.l.s4 1966171168
    %v922 = vunpack.c.0.s8 %v921
    %v923 = vlaneseq
    %v924 = vshrl.u32 %v923, 7
    %v925 = vsub.s32 %v922, %v924
    %v926 = vrot.slane %v898, %v925
    %v927 = vcombine.high %v905, %v905
    %v928 = vcombine.high %v912, %v912
    %v929 = vcombine.high %v919, %v919
    %v930 = vcombine.high %v926, %v926
    %v931 = vcombine.high %v28, %v28
    %v933 = vunpack.c.l.s4 1966171168
    %v934 = vunpack.c.0.s8 %v933
    %v935 = vlaneseq
    %v936 = vshrl.u32 %v935, 7
    %v937 = vsub.s32 %v934, %v936
    %v938 = vrot.slane %v28, %v937
    %v940 = vunpack.c.l.s4 1966171168
    %v941 = vunpack.c.0.s8 %v940
    %v942 = vlaneseq
    %v943 = vshrl.u32 %v942, 7
    %v944 = vsub.s32 %v941, %v943
    %v945 = vrot.slane %v931, %v944
    %v946 = vcombine.high %v938, %v938
    %v947 = vcombine.high %v945, %v945
    %v949 = vunpack.c.l.s4 1966171168
    %v950 = vunpack.c.0.s8 %v949
    %v951 = vlaneseq
    %v952 = vshrl.u32 %v951, 7
    %v953 = vsub.s32 %v950, %v952
    %v954 = vrot.slane %v938, %v953
    %v956 = vunpack.c.l.s4 1966171168
    %v957 = vunpack.c.0.s8 %v956
    %v958 = vlaneseq
    %v959 = vshrl.u32 %v958, 7
    %v960 = vsub.s32 %v957, %v959
    %v961 = vrot.slane %v945, %v960
    %v963 = vunpack.c.l.s4 1966171168
    %v964 = vunpack.c.0.s8 %v963
    %v965 = vlaneseq
    %v966 = vshrl.u32 %v965, 7
    %v967 = vsub.s32 %v964, %v966
    %v968 = vrot.slane %v946, %v967
    %v970 = vunpack.c.l.s4 1966171168
    %v971 = vunpack.c.0.s8 %v970
    %v972 = vlaneseq
    %v973 = vshrl.u32 %v972, 7
    %v974 = vsub.s32 %v971, %v973
    %v975 = vrot.slane %v947, %v974
    %v976 = vcombine.high %v954, %v954
    %v977 = vcombine.high %v961, %v961
    %v978 = vcombine.high %v968, %v968
    %v979 = vcombine.high %v975, %v975
    %v980 = vcombine.high %v29, %v29
    %v982 = vunpack.c.l.s4 1966171168
    %v983 = vunpack.c.0.s8 %v982
    %v984 = vlaneseq
    %v985 = vshrl.u32 %v984, 7
    %v986 = vsub.s32 %v983, %v985
    %v987 = vrot.slane %v29, %v986
    %v989 = vunpack.c.l.s4 1966171168
    %v990 = vunpack.c.0.s8 %v989
    %v991 = vlaneseq
    %v992 = vshrl.u32 %v991, 7
    %v993 = vsub.s32 %v990, %v992
    %v994 = vrot.slane %v980, %v993
    %v995 = vcombine.high %v987, %v987
    %v996 = vcombine.high %v994, %v994
    %v998 = vunpack.c.l.s4 1966171168
    %v999 = vunpack.c.0.s8 %v998
    %v1000 = vlaneseq
    %v1001 = vshrl.u32 %v1000, 7
    %v1002 = vsub.s32 %v999, %v1001
    %v1003 = vrot.slane %v987, %v1002
    %v1005 = vunpack.c.l.s4 1966171168
    %v1006 = vunpack.c.0.s8 %v1005
    %v1007 = vlaneseq
    %v1008 = vshrl.u32 %v1007, 7
    %v1009 = vsub.s32 %v1006, %v1008
    %v1010 = vrot.slane %v994, %v1009
    %v1012 = vunpack.c.l.s4 1966171168
    %v1013 = vunpack.c.0.s8 %v1012
    %v1014 = vlaneseq
    %v1015 = vshrl.u32 %v1014, 7
    %v1016 = vsub.s32 %v1013, %v1015
    %v1017 = vrot.slane %v995, %v1016
    %v1019 = vunpack.c.l.s4 1966171168
    %v1020 = vunpack.c.0.s8 %v1019
    %v1021 = vlaneseq
    %v1022 = vshrl.u32 %v1021, 7
    %v1023 = vsub.s32 %v1020, %v1022
    %v1024 = vrot.slane %v996, %v1023
    %v1025 = vcombine.high %v1003, %v1003
    %v1026 = vcombine.high %v1010, %v1010
    %v1027 = vcombine.high %v1017, %v1017
    %v1028 = vcombine.high %v1024, %v1024
    %v1029 = vcombine.high %v30, %v30
    %v1031 = vunpack.c.l.s4 1966171168
    %v1032 = vunpack.c.0.s8 %v1031
    %v1033 = vlaneseq
    %v1034 = vshrl.u32 %v1033, 7
    %v1035 = vsub.s32 %v1032, %v1034
    %v1036 = vrot.slane %v30, %v1035
    %v1038 = vunpack.c.l.s4 1966171168
    %v1039 = vunpack.c.0.s8 %v1038
    %v1040 = vlaneseq
    %v1041 = vshrl.u32 %v1040, 7
    %v1042 = vsub.s32 %v1039, %v1041
    %v1043 = vrot.slane %v1029, %v1042
    %v1044 = vcombine.high %v1036, %v1036
    %v1045 = vcombine.high %v1043, %v1043
    %v1047 = vunpack.c.l.s4 1966171168
    %v1048 = vunpack.c.0.s8 %v1047
    %v1049 = vlaneseq
    %v1050 = vshrl.u32 %v1049, 7
    %v1051 = vsub.s32 %v1048, %v1050
    %v1052 = vrot.slane %v1036, %v1051
    %v1054 = vunpack.c.l.s4 1966171168
    %v1055 = vunpack.c.0.s8 %v1054
    %v1056 = vlaneseq
    %v1057 = vshrl.u32 %v1056, 7
    %v1058 = vsub.s32 %v1055, %v1057
    %v1059 = vrot.slane %v1043, %v1058
    %v1061 = vunpack.c.l.s4 1966171168
    %v1062 = vunpack.c.0.s8 %v1061
    %v1063 = vlaneseq
    %v1064 = vshrl.u32 %v1063, 7
    %v1065 = vsub.s32 %v1062, %v1064
    %v1066 = vrot.slane %v1044, %v1065
    %v1068 = vunpack.c.l.s4 1966171168
    %v1069 = vunpack.c.0.s8 %v1068
    %v1070 = vlaneseq
    %v1071 = vshrl.u32 %v1070, 7
    %v1072 = vsub.s32 %v1069, %v1071
    %v1073 = vrot.slane %v1045, %v1072
    %v1074 = vcombine.high %v1052, %v1052
    %v1075 = vcombine.high %v1059, %v1059
    %v1076 = vcombine.high %v1066, %v1066
    %v1077 = vcombine.high %v1073, %v1073
    %v1078 = vcombine.high %v31, %v31
    %v1080 = vunpack.c.l.s4 1966171168
    %v1081 = vunpack.c.0.s8 %v1080
    %v1082 = vlaneseq
    %v1083 = vshrl.u32 %v1082, 7
    %v1084 = vsub.s32 %v1081, %v1083
    %v1085 = vrot.slane %v31, %v1084
    %v1087 = vunpack.c.l.s4 1966171168
    %v1088 = vunpack.c.0.s8 %v1087
    %v1089 = vlaneseq
    %v1090 = vshrl.u32 %v1089, 7
    %v1091 = vsub.s32 %v1088, %v1090
    %v1092 = vrot.slane %v1078, %v1091
    %v1093 = vcombine.high %v1085, %v1085
    %v1094 = vcombine.high %v1092, %v1092
    %v1096 = vunpack.c.l.s4 1966171168
    %v1097 = vunpack.c.0.s8 %v1096
    %v1098 = vlaneseq
    %v1099 = vshrl.u32 %v1098, 7
    %v1100 = vsub.s32 %v1097, %v1099
    %v1101 = vrot.slane %v1085, %v1100
    %v1103 = vunpack.c.l.s4 1966171168
    %v1104 = vunpack.c.0.s8 %v1103
    %v1105 = vlaneseq
    %v1106 = vshrl.u32 %v1105, 7
    %v1107 = vsub.s32 %v1104, %v1106
    %v1108 = vrot.slane %v1092, %v1107
    %v1110 = vunpack.c.l.s4 1966171168
    %v1111 = vunpack.c.0.s8 %v1110
    %v1112 = vlaneseq
    %v1113 = vshrl.u32 %v1112, 7
    %v1114 = vsub.s32 %v1111, %v1113
    %v1115 = vrot.slane %v1093, %v1114
    %v1117 = vunpack.c.l.s4 1966171168
    %v1118 = vunpack.c.0.s8 %v1117
    %v1119 = vlaneseq
    %v1120 = vshrl.u32 %v1119, 7
    %v1121 = vsub.s32 %v1118, %v1120
    %v1122 = vrot.slane %v1094, %v1121
    %v1123 = vcombine.high %v1101, %v1101
    %v1124 = vcombine.high %v1108, %v1108
    %v1125 = vcombine.high %v1115, %v1115
    %v1126 = vcombine.high %v1122, %v1122
    %v1127 = vcombine.high %v32, %v32
    %v1129 = vunpack.c.l.s4 1966171168
    %v1130 = vunpack.c.0.s8 %v1129
    %v1131 = vlaneseq
    %v1132 = vshrl.u32 %v1131, 7
    %v1133 = vsub.s32 %v1130, %v1132
    %v1134 = vrot.slane %v32, %v1133
    %v1136 = vunpack.c.l.s4 1966171168
    %v1137 = vunpack.c.0.s8 %v1136
    %v1138 = vlaneseq
    %v1139 = vshrl.u32 %v1138, 7
    %v1140 = vsub.s32 %v1137, %v1139
    %v1141 = vrot.slane %v1127, %v1140
    %v1142 = vcombine.high %v1134, %v1134
    %v1143 = vcombine.high %v1141, %v1141
    %v1145 = vunpack.c.l.s4 1966171168
    %v1146 = vunpack.c.0.s8 %v1145
    %v1147 = vlaneseq
    %v1148 = vshrl.u32 %v1147, 7
    %v1149 = vsub.s32 %v1146, %v1148
    %v1150 = vrot.slane %v1134, %v1149
    %v1152 = vunpack.c.l.s4 1966171168
    %v1153 = vunpack.c.0.s8 %v1152
    %v1154 = vlaneseq
    %v1155 = vshrl.u32 %v1154, 7
    %v1156 = vsub.s32 %v1153, %v1155
    %v1157 = vrot.slane %v1141, %v1156
    %v1159 = vunpack.c.l.s4 1966171168
    %v1160 = vunpack.c.0.s8 %v1159
    %v1161 = vlaneseq
    %v1162 = vshrl.u32 %v1161, 7
    %v1163 = vsub.s32 %v1160, %v1162
    %v1164 = vrot.slane %v1142, %v1163
    %v1166 = vunpack.c.l.s4 1966171168
    %v1167 = vunpack.c.0.s8 %v1166
    %v1168 = vlaneseq
    %v1169 = vshrl.u32 %v1168, 7
    %v1170 = vsub.s32 %v1167, %v1169
    %v1171 = vrot.slane %v1143, %v1170
    %v1172 = vcombine.high %v1150, %v1150
    %v1173 = vcombine.high %v1157, %v1157
    %v1174 = vcombine.high %v1164, %v1164
    %v1175 = vcombine.high %v1171, %v1171
    %v1176 = vcombine.high %v33, %v33
    %v1178 = vunpack.c.l.s4 1966171168
    %v1179 = vunpack.c.0.s8 %v1178
    %v1180 = vlaneseq
    %v1181 = vshrl.u32 %v1180, 7
    %v1182 = vsub.s32 %v1179, %v1181
    %v1183 = vrot.slane %v33, %v1182
    %v1185 = vunpack.c.l.s4 1966171168
    %v1186 = vunpack.c.0.s8 %v1185
    %v1187 = vlaneseq
    %v1188 = vshrl.u32 %v1187, 7
    %v1189 = vsub.s32 %v1186, %v1188
    %v1190 = vrot.slane %v1176, %v1189
    %v1191 = vcombine.high %v1183, %v1183
    %v1192 = vcombine.high %v1190, %v1190
    %v1194 = vunpack.c.l.s4 1966171168
    %v1195 = vunpack.c.0.s8 %v1194
    %v1196 = vlaneseq
    %v1197 = vshrl.u32 %v1196, 7
    %v1198 = vsub.s32 %v1195, %v1197
    %v1199 = vrot.slane %v1183, %v1198
    %v1201 = vunpack.c.l.s4 1966171168
    %v1202 = vunpack.c.0.s8 %v1201
    %v1203 = vlaneseq
    %v1204 = vshrl.u32 %v1203, 7
    %v1205 = vsub.s32 %v1202, %v1204
    %v1206 = vrot.slane %v1190, %v1205
    %v1208 = vunpack.c.l.s4 1966171168
    %v1209 = vunpack.c.0.s8 %v1208
    %v1210 = vlaneseq
    %v1211 = vshrl.u32 %v1210, 7
    %v1212 = vsub.s32 %v1209, %v1211
    %v1213 = vrot.slane %v1191, %v1212
    %v1215 = vunpack.c.l.s4 1966171168
    %v1216 = vunpack.c.0.s8 %v1215
    %v1217 = vlaneseq
    %v1218 = vshrl.u32 %v1217, 7
    %v1219 = vsub.s32 %v1216, %v1218
    %v1220 = vrot.slane %v1192, %v1219
    %v1221 = vcombine.high %v1199, %v1199
    %v1222 = vcombine.high %v1206, %v1206
    %v1223 = vcombine.high %v1213, %v1213
    %v1224 = vcombine.high %v1220, %v1220
    %v1225 = vcombine.high %v34, %v34
    %v1227 = vunpack.c.l.s4 1966171168
    %v1228 = vunpack.c.0.s8 %v1227
    %v1229 = vlaneseq
    %v1230 = vshrl.u32 %v1229, 7
    %v1231 = vsub.s32 %v1228, %v1230
    %v1232 = vrot.slane %v34, %v1231
    %v1234 = vunpack.c.l.s4 1966171168
    %v1235 = vunpack.c.0.s8 %v1234
    %v1236 = vlaneseq
    %v1237 = vshrl.u32 %v1236, 7
    %v1238 = vsub.s32 %v1235, %v1237
    %v1239 = vrot.slane %v1225, %v1238
    %v1240 = vcombine.high %v1232, %v1232
    %v1241 = vcombine.high %v1239, %v1239
    %v1243 = vunpack.c.l.s4 1966171168
    %v1244 = vunpack.c.0.s8 %v1243
    %v1245 = vlaneseq
    %v1246 = vshrl.u32 %v1245, 7
    %v1247 = vsub.s32 %v1244, %v1246
    %v1248 = vrot.slane %v1232, %v1247
    %v1250 = vunpack.c.l.s4 1966171168
    %v1251 = vunpack.c.0.s8 %v1250
    %v1252 = vlaneseq
    %v1253 = vshrl.u32 %v1252, 7
    %v1254 = vsub.s32 %v1251, %v1253
    %v1255 = vrot.slane %v1239, %v1254
    %v1257 = vunpack.c.l.s4 1966171168
    %v1258 = vunpack.c.0.s8 %v1257
    %v1259 = vlaneseq
    %v1260 = vshrl.u32 %v1259, 7
    %v1261 = vsub.s32 %v1258, %v1260
    %v1262 = vrot.slane %v1240, %v1261
    %v1264 = vunpack.c.l.s4 1966171168
    %v1265 = vunpack.c.0.s8 %v1264
    %v1266 = vlaneseq
    %v1267 = vshrl.u32 %v1266, 7
    %v1268 = vsub.s32 %v1265, %v1267
    %v1269 = vrot.slane %v1241, %v1268
    %v1270 = vcombine.high %v1248, %v1248
    %v1271 = vcombine.high %v1255, %v1255
    %v1272 = vcombine.high %v1262, %v1262
    %v1273 = vcombine.high %v1269, %v1269
    %v1274 = vcombine.high %v35, %v35
    %v1276 = vunpack.c.l.s4 1966171168
    %v1277 = vunpack.c.0.s8 %v1276
    %v1278 = vlaneseq
    %v1279 = vshrl.u32 %v1278, 7
    %v1280 = vsub.s32 %v1277, %v1279
    %v1281 = vrot.slane %v35, %v1280
    %v1283 = vunpack.c.l.s4 1966171168
    %v1284 = vunpack.c.0.s8 %v1283
    %v1285 = vlaneseq
    %v1286 = vshrl.u32 %v1285, 7
    %v1287 = vsub.s32 %v1284, %v1286
    %v1288 = vrot.slane %v1274, %v1287
    %v1289 = vcombine.high %v1281, %v1281
    %v1290 = vcombine.high %v1288, %v1288
    %v1292 = vunpack.c.l.s4 1966171168
    %v1293 = vunpack.c.0.s8 %v1292
    %v1294 = vlaneseq
    %v1295 = vshrl.u32 %v1294, 7
    %v1296 = vsub.s32 %v1293, %v1295
    %v1297 = vrot.slane %v1281, %v1296
    %v1299 = vunpack.c.l.s4 1966171168
    %v1300 = vunpack.c.0.s8 %v1299
    %v1301 = vlaneseq
    %v1302 = vshrl.u32 %v1301, 7
    %v1303 = vsub.s32 %v1300, %v1302
    %v1304 = vrot.slane %v1288, %v1303
    %v1306 = vunpack.c.l.s4 1966171168
    %v1307 = vunpack.c.0.s8 %v1306
    %v1308 = vlaneseq
    %v1309 = vshrl.u32 %v1308, 7
    %v1310 = vsub.s32 %v1307, %v1309
    %v1311 = vrot.slane %v1289, %v1310
    %v1313 = vunpack.c.l.s4 1966171168
    %v1314 = vunpack.c.0.s8 %v1313
    %v1315 = vlaneseq
    %v1316 = vshrl.u32 %v1315, 7
    %v1317 = vsub.s32 %v1314, %v1316
    %v1318 = vrot.slane %v1290, %v1317
    %v1319 = vcombine.high %v1297, %v1297
    %v1320 = vcombine.high %v1304, %v1304
    %v1321 = vcombine.high %v1311, %v1311
    %v1322 = vcombine.high %v1318, %v1318
    %v1323 = vcombine.high %v36, %v36
    %v1325 = vunpack.c.l.s4 1966171168
    %v1326 = vunpack.c.0.s8 %v1325
    %v1327 = vlaneseq
    %v1328 = vshrl.u32 %v1327, 7
    %v1329 = vsub.s32 %v1326, %v1328
    %v1330 = vrot.slane %v36, %v1329
    %v1332 = vunpack.c.l.s4 1966171168
    %v1333 = vunpack.c.0.s8 %v1332
    %v1334 = vlaneseq
    %v1335 = vshrl.u32 %v1334, 7
    %v1336 = vsub.s32 %v1333, %v1335
    %v1337 = vrot.slane %v1323, %v1336
    %v1338 = vcombine.high %v1330, %v1330
    %v1339 = vcombine.high %v1337, %v1337
    %v1341 = vunpack.c.l.s4 1966171168
    %v1342 = vunpack.c.0.s8 %v1341
    %v1343 = vlaneseq
    %v1344 = vshrl.u32 %v1343, 7
    %v1345 = vsub.s32 %v1342, %v1344
    %v1346 = vrot.slane %v1330, %v1345
    %v1348 = vunpack.c.l.s4 1966171168
    %v1349 = vunpack.c.0.s8 %v1348
    %v1350 = vlaneseq
    %v1351 = vshrl.u32 %v1350, 7
    %v1352 = vsub.s32 %v1349, %v1351
    %v1353 = vrot.slane %v1337, %v1352
    %v1355 = vunpack.c.l.s4 1966171168
    %v1356 = vunpack.c.0.s8 %v1355
    %v1357 = vlaneseq
    %v1358 = vshrl.u32 %v1357, 7
    %v1359 = vsub.s32 %v1356, %v1358
    %v1360 = vrot.slane %v1338, %v1359
    %v1362 = vunpack.c.l.s4 1966171168
    %v1363 = vunpack.c.0.s8 %v1362
    %v1364 = vlaneseq
    %v1365 = vshrl.u32 %v1364, 7
    %v1366 = vsub.s32 %v1363, %v1365
    %v1367 = vrot.slane %v1339, %v1366
    %v1368 = vcombine.high %v1346, %v1346
    %v1369 = vcombine.high %v1353, %v1353
    %v1370 = vcombine.high %v1360, %v1360
    %v1371 = vcombine.high %v1367, %v1367
    %v1372 = vcombine.high %v37, %v37
    %v1374 = vunpack.c.l.s4 1966171168
    %v1375 = vunpack.c.0.s8 %v1374
    %v1376 = vlaneseq
    %v1377 = vshrl.u32 %v1376, 7
    %v1378 = vsub.s32 %v1375, %v1377
    %v1379 = vrot.slane %v37, %v1378
    %v1381 = vunpack.c.l.s4 1966171168
    %v1382 = vunpack.c.0.s8 %v1381
    %v1383 = vlaneseq
    %v1384 = vshrl.u32 %v1383, 7
    %v1385 = vsub.s32 %v1382, %v1384
    %v1386 = vrot.slane %v1372, %v1385
    %v1387 = vcombine.high %v1379, %v1379
    %v1388 = vcombine.high %v1386, %v1386
    %v1390 = vunpack.c.l.s4 1966171168
    %v1391 = vunpack.c.0.s8 %v1390
    %v1392 = vlaneseq
    %v1393 = vshrl.u32 %v1392, 7
    %v1394 = vsub.s32 %v1391, %v1393
    %v1395 = vrot.slane %v1379, %v1394
    %v1397 = vunpack.c.l.s4 1966171168
    %v1398 = vunpack.c.0.s8 %v1397
    %v1399 = vlaneseq
    %v1400 = vshrl.u32 %v1399, 7
    %v1401 = vsub.s32 %v1398, %v1400
    %v1402 = vrot.slane %v1386, %v1401
    %v1404 = vunpack.c.l.s4 1966171168
    %v1405 = vunpack.c.0.s8 %v1404
    %v1406 = vlaneseq
    %v1407 = vshrl.u32 %v1406, 7
    %v1408 = vsub.s32 %v1405, %v1407
    %v1409 = vrot.slane %v1387, %v1408
    %v1411 = vunpack.c.l.s4 1966171168
    %v1412 = vunpack.c.0.s8 %v1411
    %v1413 = vlaneseq
    %v1414 = vshrl.u32 %v1413, 7
    %v1415 = vsub.s32 %v1412, %v1414
    %v1416 = vrot.slane %v1388, %v1415
    %v1417 = vcombine.high %v1395, %v1395
    %v1418 = vcombine.high %v1402, %v1402
    %v1419 = vcombine.high %v1409, %v1409
    %v1420 = vcombine.high %v1416, %v1416
    %v1421 = vcombine.high %v38, %v38
    %v1423 = vunpack.c.l.s4 1966171168
    %v1424 = vunpack.c.0.s8 %v1423
    %v1425 = vlaneseq
    %v1426 = vshrl.u32 %v1425, 7
    %v1427 = vsub.s32 %v1424, %v1426
    %v1428 = vrot.slane %v38, %v1427
    %v1430 = vunpack.c.l.s4 1966171168
    %v1431 = vunpack.c.0.s8 %v1430
    %v1432 = vlaneseq
    %v1433 = vshrl.u32 %v1432, 7
    %v1434 = vsub.s32 %v1431, %v1433
    %v1435 = vrot.slane %v1421, %v1434
    %v1436 = vcombine.high %v1428, %v1428
    %v1437 = vcombine.high %v1435, %v1435
    %v1439 = vunpack.c.l.s4 1966171168
    %v1440 = vunpack.c.0.s8 %v1439
    %v1441 = vlaneseq
    %v1442 = vshrl.u32 %v1441, 7
    %v1443 = vsub.s32 %v1440, %v1442
    %v1444 = vrot.slane %v1428, %v1443
    %v1446 = vunpack.c.l.s4 1966171168
    %v1447 = vunpack.c.0.s8 %v1446
    %v1448 = vlaneseq
    %v1449 = vshrl.u32 %v1448, 7
    %v1450 = vsub.s32 %v1447, %v1449
    %v1451 = vrot.slane %v1435, %v1450
    %v1453 = vunpack.c.l.s4 1966171168
    %v1454 = vunpack.c.0.s8 %v1453
    %v1455 = vlaneseq
    %v1456 = vshrl.u32 %v1455, 7
    %v1457 = vsub.s32 %v1454, %v1456
    %v1458 = vrot.slane %v1436, %v1457
    %v1460 = vunpack.c.l.s4 1966171168
    %v1461 = vunpack.c.0.s8 %v1460
    %v1462 = vlaneseq
    %v1463 = vshrl.u32 %v1462, 7
    %v1464 = vsub.s32 %v1461, %v1463
    %v1465 = vrot.slane %v1437, %v1464
    %v1466 = vcombine.high %v1444, %v1444
    %v1467 = vcombine.high %v1451, %v1451
    %v1468 = vcombine.high %v1458, %v1458
    %v1469 = vcombine.high %v1465, %v1465
    %v1470 = vcombine.high %v39, %v39
    %v1472 = vunpack.c.l.s4 1966171168
    %v1473 = vunpack.c.0.s8 %v1472
    %v1474 = vlaneseq
    %v1475 = vshrl.u32 %v1474, 7
    %v1476 = vsub.s32 %v1473, %v1475
    %v1477 = vrot.slane %v39, %v1476
    %v1479 = vunpack.c.l.s4 1966171168
    %v1480 = vunpack.c.0.s8 %v1479
    %v1481 = vlaneseq
    %v1482 = vshrl.u32 %v1481, 7
    %v1483 = vsub.s32 %v1480, %v1482
    %v1484 = vrot.slane %v1470, %v1483
    %v1485 = vcombine.high %v1477, %v1477
    %v1486 = vcombine.high %v1484, %v1484
    %v1488 = vunpack.c.l.s4 1966171168
    %v1489 = vunpack.c.0.s8 %v1488
    %v1490 = vlaneseq
    %v1491 = vshrl.u32 %v1490, 7
    %v1492 = vsub.s32 %v1489, %v1491
    %v1493 = vrot.slane %v1477, %v1492
    %v1495 = vunpack.c.l.s4 1966171168
    %v1496 = vunpack.c.0.s8 %v1495
    %v1497 = vlaneseq
    %v1498 = vshrl.u32 %v1497, 7
    %v1499 = vsub.s32 %v1496, %v1498
    %v1500 = vrot.slane %v1484, %v1499
    %v1502 = vunpack.c.l.s4 1966171168
    %v1503 = vunpack.c.0.s8 %v1502
    %v1504 = vlaneseq
    %v1505 = vshrl.u32 %v1504, 7
    %v1506 = vsub.s32 %v1503, %v1505
    %v1507 = vrot.slane %v1485, %v1506
    %v1509 = vunpack.c.l.s4 1966171168
    %v1510 = vunpack.c.0.s8 %v1509
    %v1511 = vlaneseq
    %v1512 = vshrl.u32 %v1511, 7
    %v1513 = vsub.s32 %v1510, %v1512
    %v1514 = vrot.slane %v1486, %v1513
    %v1515 = vcombine.high %v1493, %v1493
    %v1516 = vcombine.high %v1500, %v1500
    %v1517 = vcombine.high %v1507, %v1507
    %v1518 = vcombine.high %v1514, %v1514
    %v1519 = vcombine.high %v40, %v40
    %v1521 = vunpack.c.l.s4 1966171168
    %v1522 = vunpack.c.0.s8 %v1521
    %v1523 = vlaneseq
    %v1524 = vshrl.u32 %v1523, 7
    %v1525 = vsub.s32 %v1522, %v1524
    %v1526 = vrot.slane %v40, %v1525
    %v1528 = vunpack.c.l.s4 1966171168
    %v1529 = vunpack.c.0.s8 %v1528
    %v1530 = vlaneseq
    %v1531 = vshrl.u32 %v1530, 7
    %v1532 = vsub.s32 %v1529, %v1531
    %v1533 = vrot.slane %v1519, %v1532
    %v1534 = vcombine.high %v1526, %v1526
    %v1535 = vcombine.high %v1533, %v1533
    %v1537 = vunpack.c.l.s4 1966171168
    %v1538 = vunpack.c.0.s8 %v1537
    %v1539 = vlaneseq
    %v1540 = vshrl.u32 %v1539, 7
    %v1541 = vsub.s32 %v1538, %v1540
    %v1542 = vrot.slane %v1526, %v1541
    %v1544 = vunpack.c.l.s4 1966171168
    %v1545 = vunpack.c.0.s8 %v1544
    %v1546 = vlaneseq
    %v1547 = vshrl.u32 %v1546, 7
    %v1548 = vsub.s32 %v1545, %v1547
    %v1549 = vrot.slane %v1533, %v1548
    %v1551 = vunpack.c.l.s4 1966171168
    %v1552 = vunpack.c.0.s8 %v1551
    %v1553 = vlaneseq
    %v1554 = vshrl.u32 %v1553, 7
    %v1555 = vsub.s32 %v1552, %v1554
    %v1556 = vrot.slane %v1534, %v1555
    %v1558 = vunpack.c.l.s4 1966171168
    %v1559 = vunpack.c.0.s8 %v1558
    %v1560 = vlaneseq
    %v1561 = vshrl.u32 %v1560, 7
    %v1562 = vsub.s32 %v1559, %v1561
    %v1563 = vrot.slane %v1535, %v1562
    %v1564 = vcombine.high %v1542, %v1542
    %v1565 = vcombine.high %v1549, %v1549
    %v1566 = vcombine.high %v1556, %v1556
    %v1567 = vcombine.high %v1563, %v1563
    %v1568 = vcombine.high %v41, %v41
    %v1570 = vunpack.c.l.s4 1966171168
    %v1571 = vunpack.c.0.s8 %v1570
    %v1572 = vlaneseq
    %v1573 = vshrl.u32 %v1572, 7
    %v1574 = vsub.s32 %v1571, %v1573
    %v1575 = vrot.slane %v41, %v1574
    %v1577 = vunpack.c.l.s4 1966171168
    %v1578 = vunpack.c.0.s8 %v1577
    %v1579 = vlaneseq
    %v1580 = vshrl.u32 %v1579, 7
    %v1581 = vsub.s32 %v1578, %v1580
    %v1582 = vrot.slane %v1568, %v1581
    %v1583 = vcombine.high %v1575, %v1575
    %v1584 = vcombine.high %v1582, %v1582
    %v1586 = vunpack.c.l.s4 1966171168
    %v1587 = vunpack.c.0.s8 %v1586
    %v1588 = vlaneseq
    %v1589 = vshrl.u32 %v1588, 7
    %v1590 = vsub.s32 %v1587, %v1589
    %v1591 = vrot.slane %v1575, %v1590
    %v1593 = vunpack.c.l.s4 1966171168
    %v1594 = vunpack.c.0.s8 %v1593
    %v1595 = vlaneseq
    %v1596 = vshrl.u32 %v1595, 7
    %v1597 = vsub.s32 %v1594, %v1596
    %v1598 = vrot.slane %v1582, %v1597
    %v1600 = vunpack.c.l.s4 1966171168
    %v1601 = vunpack.c.0.s8 %v1600
    %v1602 = vlaneseq
    %v1603 = vshrl.u32 %v1602, 7
    %v1604 = vsub.s32 %v1601, %v1603
    %v1605 = vrot.slane %v1583, %v1604
    %v1607 = vunpack.c.l.s4 1966171168
    %v1608 = vunpack.c.0.s8 %v1607
    %v1609 = vlaneseq
    %v1610 = vshrl.u32 %v1609, 7
    %v1611 = vsub.s32 %v1608, %v1610
    %v1612 = vrot.slane %v1584, %v1611
    %v1613 = vcombine.high %v1591, %v1591
    %v1614 = vcombine.high %v1598, %v1598
    %v1615 = vcombine.high %v1605, %v1605
    %v1616 = vcombine.high %v1612, %v1612
    %v1617 = vcombine.high %v42, %v42
    %v1619 = vunpack.c.l.s4 1966171168
    %v1620 = vunpack.c.0.s8 %v1619
    %v1621 = vlaneseq
    %v1622 = vshrl.u32 %v1621, 7
    %v1623 = vsub.s32 %v1620, %v1622
    %v1624 = vrot.slane %v42, %v1623
    %v1626 = vunpack.c.l.s4 1966171168
    %v1627 = vunpack.c.0.s8 %v1626
    %v1628 = vlaneseq
    %v1629 = vshrl.u32 %v1628, 7
    %v1630 = vsub.s32 %v1627, %v1629
    %v1631 = vrot.slane %v1617, %v1630
    %v1632 = vcombine.high %v1624, %v1624
    %v1633 = vcombine.high %v1631, %v1631
    %v1635 = vunpack.c.l.s4 1966171168
    %v1636 = vunpack.c.0.s8 %v1635
    %v1637 = vlaneseq
    %v1638 = vshrl.u32 %v1637, 7
    %v1639 = vsub.s32 %v1636, %v1638
    %v1640 = vrot.slane %v1624, %v1639
    %v1642 = vunpack.c.l.s4 1966171168
    %v1643 = vunpack.c.0.s8 %v1642
    %v1644 = vlaneseq
    %v1645 = vshrl.u32 %v1644, 7
    %v1646 = vsub.s32 %v1643, %v1645
    %v1647 = vrot.slane %v1631, %v1646
    %v1649 = vunpack.c.l.s4 1966171168
    %v1650 = vunpack.c.0.s8 %v1649
    %v1651 = vlaneseq
    %v1652 = vshrl.u32 %v1651, 7
    %v1653 = vsub.s32 %v1650, %v1652
    %v1654 = vrot.slane %v1632, %v1653
    %v1656 = vunpack.c.l.s4 1966171168
    %v1657 = vunpack.c.0.s8 %v1656
    %v1658 = vlaneseq
    %v1659 = vshrl.u32 %v1658, 7
    %v1660 = vsub.s32 %v1657, %v1659
    %v1661 = vrot.slane %v1633, %v1660
    %v1662 = vcombine.high %v1640, %v1640
    %v1663 = vcombine.high %v1647, %v1647
    %v1664 = vcombine.high %v1654, %v1654
    %v1665 = vcombine.high %v1661, %v1661
    %v1666 = vcombine.high %v43, %v43
    %v1668 = vunpack.c.l.s4 1966171168
    %v1669 = vunpack.c.0.s8 %v1668
    %v1670 = vlaneseq
    %v1671 = vshrl.u32 %v1670, 7
    %v1672 = vsub.s32 %v1669, %v1671
    %v1673 = vrot.slane %v43, %v1672
    %v1675 = vunpack.c.l.s4 1966171168
    %v1676 = vunpack.c.0.s8 %v1675
    %v1677 = vlaneseq
    %v1678 = vshrl.u32 %v1677, 7
    %v1679 = vsub.s32 %v1676, %v1678
    %v1680 = vrot.slane %v1666, %v1679
    %v1681 = vcombine.high %v1673, %v1673
    %v1682 = vcombine.high %v1680, %v1680
    %v1684 = vunpack.c.l.s4 1966171168
    %v1685 = vunpack.c.0.s8 %v1684
    %v1686 = vlaneseq
    %v1687 = vshrl.u32 %v1686, 7
    %v1688 = vsub.s32 %v1685, %v1687
    %v1689 = vrot.slane %v1673, %v1688
    %v1691 = vunpack.c.l.s4 1966171168
    %v1692 = vunpack.c.0.s8 %v1691
    %v1693 = vlaneseq
    %v1694 = vshrl.u32 %v1693, 7
    %v1695 = vsub.s32 %v1692, %v1694
    %v1696 = vrot.slane %v1680, %v1695
    %v1698 = vunpack.c.l.s4 1966171168
    %v1699 = vunpack.c.0.s8 %v1698
    %v1700 = vlaneseq
    %v1701 = vshrl.u32 %v1700, 7
    %v1702 = vsub.s32 %v1699, %v1701
    %v1703 = vrot.slane %v1681, %v1702
    %v1705 = vunpack.c.l.s4 1966171168
    %v1706 = vunpack.c.0.s8 %v1705
    %v1707 = vlaneseq
    %v1708 = vshrl.u32 %v1707, 7
    %v1709 = vsub.s32 %v1706, %v1708
    %v1710 = vrot.slane %v1682, %v1709
    %v1711 = vcombine.high %v1689, %v1689
    %v1712 = vcombine.high %v1696, %v1696
    %v1713 = vcombine.high %v1703, %v1703
    %v1714 = vcombine.high %v1710, %v1710
    %v1715 = vcombine.high %v44, %v44
    %v1717 = vunpack.c.l.s4 1966171168
    %v1718 = vunpack.c.0.s8 %v1717
    %v1719 = vlaneseq
    %v1720 = vshrl.u32 %v1719, 7
    %v1721 = vsub.s32 %v1718, %v1720
    %v1722 = vrot.slane %v44, %v1721
    %v1724 = vunpack.c.l.s4 1966171168
    %v1725 = vunpack.c.0.s8 %v1724
    %v1726 = vlaneseq
    %v1727 = vshrl.u32 %v1726, 7
    %v1728 = vsub.s32 %v1725, %v1727
    %v1729 = vrot.slane %v1715, %v1728
    %v1730 = vcombine.high %v1722, %v1722
    %v1731 = vcombine.high %v1729, %v1729
    %v1733 = vunpack.c.l.s4 1966171168
    %v1734 = vunpack.c.0.s8 %v1733
    %v1735 = vlaneseq
    %v1736 = vshrl.u32 %v1735, 7
    %v1737 = vsub.s32 %v1734, %v1736
    %v1738 = vrot.slane %v1722, %v1737
    %v1740 = vunpack.c.l.s4 1966171168
    %v1741 = vunpack.c.0.s8 %v1740
    %v1742 = vlaneseq
    %v1743 = vshrl.u32 %v1742, 7
    %v1744 = vsub.s32 %v1741, %v1743
    %v1745 = vrot.slane %v1729, %v1744
    %v1747 = vunpack.c.l.s4 1966171168
    %v1748 = vunpack.c.0.s8 %v1747
    %v1749 = vlaneseq
    %v1750 = vshrl.u32 %v1749, 7
    %v1751 = vsub.s32 %v1748, %v1750
    %v1752 = vrot.slane %v1730, %v1751
    %v1754 = vunpack.c.l.s4 1966171168
    %v1755 = vunpack.c.0.s8 %v1754
    %v1756 = vlaneseq
    %v1757 = vshrl.u32 %v1756, 7
    %v1758 = vsub.s32 %v1755, %v1757
    %v1759 = vrot.slane %v1731, %v1758
    %v1760 = vcombine.high %v1738, %v1738
    %v1761 = vcombine.high %v1745, %v1745
    %v1762 = vcombine.high %v1752, %v1752
    %v1763 = vcombine.high %v1759, %v1759
    %v1764 = vcombine.high %v45, %v45
    %v1766 = vunpack.c.l.s4 1966171168
    %v1767 = vunpack.c.0.s8 %v1766
    %v1768 = vlaneseq
    %v1769 = vshrl.u32 %v1768, 7
    %v1770 = vsub.s32 %v1767, %v1769
    %v1771 = vrot.slane %v45, %v1770
    %v1773 = vunpack.c.l.s4 1966171168
    %v1774 = vunpack.c.0.s8 %v1773
    %v1775 = vlaneseq
    %v1776 = vshrl.u32 %v1775, 7
    %v1777 = vsub.s32 %v1774, %v1776
    %v1778 = vrot.slane %v1764, %v1777
    %v1779 = vcombine.high %v1771, %v1771
    %v1780 = vcombine.high %v1778, %v1778
    %v1782 = vunpack.c.l.s4 1966171168
    %v1783 = vunpack.c.0.s8 %v1782
    %v1784 = vlaneseq
    %v1785 = vshrl.u32 %v1784, 7
    %v1786 = vsub.s32 %v1783, %v1785
    %v1787 = vrot.slane %v1771, %v1786
    %v1789 = vunpack.c.l.s4 1966171168
    %v1790 = vunpack.c.0.s8 %v1789
    %v1791 = vlaneseq
    %v1792 = vshrl.u32 %v1791, 7
    %v1793 = vsub.s32 %v1790, %v1792
    %v1794 = vrot.slane %v1778, %v1793
    %v1796 = vunpack.c.l.s4 1966171168
    %v1797 = vunpack.c.0.s8 %v1796
    %v1798 = vlaneseq
    %v1799 = vshrl.u32 %v1798, 7
    %v1800 = vsub.s32 %v1797, %v1799
    %v1801 = vrot.slane %v1779, %v1800
    %v1803 = vunpack.c.l.s4 1966171168
    %v1804 = vunpack.c.0.s8 %v1803
    %v1805 = vlaneseq
    %v1806 = vshrl.u32 %v1805, 7
    %v1807 = vsub.s32 %v1804, %v1806
    %v1808 = vrot.slane %v1780, %v1807
    %v1809 = vcombine.high %v1787, %v1787
    %v1810 = vcombine.high %v1794, %v1794
    %v1811 = vcombine.high %v1801, %v1801
    %v1812 = vcombine.high %v1808, %v1808
    %v1813 = vcombine.high %v46, %v46
    %v1815 = vunpack.c.l.s4 1966171168
    %v1816 = vunpack.c.0.s8 %v1815
    %v1817 = vlaneseq
    %v1818 = vshrl.u32 %v1817, 7
    %v1819 = vsub.s32 %v1816, %v1818
    %v1820 = vrot.slane %v46, %v1819
    %v1822 = vunpack.c.l.s4 1966171168
    %v1823 = vunpack.c.0.s8 %v1822
    %v1824 = vlaneseq
    %v1825 = vshrl.u32 %v1824, 7
    %v1826 = vsub.s32 %v1823, %v1825
    %v1827 = vrot.slane %v1813, %v1826
    %v1828 = vcombine.high %v1820, %v1820
    %v1829 = vcombine.high %v1827, %v1827
    %v1831 = vunpack.c.l.s4 1966171168
    %v1832 = vunpack.c.0.s8 %v1831
    %v1833 = vlaneseq
    %v1834 = vshrl.u32 %v1833, 7
    %v1835 = vsub.s32 %v1832, %v1834
    %v1836 = vrot.slane %v1820, %v1835
    %v1838 = vunpack.c.l.s4 1966171168
    %v1839 = vunpack.c.0.s8 %v1838
    %v1840 = vlaneseq
    %v1841 = vshrl.u32 %v1840, 7
    %v1842 = vsub.s32 %v1839, %v1841
    %v1843 = vrot.slane %v1827, %v1842
    %v1845 = vunpack.c.l.s4 1966171168
    %v1846 = vunpack.c.0.s8 %v1845
    %v1847 = vlaneseq
    %v1848 = vshrl.u32 %v1847, 7
    %v1849 = vsub.s32 %v1846, %v1848
    %v1850 = vrot.slane %v1828, %v1849
    %v1852 = vunpack.c.l.s4 1966171168
    %v1853 = vunpack.c.0.s8 %v1852
    %v1854 = vlaneseq
    %v1855 = vshrl.u32 %v1854, 7
    %v1856 = vsub.s32 %v1853, %v1855
    %v1857 = vrot.slane %v1829, %v1856
    %v1858 = vcombine.high %v1836, %v1836
    %v1859 = vcombine.high %v1843, %v1843
    %v1860 = vcombine.high %v1850, %v1850
    %v1861 = vcombine.high %v1857, %v1857
    %v1862 = vcombine.high %v47, %v47
    %v1864 = vunpack.c.l.s4 1966171168
    %v1865 = vunpack.c.0.s8 %v1864
    %v1866 = vlaneseq
    %v1867 = vshrl.u32 %v1866, 7
    %v1868 = vsub.s32 %v1865, %v1867
    %v1869 = vrot.slane %v47, %v1868
    %v1871 = vunpack.c.l.s4 1966171168
    %v1872 = vunpack.c.0.s8 %v1871
    %v1873 = vlaneseq
    %v1874 = vshrl.u32 %v1873, 7
    %v1875 = vsub.s32 %v1872, %v1874
    %v1876 = vrot.slane %v1862, %v1875
    %v1877 = vcombine.high %v1869, %v1869
    %v1878 = vcombine.high %v1876, %v1876
    %v1880 = vunpack.c.l.s4 1966171168
    %v1881 = vunpack.c.0.s8 %v1880
    %v1882 = vlaneseq
    %v1883 = vshrl.u32 %v1882, 7
    %v1884 = vsub.s32 %v1881, %v1883
    %v1885 = vrot.slane %v1869, %v1884
    %v1887 = vunpack.c.l.s4 1966171168
    %v1888 = vunpack.c.0.s8 %v1887
    %v1889 = vlaneseq
    %v1890 = vshrl.u32 %v1889, 7
    %v1891 = vsub.s32 %v1888, %v1890
    %v1892 = vrot.slane %v1876, %v1891
    %v1894 = vunpack.c.l.s4 1966171168
    %v1895 = vunpack.c.0.s8 %v1894
    %v1896 = vlaneseq
    %v1897 = vshrl.u32 %v1896, 7
    %v1898 = vsub.s32 %v1895, %v1897
    %v1899 = vrot.slane %v1877, %v1898
    %v1901 = vunpack.c.l.s4 1966171168
    %v1902 = vunpack.c.0.s8 %v1901
    %v1903 = vlaneseq
    %v1904 = vshrl.u32 %v1903, 7
    %v1905 = vsub.s32 %v1902, %v1904
    %v1906 = vrot.slane %v1878, %v1905
    %v1907 = vcombine.high %v1885, %v1885
    %v1908 = vcombine.high %v1892, %v1892
    %v1909 = vcombine.high %v1899, %v1899
    %v1910 = vcombine.high %v1906, %v1906
    %v2423 = vunpack.c.l.b16 %v48
    %v2424 = vunpack.c.h.b16 %v48
    %v2425 = vunpack.c.l.b16 %v49
    %v2426 = vunpack.c.h.b16 %v49
    %v2427 = vunpack.c.l.b16 %v50
    %v2428 = vunpack.c.h.b16 %v50
    %v2429 = vunpack.c.l.b16 %v51
    %v2430 = vunpack.c.h.b16 %v51
    %v2431 = vunpack.c.l.b16 %v52
    %v2432 = vunpack.c.h.b16 %v52
    %v2433 = vunpack.c.l.b16 %v53
    %v2434 = vunpack.c.h.b16 %v53
    %v2435 = vunpack.c.l.b16 %v54
    %v2436 = vunpack.c.h.b16 %v54
    %v2437 = vunpack.c.l.b16 %v55
    %v2438 = vunpack.c.h.b16 %v55
    %v2439 = vunpack.c.l.b16 %v56
    %v2440 = vunpack.c.h.b16 %v56
    %v2441 = vunpack.c.l.b16 %v57
    %v2442 = vunpack.c.h.b16 %v57
    %v2443 = vunpack.c.l.b16 %v58
    %v2444 = vunpack.c.h.b16 %v58
    %v2445 = vunpack.c.l.b16 %v59
    %v2446 = vunpack.c.h.b16 %v59
    %v2447 = vunpack.c.l.b16 %v60
    %v2448 = vunpack.c.h.b16 %v60
    %v2449 = vunpack.c.l.b16 %v61
    %v2450 = vunpack.c.h.b16 %v61
    %v2451 = vunpack.c.l.b16 %v62
    %v2452 = vunpack.c.h.b16 %v62
    %v2453 = vunpack.c.l.b16 %v63
    %v2454 = vunpack.c.h.b16 %v63
    %v2455 = vunpack.c.l.b16 %v64
    %v2456 = vunpack.c.h.b16 %v64
    %v2457 = vunpack.c.l.b16 %v65
    %v2458 = vunpack.c.h.b16 %v65
    %v2459 = vunpack.c.l.b16 %v66
    %v2460 = vunpack.c.h.b16 %v66
    %v2461 = vunpack.c.l.b16 %v67
    %v2462 = vunpack.c.h.b16 %v67
    %v2463 = vunpack.c.l.b16 %v68
    %v2464 = vunpack.c.h.b16 %v68
    %v2465 = vunpack.c.l.b16 %v69
    %v2466 = vunpack.c.h.b16 %v69
    %v2467 = vunpack.c.l.b16 %v70
    %v2468 = vunpack.c.h.b16 %v70
    %v2469 = vunpack.c.l.b16 %v71
    %v2470 = vunpack.c.h.b16 %v71
    %v2471 = vunpack.c.l.b16 %v72
    %v2472 = vunpack.c.h.b16 %v72
    %v2473 = vunpack.c.l.b16 %v73
    %v2474 = vunpack.c.h.b16 %v73
    %v2475 = vunpack.c.l.b16 %v74
    %v2476 = vunpack.c.h.b16 %v74
    %v2477 = vunpack.c.l.b16 %v75
    %v2478 = vunpack.c.h.b16 %v75
    %v2479 = vunpack.c.l.b16 %v76
    %v2480 = vunpack.c.h.b16 %v76
    %v2481 = vunpack.c.l.b16 %v77
    %v2482 = vunpack.c.h.b16 %v77
    %v2483 = vunpack.c.l.b16 %v78
    %v2484 = vunpack.c.h.b16 %v78
    %v2485 = vunpack.c.l.b16 %v79
    %v2486 = vunpack.c.h.b16 %v79
    %v2487 = vunpack.c.l.b16 %v80
    %v2488 = vunpack.c.h.b16 %v80
    %v2489 = vunpack.c.l.b16 %v81
    %v2490 = vunpack.c.h.b16 %v81
    %v2491 = vunpack.c.l.b16 %v82
    %v2492 = vunpack.c.h.b16 %v82
    %v2493 = vunpack.c.l.b16 %v83
    %v2494 = vunpack.c.h.b16 %v83
    %v2495 = vunpack.c.l.b16 %v84
    %v2496 = vunpack.c.h.b16 %v84
    %v2497 = vunpack.c.l.b16 %v85
    %v2498 = vunpack.c.h.b16 %v85
    %v2499 = vunpack.c.l.b16 %v86
    %v2500 = vunpack.c.h.b16 %v86
    %v2501 = vunpack.c.l.b16 %v87
    %v2502 = vunpack.c.h.b16 %v87
    %v2503 = vunpack.c.l.b16 %v88
    %v2504 = vunpack.c.h.b16 %v88
    %v2505 = vunpack.c.l.b16 %v89
    %v2506 = vunpack.c.h.b16 %v89
    %v2507 = vunpack.c.l.b16 %v90
    %v2508 = vunpack.c.h.b16 %v90
    %v2509 = vunpack.c.l.b16 %v91
    %v2510 = vunpack.c.h.b16 %v91
    %v2511 = vunpack.c.l.b16 %v92
    %v2512 = vunpack.c.h.b16 %v92
    %v2513 = vunpack.c.l.b16 %v93
    %v2514 = vunpack.c.h.b16 %v93
    %v2515 = vunpack.c.l.b16 %v94
    %v2516 = vunpack.c.h.b16 %v94
    %v2517 = vunpack.c.l.b16 %v95
    %v2518 = vunpack.c.h.b16 %v95
    %v2519 = vunpack.c.l.b16 %v96
    %v2520 = vunpack.c.h.b16 %v96
    %v2521 = vunpack.c.l.b16 %v97
    %v2522 = vunpack.c.h.b16 %v97
    %v2523 = vunpack.c.l.b16 %v98
    %v2524 = vunpack.c.h.b16 %v98
    %v2525 = vunpack.c.l.b16 %v99
    %v2526 = vunpack.c.h.b16 %v99
    %v2527 = vunpack.c.l.b16 %v100
    %v2528 = vunpack.c.h.b16 %v100
    %v2529 = vunpack.c.l.b16 %v101
    %v2530 = vunpack.c.h.b16 %v101
    %v2531 = vunpack.c.l.b16 %v102
    %v2532 = vunpack.c.h.b16 %v102
    %v2533 = vunpack.c.l.b16 %v103
    %v2534 = vunpack.c.h.b16 %v103
    %v2535 = vunpack.c.l.b16 %v104
    %v2536 = vunpack.c.h.b16 %v104
    %v2537 = vunpack.c.l.b16 %v105
    %v2538 = vunpack.c.h.b16 %v105
    %v2539 = vunpack.c.l.b16 %v106
    %v2540 = vunpack.c.h.b16 %v106
    %v2541 = vunpack.c.l.b16 %v107
    %v2542 = vunpack.c.h.b16 %v107
    %v2543 = vunpack.c.l.b16 %v108
    %v2544 = vunpack.c.h.b16 %v108
    %v2545 = vunpack.c.l.b16 %v109
    %v2546 = vunpack.c.h.b16 %v109
    %v2547 = vunpack.c.l.b16 %v110
    %v2548 = vunpack.c.h.b16 %v110
    %v2549 = vunpack.c.l.b16 %v111
    %v2550 = vunpack.c.h.b16 %v111
    %v2551 = vunpack.c.l.b16 %v112
    %v2552 = vunpack.c.h.b16 %v112
    %v2553 = vunpack.c.l.b16 %v113
    %v2554 = vunpack.c.h.b16 %v113
    %v2555 = vunpack.c.l.b16 %v114
    %v2556 = vunpack.c.h.b16 %v114
    %v2557 = vunpack.c.l.b16 %v115
    %v2558 = vunpack.c.h.b16 %v115
    %v2559 = vunpack.c.l.b16 %v116
    %v2560 = vunpack.c.h.b16 %v116
    %v2561 = vunpack.c.l.b16 %v117
    %v2562 = vunpack.c.h.b16 %v117
    %v2563 = vunpack.c.l.b16 %v118
    %v2564 = vunpack.c.h.b16 %v118
    %v2565 = vunpack.c.l.b16 %v119
    %v2566 = vunpack.c.h.b16 %v119
    %v2567 = vunpack.c.l.b16 %v120
    %v2568 = vunpack.c.h.b16 %v120
    %v2569 = vunpack.c.l.b16 %v121
    %v2570 = vunpack.c.h.b16 %v121
    %v2571 = vunpack.c.l.b16 %v122
    %v2572 = vunpack.c.h.b16 %v122
    %v2573 = vunpack.c.l.b16 %v123
    %v2574 = vunpack.c.h.b16 %v123
    %v2575 = vunpack.c.l.b16 %v124
    %v2576 = vunpack.c.h.b16 %v124
    %v2577 = vunpack.c.l.b16 %v125
    %v2578 = vunpack.c.h.b16 %v125
    %v2579 = vunpack.c.l.b16 %v126
    %v2580 = vunpack.c.h.b16 %v126
    %v2581 = vunpack.c.l.b16 %v127
    %v2582 = vunpack.c.h.b16 %v127
    %v2583 = vunpack.c.l.b16 %v128
    %v2584 = vunpack.c.h.b16 %v128
    %v2585 = vunpack.c.l.b16 %v129
    %v2586 = vunpack.c.h.b16 %v129
    %v2587 = vunpack.c.l.b16 %v130
    %v2588 = vunpack.c.h.b16 %v130
    %v2589 = vunpack.c.l.b16 %v131
    %v2590 = vunpack.c.h.b16 %v131
    %v2591 = vunpack.c.l.b16 %v132
    %v2592 = vunpack.c.h.b16 %v132
    %v2593 = vunpack.c.l.b16 %v133
    %v2594 = vunpack.c.h.b16 %v133
    %v2595 = vunpack.c.l.b16 %v134
    %v2596 = vunpack.c.h.b16 %v134
    %v2597 = vunpack.c.l.b16 %v135
    %v2598 = vunpack.c.h.b16 %v135
    %v2599 = vunpack.c.l.b16 %v136
    %v2600 = vunpack.c.h.b16 %v136
    %v2601 = vunpack.c.l.b16 %v137
    %v2602 = vunpack.c.h.b16 %v137
    %v2603 = vunpack.c.l.b16 %v138
    %v2604 = vunpack.c.h.b16 %v138
    %v2605 = vunpack.c.l.b16 %v139
    %v2606 = vunpack.c.h.b16 %v139
    %v2607 = vunpack.c.l.b16 %v140
    %v2608 = vunpack.c.h.b16 %v140
    %v2609 = vunpack.c.l.b16 %v141
    %v2610 = vunpack.c.h.b16 %v141
    %v2611 = vunpack.c.l.b16 %v142
    %v2612 = vunpack.c.h.b16 %v142
    %v2613 = vunpack.c.l.b16 %v143
    %v2614 = vunpack.c.h.b16 %v143
    %v2615 = vunpack.c.l.b16 %v144
    %v2616 = vunpack.c.h.b16 %v144
    %v2617 = vunpack.c.l.b16 %v145
    %v2618 = vunpack.c.h.b16 %v145
    %v2619 = vunpack.c.l.b16 %v146
    %v2620 = vunpack.c.h.b16 %v146
    %v2621 = vunpack.c.l.b16 %v147
    %v2622 = vunpack.c.h.b16 %v147
    %v2623 = vunpack.c.l.b16 %v148
    %v2624 = vunpack.c.h.b16 %v148
    %v2625 = vunpack.c.l.b16 %v149
    %v2626 = vunpack.c.h.b16 %v149
    %v2627 = vunpack.c.l.b16 %v150
    %v2628 = vunpack.c.h.b16 %v150
    %v2629 = vunpack.c.l.b16 %v151
    %v2630 = vunpack.c.h.b16 %v151
    %v2631 = vunpack.c.l.b16 %v152
    %v2632 = vunpack.c.h.b16 %v152
    %v2633 = vunpack.c.l.b16 %v153
    %v2634 = vunpack.c.h.b16 %v153
    %v2635 = vunpack.c.l.b16 %v154
    %v2636 = vunpack.c.h.b16 %v154
    %v2637 = vunpack.c.l.b16 %v155
    %v2638 = vunpack.c.h.b16 %v155
    %v2639 = vunpack.c.l.b16 %v156
    %v2640 = vunpack.c.h.b16 %v156
    %v2641 = vunpack.c.l.b16 %v157
    %v2642 = vunpack.c.h.b16 %v157
    %v2643 = vunpack.c.l.b16 %v158
    %v2644 = vunpack.c.h.b16 %v158
    %v2645 = vunpack.c.l.b16 %v159
    %v2646 = vunpack.c.h.b16 %v159
    %v2647 = vunpack.c.l.b16 %v160
    %v2648 = vunpack.c.h.b16 %v160
    %v2649 = vunpack.c.l.b16 %v161
    %v2650 = vunpack.c.h.b16 %v161
    %v2651 = vunpack.c.l.b16 %v162
    %v2652 = vunpack.c.h.b16 %v162
    %v2653 = vunpack.c.l.b16 %v163
    %v2654 = vunpack.c.h.b16 %v163
    %v2655 = vunpack.c.l.b16 %v164
    %v2656 = vunpack.c.h.b16 %v164
    %v2657 = vunpack.c.l.b16 %v165
    %v2658 = vunpack.c.h.b16 %v165
    %v2659 = vunpack.c.l.b16 %v166
    %v2660 = vunpack.c.h.b16 %v166
    %v2661 = vunpack.c.l.b16 %v167
    %v2662 = vunpack.c.h.b16 %v167
    %v2663 = vunpack.c.l.b16 %v168
    %v2664 = vunpack.c.h.b16 %v168
    %v2665 = vunpack.c.l.b16 %v169
    %v2666 = vunpack.c.h.b16 %v169
    %v2667 = vunpack.c.l.b16 %v170
    %v2668 = vunpack.c.h.b16 %v170
    %v2669 = vunpack.c.l.b16 %v171
    %v2670 = vunpack.c.h.b16 %v171
    %v2671 = vunpack.c.l.b16 %v172
    %v2672 = vunpack.c.h.b16 %v172
    %v2673 = vunpack.c.l.b16 %v173
    %v2674 = vunpack.c.h.b16 %v173
    %v2675 = vunpack.c.l.b16 %v174
    %v2676 = vunpack.c.h.b16 %v174
    %v2677 = vunpack.c.l.b16 %v175
    %v2678 = vunpack.c.h.b16 %v175
    %v2679 = vunpack.c.l.b16 %v176
    %v2680 = vunpack.c.h.b16 %v176
    %v2681 = vunpack.c.l.b16 %v177
    %v2682 = vunpack.c.h.b16 %v177
    %v2683 = vunpack.c.l.b16 %v178
    %v2684 = vunpack.c.h.b16 %v178
    %v2685 = vunpack.c.l.b16 %v179
    %v2686 = vunpack.c.h.b16 %v179
    %v2687 = vunpack.c.l.b16 %v180
    %v2688 = vunpack.c.h.b16 %v180
    %v2689 = vunpack.c.l.b16 %v181
    %v2690 = vunpack.c.h.b16 %v181
    %v2691 = vunpack.c.l.b16 %v182
    %v2692 = vunpack.c.h.b16 %v182
    %v2693 = vunpack.c.l.b16 %v183
    %v2694 = vunpack.c.h.b16 %v183
    %v2695 = vunpack.c.l.b16 %v184
    %v2696 = vunpack.c.h.b16 %v184
    %v2697 = vunpack.c.l.b16 %v185
    %v2698 = vunpack.c.h.b16 %v185
    %v2699 = vunpack.c.l.b16 %v186
    %v2700 = vunpack.c.h.b16 %v186
    %v2701 = vunpack.c.l.b16 %v187
    %v2702 = vunpack.c.h.b16 %v187
    %v2703 = vunpack.c.l.b16 %v188
    %v2704 = vunpack.c.h.b16 %v188
    %v2705 = vunpack.c.l.b16 %v189
    %v2706 = vunpack.c.h.b16 %v189
    %v2707 = vunpack.c.l.b16 %v190
    %v2708 = vunpack.c.h.b16 %v190
    %v2709 = vunpack.c.l.b16 %v191
    %v2710 = vunpack.c.h.b16 %v191
    %v2711 = vunpack.c.l.b16 %v192
    %v2712 = vunpack.c.h.b16 %v192
    %v2713 = vunpack.c.l.b16 %v193
    %v2714 = vunpack.c.h.b16 %v193
    %v2715 = vunpack.c.l.b16 %v194
    %v2716 = vunpack.c.h.b16 %v194
    %v2717 = vunpack.c.l.b16 %v195
    %v2718 = vunpack.c.h.b16 %v195
    %v2719 = vunpack.c.l.b16 %v196
    %v2720 = vunpack.c.h.b16 %v196
    %v2721 = vunpack.c.l.b16 %v197
    %v2722 = vunpack.c.h.b16 %v197
    %v2723 = vunpack.c.l.b16 %v198
    %v2724 = vunpack.c.h.b16 %v198
    %v2725 = vunpack.c.l.b16 %v199
    %v2726 = vunpack.c.h.b16 %v199
    %v2727 = vunpack.c.l.b16 %v200
    %v2728 = vunpack.c.h.b16 %v200
    %v2729 = vunpack.c.l.b16 %v201
    %v2730 = vunpack.c.h.b16 %v201
    %v2731 = vunpack.c.l.b16 %v202
    %v2732 = vunpack.c.h.b16 %v202
    %v2733 = vunpack.c.l.b16 %v203
    %v2734 = vunpack.c.h.b16 %v203
    %v2735 = vunpack.c.l.b16 %v204
    %v2736 = vunpack.c.h.b16 %v204
    %v2737 = vunpack.c.l.b16 %v205
    %v2738 = vunpack.c.h.b16 %v205
    %v2739 = vunpack.c.l.b16 %v206
    %v2740 = vunpack.c.h.b16 %v206
    %v2741 = vunpack.c.l.b16 %v207
    %v2742 = vunpack.c.h.b16 %v207
    %v2743 = vunpack.c.l.b16 %v208
    %v2744 = vunpack.c.h.b16 %v208
    %v2745 = vunpack.c.l.b16 %v209
    %v2746 = vunpack.c.h.b16 %v209
    %v2747 = vunpack.c.l.b16 %v210
    %v2748 = vunpack.c.h.b16 %v210
    %v2749 = vunpack.c.l.b16 %v211
    %v2750 = vunpack.c.h.b16 %v211
    %v2751 = vunpack.c.l.b16 %v212
    %v2752 = vunpack.c.h.b16 %v212
    %v2753 = vunpack.c.l.b16 %v213
    %v2754 = vunpack.c.h.b16 %v213
    %v2755 = vunpack.c.l.b16 %v214
    %v2756 = vunpack.c.h.b16 %v214
    %v2757 = vunpack.c.l.b16 %v215
    %v2758 = vunpack.c.h.b16 %v215
    %v2759 = vunpack.c.l.b16 %v216
    %v2760 = vunpack.c.h.b16 %v216
    %v2761 = vunpack.c.l.b16 %v217
    %v2762 = vunpack.c.h.b16 %v217
    %v2763 = vunpack.c.l.b16 %v218
    %v2764 = vunpack.c.h.b16 %v218
    %v2765 = vunpack.c.l.b16 %v219
    %v2766 = vunpack.c.h.b16 %v219
    %v2767 = vunpack.c.l.b16 %v220
    %v2768 = vunpack.c.h.b16 %v220
    %v2769 = vunpack.c.l.b16 %v221
    %v2770 = vunpack.c.h.b16 %v221
    %v2771 = vunpack.c.l.b16 %v222
    %v2772 = vunpack.c.h.b16 %v222
    %v2773 = vunpack.c.l.b16 %v223
    %v2774 = vunpack.c.h.b16 %v223
    %v2775 = vunpack.c.l.b16 %v224
    %v2776 = vunpack.c.h.b16 %v224
    %v2777 = vunpack.c.l.b16 %v225
    %v2778 = vunpack.c.h.b16 %v225
    %v2779 = vunpack.c.l.b16 %v226
    %v2780 = vunpack.c.h.b16 %v226
    %v2781 = vunpack.c.l.b16 %v227
    %v2782 = vunpack.c.h.b16 %v227
    %v2783 = vunpack.c.l.b16 %v228
    %v2784 = vunpack.c.h.b16 %v228
    %v2785 = vunpack.c.l.b16 %v229
    %v2786 = vunpack.c.h.b16 %v229
    %v2787 = vunpack.c.l.b16 %v230
    %v2788 = vunpack.c.h.b16 %v230
    %v2789 = vunpack.c.l.b16 %v231
    %v2790 = vunpack.c.h.b16 %v231
    %v2791 = vunpack.c.l.b16 %v232
    %v2792 = vunpack.c.h.b16 %v232
    %v2793 = vunpack.c.l.b16 %v233
    %v2794 = vunpack.c.h.b16 %v233
    %v2795 = vunpack.c.l.b16 %v234
    %v2796 = vunpack.c.h.b16 %v234
    %v2797 = vunpack.c.l.b16 %v235
    %v2798 = vunpack.c.h.b16 %v235
    %v2799 = vunpack.c.l.b16 %v236
    %v2800 = vunpack.c.h.b16 %v236
    %v2801 = vunpack.c.l.b16 %v237
    %v2802 = vunpack.c.h.b16 %v237
    %v2803 = vunpack.c.l.b16 %v238
    %v2804 = vunpack.c.h.b16 %v238
    %v2805 = vunpack.c.l.b16 %v239
    %v2806 = vunpack.c.h.b16 %v239
    %v2807 = vunpack.c.l.b16 %v240
    %v2808 = vunpack.c.h.b16 %v240
    %v2809 = vunpack.c.l.b16 %v241
    %v2810 = vunpack.c.h.b16 %v241
    %v2811 = vunpack.c.l.b16 %v242
    %v2812 = vunpack.c.h.b16 %v242
    %v2813 = vunpack.c.l.b16 %v243
    %v2814 = vunpack.c.h.b16 %v243
    %v2815 = vunpack.c.l.b16 %v244
    %v2816 = vunpack.c.h.b16 %v244
    %v2817 = vunpack.c.l.b16 %v245
    %v2818 = vunpack.c.h.b16 %v245
    %v2819 = vunpack.c.l.b16 %v246
    %v2820 = vunpack.c.h.b16 %v246
    %v2821 = vunpack.c.l.b16 %v247
    %v2822 = vunpack.c.h.b16 %v247
    %v2823 = vunpack.c.l.b16 %v248
    %v2824 = vunpack.c.h.b16 %v248
    %v2825 = vunpack.c.l.b16 %v249
    %v2826 = vunpack.c.h.b16 %v249
    %v2827 = vunpack.c.l.b16 %v250
    %v2828 = vunpack.c.h.b16 %v250
    %v2829 = vunpack.c.l.b16 %v251
    %v2830 = vunpack.c.h.b16 %v251
    %v2831 = vunpack.c.l.b16 %v252
    %v2832 = vunpack.c.h.b16 %v252
    %v2833 = vunpack.c.l.b16 %v253
    %v2834 = vunpack.c.h.b16 %v253
    %v2835 = vunpack.c.l.b16 %v254
    %v2836 = vunpack.c.h.b16 %v254
    %v2837 = vunpack.c.l.b16 %v255
    %v2838 = vunpack.c.h.b16 %v255
    %v2839 = vunpack.c.l.b16 %v256
    %v2840 = vunpack.c.h.b16 %v256
    %v2841 = vunpack.c.l.b16 %v257
    %v2842 = vunpack.c.h.b16 %v257
    %v2843 = vunpack.c.l.b16 %v258
    %v2844 = vunpack.c.h.b16 %v258
    %v2845 = vunpack.c.l.b16 %v259
    %v2846 = vunpack.c.h.b16 %v259
    %v2847 = vunpack.c.l.b16 %v260
    %v2848 = vunpack.c.h.b16 %v260
    %v2849 = vunpack.c.l.b16 %v261
    %v2850 = vunpack.c.h.b16 %v261
    %v2851 = vunpack.c.l.b16 %v262
    %v2852 = vunpack.c.h.b16 %v262
    %v2853 = vunpack.c.l.b16 %v263
    %v2854 = vunpack.c.h.b16 %v263
    %v2855 = vunpack.c.l.b16 %v264
    %v2856 = vunpack.c.h.b16 %v264
    %v2857 = vunpack.c.l.b16 %v265
    %v2858 = vunpack.c.h.b16 %v265
    %v2859 = vunpack.c.l.b16 %v266
    %v2860 = vunpack.c.h.b16 %v266
    %v2861 = vunpack.c.l.b16 %v267
    %v2862 = vunpack.c.h.b16 %v267
    %v2863 = vunpack.c.l.b16 %v268
    %v2864 = vunpack.c.h.b16 %v268
    %v2865 = vunpack.c.l.b16 %v269
    %v2866 = vunpack.c.h.b16 %v269
    %v2867 = vunpack.c.l.b16 %v270
    %v2868 = vunpack.c.h.b16 %v270
    %v2869 = vunpack.c.l.b16 %v271
    %v2870 = vunpack.c.h.b16 %v271
    %v2871 = vunpack.c.l.b16 %v272
    %v2872 = vunpack.c.h.b16 %v272
    %v2873 = vunpack.c.l.b16 %v273
    %v2874 = vunpack.c.h.b16 %v273
    %v2875 = vunpack.c.l.b16 %v274
    %v2876 = vunpack.c.h.b16 %v274
    %v2877 = vunpack.c.l.b16 %v275
    %v2878 = vunpack.c.h.b16 %v275
    %v2879 = vunpack.c.l.b16 %v276
    %v2880 = vunpack.c.h.b16 %v276
    %v2881 = vunpack.c.l.b16 %v277
    %v2882 = vunpack.c.h.b16 %v277
    %v2883 = vunpack.c.l.b16 %v278
    %v2884 = vunpack.c.h.b16 %v278
    %v2885 = vunpack.c.l.b16 %v279
    %v2886 = vunpack.c.h.b16 %v279
    %v2887 = vunpack.c.l.b16 %v280
    %v2888 = vunpack.c.h.b16 %v280
    %v2889 = vunpack.c.l.b16 %v281
    %v2890 = vunpack.c.h.b16 %v281
    %v2891 = vunpack.c.l.b16 %v282
    %v2892 = vunpack.c.h.b16 %v282
    %v2893 = vunpack.c.l.b16 %v283
    %v2894 = vunpack.c.h.b16 %v283
    %v2895 = vunpack.c.l.b16 %v284
    %v2896 = vunpack.c.h.b16 %v284
    %v2897 = vunpack.c.l.b16 %v285
    %v2898 = vunpack.c.h.b16 %v285
    %v2899 = vunpack.c.l.b16 %v286
    %v2900 = vunpack.c.h.b16 %v286
    %v2901 = vunpack.c.l.b16 %v287
    %v2902 = vunpack.c.h.b16 %v287
    %v2903 = vunpack.c.l.b16 %v288
    %v2904 = vunpack.c.h.b16 %v288
    %v2905 = vunpack.c.l.b16 %v289
    %v2906 = vunpack.c.h.b16 %v289
    %v2907 = vunpack.c.l.b16 %v290
    %v2908 = vunpack.c.h.b16 %v290
    %v2909 = vunpack.c.l.b16 %v291
    %v2910 = vunpack.c.h.b16 %v291
    %v2911 = vunpack.c.l.b16 %v292
    %v2912 = vunpack.c.h.b16 %v292
    %v2913 = vunpack.c.l.b16 %v293
    %v2914 = vunpack.c.h.b16 %v293
    %v2915 = vunpack.c.l.b16 %v294
    %v2916 = vunpack.c.h.b16 %v294
    %v2917 = vunpack.c.l.b16 %v295
    %v2918 = vunpack.c.h.b16 %v295
    %v2919 = vunpack.c.l.b16 %v296
    %v2920 = vunpack.c.h.b16 %v296
    %v2921 = vunpack.c.l.b16 %v297
    %v2922 = vunpack.c.h.b16 %v297
    %v2923 = vunpack.c.l.b16 %v298
    %v2924 = vunpack.c.h.b16 %v298
    %v2925 = vunpack.c.l.b16 %v299
    %v2926 = vunpack.c.h.b16 %v299
    %v2927 = vunpack.c.l.b16 %v300
    %v2928 = vunpack.c.h.b16 %v300
    %v2929 = vunpack.c.l.b16 %v301
    %v2930 = vunpack.c.h.b16 %v301
    %v2931 = vunpack.c.l.b16 %v302
    %v2932 = vunpack.c.h.b16 %v302
    %v2933 = vunpack.c.l.b16 %v303
    %v2934 = vunpack.c.h.b16 %v303
    %v2935 = vpack.c.b16 %v2679, %v2423
    %v2936 = vpack.c.b16 %v2680, %v2424
    %v2937 = vpack.c.b16 %v2681, %v2425
    %v2938 = vpack.c.b16 %v2682, %v2426
    %v2939 = vpack.c.b16 %v2683, %v2427
    %v2940 = vpack.c.b16 %v2684, %v2428
    %v2941 = vpack.c.b16 %v2685, %v2429
    %v2942 = vpack.c.b16 %v2686, %v2430
    %v2943 = vpack.c.b16 %v2687, %v2431
    %v2944 = vpack.c.b16 %v2688, %v2432
    %v2945 = vpack.c.b16 %v2689, %v2433
    %v2946 = vpack.c.b16 %v2690, %v2434
    %v2947 = vpack.c.b16 %v2691, %v2435
    %v2948 = vpack.c.b16 %v2692, %v2436
    %v2949 = vpack.c.b16 %v2693, %v2437
    %v2950 = vpack.c.b16 %v2694, %v2438
    %v2951 = vpack.c.b16 %v2695, %v2439
    %v2952 = vpack.c.b16 %v2696, %v2440
    %v2953 = vpack.c.b16 %v2697, %v2441
    %v2954 = vpack.c.b16 %v2698, %v2442
    %v2955 = vpack.c.b16 %v2699, %v2443
    %v2956 = vpack.c.b16 %v2700, %v2444
    %v2957 = vpack.c.b16 %v2701, %v2445
    %v2958 = vpack.c.b16 %v2702, %v2446
    %v2959 = vpack.c.b16 %v2703, %v2447
    %v2960 = vpack.c.b16 %v2704, %v2448
    %v2961 = vpack.c.b16 %v2705, %v2449
    %v2962 = vpack.c.b16 %v2706, %v2450
    %v2963 = vpack.c.b16 %v2707, %v2451
    %v2964 = vpack.c.b16 %v2708, %v2452
    %v2965 = vpack.c.b16 %v2709, %v2453
    %v2966 = vpack.c.b16 %v2710, %v2454
    %v2967 = vpack.c.b16 %v2711, %v2455
    %v2968 = vpack.c.b16 %v2712, %v2456
    %v2969 = vpack.c.b16 %v2713, %v2457
    %v2970 = vpack.c.b16 %v2714, %v2458
    %v2971 = vpack.c.b16 %v2715, %v2459
    %v2972 = vpack.c.b16 %v2716, %v2460
    %v2973 = vpack.c.b16 %v2717, %v2461
    %v2974 = vpack.c.b16 %v2718, %v2462
    %v2975 = vpack.c.b16 %v2719, %v2463
    %v2976 = vpack.c.b16 %v2720, %v2464
    %v2977 = vpack.c.b16 %v2721, %v2465
    %v2978 = vpack.c.b16 %v2722, %v2466
    %v2979 = vpack.c.b16 %v2723, %v2467
    %v2980 = vpack.c.b16 %v2724, %v2468
    %v2981 = vpack.c.b16 %v2725, %v2469
    %v2982 = vpack.c.b16 %v2726, %v2470
    %v2983 = vpack.c.b16 %v2727, %v2471
    %v2984 = vpack.c.b16 %v2728, %v2472
    %v2985 = vpack.c.b16 %v2729, %v2473
    %v2986 = vpack.c.b16 %v2730, %v2474
    %v2987 = vpack.c.b16 %v2731, %v2475
    %v2988 = vpack.c.b16 %v2732, %v2476
    %v2989 = vpack.c.b16 %v2733, %v2477
    %v2990 = vpack.c.b16 %v2734, %v2478
    %v2991 = vpack.c.b16 %v2735, %v2479
    %v2992 = vpack.c.b16 %v2736, %v2480
    %v2993 = vpack.c.b16 %v2737, %v2481
    %v2994 = vpack.c.b16 %v2738, %v2482
    %v2995 = vpack.c.b16 %v2739, %v2483
    %v2996 = vpack.c.b16 %v2740, %v2484
    %v2997 = vpack.c.b16 %v2741, %v2485
    %v2998 = vpack.c.b16 %v2742, %v2486
    %v2999 = vpack.c.b16 %v2743, %v2487
    %v3000 = vpack.c.b16 %v2744, %v2488
    %v3001 = vpack.c.b16 %v2745, %v2489
    %v3002 = vpack.c.b16 %v2746, %v2490
    %v3003 = vpack.c.b16 %v2747, %v2491
    %v3004 = vpack.c.b16 %v2748, %v2492
    %v3005 = vpack.c.b16 %v2749, %v2493
    %v3006 = vpack.c.b16 %v2750, %v2494
    %v3007 = vpack.c.b16 %v2751, %v2495
    %v3008 = vpack.c.b16 %v2752, %v2496
    %v3009 = vpack.c.b16 %v2753, %v2497
    %v3010 = vpack.c.b16 %v2754, %v2498
    %v3011 = vpack.c.b16 %v2755, %v2499
    %v3012 = vpack.c.b16 %v2756, %v2500
    %v3013 = vpack.c.b16 %v2757, %v2501
    %v3014 = vpack.c.b16 %v2758, %v2502
    %v3015 = vpack.c.b16 %v2759, %v2503
    %v3016 = vpack.c.b16 %v2760, %v2504
    %v3017 = vpack.c.b16 %v2761, %v2505
    %v3018 = vpack.c.b16 %v2762, %v2506
    %v3019 = vpack.c.b16 %v2763, %v2507
    %v3020 = vpack.c.b16 %v2764, %v2508
    %v3021 = vpack.c.b16 %v2765, %v2509
    %v3022 = vpack.c.b16 %v2766, %v2510
    %v3023 = vpack.c.b16 %v2767, %v2511
    %v3024 = vpack.c.b16 %v2768, %v2512
    %v3025 = vpack.c.b16 %v2769, %v2513
    %v3026 = vpack.c.b16 %v2770, %v2514
    %v3027 = vpack.c.b16 %v2771, %v2515
    %v3028 = vpack.c.b16 %v2772, %v2516
    %v3029 = vpack.c.b16 %v2773, %v2517
    %v3030 = vpack.c.b16 %v2774, %v2518
    %v3031 = vpack.c.b16 %v2775, %v2519
    %v3032 = vpack.c.b16 %v2776, %v2520
    %v3033 = vpack.c.b16 %v2777, %v2521
    %v3034 = vpack.c.b16 %v2778, %v2522
    %v3035 = vpack.c.b16 %v2779, %v2523
    %v3036 = vpack.c.b16 %v2780, %v2524
    %v3037 = vpack.c.b16 %v2781, %v2525
    %v3038 = vpack.c.b16 %v2782, %v2526
    %v3039 = vpack.c.b16 %v2783, %v2527
    %v3040 = vpack.c.b16 %v2784, %v2528
    %v3041 = vpack.c.b16 %v2785, %v2529
    %v3042 = vpack.c.b16 %v2786, %v2530
    %v3043 = vpack.c.b16 %v2787, %v2531
    %v3044 = vpack.c.b16 %v2788, %v2532
    %v3045 = vpack.c.b16 %v2789, %v2533
    %v3046 = vpack.c.b16 %v2790, %v2534
    %v3047 = vpack.c.b16 %v2791, %v2535
    %v3048 = vpack.c.b16 %v2792, %v2536
    %v3049 = vpack.c.b16 %v2793, %v2537
    %v3050 = vpack.c.b16 %v2794, %v2538
    %v3051 = vpack.c.b16 %v2795, %v2539
    %v3052 = vpack.c.b16 %v2796, %v2540
    %v3053 = vpack.c.b16 %v2797, %v2541
    %v3054 = vpack.c.b16 %v2798, %v2542
    %v3055 = vpack.c.b16 %v2799, %v2543
    %v3056 = vpack.c.b16 %v2800, %v2544
    %v3057 = vpack.c.b16 %v2801, %v2545
    %v3058 = vpack.c.b16 %v2802, %v2546
    %v3059 = vpack.c.b16 %v2803, %v2547
    %v3060 = vpack.c.b16 %v2804, %v2548
    %v3061 = vpack.c.b16 %v2805, %v2549
    %v3062 = vpack.c.b16 %v2806, %v2550
    %v3063 = vpack.c.b16 %v2807, %v2551
    %v3064 = vpack.c.b16 %v2808, %v2552
    %v3065 = vpack.c.b16 %v2809, %v2553
    %v3066 = vpack.c.b16 %v2810, %v2554
    %v3067 = vpack.c.b16 %v2811, %v2555
    %v3068 = vpack.c.b16 %v2812, %v2556
    %v3069 = vpack.c.b16 %v2813, %v2557
    %v3070 = vpack.c.b16 %v2814, %v2558
    %v3071 = vpack.c.b16 %v2815, %v2559
    %v3072 = vpack.c.b16 %v2816, %v2560
    %v3073 = vpack.c.b16 %v2817, %v2561
    %v3074 = vpack.c.b16 %v2818, %v2562
    %v3075 = vpack.c.b16 %v2819, %v2563
    %v3076 = vpack.c.b16 %v2820, %v2564
    %v3077 = vpack.c.b16 %v2821, %v2565
    %v3078 = vpack.c.b16 %v2822, %v2566
    %v3079 = vpack.c.b16 %v2823, %v2567
    %v3080 = vpack.c.b16 %v2824, %v2568
    %v3081 = vpack.c.b16 %v2825, %v2569
    %v3082 = vpack.c.b16 %v2826, %v2570
    %v3083 = vpack.c.b16 %v2827, %v2571
    %v3084 = vpack.c.b16 %v2828, %v2572
    %v3085 = vpack.c.b16 %v2829, %v2573
    %v3086 = vpack.c.b16 %v2830, %v2574
    %v3087 = vpack.c.b16 %v2831, %v2575
    %v3088 = vpack.c.b16 %v2832, %v2576
    %v3089 = vpack.c.b16 %v2833, %v2577
    %v3090 = vpack.c.b16 %v2834, %v2578
    %v3091 = vpack.c.b16 %v2835, %v2579
    %v3092 = vpack.c.b16 %v2836, %v2580
    %v3093 = vpack.c.b16 %v2837, %v2581
    %v3094 = vpack.c.b16 %v2838, %v2582
    %v3095 = vpack.c.b16 %v2839, %v2583
    %v3096 = vpack.c.b16 %v2840, %v2584
    %v3097 = vpack.c.b16 %v2841, %v2585
    %v3098 = vpack.c.b16 %v2842, %v2586
    %v3099 = vpack.c.b16 %v2843, %v2587
    %v3100 = vpack.c.b16 %v2844, %v2588
    %v3101 = vpack.c.b16 %v2845, %v2589
    %v3102 = vpack.c.b16 %v2846, %v2590
    %v3103 = vpack.c.b16 %v2847, %v2591
    %v3104 = vpack.c.b16 %v2848, %v2592
    %v3105 = vpack.c.b16 %v2849, %v2593
    %v3106 = vpack.c.b16 %v2850, %v2594
    %v3107 = vpack.c.b16 %v2851, %v2595
    %v3108 = vpack.c.b16 %v2852, %v2596
    %v3109 = vpack.c.b16 %v2853, %v2597
    %v3110 = vpack.c.b16 %v2854, %v2598
    %v3111 = vpack.c.b16 %v2855, %v2599
    %v3112 = vpack.c.b16 %v2856, %v2600
    %v3113 = vpack.c.b16 %v2857, %v2601
    %v3114 = vpack.c.b16 %v2858, %v2602
    %v3115 = vpack.c.b16 %v2859, %v2603
    %v3116 = vpack.c.b16 %v2860, %v2604
    %v3117 = vpack.c.b16 %v2861, %v2605
    %v3118 = vpack.c.b16 %v2862, %v2606
    %v3119 = vpack.c.b16 %v2863, %v2607
    %v3120 = vpack.c.b16 %v2864, %v2608
    %v3121 = vpack.c.b16 %v2865, %v2609
    %v3122 = vpack.c.b16 %v2866, %v2610
    %v3123 = vpack.c.b16 %v2867, %v2611
    %v3124 = vpack.c.b16 %v2868, %v2612
    %v3125 = vpack.c.b16 %v2869, %v2613
    %v3126 = vpack.c.b16 %v2870, %v2614
    %v3127 = vpack.c.b16 %v2871, %v2615
    %v3128 = vpack.c.b16 %v2872, %v2616
    %v3129 = vpack.c.b16 %v2873, %v2617
    %v3130 = vpack.c.b16 %v2874, %v2618
    %v3131 = vpack.c.b16 %v2875, %v2619
    %v3132 = vpack.c.b16 %v2876, %v2620
    %v3133 = vpack.c.b16 %v2877, %v2621
    %v3134 = vpack.c.b16 %v2878, %v2622
    %v3135 = vpack.c.b16 %v2879, %v2623
    %v3136 = vpack.c.b16 %v2880, %v2624
    %v3137 = vpack.c.b16 %v2881, %v2625
    %v3138 = vpack.c.b16 %v2882, %v2626
    %v3139 = vpack.c.b16 %v2883, %v2627
    %v3140 = vpack.c.b16 %v2884, %v2628
    %v3141 = vpack.c.b16 %v2885, %v2629
    %v3142 = vpack.c.b16 %v2886, %v2630
    %v3143 = vpack.c.b16 %v2887, %v2631
    %v3144 = vpack.c.b16 %v2888, %v2632
    %v3145 = vpack.c.b16 %v2889, %v2633
    %v3146 = vpack.c.b16 %v2890, %v2634
    %v3147 = vpack.c.b16 %v2891, %v2635
    %v3148 = vpack.c.b16 %v2892, %v2636
    %v3149 = vpack.c.b16 %v2893, %v2637
    %v3150 = vpack.c.b16 %v2894, %v2638
    %v3151 = vpack.c.b16 %v2895, %v2639
    %v3152 = vpack.c.b16 %v2896, %v2640
    %v3153 = vpack.c.b16 %v2897, %v2641
    %v3154 = vpack.c.b16 %v2898, %v2642
    %v3155 = vpack.c.b16 %v2899, %v2643
    %v3156 = vpack.c.b16 %v2900, %v2644
    %v3157 = vpack.c.b16 %v2901, %v2645
    %v3158 = vpack.c.b16 %v2902, %v2646
    %v3159 = vpack.c.b16 %v2903, %v2647
    %v3160 = vpack.c.b16 %v2904, %v2648
    %v3161 = vpack.c.b16 %v2905, %v2649
    %v3162 = vpack.c.b16 %v2906, %v2650
    %v3163 = vpack.c.b16 %v2907, %v2651
    %v3164 = vpack.c.b16 %v2908, %v2652
    %v3165 = vpack.c.b16 %v2909, %v2653
    %v3166 = vpack.c.b16 %v2910, %v2654
    %v3167 = vpack.c.b16 %v2911, %v2655
    %v3168 = vpack.c.b16 %v2912, %v2656
    %v3169 = vpack.c.b16 %v2913, %v2657
    %v3170 = vpack.c.b16 %v2914, %v2658
    %v3171 = vpack.c.b16 %v2915, %v2659
    %v3172 = vpack.c.b16 %v2916, %v2660
    %v3173 = vpack.c.b16 %v2917, %v2661
    %v3174 = vpack.c.b16 %v2918, %v2662
    %v3175 = vpack.c.b16 %v2919, %v2663
    %v3176 = vpack.c.b16 %v2920, %v2664
    %v3177 = vpack.c.b16 %v2921, %v2665
    %v3178 = vpack.c.b16 %v2922, %v2666
    %v3179 = vpack.c.b16 %v2923, %v2667
    %v3180 = vpack.c.b16 %v2924, %v2668
    %v3181 = vpack.c.b16 %v2925, %v2669
    %v3182 = vpack.c.b16 %v2926, %v2670
    %v3183 = vpack.c.b16 %v2927, %v2671
    %v3184 = vpack.c.b16 %v2928, %v2672
    %v3185 = vpack.c.b16 %v2929, %v2673
    %v3186 = vpack.c.b16 %v2930, %v2674
    %v3187 = vpack.c.b16 %v2931, %v2675
    %v3188 = vpack.c.b16 %v2932, %v2676
    %v3189 = vpack.c.b16 %v2933, %v2677
    %v3190 = vpack.c.b16 %v2934, %v2678
    %3447 = vmatprep.subr.bf16.mxu0 0
    %3448 = vmatpush1.bf16.xpose.msra.mxu0 0
    %3449 = vmatprep.subr.bf16.mxu0 0
    %3450 = vmatpush1.bf16.xpose.msra.mxu0 0
    %3451 = vmatprep.subr.bf16.mxu0 0
    %3452 = vmatpush1.bf16.xpose.msra.mxu0 0
    %3453 = vmatprep.subr.bf16.mxu0 0
    %3454 = vmatpush1.bf16.xpose.msra.mxu0 0
    %3455 = vmatprep.subr.bf16.mxu0 0
    %3456 = vmatpush1.bf16.xpose.msra.mxu0 0
    %3457 = vmatprep.subr.bf16.mxu0 0
    %3458 = vmatpush1.bf16.xpose.msra.mxu0 0
    %3459 = vmatprep.subr.bf16.mxu0 0
    %3460 = vmatpush1.bf16.xpose.msra.mxu0 0
    %3461 = vmatprep.subr.bf16.mxu0 %v2936
    %3462 = vmatpush1.bf16.xpose.msra.mxu0 %v2935
    %3463 = vmatprep.subr.bf16.mxu0 0
    %3464 = vmatpush2.bf16.xpose.msra.mxu0 0
    %3465 = vmatprep.subr.bf16.mxu0 0
    %3466 = vmatpush2.bf16.xpose.msra.mxu0 0
    %3467 = vmatprep.subr.bf16.mxu0 0
    %3468 = vmatpush2.bf16.xpose.msra.mxu0 0
    %3469 = vmatprep.subr.bf16.mxu0 0
    %3470 = vmatpush2.bf16.xpose.msra.mxu0 0
    %3471 = vmatprep.subr.bf16.mxu0 0
    %3472 = vmatpush2.bf16.xpose.msra.mxu0 0
    %3473 = vmatprep.subr.bf16.mxu0 0
    %3474 = vmatpush2.bf16.xpose.msra.mxu0 0
    %3475 = vmatprep.subr.bf16.mxu0 0
    %3476 = vmatpush2.bf16.xpose.msra.mxu0 0
    %3477 = vmatprep.subr.bf16.mxu0 0
    %3478 = vmatpush2.bf16.xpose.msra.mxu0 0
    %3479 = vmatprep.mubr.bf16.mxu0 %v380
    %3480 = vmatmul.mubr.bf16.gmra.mxu0 %v366
    %v3481 = vpop.f32.mrf.mxu0
    %v3482 = vadd.f32 %v309, %v3481
    %v3483 = vpop.f32.mrf.mxu0
    %v3484 = vpop.f32.mrf.mxu0
    %v3485 = vpop.f32.mrf.mxu0
    %3486 = vdwg.mxu0
    %3487 = vmatprep.subr.bf16.mxu0 0
    %3488 = vmatpush1.bf16.xpose.msra.mxu0 0
    %3489 = vmatprep.subr.bf16.mxu0 0
    %3490 = vmatpush1.bf16.xpose.msra.mxu0 0
    %3491 = vmatprep.subr.bf16.mxu0 0
    %3492 = vmatpush1.bf16.xpose.msra.mxu0 0
    %3493 = vmatprep.subr.bf16.mxu0 0
    %3494 = vmatpush1.bf16.xpose.msra.mxu0 0
    %3495 = vmatprep.subr.bf16.mxu0 0
    %3496 = vmatpush1.bf16.xpose.msra.mxu0 0
    %3497 = vmatprep.subr.bf16.mxu0 0
    %3498 = vmatpush1.bf16.xpose.msra.mxu0 0
    %3499 = vmatprep.subr.bf16.mxu0 0
    %3500 = vmatpush1.bf16.xpose.msra.mxu0 0
    %3501 = vmatprep.subr.bf16.mxu0 %v2938
    %3502 = vmatpush1.bf16.xpose.msra.mxu0 %v2937
    %3503 = vmatprep.subr.bf16.mxu0 0
    %3504 = vmatpush2.bf16.xpose.msra.mxu0 0
    %3505 = vmatprep.subr.bf16.mxu0 0
    %3506 = vmatpush2.bf16.xpose.msra.mxu0 0
    %3507 = vmatprep.subr.bf16.mxu0 0
    %3508 = vmatpush2.bf16.xpose.msra.mxu0 0
    %3509 = vmatprep.subr.bf16.mxu0 0
    %3510 = vmatpush2.bf16.xpose.msra.mxu0 0
    %3511 = vmatprep.subr.bf16.mxu0 0
    %3512 = vmatpush2.bf16.xpose.msra.mxu0 0
    %3513 = vmatprep.subr.bf16.mxu0 0
    %3514 = vmatpush2.bf16.xpose.msra.mxu0 0
    %3515 = vmatprep.subr.bf16.mxu0 0
    %3516 = vmatpush2.bf16.xpose.msra.mxu0 0
    %3517 = vmatprep.subr.bf16.mxu0 0
    %3518 = vmatpush2.bf16.xpose.msra.mxu0 0
    %3519 = vmatprep.mubr.bf16.mxu0 %v390
    %3520 = vmatmul.mubr.bf16.gmra.mxu0 %v388
    %v3521 = vpop.f32.mrf.mxu0
    %v3522 = vadd.f32 %v3482, %v3521
    %v3523 = vpop.f32.mrf.mxu0
    %v3524 = vpop.f32.mrf.mxu0
    %v3525 = vpop.f32.mrf.mxu0
    %3526 = vdwg.mxu0
    %3527 = vmatprep.subr.bf16.mxu0 0
    %3528 = vmatpush1.bf16.xpose.msra.mxu0 0
    %3529 = vmatprep.subr.bf16.mxu0 0
    %3530 = vmatpush1.bf16.xpose.msra.mxu0 0
    %3531 = vmatprep.subr.bf16.mxu0 0
    %3532 = vmatpush1.bf16.xpose.msra.mxu0 0
    %3533 = vmatprep.subr.bf16.mxu0 0
    %3534 = vmatpush1.bf16.xpose.msra.mxu0 0
    %3535 = vmatprep.subr.bf16.mxu0 0
    %3536 = vmatpush1.bf16.xpose.msra.mxu0 0
    %3537 = vmatprep.subr.bf16.mxu0 0
    %3538 = vmatpush1.bf16.xpose.msra.mxu0 0
    %3539 = vmatprep.subr.bf16.mxu0 0
    %3540 = vmatpush1.bf16.xpose.msra.mxu0 0
    %3541 = vmatprep.subr.bf16.mxu0 %v2940
    %3542 = vmatpush1.bf16.xpose.msra.mxu0 %v2939
    %3543 = vmatprep.subr.bf16.mxu0 0
    %3544 = vmatpush2.bf16.xpose.msra.mxu0 0
    %3545 = vmatprep.subr.bf16.mxu0 0
    %3546 = vmatpush2.bf16.xpose.msra.mxu0 0
    %3547 = vmatprep.subr.bf16.mxu0 0
    %3548 = vmatpush2.bf16.xpose.msra.mxu0 0
    %3549 = vmatprep.subr.bf16.mxu0 0
    %3550 = vmatpush2.bf16.xpose.msra.mxu0 0
    %3551 = vmatprep.subr.bf16.mxu0 0
    %3552 = vmatpush2.bf16.xpose.msra.mxu0 0
    %3553 = vmatprep.subr.bf16.mxu0 0
    %3554 = vmatpush2.bf16.xpose.msra.mxu0 0
    %3555 = vmatprep.subr.bf16.mxu0 0
    %3556 = vmatpush2.bf16.xpose.msra.mxu0 0
    %3557 = vmatprep.subr.bf16.mxu0 0
    %3558 = vmatpush2.bf16.xpose.msra.mxu0 0
    %3559 = vmatprep.mubr.bf16.mxu0 %v387
    %3560 = vmatmul.mubr.bf16.gmra.mxu0 %v373
    %v3561 = vpop.f32.mrf.mxu0
    %v3562 = vadd.f32 %v3522, %v3561
    %v3563 = vpop.f32.mrf.mxu0
    %v3564 = vpop.f32.mrf.mxu0
    %v3565 = vpop.f32.mrf.mxu0
    %3566 = vdwg.mxu0
    %3567 = vmatprep.subr.bf16.mxu0 0
    %3568 = vmatpush1.bf16.xpose.msra.mxu0 0
    %3569 = vmatprep.subr.bf16.mxu0 0
    %3570 = vmatpush1.bf16.xpose.msra.mxu0 0
    %3571 = vmatprep.subr.bf16.mxu0 0
    %3572 = vmatpush1.bf16.xpose.msra.mxu0 0
    %3573 = vmatprep.subr.bf16.mxu0 0
    %3574 = vmatpush1.bf16.xpose.msra.mxu0 0
    %3575 = vmatprep.subr.bf16.mxu0 0
    %3576 = vmatpush1.bf16.xpose.msra.mxu0 0
    %3577 = vmatprep.subr.bf16.mxu0 0
    %3578 = vmatpush1.bf16.xpose.msra.mxu0 0
    %3579 = vmatprep.subr.bf16.mxu0 0
    %3580 = vmatpush1.bf16.xpose.msra.mxu0 0
    %3581 = vmatprep.subr.bf16.mxu0 %v2942
    %3582 = vmatpush1.bf16.xpose.msra.mxu0 %v2941
    %3583 = vmatprep.subr.bf16.mxu0 0
    %3584 = vmatpush2.bf16.xpose.msra.mxu0 0
    %3585 = vmatprep.subr.bf16.mxu0 0
    %3586 = vmatpush2.bf16.xpose.msra.mxu0 0
    %3587 = vmatprep.subr.bf16.mxu0 0
    %3588 = vmatpush2.bf16.xpose.msra.mxu0 0
    %3589 = vmatprep.subr.bf16.mxu0 0
    %3590 = vmatpush2.bf16.xpose.msra.mxu0 0
    %3591 = vmatprep.subr.bf16.mxu0 0
    %3592 = vmatpush2.bf16.xpose.msra.mxu0 0
    %3593 = vmatprep.subr.bf16.mxu0 0
    %3594 = vmatpush2.bf16.xpose.msra.mxu0 0
    %3595 = vmatprep.subr.bf16.mxu0 0
    %3596 = vmatpush2.bf16.xpose.msra.mxu0 0
    %3597 = vmatprep.subr.bf16.mxu0 0
    %3598 = vmatpush2.bf16.xpose.msra.mxu0 0
    %3599 = vmatprep.mubr.bf16.mxu0 %v391
    %3600 = vmatmul.mubr.bf16.gmra.mxu0 %v389
    %v3601 = vpop.f32.mrf.mxu0
    %v3602 = vadd.f32 %v3562, %v3601
    %v3603 = vpop.f32.mrf.mxu0
    %v3604 = vpop.f32.mrf.mxu0
    %v3605 = vpop.f32.mrf.mxu0
    %3606 = vdwg.mxu0
    %3607 = vmatprep.subr.bf16.mxu0 0
    %3608 = vmatpush1.bf16.xpose.msra.mxu0 0
    %3609 = vmatprep.subr.bf16.mxu0 0
    %3610 = vmatpush1.bf16.xpose.msra.mxu0 0
    %3611 = vmatprep.subr.bf16.mxu0 0
    %3612 = vmatpush1.bf16.xpose.msra.mxu0 0
    %3613 = vmatprep.subr.bf16.mxu0 0
    %3614 = vmatpush1.bf16.xpose.msra.mxu0 0
    %3615 = vmatprep.subr.bf16.mxu0 0
    %3616 = vmatpush1.bf16.xpose.msra.mxu0 0
    %3617 = vmatprep.subr.bf16.mxu0 0
    %3618 = vmatpush1.bf16.xpose.msra.mxu0 0
    %3619 = vmatprep.subr.bf16.mxu0 0
    %3620 = vmatpush1.bf16.xpose.msra.mxu0 0
    %3621 = vmatprep.subr.bf16.mxu0 %v2944
    %3622 = vmatpush1.bf16.xpose.msra.mxu0 %v2943
    %3623 = vmatprep.subr.bf16.mxu0 0
    %3624 = vmatpush2.bf16.xpose.msra.mxu0 0
    %3625 = vmatprep.subr.bf16.mxu0 0
    %3626 = vmatpush2.bf16.xpose.msra.mxu0 0
    %3627 = vmatprep.subr.bf16.mxu0 0
    %3628 = vmatpush2.bf16.xpose.msra.mxu0 0
    %3629 = vmatprep.subr.bf16.mxu0 0
    %3630 = vmatpush2.bf16.xpose.msra.mxu0 0
    %3631 = vmatprep.subr.bf16.mxu0 0
    %3632 = vmatpush2.bf16.xpose.msra.mxu0 0
    %3633 = vmatprep.subr.bf16.mxu0 0
    %3634 = vmatpush2.bf16.xpose.msra.mxu0 0
    %3635 = vmatprep.subr.bf16.mxu0 0
    %3636 = vmatpush2.bf16.xpose.msra.mxu0 0
    %3637 = vmatprep.subr.bf16.mxu0 0
    %3638 = vmatpush2.bf16.xpose.msra.mxu0 0
    %3639 = vmatprep.mubr.bf16.mxu0 %v429
    %3640 = vmatmul.mubr.bf16.gmra.mxu0 %v415
    %v3641 = vpop.f32.mrf.mxu0
    %v3642 = vadd.f32 %v3602, %v3641
    %v3643 = vpop.f32.mrf.mxu0
    %v3644 = vpop.f32.mrf.mxu0
    %v3645 = vpop.f32.mrf.mxu0
    %3646 = vdwg.mxu0
    %3647 = vmatprep.subr.bf16.mxu0 0
    %3648 = vmatpush1.bf16.xpose.msra.mxu0 0
    %3649 = vmatprep.subr.bf16.mxu0 0
    %3650 = vmatpush1.bf16.xpose.msra.mxu0 0
    %3651 = vmatprep.subr.bf16.mxu0 0
    %3652 = vmatpush1.bf16.xpose.msra.mxu0 0
    %3653 = vmatprep.subr.bf16.mxu0 0
    %3654 = vmatpush1.bf16.xpose.msra.mxu0 0
    %3655 = vmatprep.subr.bf16.mxu0 0
    %3656 = vmatpush1.bf16.xpose.msra.mxu0 0
    %3657 = vmatprep.subr.bf16.mxu0 0
    %3658 = vmatpush1.bf16.xpose.msra.mxu0 0
    %3659 = vmatprep.subr.bf16.mxu0 0
    %3660 = vmatpush1.bf16.xpose.msra.mxu0 0
    %3661 = vmatprep.subr.bf16.mxu0 %v2946
    %3662 = vmatpush1.bf16.xpose.msra.mxu0 %v2945
    %3663 = vmatprep.subr.bf16.mxu0 0
    %3664 = vmatpush2.bf16.xpose.msra.mxu0 0
    %3665 = vmatprep.subr.bf16.mxu0 0
    %3666 = vmatpush2.bf16.xpose.msra.mxu0 0
    %3667 = vmatprep.subr.bf16.mxu0 0
    %3668 = vmatpush2.bf16.xpose.msra.mxu0 0
    %3669 = vmatprep.subr.bf16.mxu0 0
    %3670 = vmatpush2.bf16.xpose.msra.mxu0 0
    %3671 = vmatprep.subr.bf16.mxu0 0
    %3672 = vmatpush2.bf16.xpose.msra.mxu0 0
    %3673 = vmatprep.subr.bf16.mxu0 0
    %3674 = vmatpush2.bf16.xpose.msra.mxu0 0
    %3675 = vmatprep.subr.bf16.mxu0 0
    %3676 = vmatpush2.bf16.xpose.msra.mxu0 0
    %3677 = vmatprep.subr.bf16.mxu0 0
    %3678 = vmatpush2.bf16.xpose.msra.mxu0 0
    %3679 = vmatprep.mubr.bf16.mxu0 %v439
    %3680 = vmatmul.mubr.bf16.gmra.mxu0 %v437
    %v3681 = vpop.f32.mrf.mxu0
    %v3682 = vadd.f32 %v3642, %v3681
    %v3683 = vpop.f32.mrf.mxu0
    %v3684 = vpop.f32.mrf.mxu0
    %v3685 = vpop.f32.mrf.mxu0
    %3686 = vdwg.mxu0
    %3687 = vmatprep.subr.bf16.mxu0 0
    %3688 = vmatpush1.bf16.xpose.msra.mxu0 0
    %3689 = vmatprep.subr.bf16.mxu0 0
    %3690 = vmatpush1.bf16.xpose.msra.mxu0 0
    %3691 = vmatprep.subr.bf16.mxu0 0
    %3692 = vmatpush1.bf16.xpose.msra.mxu0 0
    %3693 = vmatprep.subr.bf16.mxu0 0
    %3694 = vmatpush1.bf16.xpose.msra.mxu0 0
    %3695 = vmatprep.subr.bf16.mxu0 0
    %3696 = vmatpush1.bf16.xpose.msra.mxu0 0
    %3697 = vmatprep.subr.bf16.mxu0 0
    %3698 = vmatpush1.bf16.xpose.msra.mxu0 0
    %3699 = vmatprep.subr.bf16.mxu0 0
    %3700 = vmatpush1.bf16.xpose.msra.mxu0 0
    %3701 = vmatprep.subr.bf16.mxu0 %v2948
    %3702 = vmatpush1.bf16.xpose.msra.mxu0 %v2947
    %3703 = vmatprep.subr.bf16.mxu0 0
    %3704 = vmatpush2.bf16.xpose.msra.mxu0 0
    %3705 = vmatprep.subr.bf16.mxu0 0
    %3706 = vmatpush2.bf16.xpose.msra.mxu0 0
    %3707 = vmatprep.subr.bf16.mxu0 0
    %3708 = vmatpush2.bf16.xpose.msra.mxu0 0
    %3709 = vmatprep.subr.bf16.mxu0 0
    %3710 = vmatpush2.bf16.xpose.msra.mxu0 0
    %3711 = vmatprep.subr.bf16.mxu0 0
    %3712 = vmatpush2.bf16.xpose.msra.mxu0 0
    %3713 = vmatprep.subr.bf16.mxu0 0
    %3714 = vmatpush2.bf16.xpose.msra.mxu0 0
    %3715 = vmatprep.subr.bf16.mxu0 0
    %3716 = vmatpush2.bf16.xpose.msra.mxu0 0
    %3717 = vmatprep.subr.bf16.mxu0 0
    %3718 = vmatpush2.bf16.xpose.msra.mxu0 0
    %3719 = vmatprep.mubr.bf16.mxu0 %v436
    %3720 = vmatmul.mubr.bf16.gmra.mxu0 %v422
    %v3721 = vpop.f32.mrf.mxu0
    %v3722 = vadd.f32 %v3682, %v3721
    %v3723 = vpop.f32.mrf.mxu0
    %v3724 = vpop.f32.mrf.mxu0
    %v3725 = vpop.f32.mrf.mxu0
    %3726 = vdwg.mxu0
    %3727 = vmatprep.subr.bf16.mxu0 0
    %3728 = vmatpush1.bf16.xpose.msra.mxu0 0
    %3729 = vmatprep.subr.bf16.mxu0 0
    %3730 = vmatpush1.bf16.xpose.msra.mxu0 0
    %3731 = vmatprep.subr.bf16.mxu0 0
    %3732 = vmatpush1.bf16.xpose.msra.mxu0 0
    %3733 = vmatprep.subr.bf16.mxu0 0
    %3734 = vmatpush1.bf16.xpose.msra.mxu0 0
    %3735 = vmatprep.subr.bf16.mxu0 0
    %3736 = vmatpush1.bf16.xpose.msra.mxu0 0
    %3737 = vmatprep.subr.bf16.mxu0 0
    %3738 = vmatpush1.bf16.xpose.msra.mxu0 0
    %3739 = vmatprep.subr.bf16.mxu0 0
    %3740 = vmatpush1.bf16.xpose.msra.mxu0 0
    %3741 = vmatprep.subr.bf16.mxu0 %v2950
    %3742 = vmatpush1.bf16.xpose.msra.mxu0 %v2949
    %3743 = vmatprep.subr.bf16.mxu0 0
    %3744 = vmatpush2.bf16.xpose.msra.mxu0 0
    %3745 = vmatprep.subr.bf16.mxu0 0
    %3746 = vmatpush2.bf16.xpose.msra.mxu0 0
    %3747 = vmatprep.subr.bf16.mxu0 0
    %3748 = vmatpush2.bf16.xpose.msra.mxu0 0
    %3749 = vmatprep.subr.bf16.mxu0 0
    %3750 = vmatpush2.bf16.xpose.msra.mxu0 0
    %3751 = vmatprep.subr.bf16.mxu0 0
    %3752 = vmatpush2.bf16.xpose.msra.mxu0 0
    %3753 = vmatprep.subr.bf16.mxu0 0
    %3754 = vmatpush2.bf16.xpose.msra.mxu0 0
    %3755 = vmatprep.subr.bf16.mxu0 0
    %3756 = vmatpush2.bf16.xpose.msra.mxu0 0
    %3757 = vmatprep.subr.bf16.mxu0 0
    %3758 = vmatpush2.bf16.xpose.msra.mxu0 0
    %3759 = vmatprep.mubr.bf16.mxu0 %v440
    %3760 = vmatmul.mubr.bf16.gmra.mxu0 %v438
    %v3761 = vpop.f32.mrf.mxu0
    %v3762 = vadd.f32 %v3722, %v3761
    %v3763 = vpop.f32.mrf.mxu0
    %v3764 = vpop.f32.mrf.mxu0
    %v3765 = vpop.f32.mrf.mxu0
    %3766 = vdwg.mxu0
    %3767 = vmatprep.subr.bf16.mxu0 0
    %3768 = vmatpush1.bf16.xpose.msra.mxu0 0
    %3769 = vmatprep.subr.bf16.mxu0 0
    %3770 = vmatpush1.bf16.xpose.msra.mxu0 0
    %3771 = vmatprep.subr.bf16.mxu0 0
    %3772 = vmatpush1.bf16.xpose.msra.mxu0 0
    %3773 = vmatprep.subr.bf16.mxu0 0
    %3774 = vmatpush1.bf16.xpose.msra.mxu0 0
    %3775 = vmatprep.subr.bf16.mxu0 0
    %3776 = vmatpush1.bf16.xpose.msra.mxu0 0
    %3777 = vmatprep.subr.bf16.mxu0 0
    %3778 = vmatpush1.bf16.xpose.msra.mxu0 0
    %3779 = vmatprep.subr.bf16.mxu0 0
    %3780 = vmatpush1.bf16.xpose.msra.mxu0 0
    %3781 = vmatprep.subr.bf16.mxu0 %v2952
    %3782 = vmatpush1.bf16.xpose.msra.mxu0 %v2951
    %3783 = vmatprep.subr.bf16.mxu0 0
    %3784 = vmatpush2.bf16.xpose.msra.mxu0 0
    %3785 = vmatprep.subr.bf16.mxu0 0
    %3786 = vmatpush2.bf16.xpose.msra.mxu0 0
    %3787 = vmatprep.subr.bf16.mxu0 0
    %3788 = vmatpush2.bf16.xpose.msra.mxu0 0
    %3789 = vmatprep.subr.bf16.mxu0 0
    %3790 = vmatpush2.bf16.xpose.msra.mxu0 0
    %3791 = vmatprep.subr.bf16.mxu0 0
    %3792 = vmatpush2.bf16.xpose.msra.mxu0 0
    %3793 = vmatprep.subr.bf16.mxu0 0
    %3794 = vmatpush2.bf16.xpose.msra.mxu0 0
    %3795 = vmatprep.subr.bf16.mxu0 0
    %3796 = vmatpush2.bf16.xpose.msra.mxu0 0
    %3797 = vmatprep.subr.bf16.mxu0 0
    %3798 = vmatpush2.bf16.xpose.msra.mxu0 0
    %3799 = vmatprep.mubr.bf16.mxu0 %v478
    %3800 = vmatmul.mubr.bf16.gmra.mxu0 %v464
    %v3801 = vpop.f32.mrf.mxu0
    %v3802 = vadd.f32 %v3762, %v3801
    %v3803 = vpop.f32.mrf.mxu0
    %v3804 = vpop.f32.mrf.mxu0
    %v3805 = vpop.f32.mrf.mxu0
    %3806 = vdwg.mxu0
    %3807 = vmatprep.subr.bf16.mxu0 0
    %3808 = vmatpush1.bf16.xpose.msra.mxu0 0
    %3809 = vmatprep.subr.bf16.mxu0 0
    %3810 = vmatpush1.bf16.xpose.msra.mxu0 0
    %3811 = vmatprep.subr.bf16.mxu0 0
    %3812 = vmatpush1.bf16.xpose.msra.mxu0 0
    %3813 = vmatprep.subr.bf16.mxu0 0
    %3814 = vmatpush1.bf16.xpose.msra.mxu0 0
    %3815 = vmatprep.subr.bf16.mxu0 0
    %3816 = vmatpush1.bf16.xpose.msra.mxu0 0
    %3817 = vmatprep.subr.bf16.mxu0 0
    %3818 = vmatpush1.bf16.xpose.msra.mxu0 0
    %3819 = vmatprep.subr.bf16.mxu0 0
    %3820 = vmatpush1.bf16.xpose.msra.mxu0 0
    %3821 = vmatprep.subr.bf16.mxu0 %v2954
    %3822 = vmatpush1.bf16.xpose.msra.mxu0 %v2953
    %3823 = vmatprep.subr.bf16.mxu0 0
    %3824 = vmatpush2.bf16.xpose.msra.mxu0 0
    %3825 = vmatprep.subr.bf16.mxu0 0
    %3826 = vmatpush2.bf16.xpose.msra.mxu0 0
    %3827 = vmatprep.subr.bf16.mxu0 0
    %3828 = vmatpush2.bf16.xpose.msra.mxu0 0
    %3829 = vmatprep.subr.bf16.mxu0 0
    %3830 = vmatpush2.bf16.xpose.msra.mxu0 0
    %3831 = vmatprep.subr.bf16.mxu0 0
    %3832 = vmatpush2.bf16.xpose.msra.mxu0 0
    %3833 = vmatprep.subr.bf16.mxu0 0
    %3834 = vmatpush2.bf16.xpose.msra.mxu0 0
    %3835 = vmatprep.subr.bf16.mxu0 0
    %3836 = vmatpush2.bf16.xpose.msra.mxu0 0
    %3837 = vmatprep.subr.bf16.mxu0 0
    %3838 = vmatpush2.bf16.xpose.msra.mxu0 0
    %3839 = vmatprep.mubr.bf16.mxu0 %v488
    %3840 = vmatmul.mubr.bf16.gmra.mxu0 %v486
    %v3841 = vpop.f32.mrf.mxu0
    %v3842 = vadd.f32 %v3802, %v3841
    %v3843 = vpop.f32.mrf.mxu0
    %v3844 = vpop.f32.mrf.mxu0
    %v3845 = vpop.f32.mrf.mxu0
    %3846 = vdwg.mxu0
    %3847 = vmatprep.subr.bf16.mxu0 0
    %3848 = vmatpush1.bf16.xpose.msra.mxu0 0
    %3849 = vmatprep.subr.bf16.mxu0 0
    %3850 = vmatpush1.bf16.xpose.msra.mxu0 0
    %3851 = vmatprep.subr.bf16.mxu0 0
    %3852 = vmatpush1.bf16.xpose.msra.mxu0 0
    %3853 = vmatprep.subr.bf16.mxu0 0
    %3854 = vmatpush1.bf16.xpose.msra.mxu0 0
    %3855 = vmatprep.subr.bf16.mxu0 0
    %3856 = vmatpush1.bf16.xpose.msra.mxu0 0
    %3857 = vmatprep.subr.bf16.mxu0 0
    %3858 = vmatpush1.bf16.xpose.msra.mxu0 0
    %3859 = vmatprep.subr.bf16.mxu0 0
    %3860 = vmatpush1.bf16.xpose.msra.mxu0 0
    %3861 = vmatprep.subr.bf16.mxu0 %v2956
    %3862 = vmatpush1.bf16.xpose.msra.mxu0 %v2955
    %3863 = vmatprep.subr.bf16.mxu0 0
    %3864 = vmatpush2.bf16.xpose.msra.mxu0 0
    %3865 = vmatprep.subr.bf16.mxu0 0
    %3866 = vmatpush2.bf16.xpose.msra.mxu0 0
    %3867 = vmatprep.subr.bf16.mxu0 0
    %3868 = vmatpush2.bf16.xpose.msra.mxu0 0
    %3869 = vmatprep.subr.bf16.mxu0 0
    %3870 = vmatpush2.bf16.xpose.msra.mxu0 0
    %3871 = vmatprep.subr.bf16.mxu0 0
    %3872 = vmatpush2.bf16.xpose.msra.mxu0 0
    %3873 = vmatprep.subr.bf16.mxu0 0
    %3874 = vmatpush2.bf16.xpose.msra.mxu0 0
    %3875 = vmatprep.subr.bf16.mxu0 0
    %3876 = vmatpush2.bf16.xpose.msra.mxu0 0
    %3877 = vmatprep.subr.bf16.mxu0 0
    %3878 = vmatpush2.bf16.xpose.msra.mxu0 0
    %3879 = vmatprep.mubr.bf16.mxu0 %v485
    %3880 = vmatmul.mubr.bf16.gmra.mxu0 %v471
    %v3881 = vpop.f32.mrf.mxu0
    %v3882 = vadd.f32 %v3842, %v3881
    %v3883 = vpop.f32.mrf.mxu0
    %v3884 = vpop.f32.mrf.mxu0
    %v3885 = vpop.f32.mrf.mxu0
    %3886 = vdwg.mxu0
    %3887 = vmatprep.subr.bf16.mxu0 0
    %3888 = vmatpush1.bf16.xpose.msra.mxu0 0
    %3889 = vmatprep.subr.bf16.mxu0 0
    %3890 = vmatpush1.bf16.xpose.msra.mxu0 0
    %3891 = vmatprep.subr.bf16.mxu0 0
    %3892 = vmatpush1.bf16.xpose.msra.mxu0 0
    %3893 = vmatprep.subr.bf16.mxu0 0
    %3894 = vmatpush1.bf16.xpose.msra.mxu0 0
    %3895 = vmatprep.subr.bf16.mxu0 0
    %3896 = vmatpush1.bf16.xpose.msra.mxu0 0
    %3897 = vmatprep.subr.bf16.mxu0 0
    %3898 = vmatpush1.bf16.xpose.msra.mxu0 0
    %3899 = vmatprep.subr.bf16.mxu0 0
    %3900 = vmatpush1.bf16.xpose.msra.mxu0 0
    %3901 = vmatprep.subr.bf16.mxu0 %v2958
    %3902 = vmatpush1.bf16.xpose.msra.mxu0 %v2957
    %3903 = vmatprep.subr.bf16.mxu0 0
    %3904 = vmatpush2.bf16.xpose.msra.mxu0 0
    %3905 = vmatprep.subr.bf16.mxu0 0
    %3906 = vmatpush2.bf16.xpose.msra.mxu0 0
    %3907 = vmatprep.subr.bf16.mxu0 0
    %3908 = vmatpush2.bf16.xpose.msra.mxu0 0
    %3909 = vmatprep.subr.bf16.mxu0 0
    %3910 = vmatpush2.bf16.xpose.msra.mxu0 0
    %3911 = vmatprep.subr.bf16.mxu0 0
    %3912 = vmatpush2.bf16.xpose.msra.mxu0 0
    %3913 = vmatprep.subr.bf16.mxu0 0
    %3914 = vmatpush2.bf16.xpose.msra.mxu0 0
    %3915 = vmatprep.subr.bf16.mxu0 0
    %3916 = vmatpush2.bf16.xpose.msra.mxu0 0
    %3917 = vmatprep.subr.bf16.mxu0 0
    %3918 = vmatpush2.bf16.xpose.msra.mxu0 0
    %3919 = vmatprep.mubr.bf16.mxu0 %v489
    %3920 = vmatmul.mubr.bf16.gmra.mxu0 %v487
    %v3921 = vpop.f32.mrf.mxu0
    %v3922 = vadd.f32 %v3882, %v3921
    %v3923 = vpop.f32.mrf.mxu0
    %v3924 = vpop.f32.mrf.mxu0
    %v3925 = vpop.f32.mrf.mxu0
    %3926 = vdwg.mxu0
    %3927 = vmatprep.subr.bf16.mxu0 0
    %3928 = vmatpush1.bf16.xpose.msra.mxu0 0
    %3929 = vmatprep.subr.bf16.mxu0 0
    %3930 = vmatpush1.bf16.xpose.msra.mxu0 0
    %3931 = vmatprep.subr.bf16.mxu0 0
    %3932 = vmatpush1.bf16.xpose.msra.mxu0 0
    %3933 = vmatprep.subr.bf16.mxu0 0
    %3934 = vmatpush1.bf16.xpose.msra.mxu0 0
    %3935 = vmatprep.subr.bf16.mxu0 0
    %3936 = vmatpush1.bf16.xpose.msra.mxu0 0
    %3937 = vmatprep.subr.bf16.mxu0 0
    %3938 = vmatpush1.bf16.xpose.msra.mxu0 0
    %3939 = vmatprep.subr.bf16.mxu0 0
    %3940 = vmatpush1.bf16.xpose.msra.mxu0 0
    %3941 = vmatprep.subr.bf16.mxu0 %v2960
    %3942 = vmatpush1.bf16.xpose.msra.mxu0 %v2959
    %3943 = vmatprep.subr.bf16.mxu0 0
    %3944 = vmatpush2.bf16.xpose.msra.mxu0 0
    %3945 = vmatprep.subr.bf16.mxu0 0
    %3946 = vmatpush2.bf16.xpose.msra.mxu0 0
    %3947 = vmatprep.subr.bf16.mxu0 0
    %3948 = vmatpush2.bf16.xpose.msra.mxu0 0
    %3949 = vmatprep.subr.bf16.mxu0 0
    %3950 = vmatpush2.bf16.xpose.msra.mxu0 0
    %3951 = vmatprep.subr.bf16.mxu0 0
    %3952 = vmatpush2.bf16.xpose.msra.mxu0 0
    %3953 = vmatprep.subr.bf16.mxu0 0
    %3954 = vmatpush2.bf16.xpose.msra.mxu0 0
    %3955 = vmatprep.subr.bf16.mxu0 0
    %3956 = vmatpush2.bf16.xpose.msra.mxu0 0
    %3957 = vmatprep.subr.bf16.mxu0 0
    %3958 = vmatpush2.bf16.xpose.msra.mxu0 0
    %3959 = vmatprep.mubr.bf16.mxu0 %v527
    %3960 = vmatmul.mubr.bf16.gmra.mxu0 %v513
    %v3961 = vpop.f32.mrf.mxu0
    %v3962 = vadd.f32 %v3922, %v3961
    %v3963 = vpop.f32.mrf.mxu0
    %v3964 = vpop.f32.mrf.mxu0
    %v3965 = vpop.f32.mrf.mxu0
    %3966 = vdwg.mxu0
    %3967 = vmatprep.subr.bf16.mxu0 0
    %3968 = vmatpush1.bf16.xpose.msra.mxu0 0
    %3969 = vmatprep.subr.bf16.mxu0 0
    %3970 = vmatpush1.bf16.xpose.msra.mxu0 0
    %3971 = vmatprep.subr.bf16.mxu0 0
    %3972 = vmatpush1.bf16.xpose.msra.mxu0 0
    %3973 = vmatprep.subr.bf16.mxu0 0
    %3974 = vmatpush1.bf16.xpose.msra.mxu0 0
    %3975 = vmatprep.subr.bf16.mxu0 0
    %3976 = vmatpush1.bf16.xpose.msra.mxu0 0
    %3977 = vmatprep.subr.bf16.mxu0 0
    %3978 = vmatpush1.bf16.xpose.msra.mxu0 0
    %3979 = vmatprep.subr.bf16.mxu0 0
    %3980 = vmatpush1.bf16.xpose.msra.mxu0 0
    %3981 = vmatprep.subr.bf16.mxu0 %v2962
    %3982 = vmatpush1.bf16.xpose.msra.mxu0 %v2961
    %3983 = vmatprep.subr.bf16.mxu0 0
    %3984 = vmatpush2.bf16.xpose.msra.mxu0 0
    %3985 = vmatprep.subr.bf16.mxu0 0
    %3986 = vmatpush2.bf16.xpose.msra.mxu0 0
    %3987 = vmatprep.subr.bf16.mxu0 0
    %3988 = vmatpush2.bf16.xpose.msra.mxu0 0
    %3989 = vmatprep.subr.bf16.mxu0 0
    %3990 = vmatpush2.bf16.xpose.msra.mxu0 0
    %3991 = vmatprep.subr.bf16.mxu0 0
    %3992 = vmatpush2.bf16.xpose.msra.mxu0 0
    %3993 = vmatprep.subr.bf16.mxu0 0
    %3994 = vmatpush2.bf16.xpose.msra.mxu0 0
    %3995 = vmatprep.subr.bf16.mxu0 0
    %3996 = vmatpush2.bf16.xpose.msra.mxu0 0
    %3997 = vmatprep.subr.bf16.mxu0 0
    %3998 = vmatpush2.bf16.xpose.msra.mxu0 0
    %3999 = vmatprep.mubr.bf16.mxu0 %v537
    %4000 = vmatmul.mubr.bf16.gmra.mxu0 %v535
    %v4001 = vpop.f32.mrf.mxu0
    %v4002 = vadd.f32 %v3962, %v4001
    %v4003 = vpop.f32.mrf.mxu0
    %v4004 = vpop.f32.mrf.mxu0
    %v4005 = vpop.f32.mrf.mxu0
    %4006 = vdwg.mxu0
    %4007 = vmatprep.subr.bf16.mxu0 0
    %4008 = vmatpush1.bf16.xpose.msra.mxu0 0
    %4009 = vmatprep.subr.bf16.mxu0 0
    %4010 = vmatpush1.bf16.xpose.msra.mxu0 0
    %4011 = vmatprep.subr.bf16.mxu0 0
    %4012 = vmatpush1.bf16.xpose.msra.mxu0 0
    %4013 = vmatprep.subr.bf16.mxu0 0
    %4014 = vmatpush1.bf16.xpose.msra.mxu0 0
    %4015 = vmatprep.subr.bf16.mxu0 0
    %4016 = vmatpush1.bf16.xpose.msra.mxu0 0
    %4017 = vmatprep.subr.bf16.mxu0 0
    %4018 = vmatpush1.bf16.xpose.msra.mxu0 0
    %4019 = vmatprep.subr.bf16.mxu0 0
    %4020 = vmatpush1.bf16.xpose.msra.mxu0 0
    %4021 = vmatprep.subr.bf16.mxu0 %v2964
    %4022 = vmatpush1.bf16.xpose.msra.mxu0 %v2963
    %4023 = vmatprep.subr.bf16.mxu0 0
    %4024 = vmatpush2.bf16.xpose.msra.mxu0 0
    %4025 = vmatprep.subr.bf16.mxu0 0
    %4026 = vmatpush2.bf16.xpose.msra.mxu0 0
    %4027 = vmatprep.subr.bf16.mxu0 0
    %4028 = vmatpush2.bf16.xpose.msra.mxu0 0
    %4029 = vmatprep.subr.bf16.mxu0 0
    %4030 = vmatpush2.bf16.xpose.msra.mxu0 0
    %4031 = vmatprep.subr.bf16.mxu0 0
    %4032 = vmatpush2.bf16.xpose.msra.mxu0 0
    %4033 = vmatprep.subr.bf16.mxu0 0
    %4034 = vmatpush2.bf16.xpose.msra.mxu0 0
    %4035 = vmatprep.subr.bf16.mxu0 0
    %4036 = vmatpush2.bf16.xpose.msra.mxu0 0
    %4037 = vmatprep.subr.bf16.mxu0 0
    %4038 = vmatpush2.bf16.xpose.msra.mxu0 0
    %4039 = vmatprep.mubr.bf16.mxu0 %v534
    %4040 = vmatmul.mubr.bf16.gmra.mxu0 %v520
    %v4041 = vpop.f32.mrf.mxu0
    %v4042 = vadd.f32 %v4002, %v4041
    %v4043 = vpop.f32.mrf.mxu0
    %v4044 = vpop.f32.mrf.mxu0
    %v4045 = vpop.f32.mrf.mxu0
    %4046 = vdwg.mxu0
    %4047 = vmatprep.subr.bf16.mxu0 0
    %4048 = vmatpush1.bf16.xpose.msra.mxu0 0
    %4049 = vmatprep.subr.bf16.mxu0 0
    %4050 = vmatpush1.bf16.xpose.msra.mxu0 0
    %4051 = vmatprep.subr.bf16.mxu0 0
    %4052 = vmatpush1.bf16.xpose.msra.mxu0 0
    %4053 = vmatprep.subr.bf16.mxu0 0
    %4054 = vmatpush1.bf16.xpose.msra.mxu0 0
    %4055 = vmatprep.subr.bf16.mxu0 0
    %4056 = vmatpush1.bf16.xpose.msra.mxu0 0
    %4057 = vmatprep.subr.bf16.mxu0 0
    %4058 = vmatpush1.bf16.xpose.msra.mxu0 0
    %4059 = vmatprep.subr.bf16.mxu0 0
    %4060 = vmatpush1.bf16.xpose.msra.mxu0 0
    %4061 = vmatprep.subr.bf16.mxu0 %v2966
    %4062 = vmatpush1.bf16.xpose.msra.mxu0 %v2965
    %4063 = vmatprep.subr.bf16.mxu0 0
    %4064 = vmatpush2.bf16.xpose.msra.mxu0 0
    %4065 = vmatprep.subr.bf16.mxu0 0
    %4066 = vmatpush2.bf16.xpose.msra.mxu0 0
    %4067 = vmatprep.subr.bf16.mxu0 0
    %4068 = vmatpush2.bf16.xpose.msra.mxu0 0
    %4069 = vmatprep.subr.bf16.mxu0 0
    %4070 = vmatpush2.bf16.xpose.msra.mxu0 0
    %4071 = vmatprep.subr.bf16.mxu0 0
    %4072 = vmatpush2.bf16.xpose.msra.mxu0 0
    %4073 = vmatprep.subr.bf16.mxu0 0
    %4074 = vmatpush2.bf16.xpose.msra.mxu0 0
    %4075 = vmatprep.subr.bf16.mxu0 0
    %4076 = vmatpush2.bf16.xpose.msra.mxu0 0
    %4077 = vmatprep.subr.bf16.mxu0 0
    %4078 = vmatpush2.bf16.xpose.msra.mxu0 0
    %4079 = vmatprep.mubr.bf16.mxu0 %v538
    %4080 = vmatmul.mubr.bf16.gmra.mxu0 %v536
    %v4081 = vpop.f32.mrf.mxu0
    %v4082 = vadd.f32 %v4042, %v4081
    %v4083 = vpop.f32.mrf.mxu0
    %v4084 = vpop.f32.mrf.mxu0
    %v4085 = vpop.f32.mrf.mxu0
    %4086 = vdwg.mxu0
    %4087 = vmatprep.subr.bf16.mxu0 0
    %4088 = vmatpush1.bf16.xpose.msra.mxu0 0
    %4089 = vmatprep.subr.bf16.mxu0 0
    %4090 = vmatpush1.bf16.xpose.msra.mxu0 0
    %4091 = vmatprep.subr.bf16.mxu0 0
    %4092 = vmatpush1.bf16.xpose.msra.mxu0 0
    %4093 = vmatprep.subr.bf16.mxu0 0
    %4094 = vmatpush1.bf16.xpose.msra.mxu0 0
    %4095 = vmatprep.subr.bf16.mxu0 0
    %4096 = vmatpush1.bf16.xpose.msra.mxu0 0
    %4097 = vmatprep.subr.bf16.mxu0 0
    %4098 = vmatpush1.bf16.xpose.msra.mxu0 0
    %4099 = vmatprep.subr.bf16.mxu0 0
    %4100 = vmatpush1.bf16.xpose.msra.mxu0 0
    %4101 = vmatprep.subr.bf16.mxu0 %v2968
    %4102 = vmatpush1.bf16.xpose.msra.mxu0 %v2967
    %4103 = vmatprep.subr.bf16.mxu0 0
    %4104 = vmatpush2.bf16.xpose.msra.mxu0 0
    %4105 = vmatprep.subr.bf16.mxu0 0
    %4106 = vmatpush2.bf16.xpose.msra.mxu0 0
    %4107 = vmatprep.subr.bf16.mxu0 0
    %4108 = vmatpush2.bf16.xpose.msra.mxu0 0
    %4109 = vmatprep.subr.bf16.mxu0 0
    %4110 = vmatpush2.bf16.xpose.msra.mxu0 0
    %4111 = vmatprep.subr.bf16.mxu0 0
    %4112 = vmatpush2.bf16.xpose.msra.mxu0 0
    %4113 = vmatprep.subr.bf16.mxu0 0
    %4114 = vmatpush2.bf16.xpose.msra.mxu0 0
    %4115 = vmatprep.subr.bf16.mxu0 0
    %4116 = vmatpush2.bf16.xpose.msra.mxu0 0
    %4117 = vmatprep.subr.bf16.mxu0 0
    %4118 = vmatpush2.bf16.xpose.msra.mxu0 0
    %4119 = vmatprep.mubr.bf16.mxu0 %v576
    %4120 = vmatmul.mubr.bf16.gmra.mxu0 %v562
    %v4121 = vpop.f32.mrf.mxu0
    %v4122 = vadd.f32 %v4082, %v4121
    %v4123 = vpop.f32.mrf.mxu0
    %v4124 = vpop.f32.mrf.mxu0
    %v4125 = vpop.f32.mrf.mxu0
    %4126 = vdwg.mxu0
    %4127 = vmatprep.subr.bf16.mxu0 0
    %4128 = vmatpush1.bf16.xpose.msra.mxu0 0
    %4129 = vmatprep.subr.bf16.mxu0 0
    %4130 = vmatpush1.bf16.xpose.msra.mxu0 0
    %4131 = vmatprep.subr.bf16.mxu0 0
    %4132 = vmatpush1.bf16.xpose.msra.mxu0 0
    %4133 = vmatprep.subr.bf16.mxu0 0
    %4134 = vmatpush1.bf16.xpose.msra.mxu0 0
    %4135 = vmatprep.subr.bf16.mxu0 0
    %4136 = vmatpush1.bf16.xpose.msra.mxu0 0
    %4137 = vmatprep.subr.bf16.mxu0 0
    %4138 = vmatpush1.bf16.xpose.msra.mxu0 0
    %4139 = vmatprep.subr.bf16.mxu0 0
    %4140 = vmatpush1.bf16.xpose.msra.mxu0 0
    %4141 = vmatprep.subr.bf16.mxu0 %v2970
    %4142 = vmatpush1.bf16.xpose.msra.mxu0 %v2969
    %4143 = vmatprep.subr.bf16.mxu0 0
    %4144 = vmatpush2.bf16.xpose.msra.mxu0 0
    %4145 = vmatprep.subr.bf16.mxu0 0
    %4146 = vmatpush2.bf16.xpose.msra.mxu0 0
    %4147 = vmatprep.subr.bf16.mxu0 0
    %4148 = vmatpush2.bf16.xpose.msra.mxu0 0
    %4149 = vmatprep.subr.bf16.mxu0 0
    %4150 = vmatpush2.bf16.xpose.msra.mxu0 0
    %4151 = vmatprep.subr.bf16.mxu0 0
    %4152 = vmatpush2.bf16.xpose.msra.mxu0 0
    %4153 = vmatprep.subr.bf16.mxu0 0
    %4154 = vmatpush2.bf16.xpose.msra.mxu0 0
    %4155 = vmatprep.subr.bf16.mxu0 0
    %4156 = vmatpush2.bf16.xpose.msra.mxu0 0
    %4157 = vmatprep.subr.bf16.mxu0 0
    %4158 = vmatpush2.bf16.xpose.msra.mxu0 0
    %4159 = vmatprep.mubr.bf16.mxu0 %v586
    %4160 = vmatmul.mubr.bf16.gmra.mxu0 %v584
    %v4161 = vpop.f32.mrf.mxu0
    %v4162 = vadd.f32 %v4122, %v4161
    %v4163 = vpop.f32.mrf.mxu0
    %v4164 = vpop.f32.mrf.mxu0
    %v4165 = vpop.f32.mrf.mxu0
    %4166 = vdwg.mxu0
    %4167 = vmatprep.subr.bf16.mxu0 0
    %4168 = vmatpush1.bf16.xpose.msra.mxu0 0
    %4169 = vmatprep.subr.bf16.mxu0 0
    %4170 = vmatpush1.bf16.xpose.msra.mxu0 0
    %4171 = vmatprep.subr.bf16.mxu0 0
    %4172 = vmatpush1.bf16.xpose.msra.mxu0 0
    %4173 = vmatprep.subr.bf16.mxu0 0
    %4174 = vmatpush1.bf16.xpose.msra.mxu0 0
    %4175 = vmatprep.subr.bf16.mxu0 0
    %4176 = vmatpush1.bf16.xpose.msra.mxu0 0
    %4177 = vmatprep.subr.bf16.mxu0 0
    %4178 = vmatpush1.bf16.xpose.msra.mxu0 0
    %4179 = vmatprep.subr.bf16.mxu0 0
    %4180 = vmatpush1.bf16.xpose.msra.mxu0 0
    %4181 = vmatprep.subr.bf16.mxu0 %v2972
    %4182 = vmatpush1.bf16.xpose.msra.mxu0 %v2971
    %4183 = vmatprep.subr.bf16.mxu0 0
    %4184 = vmatpush2.bf16.xpose.msra.mxu0 0
    %4185 = vmatprep.subr.bf16.mxu0 0
    %4186 = vmatpush2.bf16.xpose.msra.mxu0 0
    %4187 = vmatprep.subr.bf16.mxu0 0
    %4188 = vmatpush2.bf16.xpose.msra.mxu0 0
    %4189 = vmatprep.subr.bf16.mxu0 0
    %4190 = vmatpush2.bf16.xpose.msra.mxu0 0
    %4191 = vmatprep.subr.bf16.mxu0 0
    %4192 = vmatpush2.bf16.xpose.msra.mxu0 0
    %4193 = vmatprep.subr.bf16.mxu0 0
    %4194 = vmatpush2.bf16.xpose.msra.mxu0 0
    %4195 = vmatprep.subr.bf16.mxu0 0
    %4196 = vmatpush2.bf16.xpose.msra.mxu0 0
    %4197 = vmatprep.subr.bf16.mxu0 0
    %4198 = vmatpush2.bf16.xpose.msra.mxu0 0
    %4199 = vmatprep.mubr.bf16.mxu0 %v583
    %4200 = vmatmul.mubr.bf16.gmra.mxu0 %v569
    %v4201 = vpop.f32.mrf.mxu0
    %v4202 = vadd.f32 %v4162, %v4201
    %v4203 = vpop.f32.mrf.mxu0
    %v4204 = vpop.f32.mrf.mxu0
    %v4205 = vpop.f32.mrf.mxu0
    %4206 = vdwg.mxu0
    %4207 = vmatprep.subr.bf16.mxu0 0
    %4208 = vmatpush1.bf16.xpose.msra.mxu0 0
    %4209 = vmatprep.subr.bf16.mxu0 0
    %4210 = vmatpush1.bf16.xpose.msra.mxu0 0
    %4211 = vmatprep.subr.bf16.mxu0 0
    %4212 = vmatpush1.bf16.xpose.msra.mxu0 0
    %4213 = vmatprep.subr.bf16.mxu0 0
    %4214 = vmatpush1.bf16.xpose.msra.mxu0 0
    %4215 = vmatprep.subr.bf16.mxu0 0
    %4216 = vmatpush1.bf16.xpose.msra.mxu0 0
    %4217 = vmatprep.subr.bf16.mxu0 0
    %4218 = vmatpush1.bf16.xpose.msra.mxu0 0
    %4219 = vmatprep.subr.bf16.mxu0 0
    %4220 = vmatpush1.bf16.xpose.msra.mxu0 0
    %4221 = vmatprep.subr.bf16.mxu0 %v2974
    %4222 = vmatpush1.bf16.xpose.msra.mxu0 %v2973
    %4223 = vmatprep.subr.bf16.mxu0 0
    %4224 = vmatpush2.bf16.xpose.msra.mxu0 0
    %4225 = vmatprep.subr.bf16.mxu0 0
    %4226 = vmatpush2.bf16.xpose.msra.mxu0 0
    %4227 = vmatprep.subr.bf16.mxu0 0
    %4228 = vmatpush2.bf16.xpose.msra.mxu0 0
    %4229 = vmatprep.subr.bf16.mxu0 0
    %4230 = vmatpush2.bf16.xpose.msra.mxu0 0
    %4231 = vmatprep.subr.bf16.mxu0 0
    %4232 = vmatpush2.bf16.xpose.msra.mxu0 0
    %4233 = vmatprep.subr.bf16.mxu0 0
    %4234 = vmatpush2.bf16.xpose.msra.mxu0 0
    %4235 = vmatprep.subr.bf16.mxu0 0
    %4236 = vmatpush2.bf16.xpose.msra.mxu0 0
    %4237 = vmatprep.subr.bf16.mxu0 0
    %4238 = vmatpush2.bf16.xpose.msra.mxu0 0
    %4239 = vmatprep.mubr.bf16.mxu0 %v587
    %4240 = vmatmul.mubr.bf16.gmra.mxu0 %v585
    %v4241 = vpop.f32.mrf.mxu0
    %v4242 = vadd.f32 %v4202, %v4241
    %v4243 = vpop.f32.mrf.mxu0
    %v4244 = vpop.f32.mrf.mxu0
    %v4245 = vpop.f32.mrf.mxu0
    %4246 = vdwg.mxu0
    %4247 = vmatprep.subr.bf16.mxu0 0
    %4248 = vmatpush1.bf16.xpose.msra.mxu0 0
    %4249 = vmatprep.subr.bf16.mxu0 0
    %4250 = vmatpush1.bf16.xpose.msra.mxu0 0
    %4251 = vmatprep.subr.bf16.mxu0 0
    %4252 = vmatpush1.bf16.xpose.msra.mxu0 0
    %4253 = vmatprep.subr.bf16.mxu0 0
    %4254 = vmatpush1.bf16.xpose.msra.mxu0 0
    %4255 = vmatprep.subr.bf16.mxu0 0
    %4256 = vmatpush1.bf16.xpose.msra.mxu0 0
    %4257 = vmatprep.subr.bf16.mxu0 0
    %4258 = vmatpush1.bf16.xpose.msra.mxu0 0
    %4259 = vmatprep.subr.bf16.mxu0 0
    %4260 = vmatpush1.bf16.xpose.msra.mxu0 0
    %4261 = vmatprep.subr.bf16.mxu0 %v2976
    %4262 = vmatpush1.bf16.xpose.msra.mxu0 %v2975
    %4263 = vmatprep.subr.bf16.mxu0 0
    %4264 = vmatpush2.bf16.xpose.msra.mxu0 0
    %4265 = vmatprep.subr.bf16.mxu0 0
    %4266 = vmatpush2.bf16.xpose.msra.mxu0 0
    %4267 = vmatprep.subr.bf16.mxu0 0
    %4268 = vmatpush2.bf16.xpose.msra.mxu0 0
    %4269 = vmatprep.subr.bf16.mxu0 0
    %4270 = vmatpush2.bf16.xpose.msra.mxu0 0
    %4271 = vmatprep.subr.bf16.mxu0 0
    %4272 = vmatpush2.bf16.xpose.msra.mxu0 0
    %4273 = vmatprep.subr.bf16.mxu0 0
    %4274 = vmatpush2.bf16.xpose.msra.mxu0 0
    %4275 = vmatprep.subr.bf16.mxu0 0
    %4276 = vmatpush2.bf16.xpose.msra.mxu0 0
    %4277 = vmatprep.subr.bf16.mxu0 0
    %4278 = vmatpush2.bf16.xpose.msra.mxu0 0
    %4279 = vmatprep.mubr.bf16.mxu0 %v625
    %4280 = vmatmul.mubr.bf16.gmra.mxu0 %v611
    %v4281 = vpop.f32.mrf.mxu0
    %v4282 = vadd.f32 %v4242, %v4281
    %v4283 = vpop.f32.mrf.mxu0
    %v4284 = vpop.f32.mrf.mxu0
    %v4285 = vpop.f32.mrf.mxu0
    %4286 = vdwg.mxu0
    %4287 = vmatprep.subr.bf16.mxu0 0
    %4288 = vmatpush1.bf16.xpose.msra.mxu0 0
    %4289 = vmatprep.subr.bf16.mxu0 0
    %4290 = vmatpush1.bf16.xpose.msra.mxu0 0
    %4291 = vmatprep.subr.bf16.mxu0 0
    %4292 = vmatpush1.bf16.xpose.msra.mxu0 0
    %4293 = vmatprep.subr.bf16.mxu0 0
    %4294 = vmatpush1.bf16.xpose.msra.mxu0 0
    %4295 = vmatprep.subr.bf16.mxu0 0
    %4296 = vmatpush1.bf16.xpose.msra.mxu0 0
    %4297 = vmatprep.subr.bf16.mxu0 0
    %4298 = vmatpush1.bf16.xpose.msra.mxu0 0
    %4299 = vmatprep.subr.bf16.mxu0 0
    %4300 = vmatpush1.bf16.xpose.msra.mxu0 0
    %4301 = vmatprep.subr.bf16.mxu0 %v2978
    %4302 = vmatpush1.bf16.xpose.msra.mxu0 %v2977
    %4303 = vmatprep.subr.bf16.mxu0 0
    %4304 = vmatpush2.bf16.xpose.msra.mxu0 0
    %4305 = vmatprep.subr.bf16.mxu0 0
    %4306 = vmatpush2.bf16.xpose.msra.mxu0 0
    %4307 = vmatprep.subr.bf16.mxu0 0
    %4308 = vmatpush2.bf16.xpose.msra.mxu0 0
    %4309 = vmatprep.subr.bf16.mxu0 0
    %4310 = vmatpush2.bf16.xpose.msra.mxu0 0
    %4311 = vmatprep.subr.bf16.mxu0 0
    %4312 = vmatpush2.bf16.xpose.msra.mxu0 0
    %4313 = vmatprep.subr.bf16.mxu0 0
    %4314 = vmatpush2.bf16.xpose.msra.mxu0 0
    %4315 = vmatprep.subr.bf16.mxu0 0
    %4316 = vmatpush2.bf16.xpose.msra.mxu0 0
    %4317 = vmatprep.subr.bf16.mxu0 0
    %4318 = vmatpush2.bf16.xpose.msra.mxu0 0
    %4319 = vmatprep.mubr.bf16.mxu0 %v635
    %4320 = vmatmul.mubr.bf16.gmra.mxu0 %v633
    %v4321 = vpop.f32.mrf.mxu0
    %v4322 = vadd.f32 %v4282, %v4321
    %v4323 = vpop.f32.mrf.mxu0
    %v4324 = vpop.f32.mrf.mxu0
    %v4325 = vpop.f32.mrf.mxu0
    %4326 = vdwg.mxu0
    %4327 = vmatprep.subr.bf16.mxu0 0
    %4328 = vmatpush1.bf16.xpose.msra.mxu0 0
    %4329 = vmatprep.subr.bf16.mxu0 0
    %4330 = vmatpush1.bf16.xpose.msra.mxu0 0
    %4331 = vmatprep.subr.bf16.mxu0 0
    %4332 = vmatpush1.bf16.xpose.msra.mxu0 0
    %4333 = vmatprep.subr.bf16.mxu0 0
    %4334 = vmatpush1.bf16.xpose.msra.mxu0 0
    %4335 = vmatprep.subr.bf16.mxu0 0
    %4336 = vmatpush1.bf16.xpose.msra.mxu0 0
    %4337 = vmatprep.subr.bf16.mxu0 0
    %4338 = vmatpush1.bf16.xpose.msra.mxu0 0
    %4339 = vmatprep.subr.bf16.mxu0 0
    %4340 = vmatpush1.bf16.xpose.msra.mxu0 0
    %4341 = vmatprep.subr.bf16.mxu0 %v2980
    %4342 = vmatpush1.bf16.xpose.msra.mxu0 %v2979
    %4343 = vmatprep.subr.bf16.mxu0 0
    %4344 = vmatpush2.bf16.xpose.msra.mxu0 0
    %4345 = vmatprep.subr.bf16.mxu0 0
    %4346 = vmatpush2.bf16.xpose.msra.mxu0 0
    %4347 = vmatprep.subr.bf16.mxu0 0
    %4348 = vmatpush2.bf16.xpose.msra.mxu0 0
    %4349 = vmatprep.subr.bf16.mxu0 0
    %4350 = vmatpush2.bf16.xpose.msra.mxu0 0
    %4351 = vmatprep.subr.bf16.mxu0 0
    %4352 = vmatpush2.bf16.xpose.msra.mxu0 0
    %4353 = vmatprep.subr.bf16.mxu0 0
    %4354 = vmatpush2.bf16.xpose.msra.mxu0 0
    %4355 = vmatprep.subr.bf16.mxu0 0
    %4356 = vmatpush2.bf16.xpose.msra.mxu0 0
    %4357 = vmatprep.subr.bf16.mxu0 0
    %4358 = vmatpush2.bf16.xpose.msra.mxu0 0
    %4359 = vmatprep.mubr.bf16.mxu0 %v632
    %4360 = vmatmul.mubr.bf16.gmra.mxu0 %v618
    %v4361 = vpop.f32.mrf.mxu0
    %v4362 = vadd.f32 %v4322, %v4361
    %v4363 = vpop.f32.mrf.mxu0
    %v4364 = vpop.f32.mrf.mxu0
    %v4365 = vpop.f32.mrf.mxu0
    %4366 = vdwg.mxu0
    %4367 = vmatprep.subr.bf16.mxu0 0
    %4368 = vmatpush1.bf16.xpose.msra.mxu0 0
    %4369 = vmatprep.subr.bf16.mxu0 0
    %4370 = vmatpush1.bf16.xpose.msra.mxu0 0
    %4371 = vmatprep.subr.bf16.mxu0 0
    %4372 = vmatpush1.bf16.xpose.msra.mxu0 0
    %4373 = vmatprep.subr.bf16.mxu0 0
    %4374 = vmatpush1.bf16.xpose.msra.mxu0 0
    %4375 = vmatprep.subr.bf16.mxu0 0
    %4376 = vmatpush1.bf16.xpose.msra.mxu0 0
    %4377 = vmatprep.subr.bf16.mxu0 0
    %4378 = vmatpush1.bf16.xpose.msra.mxu0 0
    %4379 = vmatprep.subr.bf16.mxu0 0
    %4380 = vmatpush1.bf16.xpose.msra.mxu0 0
    %4381 = vmatprep.subr.bf16.mxu0 %v2982
    %4382 = vmatpush1.bf16.xpose.msra.mxu0 %v2981
    %4383 = vmatprep.subr.bf16.mxu0 0
    %4384 = vmatpush2.bf16.xpose.msra.mxu0 0
    %4385 = vmatprep.subr.bf16.mxu0 0
    %4386 = vmatpush2.bf16.xpose.msra.mxu0 0
    %4387 = vmatprep.subr.bf16.mxu0 0
    %4388 = vmatpush2.bf16.xpose.msra.mxu0 0
    %4389 = vmatprep.subr.bf16.mxu0 0
    %4390 = vmatpush2.bf16.xpose.msra.mxu0 0
    %4391 = vmatprep.subr.bf16.mxu0 0
    %4392 = vmatpush2.bf16.xpose.msra.mxu0 0
    %4393 = vmatprep.subr.bf16.mxu0 0
    %4394 = vmatpush2.bf16.xpose.msra.mxu0 0
    %4395 = vmatprep.subr.bf16.mxu0 0
    %4396 = vmatpush2.bf16.xpose.msra.mxu0 0
    %4397 = vmatprep.subr.bf16.mxu0 0
    %4398 = vmatpush2.bf16.xpose.msra.mxu0 0
    %4399 = vmatprep.mubr.bf16.mxu0 %v636
    %4400 = vmatmul.mubr.bf16.gmra.mxu0 %v634
    %v4401 = vpop.f32.mrf.mxu0
    %v4402 = vadd.f32 %v4362, %v4401
    %v4403 = vpop.f32.mrf.mxu0
    %v4404 = vpop.f32.mrf.mxu0
    %v4405 = vpop.f32.mrf.mxu0
    %4406 = vdwg.mxu0
    %4407 = vmatprep.subr.bf16.mxu0 0
    %4408 = vmatpush1.bf16.xpose.msra.mxu0 0
    %4409 = vmatprep.subr.bf16.mxu0 0
    %4410 = vmatpush1.bf16.xpose.msra.mxu0 0
    %4411 = vmatprep.subr.bf16.mxu0 0
    %4412 = vmatpush1.bf16.xpose.msra.mxu0 0
    %4413 = vmatprep.subr.bf16.mxu0 0
    %4414 = vmatpush1.bf16.xpose.msra.mxu0 0
    %4415 = vmatprep.subr.bf16.mxu0 0
    %4416 = vmatpush1.bf16.xpose.msra.mxu0 0
    %4417 = vmatprep.subr.bf16.mxu0 0
    %4418 = vmatpush1.bf16.xpose.msra.mxu0 0
    %4419 = vmatprep.subr.bf16.mxu0 0
    %4420 = vmatpush1.bf16.xpose.msra.mxu0 0
    %4421 = vmatprep.subr.bf16.mxu0 %v2984
    %4422 = vmatpush1.bf16.xpose.msra.mxu0 %v2983
    %4423 = vmatprep.subr.bf16.mxu0 0
    %4424 = vmatpush2.bf16.xpose.msra.mxu0 0
    %4425 = vmatprep.subr.bf16.mxu0 0
    %4426 = vmatpush2.bf16.xpose.msra.mxu0 0
    %4427 = vmatprep.subr.bf16.mxu0 0
    %4428 = vmatpush2.bf16.xpose.msra.mxu0 0
    %4429 = vmatprep.subr.bf16.mxu0 0
    %4430 = vmatpush2.bf16.xpose.msra.mxu0 0
    %4431 = vmatprep.subr.bf16.mxu0 0
    %4432 = vmatpush2.bf16.xpose.msra.mxu0 0
    %4433 = vmatprep.subr.bf16.mxu0 0
    %4434 = vmatpush2.bf16.xpose.msra.mxu0 0
    %4435 = vmatprep.subr.bf16.mxu0 0
    %4436 = vmatpush2.bf16.xpose.msra.mxu0 0
    %4437 = vmatprep.subr.bf16.mxu0 0
    %4438 = vmatpush2.bf16.xpose.msra.mxu0 0
    %4439 = vmatprep.mubr.bf16.mxu0 %v674
    %4440 = vmatmul.mubr.bf16.gmra.mxu0 %v660
    %v4441 = vpop.f32.mrf.mxu0
    %v4442 = vadd.f32 %v4402, %v4441
    %v4443 = vpop.f32.mrf.mxu0
    %v4444 = vpop.f32.mrf.mxu0
    %v4445 = vpop.f32.mrf.mxu0
    %4446 = vdwg.mxu0
    %4447 = vmatprep.subr.bf16.mxu0 0
    %4448 = vmatpush1.bf16.xpose.msra.mxu0 0
    %4449 = vmatprep.subr.bf16.mxu0 0
    %4450 = vmatpush1.bf16.xpose.msra.mxu0 0
    %4451 = vmatprep.subr.bf16.mxu0 0
    %4452 = vmatpush1.bf16.xpose.msra.mxu0 0
    %4453 = vmatprep.subr.bf16.mxu0 0
    %4454 = vmatpush1.bf16.xpose.msra.mxu0 0
    %4455 = vmatprep.subr.bf16.mxu0 0
    %4456 = vmatpush1.bf16.xpose.msra.mxu0 0
    %4457 = vmatprep.subr.bf16.mxu0 0
    %4458 = vmatpush1.bf16.xpose.msra.mxu0 0
    %4459 = vmatprep.subr.bf16.mxu0 0
    %4460 = vmatpush1.bf16.xpose.msra.mxu0 0
    %4461 = vmatprep.subr.bf16.mxu0 %v2986
    %4462 = vmatpush1.bf16.xpose.msra.mxu0 %v2985
    %4463 = vmatprep.subr.bf16.mxu0 0
    %4464 = vmatpush2.bf16.xpose.msra.mxu0 0
    %4465 = vmatprep.subr.bf16.mxu0 0
    %4466 = vmatpush2.bf16.xpose.msra.mxu0 0
    %4467 = vmatprep.subr.bf16.mxu0 0
    %4468 = vmatpush2.bf16.xpose.msra.mxu0 0
    %4469 = vmatprep.subr.bf16.mxu0 0
    %4470 = vmatpush2.bf16.xpose.msra.mxu0 0
    %4471 = vmatprep.subr.bf16.mxu0 0
    %4472 = vmatpush2.bf16.xpose.msra.mxu0 0
    %4473 = vmatprep.subr.bf16.mxu0 0
    %4474 = vmatpush2.bf16.xpose.msra.mxu0 0
    %4475 = vmatprep.subr.bf16.mxu0 0
    %4476 = vmatpush2.bf16.xpose.msra.mxu0 0
    %4477 = vmatprep.subr.bf16.mxu0 0
    %4478 = vmatpush2.bf16.xpose.msra.mxu0 0
    %4479 = vmatprep.mubr.bf16.mxu0 %v684
    %4480 = vmatmul.mubr.bf16.gmra.mxu0 %v682
    %v4481 = vpop.f32.mrf.mxu0
    %v4482 = vadd.f32 %v4442, %v4481
    %v4483 = vpop.f32.mrf.mxu0
    %v4484 = vpop.f32.mrf.mxu0
    %v4485 = vpop.f32.mrf.mxu0
    %4486 = vdwg.mxu0
    %4487 = vmatprep.subr.bf16.mxu0 0
    %4488 = vmatpush1.bf16.xpose.msra.mxu0 0
    %4489 = vmatprep.subr.bf16.mxu0 0
    %4490 = vmatpush1.bf16.xpose.msra.mxu0 0
    %4491 = vmatprep.subr.bf16.mxu0 0
    %4492 = vmatpush1.bf16.xpose.msra.mxu0 0
    %4493 = vmatprep.subr.bf16.mxu0 0
    %4494 = vmatpush1.bf16.xpose.msra.mxu0 0
    %4495 = vmatprep.subr.bf16.mxu0 0
    %4496 = vmatpush1.bf16.xpose.msra.mxu0 0
    %4497 = vmatprep.subr.bf16.mxu0 0
    %4498 = vmatpush1.bf16.xpose.msra.mxu0 0
    %4499 = vmatprep.subr.bf16.mxu0 0
    %4500 = vmatpush1.bf16.xpose.msra.mxu0 0
    %4501 = vmatprep.subr.bf16.mxu0 %v2988
    %4502 = vmatpush1.bf16.xpose.msra.mxu0 %v2987
    %4503 = vmatprep.subr.bf16.mxu0 0
    %4504 = vmatpush2.bf16.xpose.msra.mxu0 0
    %4505 = vmatprep.subr.bf16.mxu0 0
    %4506 = vmatpush2.bf16.xpose.msra.mxu0 0
    %4507 = vmatprep.subr.bf16.mxu0 0
    %4508 = vmatpush2.bf16.xpose.msra.mxu0 0
    %4509 = vmatprep.subr.bf16.mxu0 0
    %4510 = vmatpush2.bf16.xpose.msra.mxu0 0
    %4511 = vmatprep.subr.bf16.mxu0 0
    %4512 = vmatpush2.bf16.xpose.msra.mxu0 0
    %4513 = vmatprep.subr.bf16.mxu0 0
    %4514 = vmatpush2.bf16.xpose.msra.mxu0 0
    %4515 = vmatprep.subr.bf16.mxu0 0
    %4516 = vmatpush2.bf16.xpose.msra.mxu0 0
    %4517 = vmatprep.subr.bf16.mxu0 0
    %4518 = vmatpush2.bf16.xpose.msra.mxu0 0
    %4519 = vmatprep.mubr.bf16.mxu0 %v681
    %4520 = vmatmul.mubr.bf16.gmra.mxu0 %v667
    %v4521 = vpop.f32.mrf.mxu0
    %v4522 = vadd.f32 %v4482, %v4521
    %v4523 = vpop.f32.mrf.mxu0
    %v4524 = vpop.f32.mrf.mxu0
    %v4525 = vpop.f32.mrf.mxu0
    %4526 = vdwg.mxu0
    %4527 = vmatprep.subr.bf16.mxu0 0
    %4528 = vmatpush1.bf16.xpose.msra.mxu0 0
    %4529 = vmatprep.subr.bf16.mxu0 0
    %4530 = vmatpush1.bf16.xpose.msra.mxu0 0
    %4531 = vmatprep.subr.bf16.mxu0 0
    %4532 = vmatpush1.bf16.xpose.msra.mxu0 0
    %4533 = vmatprep.subr.bf16.mxu0 0
    %4534 = vmatpush1.bf16.xpose.msra.mxu0 0
    %4535 = vmatprep.subr.bf16.mxu0 0
    %4536 = vmatpush1.bf16.xpose.msra.mxu0 0
    %4537 = vmatprep.subr.bf16.mxu0 0
    %4538 = vmatpush1.bf16.xpose.msra.mxu0 0
    %4539 = vmatprep.subr.bf16.mxu0 0
    %4540 = vmatpush1.bf16.xpose.msra.mxu0 0
    %4541 = vmatprep.subr.bf16.mxu0 %v2990
    %4542 = vmatpush1.bf16.xpose.msra.mxu0 %v2989
    %4543 = vmatprep.subr.bf16.mxu0 0
    %4544 = vmatpush2.bf16.xpose.msra.mxu0 0
    %4545 = vmatprep.subr.bf16.mxu0 0
    %4546 = vmatpush2.bf16.xpose.msra.mxu0 0
    %4547 = vmatprep.subr.bf16.mxu0 0
    %4548 = vmatpush2.bf16.xpose.msra.mxu0 0
    %4549 = vmatprep.subr.bf16.mxu0 0
    %4550 = vmatpush2.bf16.xpose.msra.mxu0 0
    %4551 = vmatprep.subr.bf16.mxu0 0
    %4552 = vmatpush2.bf16.xpose.msra.mxu0 0
    %4553 = vmatprep.subr.bf16.mxu0 0
    %4554 = vmatpush2.bf16.xpose.msra.mxu0 0
    %4555 = vmatprep.subr.bf16.mxu0 0
    %4556 = vmatpush2.bf16.xpose.msra.mxu0 0
    %4557 = vmatprep.subr.bf16.mxu0 0
    %4558 = vmatpush2.bf16.xpose.msra.mxu0 0
    %4559 = vmatprep.mubr.bf16.mxu0 %v685
    %4560 = vmatmul.mubr.bf16.gmra.mxu0 %v683
    %v4561 = vpop.f32.mrf.mxu0
    %v4562 = vadd.f32 %v4522, %v4561
    %v4563 = vpop.f32.mrf.mxu0
    %v4564 = vpop.f32.mrf.mxu0
    %v4565 = vpop.f32.mrf.mxu0
    %4566 = vdwg.mxu0
    %4567 = vmatprep.subr.bf16.mxu0 0
    %4568 = vmatpush1.bf16.xpose.msra.mxu0 0
    %4569 = vmatprep.subr.bf16.mxu0 0
    %4570 = vmatpush1.bf16.xpose.msra.mxu0 0
    %4571 = vmatprep.subr.bf16.mxu0 0
    %4572 = vmatpush1.bf16.xpose.msra.mxu0 0
    %4573 = vmatprep.subr.bf16.mxu0 0
    %4574 = vmatpush1.bf16.xpose.msra.mxu0 0
    %4575 = vmatprep.subr.bf16.mxu0 0
    %4576 = vmatpush1.bf16.xpose.msra.mxu0 0
    %4577 = vmatprep.subr.bf16.mxu0 0
    %4578 = vmatpush1.bf16.xpose.msra.mxu0 0
    %4579 = vmatprep.subr.bf16.mxu0 0
    %4580 = vmatpush1.bf16.xpose.msra.mxu0 0
    %4581 = vmatprep.subr.bf16.mxu0 %v2992
    %4582 = vmatpush1.bf16.xpose.msra.mxu0 %v2991
    %4583 = vmatprep.subr.bf16.mxu0 0
    %4584 = vmatpush2.bf16.xpose.msra.mxu0 0
    %4585 = vmatprep.subr.bf16.mxu0 0
    %4586 = vmatpush2.bf16.xpose.msra.mxu0 0
    %4587 = vmatprep.subr.bf16.mxu0 0
    %4588 = vmatpush2.bf16.xpose.msra.mxu0 0
    %4589 = vmatprep.subr.bf16.mxu0 0
    %4590 = vmatpush2.bf16.xpose.msra.mxu0 0
    %4591 = vmatprep.subr.bf16.mxu0 0
    %4592 = vmatpush2.bf16.xpose.msra.mxu0 0
    %4593 = vmatprep.subr.bf16.mxu0 0
    %4594 = vmatpush2.bf16.xpose.msra.mxu0 0
    %4595 = vmatprep.subr.bf16.mxu0 0
    %4596 = vmatpush2.bf16.xpose.msra.mxu0 0
    %4597 = vmatprep.subr.bf16.mxu0 0
    %4598 = vmatpush2.bf16.xpose.msra.mxu0 0
    %4599 = vmatprep.mubr.bf16.mxu0 %v723
    %4600 = vmatmul.mubr.bf16.gmra.mxu0 %v709
    %v4601 = vpop.f32.mrf.mxu0
    %v4602 = vadd.f32 %v4562, %v4601
    %v4603 = vpop.f32.mrf.mxu0
    %v4604 = vpop.f32.mrf.mxu0
    %v4605 = vpop.f32.mrf.mxu0
    %4606 = vdwg.mxu0
    %4607 = vmatprep.subr.bf16.mxu0 0
    %4608 = vmatpush1.bf16.xpose.msra.mxu0 0
    %4609 = vmatprep.subr.bf16.mxu0 0
    %4610 = vmatpush1.bf16.xpose.msra.mxu0 0
    %4611 = vmatprep.subr.bf16.mxu0 0
    %4612 = vmatpush1.bf16.xpose.msra.mxu0 0
    %4613 = vmatprep.subr.bf16.mxu0 0
    %4614 = vmatpush1.bf16.xpose.msra.mxu0 0
    %4615 = vmatprep.subr.bf16.mxu0 0
    %4616 = vmatpush1.bf16.xpose.msra.mxu0 0
    %4617 = vmatprep.subr.bf16.mxu0 0
    %4618 = vmatpush1.bf16.xpose.msra.mxu0 0
    %4619 = vmatprep.subr.bf16.mxu0 0
    %4620 = vmatpush1.bf16.xpose.msra.mxu0 0
    %4621 = vmatprep.subr.bf16.mxu0 %v2994
    %4622 = vmatpush1.bf16.xpose.msra.mxu0 %v2993
    %4623 = vmatprep.subr.bf16.mxu0 0
    %4624 = vmatpush2.bf16.xpose.msra.mxu0 0
    %4625 = vmatprep.subr.bf16.mxu0 0
    %4626 = vmatpush2.bf16.xpose.msra.mxu0 0
    %4627 = vmatprep.subr.bf16.mxu0 0
    %4628 = vmatpush2.bf16.xpose.msra.mxu0 0
    %4629 = vmatprep.subr.bf16.mxu0 0
    %4630 = vmatpush2.bf16.xpose.msra.mxu0 0
    %4631 = vmatprep.subr.bf16.mxu0 0
    %4632 = vmatpush2.bf16.xpose.msra.mxu0 0
    %4633 = vmatprep.subr.bf16.mxu0 0
    %4634 = vmatpush2.bf16.xpose.msra.mxu0 0
    %4635 = vmatprep.subr.bf16.mxu0 0
    %4636 = vmatpush2.bf16.xpose.msra.mxu0 0
    %4637 = vmatprep.subr.bf16.mxu0 0
    %4638 = vmatpush2.bf16.xpose.msra.mxu0 0
    %4639 = vmatprep.mubr.bf16.mxu0 %v733
    %4640 = vmatmul.mubr.bf16.gmra.mxu0 %v731
    %v4641 = vpop.f32.mrf.mxu0
    %v4642 = vadd.f32 %v4602, %v4641
    %v4643 = vpop.f32.mrf.mxu0
    %v4644 = vpop.f32.mrf.mxu0
    %v4645 = vpop.f32.mrf.mxu0
    %4646 = vdwg.mxu0
    %4647 = vmatprep.subr.bf16.mxu0 0
    %4648 = vmatpush1.bf16.xpose.msra.mxu0 0
    %4649 = vmatprep.subr.bf16.mxu0 0
    %4650 = vmatpush1.bf16.xpose.msra.mxu0 0
    %4651 = vmatprep.subr.bf16.mxu0 0
    %4652 = vmatpush1.bf16.xpose.msra.mxu0 0
    %4653 = vmatprep.subr.bf16.mxu0 0
    %4654 = vmatpush1.bf16.xpose.msra.mxu0 0
    %4655 = vmatprep.subr.bf16.mxu0 0
    %4656 = vmatpush1.bf16.xpose.msra.mxu0 0
    %4657 = vmatprep.subr.bf16.mxu0 0
    %4658 = vmatpush1.bf16.xpose.msra.mxu0 0
    %4659 = vmatprep.subr.bf16.mxu0 0
    %4660 = vmatpush1.bf16.xpose.msra.mxu0 0
    %4661 = vmatprep.subr.bf16.mxu0 %v2996
    %4662 = vmatpush1.bf16.xpose.msra.mxu0 %v2995
    %4663 = vmatprep.subr.bf16.mxu0 0
    %4664 = vmatpush2.bf16.xpose.msra.mxu0 0
    %4665 = vmatprep.subr.bf16.mxu0 0
    %4666 = vmatpush2.bf16.xpose.msra.mxu0 0
    %4667 = vmatprep.subr.bf16.mxu0 0
    %4668 = vmatpush2.bf16.xpose.msra.mxu0 0
    %4669 = vmatprep.subr.bf16.mxu0 0
    %4670 = vmatpush2.bf16.xpose.msra.mxu0 0
    %4671 = vmatprep.subr.bf16.mxu0 0
    %4672 = vmatpush2.bf16.xpose.msra.mxu0 0
    %4673 = vmatprep.subr.bf16.mxu0 0
    %4674 = vmatpush2.bf16.xpose.msra.mxu0 0
    %4675 = vmatprep.subr.bf16.mxu0 0
    %4676 = vmatpush2.bf16.xpose.msra.mxu0 0
    %4677 = vmatprep.subr.bf16.mxu0 0
    %4678 = vmatpush2.bf16.xpose.msra.mxu0 0
    %4679 = vmatprep.mubr.bf16.mxu0 %v730
    %4680 = vmatmul.mubr.bf16.gmra.mxu0 %v716
    %v4681 = vpop.f32.mrf.mxu0
    %v4682 = vadd.f32 %v4642, %v4681
    %v4683 = vpop.f32.mrf.mxu0
    %v4684 = vpop.f32.mrf.mxu0
    %v4685 = vpop.f32.mrf.mxu0
    %4686 = vdwg.mxu0
    %4687 = vmatprep.subr.bf16.mxu0 0
    %4688 = vmatpush1.bf16.xpose.msra.mxu0 0
    %4689 = vmatprep.subr.bf16.mxu0 0
    %4690 = vmatpush1.bf16.xpose.msra.mxu0 0
    %4691 = vmatprep.subr.bf16.mxu0 0
    %4692 = vmatpush1.bf16.xpose.msra.mxu0 0
    %4693 = vmatprep.subr.bf16.mxu0 0
    %4694 = vmatpush1.bf16.xpose.msra.mxu0 0
    %4695 = vmatprep.subr.bf16.mxu0 0
    %4696 = vmatpush1.bf16.xpose.msra.mxu0 0
    %4697 = vmatprep.subr.bf16.mxu0 0
    %4698 = vmatpush1.bf16.xpose.msra.mxu0 0
    %4699 = vmatprep.subr.bf16.mxu0 0
    %4700 = vmatpush1.bf16.xpose.msra.mxu0 0
    %4701 = vmatprep.subr.bf16.mxu0 %v2998
    %4702 = vmatpush1.bf16.xpose.msra.mxu0 %v2997
    %4703 = vmatprep.subr.bf16.mxu0 0
    %4704 = vmatpush2.bf16.xpose.msra.mxu0 0
    %4705 = vmatprep.subr.bf16.mxu0 0
    %4706 = vmatpush2.bf16.xpose.msra.mxu0 0
    %4707 = vmatprep.subr.bf16.mxu0 0
    %4708 = vmatpush2.bf16.xpose.msra.mxu0 0
    %4709 = vmatprep.subr.bf16.mxu0 0
    %4710 = vmatpush2.bf16.xpose.msra.mxu0 0
    %4711 = vmatprep.subr.bf16.mxu0 0
    %4712 = vmatpush2.bf16.xpose.msra.mxu0 0
    %4713 = vmatprep.subr.bf16.mxu0 0
    %4714 = vmatpush2.bf16.xpose.msra.mxu0 0
    %4715 = vmatprep.subr.bf16.mxu0 0
    %4716 = vmatpush2.bf16.xpose.msra.mxu0 0
    %4717 = vmatprep.subr.bf16.mxu0 0
    %4718 = vmatpush2.bf16.xpose.msra.mxu0 0
    %4719 = vmatprep.mubr.bf16.mxu0 %v734
    %4720 = vmatmul.mubr.bf16.gmra.mxu0 %v732
    %v4721 = vpop.f32.mrf.mxu0
    %v4722 = vadd.f32 %v4682, %v4721
    %v4723 = vpop.f32.mrf.mxu0
    %v4724 = vpop.f32.mrf.mxu0
    %v4725 = vpop.f32.mrf.mxu0
    %4726 = vdwg.mxu0
    %4727 = vmatprep.subr.bf16.mxu0 0
    %4728 = vmatpush1.bf16.xpose.msra.mxu0 0
    %4729 = vmatprep.subr.bf16.mxu0 0
    %4730 = vmatpush1.bf16.xpose.msra.mxu0 0
    %4731 = vmatprep.subr.bf16.mxu0 0
    %4732 = vmatpush1.bf16.xpose.msra.mxu0 0
    %4733 = vmatprep.subr.bf16.mxu0 0
    %4734 = vmatpush1.bf16.xpose.msra.mxu0 0
    %4735 = vmatprep.subr.bf16.mxu0 0
    %4736 = vmatpush1.bf16.xpose.msra.mxu0 0
    %4737 = vmatprep.subr.bf16.mxu0 0
    %4738 = vmatpush1.bf16.xpose.msra.mxu0 0
    %4739 = vmatprep.subr.bf16.mxu0 0
    %4740 = vmatpush1.bf16.xpose.msra.mxu0 0
    %4741 = vmatprep.subr.bf16.mxu0 %v3000
    %4742 = vmatpush1.bf16.xpose.msra.mxu0 %v2999
    %4743 = vmatprep.subr.bf16.mxu0 0
    %4744 = vmatpush2.bf16.xpose.msra.mxu0 0
    %4745 = vmatprep.subr.bf16.mxu0 0
    %4746 = vmatpush2.bf16.xpose.msra.mxu0 0
    %4747 = vmatprep.subr.bf16.mxu0 0
    %4748 = vmatpush2.bf16.xpose.msra.mxu0 0
    %4749 = vmatprep.subr.bf16.mxu0 0
    %4750 = vmatpush2.bf16.xpose.msra.mxu0 0
    %4751 = vmatprep.subr.bf16.mxu0 0
    %4752 = vmatpush2.bf16.xpose.msra.mxu0 0
    %4753 = vmatprep.subr.bf16.mxu0 0
    %4754 = vmatpush2.bf16.xpose.msra.mxu0 0
    %4755 = vmatprep.subr.bf16.mxu0 0
    %4756 = vmatpush2.bf16.xpose.msra.mxu0 0
    %4757 = vmatprep.subr.bf16.mxu0 0
    %4758 = vmatpush2.bf16.xpose.msra.mxu0 0
    %4759 = vmatprep.mubr.bf16.mxu0 %v772
    %4760 = vmatmul.mubr.bf16.gmra.mxu0 %v758
    %v4761 = vpop.f32.mrf.mxu0
    %v4762 = vadd.f32 %v4722, %v4761
    %v4763 = vpop.f32.mrf.mxu0
    %v4764 = vpop.f32.mrf.mxu0
    %v4765 = vpop.f32.mrf.mxu0
    %4766 = vdwg.mxu0
    %4767 = vmatprep.subr.bf16.mxu0 0
    %4768 = vmatpush1.bf16.xpose.msra.mxu0 0
    %4769 = vmatprep.subr.bf16.mxu0 0
    %4770 = vmatpush1.bf16.xpose.msra.mxu0 0
    %4771 = vmatprep.subr.bf16.mxu0 0
    %4772 = vmatpush1.bf16.xpose.msra.mxu0 0
    %4773 = vmatprep.subr.bf16.mxu0 0
    %4774 = vmatpush1.bf16.xpose.msra.mxu0 0
    %4775 = vmatprep.subr.bf16.mxu0 0
    %4776 = vmatpush1.bf16.xpose.msra.mxu0 0
    %4777 = vmatprep.subr.bf16.mxu0 0
    %4778 = vmatpush1.bf16.xpose.msra.mxu0 0
    %4779 = vmatprep.subr.bf16.mxu0 0
    %4780 = vmatpush1.bf16.xpose.msra.mxu0 0
    %4781 = vmatprep.subr.bf16.mxu0 %v3002
    %4782 = vmatpush1.bf16.xpose.msra.mxu0 %v3001
    %4783 = vmatprep.subr.bf16.mxu0 0
    %4784 = vmatpush2.bf16.xpose.msra.mxu0 0
    %4785 = vmatprep.subr.bf16.mxu0 0
    %4786 = vmatpush2.bf16.xpose.msra.mxu0 0
    %4787 = vmatprep.subr.bf16.mxu0 0
    %4788 = vmatpush2.bf16.xpose.msra.mxu0 0
    %4789 = vmatprep.subr.bf16.mxu0 0
    %4790 = vmatpush2.bf16.xpose.msra.mxu0 0
    %4791 = vmatprep.subr.bf16.mxu0 0
    %4792 = vmatpush2.bf16.xpose.msra.mxu0 0
    %4793 = vmatprep.subr.bf16.mxu0 0
    %4794 = vmatpush2.bf16.xpose.msra.mxu0 0
    %4795 = vmatprep.subr.bf16.mxu0 0
    %4796 = vmatpush2.bf16.xpose.msra.mxu0 0
    %4797 = vmatprep.subr.bf16.mxu0 0
    %4798 = vmatpush2.bf16.xpose.msra.mxu0 0
    %4799 = vmatprep.mubr.bf16.mxu0 %v782
    %4800 = vmatmul.mubr.bf16.gmra.mxu0 %v780
    %v4801 = vpop.f32.mrf.mxu0
    %v4802 = vadd.f32 %v4762, %v4801
    %v4803 = vpop.f32.mrf.mxu0
    %v4804 = vpop.f32.mrf.mxu0
    %v4805 = vpop.f32.mrf.mxu0
    %4806 = vdwg.mxu0
    %4807 = vmatprep.subr.bf16.mxu0 0
    %4808 = vmatpush1.bf16.xpose.msra.mxu0 0
    %4809 = vmatprep.subr.bf16.mxu0 0
    %4810 = vmatpush1.bf16.xpose.msra.mxu0 0
    %4811 = vmatprep.subr.bf16.mxu0 0
    %4812 = vmatpush1.bf16.xpose.msra.mxu0 0
    %4813 = vmatprep.subr.bf16.mxu0 0
    %4814 = vmatpush1.bf16.xpose.msra.mxu0 0
    %4815 = vmatprep.subr.bf16.mxu0 0
    %4816 = vmatpush1.bf16.xpose.msra.mxu0 0
    %4817 = vmatprep.subr.bf16.mxu0 0
    %4818 = vmatpush1.bf16.xpose.msra.mxu0 0
    %4819 = vmatprep.subr.bf16.mxu0 0
    %4820 = vmatpush1.bf16.xpose.msra.mxu0 0
    %4821 = vmatprep.subr.bf16.mxu0 %v3004
    %4822 = vmatpush1.bf16.xpose.msra.mxu0 %v3003
    %4823 = vmatprep.subr.bf16.mxu0 0
    %4824 = vmatpush2.bf16.xpose.msra.mxu0 0
    %4825 = vmatprep.subr.bf16.mxu0 0
    %4826 = vmatpush2.bf16.xpose.msra.mxu0 0
    %4827 = vmatprep.subr.bf16.mxu0 0
    %4828 = vmatpush2.bf16.xpose.msra.mxu0 0
    %4829 = vmatprep.subr.bf16.mxu0 0
    %4830 = vmatpush2.bf16.xpose.msra.mxu0 0
    %4831 = vmatprep.subr.bf16.mxu0 0
    %4832 = vmatpush2.bf16.xpose.msra.mxu0 0
    %4833 = vmatprep.subr.bf16.mxu0 0
    %4834 = vmatpush2.bf16.xpose.msra.mxu0 0
    %4835 = vmatprep.subr.bf16.mxu0 0
    %4836 = vmatpush2.bf16.xpose.msra.mxu0 0
    %4837 = vmatprep.subr.bf16.mxu0 0
    %4838 = vmatpush2.bf16.xpose.msra.mxu0 0
    %4839 = vmatprep.mubr.bf16.mxu0 %v779
    %4840 = vmatmul.mubr.bf16.gmra.mxu0 %v765
    %v4841 = vpop.f32.mrf.mxu0
    %v4842 = vadd.f32 %v4802, %v4841
    %v4843 = vpop.f32.mrf.mxu0
    %v4844 = vpop.f32.mrf.mxu0
    %v4845 = vpop.f32.mrf.mxu0
    %4846 = vdwg.mxu0
    %4847 = vmatprep.subr.bf16.mxu0 0
    %4848 = vmatpush1.bf16.xpose.msra.mxu0 0
    %4849 = vmatprep.subr.bf16.mxu0 0
    %4850 = vmatpush1.bf16.xpose.msra.mxu0 0
    %4851 = vmatprep.subr.bf16.mxu0 0
    %4852 = vmatpush1.bf16.xpose.msra.mxu0 0
    %4853 = vmatprep.subr.bf16.mxu0 0
    %4854 = vmatpush1.bf16.xpose.msra.mxu0 0
    %4855 = vmatprep.subr.bf16.mxu0 0
    %4856 = vmatpush1.bf16.xpose.msra.mxu0 0
    %4857 = vmatprep.subr.bf16.mxu0 0
    %4858 = vmatpush1.bf16.xpose.msra.mxu0 0
    %4859 = vmatprep.subr.bf16.mxu0 0
    %4860 = vmatpush1.bf16.xpose.msra.mxu0 0
    %4861 = vmatprep.subr.bf16.mxu0 %v3006
    %4862 = vmatpush1.bf16.xpose.msra.mxu0 %v3005
    %4863 = vmatprep.subr.bf16.mxu0 0
    %4864 = vmatpush2.bf16.xpose.msra.mxu0 0
    %4865 = vmatprep.subr.bf16.mxu0 0
    %4866 = vmatpush2.bf16.xpose.msra.mxu0 0
    %4867 = vmatprep.subr.bf16.mxu0 0
    %4868 = vmatpush2.bf16.xpose.msra.mxu0 0
    %4869 = vmatprep.subr.bf16.mxu0 0
    %4870 = vmatpush2.bf16.xpose.msra.mxu0 0
    %4871 = vmatprep.subr.bf16.mxu0 0
    %4872 = vmatpush2.bf16.xpose.msra.mxu0 0
    %4873 = vmatprep.subr.bf16.mxu0 0
    %4874 = vmatpush2.bf16.xpose.msra.mxu0 0
    %4875 = vmatprep.subr.bf16.mxu0 0
    %4876 = vmatpush2.bf16.xpose.msra.mxu0 0
    %4877 = vmatprep.subr.bf16.mxu0 0
    %4878 = vmatpush2.bf16.xpose.msra.mxu0 0
    %4879 = vmatprep.mubr.bf16.mxu0 %v783
    %4880 = vmatmul.mubr.bf16.gmra.mxu0 %v781
    %v4881 = vpop.f32.mrf.mxu0
    %v4882 = vadd.f32 %v4842, %v4881
    %v4883 = vpop.f32.mrf.mxu0
    %v4884 = vpop.f32.mrf.mxu0
    %v4885 = vpop.f32.mrf.mxu0
    %4886 = vdwg.mxu0
    %4887 = vmatprep.subr.bf16.mxu0 0
    %4888 = vmatpush1.bf16.xpose.msra.mxu0 0
    %4889 = vmatprep.subr.bf16.mxu0 0
    %4890 = vmatpush1.bf16.xpose.msra.mxu0 0
    %4891 = vmatprep.subr.bf16.mxu0 0
    %4892 = vmatpush1.bf16.xpose.msra.mxu0 0
    %4893 = vmatprep.subr.bf16.mxu0 0
    %4894 = vmatpush1.bf16.xpose.msra.mxu0 0
    %4895 = vmatprep.subr.bf16.mxu0 0
    %4896 = vmatpush1.bf16.xpose.msra.mxu0 0
    %4897 = vmatprep.subr.bf16.mxu0 0
    %4898 = vmatpush1.bf16.xpose.msra.mxu0 0
    %4899 = vmatprep.subr.bf16.mxu0 0
    %4900 = vmatpush1.bf16.xpose.msra.mxu0 0
    %4901 = vmatprep.subr.bf16.mxu0 %v3008
    %4902 = vmatpush1.bf16.xpose.msra.mxu0 %v3007
    %4903 = vmatprep.subr.bf16.mxu0 0
    %4904 = vmatpush2.bf16.xpose.msra.mxu0 0
    %4905 = vmatprep.subr.bf16.mxu0 0
    %4906 = vmatpush2.bf16.xpose.msra.mxu0 0
    %4907 = vmatprep.subr.bf16.mxu0 0
    %4908 = vmatpush2.bf16.xpose.msra.mxu0 0
    %4909 = vmatprep.subr.bf16.mxu0 0
    %4910 = vmatpush2.bf16.xpose.msra.mxu0 0
    %4911 = vmatprep.subr.bf16.mxu0 0
    %4912 = vmatpush2.bf16.xpose.msra.mxu0 0
    %4913 = vmatprep.subr.bf16.mxu0 0
    %4914 = vmatpush2.bf16.xpose.msra.mxu0 0
    %4915 = vmatprep.subr.bf16.mxu0 0
    %4916 = vmatpush2.bf16.xpose.msra.mxu0 0
    %4917 = vmatprep.subr.bf16.mxu0 0
    %4918 = vmatpush2.bf16.xpose.msra.mxu0 0
    %4919 = vmatprep.mubr.bf16.mxu0 %v821
    %4920 = vmatmul.mubr.bf16.gmra.mxu0 %v807
    %v4921 = vpop.f32.mrf.mxu0
    %v4922 = vadd.f32 %v4882, %v4921
    %v4923 = vpop.f32.mrf.mxu0
    %v4924 = vpop.f32.mrf.mxu0
    %v4925 = vpop.f32.mrf.mxu0
    %4926 = vdwg.mxu0
    %4927 = vmatprep.subr.bf16.mxu0 0
    %4928 = vmatpush1.bf16.xpose.msra.mxu0 0
    %4929 = vmatprep.subr.bf16.mxu0 0
    %4930 = vmatpush1.bf16.xpose.msra.mxu0 0
    %4931 = vmatprep.subr.bf16.mxu0 0
    %4932 = vmatpush1.bf16.xpose.msra.mxu0 0
    %4933 = vmatprep.subr.bf16.mxu0 0
    %4934 = vmatpush1.bf16.xpose.msra.mxu0 0
    %4935 = vmatprep.subr.bf16.mxu0 0
    %4936 = vmatpush1.bf16.xpose.msra.mxu0 0
    %4937 = vmatprep.subr.bf16.mxu0 0
    %4938 = vmatpush1.bf16.xpose.msra.mxu0 0
    %4939 = vmatprep.subr.bf16.mxu0 0
    %4940 = vmatpush1.bf16.xpose.msra.mxu0 0
    %4941 = vmatprep.subr.bf16.mxu0 %v3010
    %4942 = vmatpush1.bf16.xpose.msra.mxu0 %v3009
    %4943 = vmatprep.subr.bf16.mxu0 0
    %4944 = vmatpush2.bf16.xpose.msra.mxu0 0
    %4945 = vmatprep.subr.bf16.mxu0 0
    %4946 = vmatpush2.bf16.xpose.msra.mxu0 0
    %4947 = vmatprep.subr.bf16.mxu0 0
    %4948 = vmatpush2.bf16.xpose.msra.mxu0 0
    %4949 = vmatprep.subr.bf16.mxu0 0
    %4950 = vmatpush2.bf16.xpose.msra.mxu0 0
    %4951 = vmatprep.subr.bf16.mxu0 0
    %4952 = vmatpush2.bf16.xpose.msra.mxu0 0
    %4953 = vmatprep.subr.bf16.mxu0 0
    %4954 = vmatpush2.bf16.xpose.msra.mxu0 0
    %4955 = vmatprep.subr.bf16.mxu0 0
    %4956 = vmatpush2.bf16.xpose.msra.mxu0 0
    %4957 = vmatprep.subr.bf16.mxu0 0
    %4958 = vmatpush2.bf16.xpose.msra.mxu0 0
    %4959 = vmatprep.mubr.bf16.mxu0 %v831
    %4960 = vmatmul.mubr.bf16.gmra.mxu0 %v829
    %v4961 = vpop.f32.mrf.mxu0
    %v4962 = vadd.f32 %v4922, %v4961
    %v4963 = vpop.f32.mrf.mxu0
    %v4964 = vpop.f32.mrf.mxu0
    %v4965 = vpop.f32.mrf.mxu0
    %4966 = vdwg.mxu0
    %4967 = vmatprep.subr.bf16.mxu0 0
    %4968 = vmatpush1.bf16.xpose.msra.mxu0 0
    %4969 = vmatprep.subr.bf16.mxu0 0
    %4970 = vmatpush1.bf16.xpose.msra.mxu0 0
    %4971 = vmatprep.subr.bf16.mxu0 0
    %4972 = vmatpush1.bf16.xpose.msra.mxu0 0
    %4973 = vmatprep.subr.bf16.mxu0 0
    %4974 = vmatpush1.bf16.xpose.msra.mxu0 0
    %4975 = vmatprep.subr.bf16.mxu0 0
    %4976 = vmatpush1.bf16.xpose.msra.mxu0 0
    %4977 = vmatprep.subr.bf16.mxu0 0
    %4978 = vmatpush1.bf16.xpose.msra.mxu0 0
    %4979 = vmatprep.subr.bf16.mxu0 0
    %4980 = vmatpush1.bf16.xpose.msra.mxu0 0
    %4981 = vmatprep.subr.bf16.mxu0 %v3012
    %4982 = vmatpush1.bf16.xpose.msra.mxu0 %v3011
    %4983 = vmatprep.subr.bf16.mxu0 0
    %4984 = vmatpush2.bf16.xpose.msra.mxu0 0
    %4985 = vmatprep.subr.bf16.mxu0 0
    %4986 = vmatpush2.bf16.xpose.msra.mxu0 0
    %4987 = vmatprep.subr.bf16.mxu0 0
    %4988 = vmatpush2.bf16.xpose.msra.mxu0 0
    %4989 = vmatprep.subr.bf16.mxu0 0
    %4990 = vmatpush2.bf16.xpose.msra.mxu0 0
    %4991 = vmatprep.subr.bf16.mxu0 0
    %4992 = vmatpush2.bf16.xpose.msra.mxu0 0
    %4993 = vmatprep.subr.bf16.mxu0 0
    %4994 = vmatpush2.bf16.xpose.msra.mxu0 0
    %4995 = vmatprep.subr.bf16.mxu0 0
    %4996 = vmatpush2.bf16.xpose.msra.mxu0 0
    %4997 = vmatprep.subr.bf16.mxu0 0
    %4998 = vmatpush2.bf16.xpose.msra.mxu0 0
    %4999 = vmatprep.mubr.bf16.mxu0 %v828
    %5000 = vmatmul.mubr.bf16.gmra.mxu0 %v814
    %v5001 = vpop.f32.mrf.mxu0
    %v5002 = vadd.f32 %v4962, %v5001
    %v5003 = vpop.f32.mrf.mxu0
    %v5004 = vpop.f32.mrf.mxu0
    %v5005 = vpop.f32.mrf.mxu0
    %5006 = vdwg.mxu0
    %5007 = vmatprep.subr.bf16.mxu0 0
    %5008 = vmatpush1.bf16.xpose.msra.mxu0 0
    %5009 = vmatprep.subr.bf16.mxu0 0
    %5010 = vmatpush1.bf16.xpose.msra.mxu0 0
    %5011 = vmatprep.subr.bf16.mxu0 0
    %5012 = vmatpush1.bf16.xpose.msra.mxu0 0
    %5013 = vmatprep.subr.bf16.mxu0 0
    %5014 = vmatpush1.bf16.xpose.msra.mxu0 0
    %5015 = vmatprep.subr.bf16.mxu0 0
    %5016 = vmatpush1.bf16.xpose.msra.mxu0 0
    %5017 = vmatprep.subr.bf16.mxu0 0
    %5018 = vmatpush1.bf16.xpose.msra.mxu0 0
    %5019 = vmatprep.subr.bf16.mxu0 0
    %5020 = vmatpush1.bf16.xpose.msra.mxu0 0
    %5021 = vmatprep.subr.bf16.mxu0 %v3014
    %5022 = vmatpush1.bf16.xpose.msra.mxu0 %v3013
    %5023 = vmatprep.subr.bf16.mxu0 0
    %5024 = vmatpush2.bf16.xpose.msra.mxu0 0
    %5025 = vmatprep.subr.bf16.mxu0 0
    %5026 = vmatpush2.bf16.xpose.msra.mxu0 0
    %5027 = vmatprep.subr.bf16.mxu0 0
    %5028 = vmatpush2.bf16.xpose.msra.mxu0 0
    %5029 = vmatprep.subr.bf16.mxu0 0
    %5030 = vmatpush2.bf16.xpose.msra.mxu0 0
    %5031 = vmatprep.subr.bf16.mxu0 0
    %5032 = vmatpush2.bf16.xpose.msra.mxu0 0
    %5033 = vmatprep.subr.bf16.mxu0 0
    %5034 = vmatpush2.bf16.xpose.msra.mxu0 0
    %5035 = vmatprep.subr.bf16.mxu0 0
    %5036 = vmatpush2.bf16.xpose.msra.mxu0 0
    %5037 = vmatprep.subr.bf16.mxu0 0
    %5038 = vmatpush2.bf16.xpose.msra.mxu0 0
    %5039 = vmatprep.mubr.bf16.mxu0 %v832
    %5040 = vmatmul.mubr.bf16.gmra.mxu0 %v830
    %v5041 = vpop.f32.mrf.mxu0
    %v5042 = vadd.f32 %v5002, %v5041
    %v5043 = vpop.f32.mrf.mxu0
    %v5044 = vpop.f32.mrf.mxu0
    %v5045 = vpop.f32.mrf.mxu0
    %5046 = vdwg.mxu0
    %5047 = vmatprep.subr.bf16.mxu0 0
    %5048 = vmatpush1.bf16.xpose.msra.mxu0 0
    %5049 = vmatprep.subr.bf16.mxu0 0
    %5050 = vmatpush1.bf16.xpose.msra.mxu0 0
    %5051 = vmatprep.subr.bf16.mxu0 0
    %5052 = vmatpush1.bf16.xpose.msra.mxu0 0
    %5053 = vmatprep.subr.bf16.mxu0 0
    %5054 = vmatpush1.bf16.xpose.msra.mxu0 0
    %5055 = vmatprep.subr.bf16.mxu0 0
    %5056 = vmatpush1.bf16.xpose.msra.mxu0 0
    %5057 = vmatprep.subr.bf16.mxu0 0
    %5058 = vmatpush1.bf16.xpose.msra.mxu0 0
    %5059 = vmatprep.subr.bf16.mxu0 0
    %5060 = vmatpush1.bf16.xpose.msra.mxu0 0
    %5061 = vmatprep.subr.bf16.mxu0 %v3016
    %5062 = vmatpush1.bf16.xpose.msra.mxu0 %v3015
    %5063 = vmatprep.subr.bf16.mxu0 0
    %5064 = vmatpush2.bf16.xpose.msra.mxu0 0
    %5065 = vmatprep.subr.bf16.mxu0 0
    %5066 = vmatpush2.bf16.xpose.msra.mxu0 0
    %5067 = vmatprep.subr.bf16.mxu0 0
    %5068 = vmatpush2.bf16.xpose.msra.mxu0 0
    %5069 = vmatprep.subr.bf16.mxu0 0
    %5070 = vmatpush2.bf16.xpose.msra.mxu0 0
    %5071 = vmatprep.subr.bf16.mxu0 0
    %5072 = vmatpush2.bf16.xpose.msra.mxu0 0
    %5073 = vmatprep.subr.bf16.mxu0 0
    %5074 = vmatpush2.bf16.xpose.msra.mxu0 0
    %5075 = vmatprep.subr.bf16.mxu0 0
    %5076 = vmatpush2.bf16.xpose.msra.mxu0 0
    %5077 = vmatprep.subr.bf16.mxu0 0
    %5078 = vmatpush2.bf16.xpose.msra.mxu0 0
    %5079 = vmatprep.mubr.bf16.mxu0 %v870
    %5080 = vmatmul.mubr.bf16.gmra.mxu0 %v856
    %v5081 = vpop.f32.mrf.mxu0
    %v5082 = vadd.f32 %v5042, %v5081
    %v5083 = vpop.f32.mrf.mxu0
    %v5084 = vpop.f32.mrf.mxu0
    %v5085 = vpop.f32.mrf.mxu0
    %5086 = vdwg.mxu0
    %5087 = vmatprep.subr.bf16.mxu0 0
    %5088 = vmatpush1.bf16.xpose.msra.mxu0 0
    %5089 = vmatprep.subr.bf16.mxu0 0
    %5090 = vmatpush1.bf16.xpose.msra.mxu0 0
    %5091 = vmatprep.subr.bf16.mxu0 0
    %5092 = vmatpush1.bf16.xpose.msra.mxu0 0
    %5093 = vmatprep.subr.bf16.mxu0 0
    %5094 = vmatpush1.bf16.xpose.msra.mxu0 0
    %5095 = vmatprep.subr.bf16.mxu0 0
    %5096 = vmatpush1.bf16.xpose.msra.mxu0 0
    %5097 = vmatprep.subr.bf16.mxu0 0
    %5098 = vmatpush1.bf16.xpose.msra.mxu0 0
    %5099 = vmatprep.subr.bf16.mxu0 0
    %5100 = vmatpush1.bf16.xpose.msra.mxu0 0
    %5101 = vmatprep.subr.bf16.mxu0 %v3018
    %5102 = vmatpush1.bf16.xpose.msra.mxu0 %v3017
    %5103 = vmatprep.subr.bf16.mxu0 0
    %5104 = vmatpush2.bf16.xpose.msra.mxu0 0
    %5105 = vmatprep.subr.bf16.mxu0 0
    %5106 = vmatpush2.bf16.xpose.msra.mxu0 0
    %5107 = vmatprep.subr.bf16.mxu0 0
    %5108 = vmatpush2.bf16.xpose.msra.mxu0 0
    %5109 = vmatprep.subr.bf16.mxu0 0
    %5110 = vmatpush2.bf16.xpose.msra.mxu0 0
    %5111 = vmatprep.subr.bf16.mxu0 0
    %5112 = vmatpush2.bf16.xpose.msra.mxu0 0
    %5113 = vmatprep.subr.bf16.mxu0 0
    %5114 = vmatpush2.bf16.xpose.msra.mxu0 0
    %5115 = vmatprep.subr.bf16.mxu0 0
    %5116 = vmatpush2.bf16.xpose.msra.mxu0 0
    %5117 = vmatprep.subr.bf16.mxu0 0
    %5118 = vmatpush2.bf16.xpose.msra.mxu0 0
    %5119 = vmatprep.mubr.bf16.mxu0 %v880
    %5120 = vmatmul.mubr.bf16.gmra.mxu0 %v878
    %v5121 = vpop.f32.mrf.mxu0
    %v5122 = vadd.f32 %v5082, %v5121
    %v5123 = vpop.f32.mrf.mxu0
    %v5124 = vpop.f32.mrf.mxu0
    %v5125 = vpop.f32.mrf.mxu0
    %5126 = vdwg.mxu0
    %5127 = vmatprep.subr.bf16.mxu0 0
    %5128 = vmatpush1.bf16.xpose.msra.mxu0 0
    %5129 = vmatprep.subr.bf16.mxu0 0
    %5130 = vmatpush1.bf16.xpose.msra.mxu0 0
    %5131 = vmatprep.subr.bf16.mxu0 0
    %5132 = vmatpush1.bf16.xpose.msra.mxu0 0
    %5133 = vmatprep.subr.bf16.mxu0 0
    %5134 = vmatpush1.bf16.xpose.msra.mxu0 0
    %5135 = vmatprep.subr.bf16.mxu0 0
    %5136 = vmatpush1.bf16.xpose.msra.mxu0 0
    %5137 = vmatprep.subr.bf16.mxu0 0
    %5138 = vmatpush1.bf16.xpose.msra.mxu0 0
    %5139 = vmatprep.subr.bf16.mxu0 0
    %5140 = vmatpush1.bf16.xpose.msra.mxu0 0
    %5141 = vmatprep.subr.bf16.mxu0 %v3020
    %5142 = vmatpush1.bf16.xpose.msra.mxu0 %v3019
    %5143 = vmatprep.subr.bf16.mxu0 0
    %5144 = vmatpush2.bf16.xpose.msra.mxu0 0
    %5145 = vmatprep.subr.bf16.mxu0 0
    %5146 = vmatpush2.bf16.xpose.msra.mxu0 0
    %5147 = vmatprep.subr.bf16.mxu0 0
    %5148 = vmatpush2.bf16.xpose.msra.mxu0 0
    %5149 = vmatprep.subr.bf16.mxu0 0
    %5150 = vmatpush2.bf16.xpose.msra.mxu0 0
    %5151 = vmatprep.subr.bf16.mxu0 0
    %5152 = vmatpush2.bf16.xpose.msra.mxu0 0
    %5153 = vmatprep.subr.bf16.mxu0 0
    %5154 = vmatpush2.bf16.xpose.msra.mxu0 0
    %5155 = vmatprep.subr.bf16.mxu0 0
    %5156 = vmatpush2.bf16.xpose.msra.mxu0 0
    %5157 = vmatprep.subr.bf16.mxu0 0
    %5158 = vmatpush2.bf16.xpose.msra.mxu0 0
    %5159 = vmatprep.mubr.bf16.mxu0 %v877
    %5160 = vmatmul.mubr.bf16.gmra.mxu0 %v863
    %v5161 = vpop.f32.mrf.mxu0
    %v5162 = vadd.f32 %v5122, %v5161
    %v5163 = vpop.f32.mrf.mxu0
    %v5164 = vpop.f32.mrf.mxu0
    %v5165 = vpop.f32.mrf.mxu0
    %5166 = vdwg.mxu0
    %5167 = vmatprep.subr.bf16.mxu0 0
    %5168 = vmatpush1.bf16.xpose.msra.mxu0 0
    %5169 = vmatprep.subr.bf16.mxu0 0
    %5170 = vmatpush1.bf16.xpose.msra.mxu0 0
    %5171 = vmatprep.subr.bf16.mxu0 0
    %5172 = vmatpush1.bf16.xpose.msra.mxu0 0
    %5173 = vmatprep.subr.bf16.mxu0 0
    %5174 = vmatpush1.bf16.xpose.msra.mxu0 0
    %5175 = vmatprep.subr.bf16.mxu0 0
    %5176 = vmatpush1.bf16.xpose.msra.mxu0 0
    %5177 = vmatprep.subr.bf16.mxu0 0
    %5178 = vmatpush1.bf16.xpose.msra.mxu0 0
    %5179 = vmatprep.subr.bf16.mxu0 0
    %5180 = vmatpush1.bf16.xpose.msra.mxu0 0
    %5181 = vmatprep.subr.bf16.mxu0 %v3022
    %5182 = vmatpush1.bf16.xpose.msra.mxu0 %v3021
    %5183 = vmatprep.subr.bf16.mxu0 0
    %5184 = vmatpush2.bf16.xpose.msra.mxu0 0
    %5185 = vmatprep.subr.bf16.mxu0 0
    %5186 = vmatpush2.bf16.xpose.msra.mxu0 0
    %5187 = vmatprep.subr.bf16.mxu0 0
    %5188 = vmatpush2.bf16.xpose.msra.mxu0 0
    %5189 = vmatprep.subr.bf16.mxu0 0
    %5190 = vmatpush2.bf16.xpose.msra.mxu0 0
    %5191 = vmatprep.subr.bf16.mxu0 0
    %5192 = vmatpush2.bf16.xpose.msra.mxu0 0
    %5193 = vmatprep.subr.bf16.mxu0 0
    %5194 = vmatpush2.bf16.xpose.msra.mxu0 0
    %5195 = vmatprep.subr.bf16.mxu0 0
    %5196 = vmatpush2.bf16.xpose.msra.mxu0 0
    %5197 = vmatprep.subr.bf16.mxu0 0
    %5198 = vmatpush2.bf16.xpose.msra.mxu0 0
    %5199 = vmatprep.mubr.bf16.mxu0 %v881
    %5200 = vmatmul.mubr.bf16.gmra.mxu0 %v879
    %v5201 = vpop.f32.mrf.mxu0
    %v5202 = vadd.f32 %v5162, %v5201
    %v5203 = vpop.f32.mrf.mxu0
    %v5204 = vpop.f32.mrf.mxu0
    %v5205 = vpop.f32.mrf.mxu0
    %5206 = vdwg.mxu0
    %5207 = vmatprep.subr.bf16.mxu0 0
    %5208 = vmatpush1.bf16.xpose.msra.mxu0 0
    %5209 = vmatprep.subr.bf16.mxu0 0
    %5210 = vmatpush1.bf16.xpose.msra.mxu0 0
    %5211 = vmatprep.subr.bf16.mxu0 0
    %5212 = vmatpush1.bf16.xpose.msra.mxu0 0
    %5213 = vmatprep.subr.bf16.mxu0 0
    %5214 = vmatpush1.bf16.xpose.msra.mxu0 0
    %5215 = vmatprep.subr.bf16.mxu0 0
    %5216 = vmatpush1.bf16.xpose.msra.mxu0 0
    %5217 = vmatprep.subr.bf16.mxu0 0
    %5218 = vmatpush1.bf16.xpose.msra.mxu0 0
    %5219 = vmatprep.subr.bf16.mxu0 0
    %5220 = vmatpush1.bf16.xpose.msra.mxu0 0
    %5221 = vmatprep.subr.bf16.mxu0 %v3024
    %5222 = vmatpush1.bf16.xpose.msra.mxu0 %v3023
    %5223 = vmatprep.subr.bf16.mxu0 0
    %5224 = vmatpush2.bf16.xpose.msra.mxu0 0
    %5225 = vmatprep.subr.bf16.mxu0 0
    %5226 = vmatpush2.bf16.xpose.msra.mxu0 0
    %5227 = vmatprep.subr.bf16.mxu0 0
    %5228 = vmatpush2.bf16.xpose.msra.mxu0 0
    %5229 = vmatprep.subr.bf16.mxu0 0
    %5230 = vmatpush2.bf16.xpose.msra.mxu0 0
    %5231 = vmatprep.subr.bf16.mxu0 0
    %5232 = vmatpush2.bf16.xpose.msra.mxu0 0
    %5233 = vmatprep.subr.bf16.mxu0 0
    %5234 = vmatpush2.bf16.xpose.msra.mxu0 0
    %5235 = vmatprep.subr.bf16.mxu0 0
    %5236 = vmatpush2.bf16.xpose.msra.mxu0 0
    %5237 = vmatprep.subr.bf16.mxu0 0
    %5238 = vmatpush2.bf16.xpose.msra.mxu0 0
    %5239 = vmatprep.mubr.bf16.mxu0 %v919
    %5240 = vmatmul.mubr.bf16.gmra.mxu0 %v905
    %v5241 = vpop.f32.mrf.mxu0
    %v5242 = vadd.f32 %v5202, %v5241
    %v5243 = vpop.f32.mrf.mxu0
    %v5244 = vpop.f32.mrf.mxu0
    %v5245 = vpop.f32.mrf.mxu0
    %5246 = vdwg.mxu0
    %5247 = vmatprep.subr.bf16.mxu0 0
    %5248 = vmatpush1.bf16.xpose.msra.mxu0 0
    %5249 = vmatprep.subr.bf16.mxu0 0
    %5250 = vmatpush1.bf16.xpose.msra.mxu0 0
    %5251 = vmatprep.subr.bf16.mxu0 0
    %5252 = vmatpush1.bf16.xpose.msra.mxu0 0
    %5253 = vmatprep.subr.bf16.mxu0 0
    %5254 = vmatpush1.bf16.xpose.msra.mxu0 0
    %5255 = vmatprep.subr.bf16.mxu0 0
    %5256 = vmatpush1.bf16.xpose.msra.mxu0 0
    %5257 = vmatprep.subr.bf16.mxu0 0
    %5258 = vmatpush1.bf16.xpose.msra.mxu0 0
    %5259 = vmatprep.subr.bf16.mxu0 0
    %5260 = vmatpush1.bf16.xpose.msra.mxu0 0
    %5261 = vmatprep.subr.bf16.mxu0 %v3026
    %5262 = vmatpush1.bf16.xpose.msra.mxu0 %v3025
    %5263 = vmatprep.subr.bf16.mxu0 0
    %5264 = vmatpush2.bf16.xpose.msra.mxu0 0
    %5265 = vmatprep.subr.bf16.mxu0 0
    %5266 = vmatpush2.bf16.xpose.msra.mxu0 0
    %5267 = vmatprep.subr.bf16.mxu0 0
    %5268 = vmatpush2.bf16.xpose.msra.mxu0 0
    %5269 = vmatprep.subr.bf16.mxu0 0
    %5270 = vmatpush2.bf16.xpose.msra.mxu0 0
    %5271 = vmatprep.subr.bf16.mxu0 0
    %5272 = vmatpush2.bf16.xpose.msra.mxu0 0
    %5273 = vmatprep.subr.bf16.mxu0 0
    %5274 = vmatpush2.bf16.xpose.msra.mxu0 0
    %5275 = vmatprep.subr.bf16.mxu0 0
    %5276 = vmatpush2.bf16.xpose.msra.mxu0 0
    %5277 = vmatprep.subr.bf16.mxu0 0
    %5278 = vmatpush2.bf16.xpose.msra.mxu0 0
    %5279 = vmatprep.mubr.bf16.mxu0 %v929
    %5280 = vmatmul.mubr.bf16.gmra.mxu0 %v927
    %v5281 = vpop.f32.mrf.mxu0
    %v5282 = vadd.f32 %v5242, %v5281
    %v5283 = vpop.f32.mrf.mxu0
    %v5284 = vpop.f32.mrf.mxu0
    %v5285 = vpop.f32.mrf.mxu0
    %5286 = vdwg.mxu0
    %5287 = vmatprep.subr.bf16.mxu0 0
    %5288 = vmatpush1.bf16.xpose.msra.mxu0 0
    %5289 = vmatprep.subr.bf16.mxu0 0
    %5290 = vmatpush1.bf16.xpose.msra.mxu0 0
    %5291 = vmatprep.subr.bf16.mxu0 0
    %5292 = vmatpush1.bf16.xpose.msra.mxu0 0
    %5293 = vmatprep.subr.bf16.mxu0 0
    %5294 = vmatpush1.bf16.xpose.msra.mxu0 0
    %5295 = vmatprep.subr.bf16.mxu0 0
    %5296 = vmatpush1.bf16.xpose.msra.mxu0 0
    %5297 = vmatprep.subr.bf16.mxu0 0
    %5298 = vmatpush1.bf16.xpose.msra.mxu0 0
    %5299 = vmatprep.subr.bf16.mxu0 0
    %5300 = vmatpush1.bf16.xpose.msra.mxu0 0
    %5301 = vmatprep.subr.bf16.mxu0 %v3028
    %5302 = vmatpush1.bf16.xpose.msra.mxu0 %v3027
    %5303 = vmatprep.subr.bf16.mxu0 0
    %5304 = vmatpush2.bf16.xpose.msra.mxu0 0
    %5305 = vmatprep.subr.bf16.mxu0 0
    %5306 = vmatpush2.bf16.xpose.msra.mxu0 0
    %5307 = vmatprep.subr.bf16.mxu0 0
    %5308 = vmatpush2.bf16.xpose.msra.mxu0 0
    %5309 = vmatprep.subr.bf16.mxu0 0
    %5310 = vmatpush2.bf16.xpose.msra.mxu0 0
    %5311 = vmatprep.subr.bf16.mxu0 0
    %5312 = vmatpush2.bf16.xpose.msra.mxu0 0
    %5313 = vmatprep.subr.bf16.mxu0 0
    %5314 = vmatpush2.bf16.xpose.msra.mxu0 0
    %5315 = vmatprep.subr.bf16.mxu0 0
    %5316 = vmatpush2.bf16.xpose.msra.mxu0 0
    %5317 = vmatprep.subr.bf16.mxu0 0
    %5318 = vmatpush2.bf16.xpose.msra.mxu0 0
    %5319 = vmatprep.mubr.bf16.mxu0 %v926
    %5320 = vmatmul.mubr.bf16.gmra.mxu0 %v912
    %v5321 = vpop.f32.mrf.mxu0
    %v5322 = vadd.f32 %v5282, %v5321
    %v5323 = vpop.f32.mrf.mxu0
    %v5324 = vpop.f32.mrf.mxu0
    %v5325 = vpop.f32.mrf.mxu0
    %5326 = vdwg.mxu0
    %5327 = vmatprep.subr.bf16.mxu0 0
    %5328 = vmatpush1.bf16.xpose.msra.mxu0 0
    %5329 = vmatprep.subr.bf16.mxu0 0
    %5330 = vmatpush1.bf16.xpose.msra.mxu0 0
    %5331 = vmatprep.subr.bf16.mxu0 0
    %5332 = vmatpush1.bf16.xpose.msra.mxu0 0
    %5333 = vmatprep.subr.bf16.mxu0 0
    %5334 = vmatpush1.bf16.xpose.msra.mxu0 0
    %5335 = vmatprep.subr.bf16.mxu0 0
    %5336 = vmatpush1.bf16.xpose.msra.mxu0 0
    %5337 = vmatprep.subr.bf16.mxu0 0
    %5338 = vmatpush1.bf16.xpose.msra.mxu0 0
    %5339 = vmatprep.subr.bf16.mxu0 0
    %5340 = vmatpush1.bf16.xpose.msra.mxu0 0
    %5341 = vmatprep.subr.bf16.mxu0 %v3030
    %5342 = vmatpush1.bf16.xpose.msra.mxu0 %v3029
    %5343 = vmatprep.subr.bf16.mxu0 0
    %5344 = vmatpush2.bf16.xpose.msra.mxu0 0
    %5345 = vmatprep.subr.bf16.mxu0 0
    %5346 = vmatpush2.bf16.xpose.msra.mxu0 0
    %5347 = vmatprep.subr.bf16.mxu0 0
    %5348 = vmatpush2.bf16.xpose.msra.mxu0 0
    %5349 = vmatprep.subr.bf16.mxu0 0
    %5350 = vmatpush2.bf16.xpose.msra.mxu0 0
    %5351 = vmatprep.subr.bf16.mxu0 0
    %5352 = vmatpush2.bf16.xpose.msra.mxu0 0
    %5353 = vmatprep.subr.bf16.mxu0 0
    %5354 = vmatpush2.bf16.xpose.msra.mxu0 0
    %5355 = vmatprep.subr.bf16.mxu0 0
    %5356 = vmatpush2.bf16.xpose.msra.mxu0 0
    %5357 = vmatprep.subr.bf16.mxu0 0
    %5358 = vmatpush2.bf16.xpose.msra.mxu0 0
    %5359 = vmatprep.mubr.bf16.mxu0 %v930
    %5360 = vmatmul.mubr.bf16.gmra.mxu0 %v928
    %v5361 = vpop.f32.mrf.mxu0
    %v5362 = vadd.f32 %v5322, %v5361
    %v5363 = vpop.f32.mrf.mxu0
    %v5364 = vpop.f32.mrf.mxu0
    %v5365 = vpop.f32.mrf.mxu0
    %5366 = vdwg.mxu0
    %5367 = vmatprep.subr.bf16.mxu0 0
    %5368 = vmatpush1.bf16.xpose.msra.mxu0 0
    %5369 = vmatprep.subr.bf16.mxu0 0
    %5370 = vmatpush1.bf16.xpose.msra.mxu0 0
    %5371 = vmatprep.subr.bf16.mxu0 0
    %5372 = vmatpush1.bf16.xpose.msra.mxu0 0
    %5373 = vmatprep.subr.bf16.mxu0 0
    %5374 = vmatpush1.bf16.xpose.msra.mxu0 0
    %5375 = vmatprep.subr.bf16.mxu0 0
    %5376 = vmatpush1.bf16.xpose.msra.mxu0 0
    %5377 = vmatprep.subr.bf16.mxu0 0
    %5378 = vmatpush1.bf16.xpose.msra.mxu0 0
    %5379 = vmatprep.subr.bf16.mxu0 0
    %5380 = vmatpush1.bf16.xpose.msra.mxu0 0
    %5381 = vmatprep.subr.bf16.mxu0 %v3032
    %5382 = vmatpush1.bf16.xpose.msra.mxu0 %v3031
    %5383 = vmatprep.subr.bf16.mxu0 0
    %5384 = vmatpush2.bf16.xpose.msra.mxu0 0
    %5385 = vmatprep.subr.bf16.mxu0 0
    %5386 = vmatpush2.bf16.xpose.msra.mxu0 0
    %5387 = vmatprep.subr.bf16.mxu0 0
    %5388 = vmatpush2.bf16.xpose.msra.mxu0 0
    %5389 = vmatprep.subr.bf16.mxu0 0
    %5390 = vmatpush2.bf16.xpose.msra.mxu0 0
    %5391 = vmatprep.subr.bf16.mxu0 0
    %5392 = vmatpush2.bf16.xpose.msra.mxu0 0
    %5393 = vmatprep.subr.bf16.mxu0 0
    %5394 = vmatpush2.bf16.xpose.msra.mxu0 0
    %5395 = vmatprep.subr.bf16.mxu0 0
    %5396 = vmatpush2.bf16.xpose.msra.mxu0 0
    %5397 = vmatprep.subr.bf16.mxu0 0
    %5398 = vmatpush2.bf16.xpose.msra.mxu0 0
    %5399 = vmatprep.mubr.bf16.mxu0 %v968
    %5400 = vmatmul.mubr.bf16.gmra.mxu0 %v954
    %v5401 = vpop.f32.mrf.mxu0
    %v5402 = vadd.f32 %v5362, %v5401
    %v5403 = vpop.f32.mrf.mxu0
    %v5404 = vpop.f32.mrf.mxu0
    %v5405 = vpop.f32.mrf.mxu0
    %5406 = vdwg.mxu0
    %5407 = vmatprep.subr.bf16.mxu0 0
    %5408 = vmatpush1.bf16.xpose.msra.mxu0 0
    %5409 = vmatprep.subr.bf16.mxu0 0
    %5410 = vmatpush1.bf16.xpose.msra.mxu0 0
    %5411 = vmatprep.subr.bf16.mxu0 0
    %5412 = vmatpush1.bf16.xpose.msra.mxu0 0
    %5413 = vmatprep.subr.bf16.mxu0 0
    %5414 = vmatpush1.bf16.xpose.msra.mxu0 0
    %5415 = vmatprep.subr.bf16.mxu0 0
    %5416 = vmatpush1.bf16.xpose.msra.mxu0 0
    %5417 = vmatprep.subr.bf16.mxu0 0
    %5418 = vmatpush1.bf16.xpose.msra.mxu0 0
    %5419 = vmatprep.subr.bf16.mxu0 0
    %5420 = vmatpush1.bf16.xpose.msra.mxu0 0
    %5421 = vmatprep.subr.bf16.mxu0 %v3034
    %5422 = vmatpush1.bf16.xpose.msra.mxu0 %v3033
    %5423 = vmatprep.subr.bf16.mxu0 0
    %5424 = vmatpush2.bf16.xpose.msra.mxu0 0
    %5425 = vmatprep.subr.bf16.mxu0 0
    %5426 = vmatpush2.bf16.xpose.msra.mxu0 0
    %5427 = vmatprep.subr.bf16.mxu0 0
    %5428 = vmatpush2.bf16.xpose.msra.mxu0 0
    %5429 = vmatprep.subr.bf16.mxu0 0
    %5430 = vmatpush2.bf16.xpose.msra.mxu0 0
    %5431 = vmatprep.subr.bf16.mxu0 0
    %5432 = vmatpush2.bf16.xpose.msra.mxu0 0
    %5433 = vmatprep.subr.bf16.mxu0 0
    %5434 = vmatpush2.bf16.xpose.msra.mxu0 0
    %5435 = vmatprep.subr.bf16.mxu0 0
    %5436 = vmatpush2.bf16.xpose.msra.mxu0 0
    %5437 = vmatprep.subr.bf16.mxu0 0
    %5438 = vmatpush2.bf16.xpose.msra.mxu0 0
    %5439 = vmatprep.mubr.bf16.mxu0 %v978
    %5440 = vmatmul.mubr.bf16.gmra.mxu0 %v976
    %v5441 = vpop.f32.mrf.mxu0
    %v5442 = vadd.f32 %v5402, %v5441
    %v5443 = vpop.f32.mrf.mxu0
    %v5444 = vpop.f32.mrf.mxu0
    %v5445 = vpop.f32.mrf.mxu0
    %5446 = vdwg.mxu0
    %5447 = vmatprep.subr.bf16.mxu0 0
    %5448 = vmatpush1.bf16.xpose.msra.mxu0 0
    %5449 = vmatprep.subr.bf16.mxu0 0
    %5450 = vmatpush1.bf16.xpose.msra.mxu0 0
    %5451 = vmatprep.subr.bf16.mxu0 0
    %5452 = vmatpush1.bf16.xpose.msra.mxu0 0
    %5453 = vmatprep.subr.bf16.mxu0 0
    %5454 = vmatpush1.bf16.xpose.msra.mxu0 0
    %5455 = vmatprep.subr.bf16.mxu0 0
    %5456 = vmatpush1.bf16.xpose.msra.mxu0 0
    %5457 = vmatprep.subr.bf16.mxu0 0
    %5458 = vmatpush1.bf16.xpose.msra.mxu0 0
    %5459 = vmatprep.subr.bf16.mxu0 0
    %5460 = vmatpush1.bf16.xpose.msra.mxu0 0
    %5461 = vmatprep.subr.bf16.mxu0 %v3036
    %5462 = vmatpush1.bf16.xpose.msra.mxu0 %v3035
    %5463 = vmatprep.subr.bf16.mxu0 0
    %5464 = vmatpush2.bf16.xpose.msra.mxu0 0
    %5465 = vmatprep.subr.bf16.mxu0 0
    %5466 = vmatpush2.bf16.xpose.msra.mxu0 0
    %5467 = vmatprep.subr.bf16.mxu0 0
    %5468 = vmatpush2.bf16.xpose.msra.mxu0 0
    %5469 = vmatprep.subr.bf16.mxu0 0
    %5470 = vmatpush2.bf16.xpose.msra.mxu0 0
    %5471 = vmatprep.subr.bf16.mxu0 0
    %5472 = vmatpush2.bf16.xpose.msra.mxu0 0
    %5473 = vmatprep.subr.bf16.mxu0 0
    %5474 = vmatpush2.bf16.xpose.msra.mxu0 0
    %5475 = vmatprep.subr.bf16.mxu0 0
    %5476 = vmatpush2.bf16.xpose.msra.mxu0 0
    %5477 = vmatprep.subr.bf16.mxu0 0
    %5478 = vmatpush2.bf16.xpose.msra.mxu0 0
    %5479 = vmatprep.mubr.bf16.mxu0 %v975
    %5480 = vmatmul.mubr.bf16.gmra.mxu0 %v961
    %v5481 = vpop.f32.mrf.mxu0
    %v5482 = vadd.f32 %v5442, %v5481
    %v5483 = vpop.f32.mrf.mxu0
    %v5484 = vpop.f32.mrf.mxu0
    %v5485 = vpop.f32.mrf.mxu0
    %5486 = vdwg.mxu0
    %5487 = vmatprep.subr.bf16.mxu0 0
    %5488 = vmatpush1.bf16.xpose.msra.mxu0 0
    %5489 = vmatprep.subr.bf16.mxu0 0
    %5490 = vmatpush1.bf16.xpose.msra.mxu0 0
    %5491 = vmatprep.subr.bf16.mxu0 0
    %5492 = vmatpush1.bf16.xpose.msra.mxu0 0
    %5493 = vmatprep.subr.bf16.mxu0 0
    %5494 = vmatpush1.bf16.xpose.msra.mxu0 0
    %5495 = vmatprep.subr.bf16.mxu0 0
    %5496 = vmatpush1.bf16.xpose.msra.mxu0 0
    %5497 = vmatprep.subr.bf16.mxu0 0
    %5498 = vmatpush1.bf16.xpose.msra.mxu0 0
    %5499 = vmatprep.subr.bf16.mxu0 0
    %5500 = vmatpush1.bf16.xpose.msra.mxu0 0
    %5501 = vmatprep.subr.bf16.mxu0 %v3038
    %5502 = vmatpush1.bf16.xpose.msra.mxu0 %v3037
    %5503 = vmatprep.subr.bf16.mxu0 0
    %5504 = vmatpush2.bf16.xpose.msra.mxu0 0
    %5505 = vmatprep.subr.bf16.mxu0 0
    %5506 = vmatpush2.bf16.xpose.msra.mxu0 0
    %5507 = vmatprep.subr.bf16.mxu0 0
    %5508 = vmatpush2.bf16.xpose.msra.mxu0 0
    %5509 = vmatprep.subr.bf16.mxu0 0
    %5510 = vmatpush2.bf16.xpose.msra.mxu0 0
    %5511 = vmatprep.subr.bf16.mxu0 0
    %5512 = vmatpush2.bf16.xpose.msra.mxu0 0
    %5513 = vmatprep.subr.bf16.mxu0 0
    %5514 = vmatpush2.bf16.xpose.msra.mxu0 0
    %5515 = vmatprep.subr.bf16.mxu0 0
    %5516 = vmatpush2.bf16.xpose.msra.mxu0 0
    %5517 = vmatprep.subr.bf16.mxu0 0
    %5518 = vmatpush2.bf16.xpose.msra.mxu0 0
    %5519 = vmatprep.mubr.bf16.mxu0 %v979
    %5520 = vmatmul.mubr.bf16.gmra.mxu0 %v977
    %v5521 = vpop.f32.mrf.mxu0
    %v5522 = vadd.f32 %v5482, %v5521
    %v5523 = vpop.f32.mrf.mxu0
    %v5524 = vpop.f32.mrf.mxu0
    %v5525 = vpop.f32.mrf.mxu0
    %5526 = vdwg.mxu0
    %5527 = vmatprep.subr.bf16.mxu0 0
    %5528 = vmatpush1.bf16.xpose.msra.mxu0 0
    %5529 = vmatprep.subr.bf16.mxu0 0
    %5530 = vmatpush1.bf16.xpose.msra.mxu0 0
    %5531 = vmatprep.subr.bf16.mxu0 0
    %5532 = vmatpush1.bf16.xpose.msra.mxu0 0
    %5533 = vmatprep.subr.bf16.mxu0 0
    %5534 = vmatpush1.bf16.xpose.msra.mxu0 0
    %5535 = vmatprep.subr.bf16.mxu0 0
    %5536 = vmatpush1.bf16.xpose.msra.mxu0 0
    %5537 = vmatprep.subr.bf16.mxu0 0
    %5538 = vmatpush1.bf16.xpose.msra.mxu0 0
    %5539 = vmatprep.subr.bf16.mxu0 0
    %5540 = vmatpush1.bf16.xpose.msra.mxu0 0
    %5541 = vmatprep.subr.bf16.mxu0 %v3040
    %5542 = vmatpush1.bf16.xpose.msra.mxu0 %v3039
    %5543 = vmatprep.subr.bf16.mxu0 0
    %5544 = vmatpush2.bf16.xpose.msra.mxu0 0
    %5545 = vmatprep.subr.bf16.mxu0 0
    %5546 = vmatpush2.bf16.xpose.msra.mxu0 0
    %5547 = vmatprep.subr.bf16.mxu0 0
    %5548 = vmatpush2.bf16.xpose.msra.mxu0 0
    %5549 = vmatprep.subr.bf16.mxu0 0
    %5550 = vmatpush2.bf16.xpose.msra.mxu0 0
    %5551 = vmatprep.subr.bf16.mxu0 0
    %5552 = vmatpush2.bf16.xpose.msra.mxu0 0
    %5553 = vmatprep.subr.bf16.mxu0 0
    %5554 = vmatpush2.bf16.xpose.msra.mxu0 0
    %5555 = vmatprep.subr.bf16.mxu0 0
    %5556 = vmatpush2.bf16.xpose.msra.mxu0 0
    %5557 = vmatprep.subr.bf16.mxu0 0
    %5558 = vmatpush2.bf16.xpose.msra.mxu0 0
    %5559 = vmatprep.mubr.bf16.mxu0 %v1017
    %5560 = vmatmul.mubr.bf16.gmra.mxu0 %v1003
    %v5561 = vpop.f32.mrf.mxu0
    %v5562 = vadd.f32 %v5522, %v5561
    %v5563 = vpop.f32.mrf.mxu0
    %v5564 = vpop.f32.mrf.mxu0
    %v5565 = vpop.f32.mrf.mxu0
    %5566 = vdwg.mxu0
    %5567 = vmatprep.subr.bf16.mxu0 0
    %5568 = vmatpush1.bf16.xpose.msra.mxu0 0
    %5569 = vmatprep.subr.bf16.mxu0 0
    %5570 = vmatpush1.bf16.xpose.msra.mxu0 0
    %5571 = vmatprep.subr.bf16.mxu0 0
    %5572 = vmatpush1.bf16.xpose.msra.mxu0 0
    %5573 = vmatprep.subr.bf16.mxu0 0
    %5574 = vmatpush1.bf16.xpose.msra.mxu0 0
    %5575 = vmatprep.subr.bf16.mxu0 0
    %5576 = vmatpush1.bf16.xpose.msra.mxu0 0
    %5577 = vmatprep.subr.bf16.mxu0 0
    %5578 = vmatpush1.bf16.xpose.msra.mxu0 0
    %5579 = vmatprep.subr.bf16.mxu0 0
    %5580 = vmatpush1.bf16.xpose.msra.mxu0 0
    %5581 = vmatprep.subr.bf16.mxu0 %v3042
    %5582 = vmatpush1.bf16.xpose.msra.mxu0 %v3041
    %5583 = vmatprep.subr.bf16.mxu0 0
    %5584 = vmatpush2.bf16.xpose.msra.mxu0 0
    %5585 = vmatprep.subr.bf16.mxu0 0
    %5586 = vmatpush2.bf16.xpose.msra.mxu0 0
    %5587 = vmatprep.subr.bf16.mxu0 0
    %5588 = vmatpush2.bf16.xpose.msra.mxu0 0
    %5589 = vmatprep.subr.bf16.mxu0 0
    %5590 = vmatpush2.bf16.xpose.msra.mxu0 0
    %5591 = vmatprep.subr.bf16.mxu0 0
    %5592 = vmatpush2.bf16.xpose.msra.mxu0 0
    %5593 = vmatprep.subr.bf16.mxu0 0
    %5594 = vmatpush2.bf16.xpose.msra.mxu0 0
    %5595 = vmatprep.subr.bf16.mxu0 0
    %5596 = vmatpush2.bf16.xpose.msra.mxu0 0
    %5597 = vmatprep.subr.bf16.mxu0 0
    %5598 = vmatpush2.bf16.xpose.msra.mxu0 0
    %5599 = vmatprep.mubr.bf16.mxu0 %v1027
    %5600 = vmatmul.mubr.bf16.gmra.mxu0 %v1025
    %v5601 = vpop.f32.mrf.mxu0
    %v5602 = vadd.f32 %v5562, %v5601
    %v5603 = vpop.f32.mrf.mxu0
    %v5604 = vpop.f32.mrf.mxu0
    %v5605 = vpop.f32.mrf.mxu0
    %5606 = vdwg.mxu0
    %5607 = vmatprep.subr.bf16.mxu0 0
    %5608 = vmatpush1.bf16.xpose.msra.mxu0 0
    %5609 = vmatprep.subr.bf16.mxu0 0
    %5610 = vmatpush1.bf16.xpose.msra.mxu0 0
    %5611 = vmatprep.subr.bf16.mxu0 0
    %5612 = vmatpush1.bf16.xpose.msra.mxu0 0
    %5613 = vmatprep.subr.bf16.mxu0 0
    %5614 = vmatpush1.bf16.xpose.msra.mxu0 0
    %5615 = vmatprep.subr.bf16.mxu0 0
    %5616 = vmatpush1.bf16.xpose.msra.mxu0 0
    %5617 = vmatprep.subr.bf16.mxu0 0
    %5618 = vmatpush1.bf16.xpose.msra.mxu0 0
    %5619 = vmatprep.subr.bf16.mxu0 0
    %5620 = vmatpush1.bf16.xpose.msra.mxu0 0
    %5621 = vmatprep.subr.bf16.mxu0 %v3044
    %5622 = vmatpush1.bf16.xpose.msra.mxu0 %v3043
    %5623 = vmatprep.subr.bf16.mxu0 0
    %5624 = vmatpush2.bf16.xpose.msra.mxu0 0
    %5625 = vmatprep.subr.bf16.mxu0 0
    %5626 = vmatpush2.bf16.xpose.msra.mxu0 0
    %5627 = vmatprep.subr.bf16.mxu0 0
    %5628 = vmatpush2.bf16.xpose.msra.mxu0 0
    %5629 = vmatprep.subr.bf16.mxu0 0
    %5630 = vmatpush2.bf16.xpose.msra.mxu0 0
    %5631 = vmatprep.subr.bf16.mxu0 0
    %5632 = vmatpush2.bf16.xpose.msra.mxu0 0
    %5633 = vmatprep.subr.bf16.mxu0 0
    %5634 = vmatpush2.bf16.xpose.msra.mxu0 0
    %5635 = vmatprep.subr.bf16.mxu0 0
    %5636 = vmatpush2.bf16.xpose.msra.mxu0 0
    %5637 = vmatprep.subr.bf16.mxu0 0
    %5638 = vmatpush2.bf16.xpose.msra.mxu0 0
    %5639 = vmatprep.mubr.bf16.mxu0 %v1024
    %5640 = vmatmul.mubr.bf16.gmra.mxu0 %v1010
    %v5641 = vpop.f32.mrf.mxu0
    %v5642 = vadd.f32 %v5602, %v5641
    %v5643 = vpop.f32.mrf.mxu0
    %v5644 = vpop.f32.mrf.mxu0
    %v5645 = vpop.f32.mrf.mxu0
    %5646 = vdwg.mxu0
    %5647 = vmatprep.subr.bf16.mxu0 0
    %5648 = vmatpush1.bf16.xpose.msra.mxu0 0
    %5649 = vmatprep.subr.bf16.mxu0 0
    %5650 = vmatpush1.bf16.xpose.msra.mxu0 0
    %5651 = vmatprep.subr.bf16.mxu0 0
    %5652 = vmatpush1.bf16.xpose.msra.mxu0 0
    %5653 = vmatprep.subr.bf16.mxu0 0
    %5654 = vmatpush1.bf16.xpose.msra.mxu0 0
    %5655 = vmatprep.subr.bf16.mxu0 0
    %5656 = vmatpush1.bf16.xpose.msra.mxu0 0
    %5657 = vmatprep.subr.bf16.mxu0 0
    %5658 = vmatpush1.bf16.xpose.msra.mxu0 0
    %5659 = vmatprep.subr.bf16.mxu0 0
    %5660 = vmatpush1.bf16.xpose.msra.mxu0 0
    %5661 = vmatprep.subr.bf16.mxu0 %v3046
    %5662 = vmatpush1.bf16.xpose.msra.mxu0 %v3045
    %5663 = vmatprep.subr.bf16.mxu0 0
    %5664 = vmatpush2.bf16.xpose.msra.mxu0 0
    %5665 = vmatprep.subr.bf16.mxu0 0
    %5666 = vmatpush2.bf16.xpose.msra.mxu0 0
    %5667 = vmatprep.subr.bf16.mxu0 0
    %5668 = vmatpush2.bf16.xpose.msra.mxu0 0
    %5669 = vmatprep.subr.bf16.mxu0 0
    %5670 = vmatpush2.bf16.xpose.msra.mxu0 0
    %5671 = vmatprep.subr.bf16.mxu0 0
    %5672 = vmatpush2.bf16.xpose.msra.mxu0 0
    %5673 = vmatprep.subr.bf16.mxu0 0
    %5674 = vmatpush2.bf16.xpose.msra.mxu0 0
    %5675 = vmatprep.subr.bf16.mxu0 0
    %5676 = vmatpush2.bf16.xpose.msra.mxu0 0
    %5677 = vmatprep.subr.bf16.mxu0 0
    %5678 = vmatpush2.bf16.xpose.msra.mxu0 0
    %5679 = vmatprep.mubr.bf16.mxu0 %v1028
    %5680 = vmatmul.mubr.bf16.gmra.mxu0 %v1026
    %v5681 = vpop.f32.mrf.mxu0
    %v5682 = vadd.f32 %v5642, %v5681
    %v5683 = vpop.f32.mrf.mxu0
    %v5684 = vpop.f32.mrf.mxu0
    %v5685 = vpop.f32.mrf.mxu0
    %5686 = vdwg.mxu0
    %5687 = vmatprep.subr.bf16.mxu0 0
    %5688 = vmatpush1.bf16.xpose.msra.mxu0 0
    %5689 = vmatprep.subr.bf16.mxu0 0
    %5690 = vmatpush1.bf16.xpose.msra.mxu0 0
    %5691 = vmatprep.subr.bf16.mxu0 0
    %5692 = vmatpush1.bf16.xpose.msra.mxu0 0
    %5693 = vmatprep.subr.bf16.mxu0 0
    %5694 = vmatpush1.bf16.xpose.msra.mxu0 0
    %5695 = vmatprep.subr.bf16.mxu0 0
    %5696 = vmatpush1.bf16.xpose.msra.mxu0 0
    %5697 = vmatprep.subr.bf16.mxu0 0
    %5698 = vmatpush1.bf16.xpose.msra.mxu0 0
    %5699 = vmatprep.subr.bf16.mxu0 0
    %5700 = vmatpush1.bf16.xpose.msra.mxu0 0
    %5701 = vmatprep.subr.bf16.mxu0 %v3048
    %5702 = vmatpush1.bf16.xpose.msra.mxu0 %v3047
    %5703 = vmatprep.subr.bf16.mxu0 0
    %5704 = vmatpush2.bf16.xpose.msra.mxu0 0
    %5705 = vmatprep.subr.bf16.mxu0 0
    %5706 = vmatpush2.bf16.xpose.msra.mxu0 0
    %5707 = vmatprep.subr.bf16.mxu0 0
    %5708 = vmatpush2.bf16.xpose.msra.mxu0 0
    %5709 = vmatprep.subr.bf16.mxu0 0
    %5710 = vmatpush2.bf16.xpose.msra.mxu0 0
    %5711 = vmatprep.subr.bf16.mxu0 0
    %5712 = vmatpush2.bf16.xpose.msra.mxu0 0
    %5713 = vmatprep.subr.bf16.mxu0 0
    %5714 = vmatpush2.bf16.xpose.msra.mxu0 0
    %5715 = vmatprep.subr.bf16.mxu0 0
    %5716 = vmatpush2.bf16.xpose.msra.mxu0 0
    %5717 = vmatprep.subr.bf16.mxu0 0
    %5718 = vmatpush2.bf16.xpose.msra.mxu0 0
    %5719 = vmatprep.mubr.bf16.mxu0 %v1066
    %5720 = vmatmul.mubr.bf16.gmra.mxu0 %v1052
    %v5721 = vpop.f32.mrf.mxu0
    %v5722 = vadd.f32 %v5682, %v5721
    %v5723 = vpop.f32.mrf.mxu0
    %v5724 = vpop.f32.mrf.mxu0
    %v5725 = vpop.f32.mrf.mxu0
    %5726 = vdwg.mxu0
    %5727 = vmatprep.subr.bf16.mxu0 0
    %5728 = vmatpush1.bf16.xpose.msra.mxu0 0
    %5729 = vmatprep.subr.bf16.mxu0 0
    %5730 = vmatpush1.bf16.xpose.msra.mxu0 0
    %5731 = vmatprep.subr.bf16.mxu0 0
    %5732 = vmatpush1.bf16.xpose.msra.mxu0 0
    %5733 = vmatprep.subr.bf16.mxu0 0
    %5734 = vmatpush1.bf16.xpose.msra.mxu0 0
    %5735 = vmatprep.subr.bf16.mxu0 0
    %5736 = vmatpush1.bf16.xpose.msra.mxu0 0
    %5737 = vmatprep.subr.bf16.mxu0 0
    %5738 = vmatpush1.bf16.xpose.msra.mxu0 0
    %5739 = vmatprep.subr.bf16.mxu0 0
    %5740 = vmatpush1.bf16.xpose.msra.mxu0 0
    %5741 = vmatprep.subr.bf16.mxu0 %v3050
    %5742 = vmatpush1.bf16.xpose.msra.mxu0 %v3049
    %5743 = vmatprep.subr.bf16.mxu0 0
    %5744 = vmatpush2.bf16.xpose.msra.mxu0 0
    %5745 = vmatprep.subr.bf16.mxu0 0
    %5746 = vmatpush2.bf16.xpose.msra.mxu0 0
    %5747 = vmatprep.subr.bf16.mxu0 0
    %5748 = vmatpush2.bf16.xpose.msra.mxu0 0
    %5749 = vmatprep.subr.bf16.mxu0 0
    %5750 = vmatpush2.bf16.xpose.msra.mxu0 0
    %5751 = vmatprep.subr.bf16.mxu0 0
    %5752 = vmatpush2.bf16.xpose.msra.mxu0 0
    %5753 = vmatprep.subr.bf16.mxu0 0
    %5754 = vmatpush2.bf16.xpose.msra.mxu0 0
    %5755 = vmatprep.subr.bf16.mxu0 0
    %5756 = vmatpush2.bf16.xpose.msra.mxu0 0
    %5757 = vmatprep.subr.bf16.mxu0 0
    %5758 = vmatpush2.bf16.xpose.msra.mxu0 0
    %5759 = vmatprep.mubr.bf16.mxu0 %v1076
    %5760 = vmatmul.mubr.bf16.gmra.mxu0 %v1074
    %v5761 = vpop.f32.mrf.mxu0
    %v5762 = vadd.f32 %v5722, %v5761
    %v5763 = vpop.f32.mrf.mxu0
    %v5764 = vpop.f32.mrf.mxu0
    %v5765 = vpop.f32.mrf.mxu0
    %5766 = vdwg.mxu0
    %5767 = vmatprep.subr.bf16.mxu0 0
    %5768 = vmatpush1.bf16.xpose.msra.mxu0 0
    %5769 = vmatprep.subr.bf16.mxu0 0
    %5770 = vmatpush1.bf16.xpose.msra.mxu0 0
    %5771 = vmatprep.subr.bf16.mxu0 0
    %5772 = vmatpush1.bf16.xpose.msra.mxu0 0
    %5773 = vmatprep.subr.bf16.mxu0 0
    %5774 = vmatpush1.bf16.xpose.msra.mxu0 0
    %5775 = vmatprep.subr.bf16.mxu0 0
    %5776 = vmatpush1.bf16.xpose.msra.mxu0 0
    %5777 = vmatprep.subr.bf16.mxu0 0
    %5778 = vmatpush1.bf16.xpose.msra.mxu0 0
    %5779 = vmatprep.subr.bf16.mxu0 0
    %5780 = vmatpush1.bf16.xpose.msra.mxu0 0
    %5781 = vmatprep.subr.bf16.mxu0 %v3052
    %5782 = vmatpush1.bf16.xpose.msra.mxu0 %v3051
    %5783 = vmatprep.subr.bf16.mxu0 0
    %5784 = vmatpush2.bf16.xpose.msra.mxu0 0
    %5785 = vmatprep.subr.bf16.mxu0 0
    %5786 = vmatpush2.bf16.xpose.msra.mxu0 0
    %5787 = vmatprep.subr.bf16.mxu0 0
    %5788 = vmatpush2.bf16.xpose.msra.mxu0 0
    %5789 = vmatprep.subr.bf16.mxu0 0
    %5790 = vmatpush2.bf16.xpose.msra.mxu0 0
    %5791 = vmatprep.subr.bf16.mxu0 0
    %5792 = vmatpush2.bf16.xpose.msra.mxu0 0
    %5793 = vmatprep.subr.bf16.mxu0 0
    %5794 = vmatpush2.bf16.xpose.msra.mxu0 0
    %5795 = vmatprep.subr.bf16.mxu0 0
    %5796 = vmatpush2.bf16.xpose.msra.mxu0 0
    %5797 = vmatprep.subr.bf16.mxu0 0
    %5798 = vmatpush2.bf16.xpose.msra.mxu0 0
    %5799 = vmatprep.mubr.bf16.mxu0 %v1073
    %5800 = vmatmul.mubr.bf16.gmra.mxu0 %v1059
    %v5801 = vpop.f32.mrf.mxu0
    %v5802 = vadd.f32 %v5762, %v5801
    %v5803 = vpop.f32.mrf.mxu0
    %v5804 = vpop.f32.mrf.mxu0
    %v5805 = vpop.f32.mrf.mxu0
    %5806 = vdwg.mxu0
    %5807 = vmatprep.subr.bf16.mxu0 0
    %5808 = vmatpush1.bf16.xpose.msra.mxu0 0
    %5809 = vmatprep.subr.bf16.mxu0 0
    %5810 = vmatpush1.bf16.xpose.msra.mxu0 0
    %5811 = vmatprep.subr.bf16.mxu0 0
    %5812 = vmatpush1.bf16.xpose.msra.mxu0 0
    %5813 = vmatprep.subr.bf16.mxu0 0
    %5814 = vmatpush1.bf16.xpose.msra.mxu0 0
    %5815 = vmatprep.subr.bf16.mxu0 0
    %5816 = vmatpush1.bf16.xpose.msra.mxu0 0
    %5817 = vmatprep.subr.bf16.mxu0 0
    %5818 = vmatpush1.bf16.xpose.msra.mxu0 0
    %5819 = vmatprep.subr.bf16.mxu0 0
    %5820 = vmatpush1.bf16.xpose.msra.mxu0 0
    %5821 = vmatprep.subr.bf16.mxu0 %v3054
    %5822 = vmatpush1.bf16.xpose.msra.mxu0 %v3053
    %5823 = vmatprep.subr.bf16.mxu0 0
    %5824 = vmatpush2.bf16.xpose.msra.mxu0 0
    %5825 = vmatprep.subr.bf16.mxu0 0
    %5826 = vmatpush2.bf16.xpose.msra.mxu0 0
    %5827 = vmatprep.subr.bf16.mxu0 0
    %5828 = vmatpush2.bf16.xpose.msra.mxu0 0
    %5829 = vmatprep.subr.bf16.mxu0 0
    %5830 = vmatpush2.bf16.xpose.msra.mxu0 0
    %5831 = vmatprep.subr.bf16.mxu0 0
    %5832 = vmatpush2.bf16.xpose.msra.mxu0 0
    %5833 = vmatprep.subr.bf16.mxu0 0
    %5834 = vmatpush2.bf16.xpose.msra.mxu0 0
    %5835 = vmatprep.subr.bf16.mxu0 0
    %5836 = vmatpush2.bf16.xpose.msra.mxu0 0
    %5837 = vmatprep.subr.bf16.mxu0 0
    %5838 = vmatpush2.bf16.xpose.msra.mxu0 0
    %5839 = vmatprep.mubr.bf16.mxu0 %v1077
    %5840 = vmatmul.mubr.bf16.gmra.mxu0 %v1075
    %v5841 = vpop.f32.mrf.mxu0
    %v5842 = vadd.f32 %v5802, %v5841
    %v5843 = vpop.f32.mrf.mxu0
    %v5844 = vpop.f32.mrf.mxu0
    %v5845 = vpop.f32.mrf.mxu0
    %5846 = vdwg.mxu0
    %5847 = vmatprep.subr.bf16.mxu0 0
    %5848 = vmatpush1.bf16.xpose.msra.mxu0 0
    %5849 = vmatprep.subr.bf16.mxu0 0
    %5850 = vmatpush1.bf16.xpose.msra.mxu0 0
    %5851 = vmatprep.subr.bf16.mxu0 0
    %5852 = vmatpush1.bf16.xpose.msra.mxu0 0
    %5853 = vmatprep.subr.bf16.mxu0 0
    %5854 = vmatpush1.bf16.xpose.msra.mxu0 0
    %5855 = vmatprep.subr.bf16.mxu0 0
    %5856 = vmatpush1.bf16.xpose.msra.mxu0 0
    %5857 = vmatprep.subr.bf16.mxu0 0
    %5858 = vmatpush1.bf16.xpose.msra.mxu0 0
    %5859 = vmatprep.subr.bf16.mxu0 0
    %5860 = vmatpush1.bf16.xpose.msra.mxu0 0
    %5861 = vmatprep.subr.bf16.mxu0 %v3056
    %5862 = vmatpush1.bf16.xpose.msra.mxu0 %v3055
    %5863 = vmatprep.subr.bf16.mxu0 0
    %5864 = vmatpush2.bf16.xpose.msra.mxu0 0
    %5865 = vmatprep.subr.bf16.mxu0 0
    %5866 = vmatpush2.bf16.xpose.msra.mxu0 0
    %5867 = vmatprep.subr.bf16.mxu0 0
    %5868 = vmatpush2.bf16.xpose.msra.mxu0 0
    %5869 = vmatprep.subr.bf16.mxu0 0
    %5870 = vmatpush2.bf16.xpose.msra.mxu0 0
    %5871 = vmatprep.subr.bf16.mxu0 0
    %5872 = vmatpush2.bf16.xpose.msra.mxu0 0
    %5873 = vmatprep.subr.bf16.mxu0 0
    %5874 = vmatpush2.bf16.xpose.msra.mxu0 0
    %5875 = vmatprep.subr.bf16.mxu0 0
    %5876 = vmatpush2.bf16.xpose.msra.mxu0 0
    %5877 = vmatprep.subr.bf16.mxu0 0
    %5878 = vmatpush2.bf16.xpose.msra.mxu0 0
    %5879 = vmatprep.mubr.bf16.mxu0 %v1115
    %5880 = vmatmul.mubr.bf16.gmra.mxu0 %v1101
    %v5881 = vpop.f32.mrf.mxu0
    %v5882 = vadd.f32 %v5842, %v5881
    %v5883 = vpop.f32.mrf.mxu0
    %v5884 = vpop.f32.mrf.mxu0
    %v5885 = vpop.f32.mrf.mxu0
    %5886 = vdwg.mxu0
    %5887 = vmatprep.subr.bf16.mxu0 0
    %5888 = vmatpush1.bf16.xpose.msra.mxu0 0
    %5889 = vmatprep.subr.bf16.mxu0 0
    %5890 = vmatpush1.bf16.xpose.msra.mxu0 0
    %5891 = vmatprep.subr.bf16.mxu0 0
    %5892 = vmatpush1.bf16.xpose.msra.mxu0 0
    %5893 = vmatprep.subr.bf16.mxu0 0
    %5894 = vmatpush1.bf16.xpose.msra.mxu0 0
    %5895 = vmatprep.subr.bf16.mxu0 0
    %5896 = vmatpush1.bf16.xpose.msra.mxu0 0
    %5897 = vmatprep.subr.bf16.mxu0 0
    %5898 = vmatpush1.bf16.xpose.msra.mxu0 0
    %5899 = vmatprep.subr.bf16.mxu0 0
    %5900 = vmatpush1.bf16.xpose.msra.mxu0 0
    %5901 = vmatprep.subr.bf16.mxu0 %v3058
    %5902 = vmatpush1.bf16.xpose.msra.mxu0 %v3057
    %5903 = vmatprep.subr.bf16.mxu0 0
    %5904 = vmatpush2.bf16.xpose.msra.mxu0 0
    %5905 = vmatprep.subr.bf16.mxu0 0
    %5906 = vmatpush2.bf16.xpose.msra.mxu0 0
    %5907 = vmatprep.subr.bf16.mxu0 0
    %5908 = vmatpush2.bf16.xpose.msra.mxu0 0
    %5909 = vmatprep.subr.bf16.mxu0 0
    %5910 = vmatpush2.bf16.xpose.msra.mxu0 0
    %5911 = vmatprep.subr.bf16.mxu0 0
    %5912 = vmatpush2.bf16.xpose.msra.mxu0 0
    %5913 = vmatprep.subr.bf16.mxu0 0
    %5914 = vmatpush2.bf16.xpose.msra.mxu0 0
    %5915 = vmatprep.subr.bf16.mxu0 0
    %5916 = vmatpush2.bf16.xpose.msra.mxu0 0
    %5917 = vmatprep.subr.bf16.mxu0 0
    %5918 = vmatpush2.bf16.xpose.msra.mxu0 0
    %5919 = vmatprep.mubr.bf16.mxu0 %v1125
    %5920 = vmatmul.mubr.bf16.gmra.mxu0 %v1123
    %v5921 = vpop.f32.mrf.mxu0
    %v5922 = vadd.f32 %v5882, %v5921
    %v5923 = vpop.f32.mrf.mxu0
    %v5924 = vpop.f32.mrf.mxu0
    %v5925 = vpop.f32.mrf.mxu0
    %5926 = vdwg.mxu0
    %5927 = vmatprep.subr.bf16.mxu0 0
    %5928 = vmatpush1.bf16.xpose.msra.mxu0 0
    %5929 = vmatprep.subr.bf16.mxu0 0
    %5930 = vmatpush1.bf16.xpose.msra.mxu0 0
    %5931 = vmatprep.subr.bf16.mxu0 0
    %5932 = vmatpush1.bf16.xpose.msra.mxu0 0
    %5933 = vmatprep.subr.bf16.mxu0 0
    %5934 = vmatpush1.bf16.xpose.msra.mxu0 0
    %5935 = vmatprep.subr.bf16.mxu0 0
    %5936 = vmatpush1.bf16.xpose.msra.mxu0 0
    %5937 = vmatprep.subr.bf16.mxu0 0
    %5938 = vmatpush1.bf16.xpose.msra.mxu0 0
    %5939 = vmatprep.subr.bf16.mxu0 0
    %5940 = vmatpush1.bf16.xpose.msra.mxu0 0
    %5941 = vmatprep.subr.bf16.mxu0 %v3060
    %5942 = vmatpush1.bf16.xpose.msra.mxu0 %v3059
    %5943 = vmatprep.subr.bf16.mxu0 0
    %5944 = vmatpush2.bf16.xpose.msra.mxu0 0
    %5945 = vmatprep.subr.bf16.mxu0 0
    %5946 = vmatpush2.bf16.xpose.msra.mxu0 0
    %5947 = vmatprep.subr.bf16.mxu0 0
    %5948 = vmatpush2.bf16.xpose.msra.mxu0 0
    %5949 = vmatprep.subr.bf16.mxu0 0
    %5950 = vmatpush2.bf16.xpose.msra.mxu0 0
    %5951 = vmatprep.subr.bf16.mxu0 0
    %5952 = vmatpush2.bf16.xpose.msra.mxu0 0
    %5953 = vmatprep.subr.bf16.mxu0 0
    %5954 = vmatpush2.bf16.xpose.msra.mxu0 0
    %5955 = vmatprep.subr.bf16.mxu0 0
    %5956 = vmatpush2.bf16.xpose.msra.mxu0 0
    %5957 = vmatprep.subr.bf16.mxu0 0
    %5958 = vmatpush2.bf16.xpose.msra.mxu0 0
    %5959 = vmatprep.mubr.bf16.mxu0 %v1122
    %5960 = vmatmul.mubr.bf16.gmra.mxu0 %v1108
    %v5961 = vpop.f32.mrf.mxu0
    %v5962 = vadd.f32 %v5922, %v5961
    %v5963 = vpop.f32.mrf.mxu0
    %v5964 = vpop.f32.mrf.mxu0
    %v5965 = vpop.f32.mrf.mxu0
    %5966 = vdwg.mxu0
    %5967 = vmatprep.subr.bf16.mxu0 0
    %5968 = vmatpush1.bf16.xpose.msra.mxu0 0
    %5969 = vmatprep.subr.bf16.mxu0 0
    %5970 = vmatpush1.bf16.xpose.msra.mxu0 0
    %5971 = vmatprep.subr.bf16.mxu0 0
    %5972 = vmatpush1.bf16.xpose.msra.mxu0 0
    %5973 = vmatprep.subr.bf16.mxu0 0
    %5974 = vmatpush1.bf16.xpose.msra.mxu0 0
    %5975 = vmatprep.subr.bf16.mxu0 0
    %5976 = vmatpush1.bf16.xpose.msra.mxu0 0
    %5977 = vmatprep.subr.bf16.mxu0 0
    %5978 = vmatpush1.bf16.xpose.msra.mxu0 0
    %5979 = vmatprep.subr.bf16.mxu0 0
    %5980 = vmatpush1.bf16.xpose.msra.mxu0 0
    %5981 = vmatprep.subr.bf16.mxu0 %v3062
    %5982 = vmatpush1.bf16.xpose.msra.mxu0 %v3061
    %5983 = vmatprep.subr.bf16.mxu0 0
    %5984 = vmatpush2.bf16.xpose.msra.mxu0 0
    %5985 = vmatprep.subr.bf16.mxu0 0
    %5986 = vmatpush2.bf16.xpose.msra.mxu0 0
    %5987 = vmatprep.subr.bf16.mxu0 0
    %5988 = vmatpush2.bf16.xpose.msra.mxu0 0
    %5989 = vmatprep.subr.bf16.mxu0 0
    %5990 = vmatpush2.bf16.xpose.msra.mxu0 0
    %5991 = vmatprep.subr.bf16.mxu0 0
    %5992 = vmatpush2.bf16.xpose.msra.mxu0 0
    %5993 = vmatprep.subr.bf16.mxu0 0
    %5994 = vmatpush2.bf16.xpose.msra.mxu0 0
    %5995 = vmatprep.subr.bf16.mxu0 0
    %5996 = vmatpush2.bf16.xpose.msra.mxu0 0
    %5997 = vmatprep.subr.bf16.mxu0 0
    %5998 = vmatpush2.bf16.xpose.msra.mxu0 0
    %5999 = vmatprep.mubr.bf16.mxu0 %v1126
    %6000 = vmatmul.mubr.bf16.gmra.mxu0 %v1124
    %v6001 = vpop.f32.mrf.mxu0
    %v6002 = vadd.f32 %v5962, %v6001
    %v6003 = vpop.f32.mrf.mxu0
    %v6004 = vpop.f32.mrf.mxu0
    %v6005 = vpop.f32.mrf.mxu0
    %6006 = vdwg.mxu0
    %6007 = vmatprep.subr.bf16.mxu0 0
    %6008 = vmatpush1.bf16.xpose.msra.mxu0 0
    %6009 = vmatprep.subr.bf16.mxu0 0
    %6010 = vmatpush1.bf16.xpose.msra.mxu0 0
    %6011 = vmatprep.subr.bf16.mxu0 0
    %6012 = vmatpush1.bf16.xpose.msra.mxu0 0
    %6013 = vmatprep.subr.bf16.mxu0 0
    %6014 = vmatpush1.bf16.xpose.msra.mxu0 0
    %6015 = vmatprep.subr.bf16.mxu0 0
    %6016 = vmatpush1.bf16.xpose.msra.mxu0 0
    %6017 = vmatprep.subr.bf16.mxu0 0
    %6018 = vmatpush1.bf16.xpose.msra.mxu0 0
    %6019 = vmatprep.subr.bf16.mxu0 0
    %6020 = vmatpush1.bf16.xpose.msra.mxu0 0
    %6021 = vmatprep.subr.bf16.mxu0 %v3064
    %6022 = vmatpush1.bf16.xpose.msra.mxu0 %v3063
    %6023 = vmatprep.subr.bf16.mxu0 0
    %6024 = vmatpush2.bf16.xpose.msra.mxu0 0
    %6025 = vmatprep.subr.bf16.mxu0 0
    %6026 = vmatpush2.bf16.xpose.msra.mxu0 0
    %6027 = vmatprep.subr.bf16.mxu0 0
    %6028 = vmatpush2.bf16.xpose.msra.mxu0 0
    %6029 = vmatprep.subr.bf16.mxu0 0
    %6030 = vmatpush2.bf16.xpose.msra.mxu0 0
    %6031 = vmatprep.subr.bf16.mxu0 0
    %6032 = vmatpush2.bf16.xpose.msra.mxu0 0
    %6033 = vmatprep.subr.bf16.mxu0 0
    %6034 = vmatpush2.bf16.xpose.msra.mxu0 0
    %6035 = vmatprep.subr.bf16.mxu0 0
    %6036 = vmatpush2.bf16.xpose.msra.mxu0 0
    %6037 = vmatprep.subr.bf16.mxu0 0
    %6038 = vmatpush2.bf16.xpose.msra.mxu0 0
    %6039 = vmatprep.mubr.bf16.mxu0 %v1164
    %6040 = vmatmul.mubr.bf16.gmra.mxu0 %v1150
    %v6041 = vpop.f32.mrf.mxu0
    %v6042 = vadd.f32 %v6002, %v6041
    %v6043 = vpop.f32.mrf.mxu0
    %v6044 = vpop.f32.mrf.mxu0
    %v6045 = vpop.f32.mrf.mxu0
    %6046 = vdwg.mxu0
    %6047 = vmatprep.subr.bf16.mxu0 0
    %6048 = vmatpush1.bf16.xpose.msra.mxu0 0
    %6049 = vmatprep.subr.bf16.mxu0 0
    %6050 = vmatpush1.bf16.xpose.msra.mxu0 0
    %6051 = vmatprep.subr.bf16.mxu0 0
    %6052 = vmatpush1.bf16.xpose.msra.mxu0 0
    %6053 = vmatprep.subr.bf16.mxu0 0
    %6054 = vmatpush1.bf16.xpose.msra.mxu0 0
    %6055 = vmatprep.subr.bf16.mxu0 0
    %6056 = vmatpush1.bf16.xpose.msra.mxu0 0
    %6057 = vmatprep.subr.bf16.mxu0 0
    %6058 = vmatpush1.bf16.xpose.msra.mxu0 0
    %6059 = vmatprep.subr.bf16.mxu0 0
    %6060 = vmatpush1.bf16.xpose.msra.mxu0 0
    %6061 = vmatprep.subr.bf16.mxu0 %v3066
    %6062 = vmatpush1.bf16.xpose.msra.mxu0 %v3065
    %6063 = vmatprep.subr.bf16.mxu0 0
    %6064 = vmatpush2.bf16.xpose.msra.mxu0 0
    %6065 = vmatprep.subr.bf16.mxu0 0
    %6066 = vmatpush2.bf16.xpose.msra.mxu0 0
    %6067 = vmatprep.subr.bf16.mxu0 0
    %6068 = vmatpush2.bf16.xpose.msra.mxu0 0
    %6069 = vmatprep.subr.bf16.mxu0 0
    %6070 = vmatpush2.bf16.xpose.msra.mxu0 0
    %6071 = vmatprep.subr.bf16.mxu0 0
    %6072 = vmatpush2.bf16.xpose.msra.mxu0 0
    %6073 = vmatprep.subr.bf16.mxu0 0
    %6074 = vmatpush2.bf16.xpose.msra.mxu0 0
    %6075 = vmatprep.subr.bf16.mxu0 0
    %6076 = vmatpush2.bf16.xpose.msra.mxu0 0
    %6077 = vmatprep.subr.bf16.mxu0 0
    %6078 = vmatpush2.bf16.xpose.msra.mxu0 0
    %6079 = vmatprep.mubr.bf16.mxu0 %v1174
    %6080 = vmatmul.mubr.bf16.gmra.mxu0 %v1172
    %v6081 = vpop.f32.mrf.mxu0
    %v6082 = vadd.f32 %v6042, %v6081
    %v6083 = vpop.f32.mrf.mxu0
    %v6084 = vpop.f32.mrf.mxu0
    %v6085 = vpop.f32.mrf.mxu0
    %6086 = vdwg.mxu0
    %6087 = vmatprep.subr.bf16.mxu0 0
    %6088 = vmatpush1.bf16.xpose.msra.mxu0 0
    %6089 = vmatprep.subr.bf16.mxu0 0
    %6090 = vmatpush1.bf16.xpose.msra.mxu0 0
    %6091 = vmatprep.subr.bf16.mxu0 0
    %6092 = vmatpush1.bf16.xpose.msra.mxu0 0
    %6093 = vmatprep.subr.bf16.mxu0 0
    %6094 = vmatpush1.bf16.xpose.msra.mxu0 0
    %6095 = vmatprep.subr.bf16.mxu0 0
    %6096 = vmatpush1.bf16.xpose.msra.mxu0 0
    %6097 = vmatprep.subr.bf16.mxu0 0
    %6098 = vmatpush1.bf16.xpose.msra.mxu0 0
    %6099 = vmatprep.subr.bf16.mxu0 0
    %6100 = vmatpush1.bf16.xpose.msra.mxu0 0
    %6101 = vmatprep.subr.bf16.mxu0 %v3068
    %6102 = vmatpush1.bf16.xpose.msra.mxu0 %v3067
    %6103 = vmatprep.subr.bf16.mxu0 0
    %6104 = vmatpush2.bf16.xpose.msra.mxu0 0
    %6105 = vmatprep.subr.bf16.mxu0 0
    %6106 = vmatpush2.bf16.xpose.msra.mxu0 0
    %6107 = vmatprep.subr.bf16.mxu0 0
    %6108 = vmatpush2.bf16.xpose.msra.mxu0 0
    %6109 = vmatprep.subr.bf16.mxu0 0
    %6110 = vmatpush2.bf16.xpose.msra.mxu0 0
    %6111 = vmatprep.subr.bf16.mxu0 0
    %6112 = vmatpush2.bf16.xpose.msra.mxu0 0
    %6113 = vmatprep.subr.bf16.mxu0 0
    %6114 = vmatpush2.bf16.xpose.msra.mxu0 0
    %6115 = vmatprep.subr.bf16.mxu0 0
    %6116 = vmatpush2.bf16.xpose.msra.mxu0 0
    %6117 = vmatprep.subr.bf16.mxu0 0
    %6118 = vmatpush2.bf16.xpose.msra.mxu0 0
    %6119 = vmatprep.mubr.bf16.mxu0 %v1171
    %6120 = vmatmul.mubr.bf16.gmra.mxu0 %v1157
    %v6121 = vpop.f32.mrf.mxu0
    %v6122 = vadd.f32 %v6082, %v6121
    %v6123 = vpop.f32.mrf.mxu0
    %v6124 = vpop.f32.mrf.mxu0
    %v6125 = vpop.f32.mrf.mxu0
    %6126 = vdwg.mxu0
    %6127 = vmatprep.subr.bf16.mxu0 0
    %6128 = vmatpush1.bf16.xpose.msra.mxu0 0
    %6129 = vmatprep.subr.bf16.mxu0 0
    %6130 = vmatpush1.bf16.xpose.msra.mxu0 0
    %6131 = vmatprep.subr.bf16.mxu0 0
    %6132 = vmatpush1.bf16.xpose.msra.mxu0 0
    %6133 = vmatprep.subr.bf16.mxu0 0
    %6134 = vmatpush1.bf16.xpose.msra.mxu0 0
    %6135 = vmatprep.subr.bf16.mxu0 0
    %6136 = vmatpush1.bf16.xpose.msra.mxu0 0
    %6137 = vmatprep.subr.bf16.mxu0 0
    %6138 = vmatpush1.bf16.xpose.msra.mxu0 0
    %6139 = vmatprep.subr.bf16.mxu0 0
    %6140 = vmatpush1.bf16.xpose.msra.mxu0 0
    %6141 = vmatprep.subr.bf16.mxu0 %v3070
    %6142 = vmatpush1.bf16.xpose.msra.mxu0 %v3069
    %6143 = vmatprep.subr.bf16.mxu0 0
    %6144 = vmatpush2.bf16.xpose.msra.mxu0 0
    %6145 = vmatprep.subr.bf16.mxu0 0
    %6146 = vmatpush2.bf16.xpose.msra.mxu0 0
    %6147 = vmatprep.subr.bf16.mxu0 0
    %6148 = vmatpush2.bf16.xpose.msra.mxu0 0
    %6149 = vmatprep.subr.bf16.mxu0 0
    %6150 = vmatpush2.bf16.xpose.msra.mxu0 0
    %6151 = vmatprep.subr.bf16.mxu0 0
    %6152 = vmatpush2.bf16.xpose.msra.mxu0 0
    %6153 = vmatprep.subr.bf16.mxu0 0
    %6154 = vmatpush2.bf16.xpose.msra.mxu0 0
    %6155 = vmatprep.subr.bf16.mxu0 0
    %6156 = vmatpush2.bf16.xpose.msra.mxu0 0
    %6157 = vmatprep.subr.bf16.mxu0 0
    %6158 = vmatpush2.bf16.xpose.msra.mxu0 0
    %6159 = vmatprep.mubr.bf16.mxu0 %v1175
    %6160 = vmatmul.mubr.bf16.gmra.mxu0 %v1173
    %v6161 = vpop.f32.mrf.mxu0
    %v6162 = vadd.f32 %v6122, %v6161
    %v6163 = vpop.f32.mrf.mxu0
    %v6164 = vpop.f32.mrf.mxu0
    %v6165 = vpop.f32.mrf.mxu0
    %6166 = vdwg.mxu0
    %6167 = vmatprep.subr.bf16.mxu0 0
    %6168 = vmatpush1.bf16.xpose.msra.mxu0 0
    %6169 = vmatprep.subr.bf16.mxu0 0
    %6170 = vmatpush1.bf16.xpose.msra.mxu0 0
    %6171 = vmatprep.subr.bf16.mxu0 0
    %6172 = vmatpush1.bf16.xpose.msra.mxu0 0
    %6173 = vmatprep.subr.bf16.mxu0 0
    %6174 = vmatpush1.bf16.xpose.msra.mxu0 0
    %6175 = vmatprep.subr.bf16.mxu0 0
    %6176 = vmatpush1.bf16.xpose.msra.mxu0 0
    %6177 = vmatprep.subr.bf16.mxu0 0
    %6178 = vmatpush1.bf16.xpose.msra.mxu0 0
    %6179 = vmatprep.subr.bf16.mxu0 0
    %6180 = vmatpush1.bf16.xpose.msra.mxu0 0
    %6181 = vmatprep.subr.bf16.mxu0 %v3072
    %6182 = vmatpush1.bf16.xpose.msra.mxu0 %v3071
    %6183 = vmatprep.subr.bf16.mxu0 0
    %6184 = vmatpush2.bf16.xpose.msra.mxu0 0
    %6185 = vmatprep.subr.bf16.mxu0 0
    %6186 = vmatpush2.bf16.xpose.msra.mxu0 0
    %6187 = vmatprep.subr.bf16.mxu0 0
    %6188 = vmatpush2.bf16.xpose.msra.mxu0 0
    %6189 = vmatprep.subr.bf16.mxu0 0
    %6190 = vmatpush2.bf16.xpose.msra.mxu0 0
    %6191 = vmatprep.subr.bf16.mxu0 0
    %6192 = vmatpush2.bf16.xpose.msra.mxu0 0
    %6193 = vmatprep.subr.bf16.mxu0 0
    %6194 = vmatpush2.bf16.xpose.msra.mxu0 0
    %6195 = vmatprep.subr.bf16.mxu0 0
    %6196 = vmatpush2.bf16.xpose.msra.mxu0 0
    %6197 = vmatprep.subr.bf16.mxu0 0
    %6198 = vmatpush2.bf16.xpose.msra.mxu0 0
    %6199 = vmatprep.mubr.bf16.mxu0 %v1213
    %6200 = vmatmul.mubr.bf16.gmra.mxu0 %v1199
    %v6201 = vpop.f32.mrf.mxu0
    %v6202 = vadd.f32 %v6162, %v6201
    %v6203 = vpop.f32.mrf.mxu0
    %v6204 = vpop.f32.mrf.mxu0
    %v6205 = vpop.f32.mrf.mxu0
    %6206 = vdwg.mxu0
    %6207 = vmatprep.subr.bf16.mxu0 0
    %6208 = vmatpush1.bf16.xpose.msra.mxu0 0
    %6209 = vmatprep.subr.bf16.mxu0 0
    %6210 = vmatpush1.bf16.xpose.msra.mxu0 0
    %6211 = vmatprep.subr.bf16.mxu0 0
    %6212 = vmatpush1.bf16.xpose.msra.mxu0 0
    %6213 = vmatprep.subr.bf16.mxu0 0
    %6214 = vmatpush1.bf16.xpose.msra.mxu0 0
    %6215 = vmatprep.subr.bf16.mxu0 0
    %6216 = vmatpush1.bf16.xpose.msra.mxu0 0
    %6217 = vmatprep.subr.bf16.mxu0 0
    %6218 = vmatpush1.bf16.xpose.msra.mxu0 0
    %6219 = vmatprep.subr.bf16.mxu0 0
    %6220 = vmatpush1.bf16.xpose.msra.mxu0 0
    %6221 = vmatprep.subr.bf16.mxu0 %v3074
    %6222 = vmatpush1.bf16.xpose.msra.mxu0 %v3073
    %6223 = vmatprep.subr.bf16.mxu0 0
    %6224 = vmatpush2.bf16.xpose.msra.mxu0 0
    %6225 = vmatprep.subr.bf16.mxu0 0
    %6226 = vmatpush2.bf16.xpose.msra.mxu0 0
    %6227 = vmatprep.subr.bf16.mxu0 0
    %6228 = vmatpush2.bf16.xpose.msra.mxu0 0
    %6229 = vmatprep.subr.bf16.mxu0 0
    %6230 = vmatpush2.bf16.xpose.msra.mxu0 0
    %6231 = vmatprep.subr.bf16.mxu0 0
    %6232 = vmatpush2.bf16.xpose.msra.mxu0 0
    %6233 = vmatprep.subr.bf16.mxu0 0
    %6234 = vmatpush2.bf16.xpose.msra.mxu0 0
    %6235 = vmatprep.subr.bf16.mxu0 0
    %6236 = vmatpush2.bf16.xpose.msra.mxu0 0
    %6237 = vmatprep.subr.bf16.mxu0 0
    %6238 = vmatpush2.bf16.xpose.msra.mxu0 0
    %6239 = vmatprep.mubr.bf16.mxu0 %v1223
    %6240 = vmatmul.mubr.bf16.gmra.mxu0 %v1221
    %v6241 = vpop.f32.mrf.mxu0
    %v6242 = vadd.f32 %v6202, %v6241
    %v6243 = vpop.f32.mrf.mxu0
    %v6244 = vpop.f32.mrf.mxu0
    %v6245 = vpop.f32.mrf.mxu0
    %6246 = vdwg.mxu0
    %6247 = vmatprep.subr.bf16.mxu0 0
    %6248 = vmatpush1.bf16.xpose.msra.mxu0 0
    %6249 = vmatprep.subr.bf16.mxu0 0
    %6250 = vmatpush1.bf16.xpose.msra.mxu0 0
    %6251 = vmatprep.subr.bf16.mxu0 0
    %6252 = vmatpush1.bf16.xpose.msra.mxu0 0
    %6253 = vmatprep.subr.bf16.mxu0 0
    %6254 = vmatpush1.bf16.xpose.msra.mxu0 0
    %6255 = vmatprep.subr.bf16.mxu0 0
    %6256 = vmatpush1.bf16.xpose.msra.mxu0 0
    %6257 = vmatprep.subr.bf16.mxu0 0
    %6258 = vmatpush1.bf16.xpose.msra.mxu0 0
    %6259 = vmatprep.subr.bf16.mxu0 0
    %6260 = vmatpush1.bf16.xpose.msra.mxu0 0
    %6261 = vmatprep.subr.bf16.mxu0 %v3076
    %6262 = vmatpush1.bf16.xpose.msra.mxu0 %v3075
    %6263 = vmatprep.subr.bf16.mxu0 0
    %6264 = vmatpush2.bf16.xpose.msra.mxu0 0
    %6265 = vmatprep.subr.bf16.mxu0 0
    %6266 = vmatpush2.bf16.xpose.msra.mxu0 0
    %6267 = vmatprep.subr.bf16.mxu0 0
    %6268 = vmatpush2.bf16.xpose.msra.mxu0 0
    %6269 = vmatprep.subr.bf16.mxu0 0
    %6270 = vmatpush2.bf16.xpose.msra.mxu0 0
    %6271 = vmatprep.subr.bf16.mxu0 0
    %6272 = vmatpush2.bf16.xpose.msra.mxu0 0
    %6273 = vmatprep.subr.bf16.mxu0 0
    %6274 = vmatpush2.bf16.xpose.msra.mxu0 0
    %6275 = vmatprep.subr.bf16.mxu0 0
    %6276 = vmatpush2.bf16.xpose.msra.mxu0 0
    %6277 = vmatprep.subr.bf16.mxu0 0
    %6278 = vmatpush2.bf16.xpose.msra.mxu0 0
    %6279 = vmatprep.mubr.bf16.mxu0 %v1220
    %6280 = vmatmul.mubr.bf16.gmra.mxu0 %v1206
    %v6281 = vpop.f32.mrf.mxu0
    %v6282 = vadd.f32 %v6242, %v6281
    %v6283 = vpop.f32.mrf.mxu0
    %v6284 = vpop.f32.mrf.mxu0
    %v6285 = vpop.f32.mrf.mxu0
    %6286 = vdwg.mxu0
    %6287 = vmatprep.subr.bf16.mxu0 0
    %6288 = vmatpush1.bf16.xpose.msra.mxu0 0
    %6289 = vmatprep.subr.bf16.mxu0 0
    %6290 = vmatpush1.bf16.xpose.msra.mxu0 0
    %6291 = vmatprep.subr.bf16.mxu0 0
    %6292 = vmatpush1.bf16.xpose.msra.mxu0 0
    %6293 = vmatprep.subr.bf16.mxu0 0
    %6294 = vmatpush1.bf16.xpose.msra.mxu0 0
    %6295 = vmatprep.subr.bf16.mxu0 0
    %6296 = vmatpush1.bf16.xpose.msra.mxu0 0
    %6297 = vmatprep.subr.bf16.mxu0 0
    %6298 = vmatpush1.bf16.xpose.msra.mxu0 0
    %6299 = vmatprep.subr.bf16.mxu0 0
    %6300 = vmatpush1.bf16.xpose.msra.mxu0 0
    %6301 = vmatprep.subr.bf16.mxu0 %v3078
    %6302 = vmatpush1.bf16.xpose.msra.mxu0 %v3077
    %6303 = vmatprep.subr.bf16.mxu0 0
    %6304 = vmatpush2.bf16.xpose.msra.mxu0 0
    %6305 = vmatprep.subr.bf16.mxu0 0
    %6306 = vmatpush2.bf16.xpose.msra.mxu0 0
    %6307 = vmatprep.subr.bf16.mxu0 0
    %6308 = vmatpush2.bf16.xpose.msra.mxu0 0
    %6309 = vmatprep.subr.bf16.mxu0 0
    %6310 = vmatpush2.bf16.xpose.msra.mxu0 0
    %6311 = vmatprep.subr.bf16.mxu0 0
    %6312 = vmatpush2.bf16.xpose.msra.mxu0 0
    %6313 = vmatprep.subr.bf16.mxu0 0
    %6314 = vmatpush2.bf16.xpose.msra.mxu0 0
    %6315 = vmatprep.subr.bf16.mxu0 0
    %6316 = vmatpush2.bf16.xpose.msra.mxu0 0
    %6317 = vmatprep.subr.bf16.mxu0 0
    %6318 = vmatpush2.bf16.xpose.msra.mxu0 0
    %6319 = vmatprep.mubr.bf16.mxu0 %v1224
    %6320 = vmatmul.mubr.bf16.gmra.mxu0 %v1222
    %v6321 = vpop.f32.mrf.mxu0
    %v6322 = vadd.f32 %v6282, %v6321
    %v6323 = vpop.f32.mrf.mxu0
    %v6324 = vpop.f32.mrf.mxu0
    %v6325 = vpop.f32.mrf.mxu0
    %6326 = vdwg.mxu0
    %6327 = vmatprep.subr.bf16.mxu0 0
    %6328 = vmatpush1.bf16.xpose.msra.mxu0 0
    %6329 = vmatprep.subr.bf16.mxu0 0
    %6330 = vmatpush1.bf16.xpose.msra.mxu0 0
    %6331 = vmatprep.subr.bf16.mxu0 0
    %6332 = vmatpush1.bf16.xpose.msra.mxu0 0
    %6333 = vmatprep.subr.bf16.mxu0 0
    %6334 = vmatpush1.bf16.xpose.msra.mxu0 0
    %6335 = vmatprep.subr.bf16.mxu0 0
    %6336 = vmatpush1.bf16.xpose.msra.mxu0 0
    %6337 = vmatprep.subr.bf16.mxu0 0
    %6338 = vmatpush1.bf16.xpose.msra.mxu0 0
    %6339 = vmatprep.subr.bf16.mxu0 0
    %6340 = vmatpush1.bf16.xpose.msra.mxu0 0
    %6341 = vmatprep.subr.bf16.mxu0 %v3080
    %6342 = vmatpush1.bf16.xpose.msra.mxu0 %v3079
    %6343 = vmatprep.subr.bf16.mxu0 0
    %6344 = vmatpush2.bf16.xpose.msra.mxu0 0
    %6345 = vmatprep.subr.bf16.mxu0 0
    %6346 = vmatpush2.bf16.xpose.msra.mxu0 0
    %6347 = vmatprep.subr.bf16.mxu0 0
    %6348 = vmatpush2.bf16.xpose.msra.mxu0 0
    %6349 = vmatprep.subr.bf16.mxu0 0
    %6350 = vmatpush2.bf16.xpose.msra.mxu0 0
    %6351 = vmatprep.subr.bf16.mxu0 0
    %6352 = vmatpush2.bf16.xpose.msra.mxu0 0
    %6353 = vmatprep.subr.bf16.mxu0 0
    %6354 = vmatpush2.bf16.xpose.msra.mxu0 0
    %6355 = vmatprep.subr.bf16.mxu0 0
    %6356 = vmatpush2.bf16.xpose.msra.mxu0 0
    %6357 = vmatprep.subr.bf16.mxu0 0
    %6358 = vmatpush2.bf16.xpose.msra.mxu0 0
    %6359 = vmatprep.mubr.bf16.mxu0 %v1262
    %6360 = vmatmul.mubr.bf16.gmra.mxu0 %v1248
    %v6361 = vpop.f32.mrf.mxu0
    %v6362 = vadd.f32 %v6322, %v6361
    %v6363 = vpop.f32.mrf.mxu0
    %v6364 = vpop.f32.mrf.mxu0
    %v6365 = vpop.f32.mrf.mxu0
    %6366 = vdwg.mxu0
    %6367 = vmatprep.subr.bf16.mxu0 0
    %6368 = vmatpush1.bf16.xpose.msra.mxu0 0
    %6369 = vmatprep.subr.bf16.mxu0 0
    %6370 = vmatpush1.bf16.xpose.msra.mxu0 0
    %6371 = vmatprep.subr.bf16.mxu0 0
    %6372 = vmatpush1.bf16.xpose.msra.mxu0 0
    %6373 = vmatprep.subr.bf16.mxu0 0
    %6374 = vmatpush1.bf16.xpose.msra.mxu0 0
    %6375 = vmatprep.subr.bf16.mxu0 0
    %6376 = vmatpush1.bf16.xpose.msra.mxu0 0
    %6377 = vmatprep.subr.bf16.mxu0 0
    %6378 = vmatpush1.bf16.xpose.msra.mxu0 0
    %6379 = vmatprep.subr.bf16.mxu0 0
    %6380 = vmatpush1.bf16.xpose.msra.mxu0 0
    %6381 = vmatprep.subr.bf16.mxu0 %v3082
    %6382 = vmatpush1.bf16.xpose.msra.mxu0 %v3081
    %6383 = vmatprep.subr.bf16.mxu0 0
    %6384 = vmatpush2.bf16.xpose.msra.mxu0 0
    %6385 = vmatprep.subr.bf16.mxu0 0
    %6386 = vmatpush2.bf16.xpose.msra.mxu0 0
    %6387 = vmatprep.subr.bf16.mxu0 0
    %6388 = vmatpush2.bf16.xpose.msra.mxu0 0
    %6389 = vmatprep.subr.bf16.mxu0 0
    %6390 = vmatpush2.bf16.xpose.msra.mxu0 0
    %6391 = vmatprep.subr.bf16.mxu0 0
    %6392 = vmatpush2.bf16.xpose.msra.mxu0 0
    %6393 = vmatprep.subr.bf16.mxu0 0
    %6394 = vmatpush2.bf16.xpose.msra.mxu0 0
    %6395 = vmatprep.subr.bf16.mxu0 0
    %6396 = vmatpush2.bf16.xpose.msra.mxu0 0
    %6397 = vmatprep.subr.bf16.mxu0 0
    %6398 = vmatpush2.bf16.xpose.msra.mxu0 0
    %6399 = vmatprep.mubr.bf16.mxu0 %v1272
    %6400 = vmatmul.mubr.bf16.gmra.mxu0 %v1270
    %v6401 = vpop.f32.mrf.mxu0
    %v6402 = vadd.f32 %v6362, %v6401
    %v6403 = vpop.f32.mrf.mxu0
    %v6404 = vpop.f32.mrf.mxu0
    %v6405 = vpop.f32.mrf.mxu0
    %6406 = vdwg.mxu0
    %6407 = vmatprep.subr.bf16.mxu0 0
    %6408 = vmatpush1.bf16.xpose.msra.mxu0 0
    %6409 = vmatprep.subr.bf16.mxu0 0
    %6410 = vmatpush1.bf16.xpose.msra.mxu0 0
    %6411 = vmatprep.subr.bf16.mxu0 0
    %6412 = vmatpush1.bf16.xpose.msra.mxu0 0
    %6413 = vmatprep.subr.bf16.mxu0 0
    %6414 = vmatpush1.bf16.xpose.msra.mxu0 0
    %6415 = vmatprep.subr.bf16.mxu0 0
    %6416 = vmatpush1.bf16.xpose.msra.mxu0 0
    %6417 = vmatprep.subr.bf16.mxu0 0
    %6418 = vmatpush1.bf16.xpose.msra.mxu0 0
    %6419 = vmatprep.subr.bf16.mxu0 0
    %6420 = vmatpush1.bf16.xpose.msra.mxu0 0
    %6421 = vmatprep.subr.bf16.mxu0 %v3084
    %6422 = vmatpush1.bf16.xpose.msra.mxu0 %v3083
    %6423 = vmatprep.subr.bf16.mxu0 0
    %6424 = vmatpush2.bf16.xpose.msra.mxu0 0
    %6425 = vmatprep.subr.bf16.mxu0 0
    %6426 = vmatpush2.bf16.xpose.msra.mxu0 0
    %6427 = vmatprep.subr.bf16.mxu0 0
    %6428 = vmatpush2.bf16.xpose.msra.mxu0 0
    %6429 = vmatprep.subr.bf16.mxu0 0
    %6430 = vmatpush2.bf16.xpose.msra.mxu0 0
    %6431 = vmatprep.subr.bf16.mxu0 0
    %6432 = vmatpush2.bf16.xpose.msra.mxu0 0
    %6433 = vmatprep.subr.bf16.mxu0 0
    %6434 = vmatpush2.bf16.xpose.msra.mxu0 0
    %6435 = vmatprep.subr.bf16.mxu0 0
    %6436 = vmatpush2.bf16.xpose.msra.mxu0 0
    %6437 = vmatprep.subr.bf16.mxu0 0
    %6438 = vmatpush2.bf16.xpose.msra.mxu0 0
    %6439 = vmatprep.mubr.bf16.mxu0 %v1269
    %6440 = vmatmul.mubr.bf16.gmra.mxu0 %v1255
    %v6441 = vpop.f32.mrf.mxu0
    %v6442 = vadd.f32 %v6402, %v6441
    %v6443 = vpop.f32.mrf.mxu0
    %v6444 = vpop.f32.mrf.mxu0
    %v6445 = vpop.f32.mrf.mxu0
    %6446 = vdwg.mxu0
    %6447 = vmatprep.subr.bf16.mxu0 0
    %6448 = vmatpush1.bf16.xpose.msra.mxu0 0
    %6449 = vmatprep.subr.bf16.mxu0 0
    %6450 = vmatpush1.bf16.xpose.msra.mxu0 0
    %6451 = vmatprep.subr.bf16.mxu0 0
    %6452 = vmatpush1.bf16.xpose.msra.mxu0 0
    %6453 = vmatprep.subr.bf16.mxu0 0
    %6454 = vmatpush1.bf16.xpose.msra.mxu0 0
    %6455 = vmatprep.subr.bf16.mxu0 0
    %6456 = vmatpush1.bf16.xpose.msra.mxu0 0
    %6457 = vmatprep.subr.bf16.mxu0 0
    %6458 = vmatpush1.bf16.xpose.msra.mxu0 0
    %6459 = vmatprep.subr.bf16.mxu0 0
    %6460 = vmatpush1.bf16.xpose.msra.mxu0 0
    %6461 = vmatprep.subr.bf16.mxu0 %v3086
    %6462 = vmatpush1.bf16.xpose.msra.mxu0 %v3085
    %6463 = vmatprep.subr.bf16.mxu0 0
    %6464 = vmatpush2.bf16.xpose.msra.mxu0 0
    %6465 = vmatprep.subr.bf16.mxu0 0
    %6466 = vmatpush2.bf16.xpose.msra.mxu0 0
    %6467 = vmatprep.subr.bf16.mxu0 0
    %6468 = vmatpush2.bf16.xpose.msra.mxu0 0
    %6469 = vmatprep.subr.bf16.mxu0 0
    %6470 = vmatpush2.bf16.xpose.msra.mxu0 0
    %6471 = vmatprep.subr.bf16.mxu0 0
    %6472 = vmatpush2.bf16.xpose.msra.mxu0 0
    %6473 = vmatprep.subr.bf16.mxu0 0
    %6474 = vmatpush2.bf16.xpose.msra.mxu0 0
    %6475 = vmatprep.subr.bf16.mxu0 0
    %6476 = vmatpush2.bf16.xpose.msra.mxu0 0
    %6477 = vmatprep.subr.bf16.mxu0 0
    %6478 = vmatpush2.bf16.xpose.msra.mxu0 0
    %6479 = vmatprep.mubr.bf16.mxu0 %v1273
    %6480 = vmatmul.mubr.bf16.gmra.mxu0 %v1271
    %v6481 = vpop.f32.mrf.mxu0
    %v6482 = vadd.f32 %v6442, %v6481
    %v6483 = vpop.f32.mrf.mxu0
    %v6484 = vpop.f32.mrf.mxu0
    %v6485 = vpop.f32.mrf.mxu0
    %6486 = vdwg.mxu0
    %6487 = vmatprep.subr.bf16.mxu0 0
    %6488 = vmatpush1.bf16.xpose.msra.mxu0 0
    %6489 = vmatprep.subr.bf16.mxu0 0
    %6490 = vmatpush1.bf16.xpose.msra.mxu0 0
    %6491 = vmatprep.subr.bf16.mxu0 0
    %6492 = vmatpush1.bf16.xpose.msra.mxu0 0
    %6493 = vmatprep.subr.bf16.mxu0 0
    %6494 = vmatpush1.bf16.xpose.msra.mxu0 0
    %6495 = vmatprep.subr.bf16.mxu0 0
    %6496 = vmatpush1.bf16.xpose.msra.mxu0 0
    %6497 = vmatprep.subr.bf16.mxu0 0
    %6498 = vmatpush1.bf16.xpose.msra.mxu0 0
    %6499 = vmatprep.subr.bf16.mxu0 0
    %6500 = vmatpush1.bf16.xpose.msra.mxu0 0
    %6501 = vmatprep.subr.bf16.mxu0 %v3088
    %6502 = vmatpush1.bf16.xpose.msra.mxu0 %v3087
    %6503 = vmatprep.subr.bf16.mxu0 0
    %6504 = vmatpush2.bf16.xpose.msra.mxu0 0
    %6505 = vmatprep.subr.bf16.mxu0 0
    %6506 = vmatpush2.bf16.xpose.msra.mxu0 0
    %6507 = vmatprep.subr.bf16.mxu0 0
    %6508 = vmatpush2.bf16.xpose.msra.mxu0 0
    %6509 = vmatprep.subr.bf16.mxu0 0
    %6510 = vmatpush2.bf16.xpose.msra.mxu0 0
    %6511 = vmatprep.subr.bf16.mxu0 0
    %6512 = vmatpush2.bf16.xpose.msra.mxu0 0
    %6513 = vmatprep.subr.bf16.mxu0 0
    %6514 = vmatpush2.bf16.xpose.msra.mxu0 0
    %6515 = vmatprep.subr.bf16.mxu0 0
    %6516 = vmatpush2.bf16.xpose.msra.mxu0 0
    %6517 = vmatprep.subr.bf16.mxu0 0
    %6518 = vmatpush2.bf16.xpose.msra.mxu0 0
    %6519 = vmatprep.mubr.bf16.mxu0 %v1311
    %6520 = vmatmul.mubr.bf16.gmra.mxu0 %v1297
    %v6521 = vpop.f32.mrf.mxu0
    %v6522 = vadd.f32 %v6482, %v6521
    %v6523 = vpop.f32.mrf.mxu0
    %v6524 = vpop.f32.mrf.mxu0
    %v6525 = vpop.f32.mrf.mxu0
    %6526 = vdwg.mxu0
    %6527 = vmatprep.subr.bf16.mxu0 0
    %6528 = vmatpush1.bf16.xpose.msra.mxu0 0
    %6529 = vmatprep.subr.bf16.mxu0 0
    %6530 = vmatpush1.bf16.xpose.msra.mxu0 0
    %6531 = vmatprep.subr.bf16.mxu0 0
    %6532 = vmatpush1.bf16.xpose.msra.mxu0 0
    %6533 = vmatprep.subr.bf16.mxu0 0
    %6534 = vmatpush1.bf16.xpose.msra.mxu0 0
    %6535 = vmatprep.subr.bf16.mxu0 0
    %6536 = vmatpush1.bf16.xpose.msra.mxu0 0
    %6537 = vmatprep.subr.bf16.mxu0 0
    %6538 = vmatpush1.bf16.xpose.msra.mxu0 0
    %6539 = vmatprep.subr.bf16.mxu0 0
    %6540 = vmatpush1.bf16.xpose.msra.mxu0 0
    %6541 = vmatprep.subr.bf16.mxu0 %v3090
    %6542 = vmatpush1.bf16.xpose.msra.mxu0 %v3089
    %6543 = vmatprep.subr.bf16.mxu0 0
    %6544 = vmatpush2.bf16.xpose.msra.mxu0 0
    %6545 = vmatprep.subr.bf16.mxu0 0
    %6546 = vmatpush2.bf16.xpose.msra.mxu0 0
    %6547 = vmatprep.subr.bf16.mxu0 0
    %6548 = vmatpush2.bf16.xpose.msra.mxu0 0
    %6549 = vmatprep.subr.bf16.mxu0 0
    %6550 = vmatpush2.bf16.xpose.msra.mxu0 0
    %6551 = vmatprep.subr.bf16.mxu0 0
    %6552 = vmatpush2.bf16.xpose.msra.mxu0 0
    %6553 = vmatprep.subr.bf16.mxu0 0
    %6554 = vmatpush2.bf16.xpose.msra.mxu0 0
    %6555 = vmatprep.subr.bf16.mxu0 0
    %6556 = vmatpush2.bf16.xpose.msra.mxu0 0
    %6557 = vmatprep.subr.bf16.mxu0 0
    %6558 = vmatpush2.bf16.xpose.msra.mxu0 0
    %6559 = vmatprep.mubr.bf16.mxu0 %v1321
    %6560 = vmatmul.mubr.bf16.gmra.mxu0 %v1319
    %v6561 = vpop.f32.mrf.mxu0
    %v6562 = vadd.f32 %v6522, %v6561
    %v6563 = vpop.f32.mrf.mxu0
    %v6564 = vpop.f32.mrf.mxu0
    %v6565 = vpop.f32.mrf.mxu0
    %6566 = vdwg.mxu0
    %6567 = vmatprep.subr.bf16.mxu0 0
    %6568 = vmatpush1.bf16.xpose.msra.mxu0 0
    %6569 = vmatprep.subr.bf16.mxu0 0
    %6570 = vmatpush1.bf16.xpose.msra.mxu0 0
    %6571 = vmatprep.subr.bf16.mxu0 0
    %6572 = vmatpush1.bf16.xpose.msra.mxu0 0
    %6573 = vmatprep.subr.bf16.mxu0 0
    %6574 = vmatpush1.bf16.xpose.msra.mxu0 0
    %6575 = vmatprep.subr.bf16.mxu0 0
    %6576 = vmatpush1.bf16.xpose.msra.mxu0 0
    %6577 = vmatprep.subr.bf16.mxu0 0
    %6578 = vmatpush1.bf16.xpose.msra.mxu0 0
    %6579 = vmatprep.subr.bf16.mxu0 0
    %6580 = vmatpush1.bf16.xpose.msra.mxu0 0
    %6581 = vmatprep.subr.bf16.mxu0 %v3092
    %6582 = vmatpush1.bf16.xpose.msra.mxu0 %v3091
    %6583 = vmatprep.subr.bf16.mxu0 0
    %6584 = vmatpush2.bf16.xpose.msra.mxu0 0
    %6585 = vmatprep.subr.bf16.mxu0 0
    %6586 = vmatpush2.bf16.xpose.msra.mxu0 0
    %6587 = vmatprep.subr.bf16.mxu0 0
    %6588 = vmatpush2.bf16.xpose.msra.mxu0 0
    %6589 = vmatprep.subr.bf16.mxu0 0
    %6590 = vmatpush2.bf16.xpose.msra.mxu0 0
    %6591 = vmatprep.subr.bf16.mxu0 0
    %6592 = vmatpush2.bf16.xpose.msra.mxu0 0
    %6593 = vmatprep.subr.bf16.mxu0 0
    %6594 = vmatpush2.bf16.xpose.msra.mxu0 0
    %6595 = vmatprep.subr.bf16.mxu0 0
    %6596 = vmatpush2.bf16.xpose.msra.mxu0 0
    %6597 = vmatprep.subr.bf16.mxu0 0
    %6598 = vmatpush2.bf16.xpose.msra.mxu0 0
    %6599 = vmatprep.mubr.bf16.mxu0 %v1318
    %6600 = vmatmul.mubr.bf16.gmra.mxu0 %v1304
    %v6601 = vpop.f32.mrf.mxu0
    %v6602 = vadd.f32 %v6562, %v6601
    %v6603 = vpop.f32.mrf.mxu0
    %v6604 = vpop.f32.mrf.mxu0
    %v6605 = vpop.f32.mrf.mxu0
    %6606 = vdwg.mxu0
    %6607 = vmatprep.subr.bf16.mxu0 0
    %6608 = vmatpush1.bf16.xpose.msra.mxu0 0
    %6609 = vmatprep.subr.bf16.mxu0 0
    %6610 = vmatpush1.bf16.xpose.msra.mxu0 0
    %6611 = vmatprep.subr.bf16.mxu0 0
    %6612 = vmatpush1.bf16.xpose.msra.mxu0 0
    %6613 = vmatprep.subr.bf16.mxu0 0
    %6614 = vmatpush1.bf16.xpose.msra.mxu0 0
    %6615 = vmatprep.subr.bf16.mxu0 0
    %6616 = vmatpush1.bf16.xpose.msra.mxu0 0
    %6617 = vmatprep.subr.bf16.mxu0 0
    %6618 = vmatpush1.bf16.xpose.msra.mxu0 0
    %6619 = vmatprep.subr.bf16.mxu0 0
    %6620 = vmatpush1.bf16.xpose.msra.mxu0 0
    %6621 = vmatprep.subr.bf16.mxu0 %v3094
    %6622 = vmatpush1.bf16.xpose.msra.mxu0 %v3093
    %6623 = vmatprep.subr.bf16.mxu0 0
    %6624 = vmatpush2.bf16.xpose.msra.mxu0 0
    %6625 = vmatprep.subr.bf16.mxu0 0
    %6626 = vmatpush2.bf16.xpose.msra.mxu0 0
    %6627 = vmatprep.subr.bf16.mxu0 0
    %6628 = vmatpush2.bf16.xpose.msra.mxu0 0
    %6629 = vmatprep.subr.bf16.mxu0 0
    %6630 = vmatpush2.bf16.xpose.msra.mxu0 0
    %6631 = vmatprep.subr.bf16.mxu0 0
    %6632 = vmatpush2.bf16.xpose.msra.mxu0 0
    %6633 = vmatprep.subr.bf16.mxu0 0
    %6634 = vmatpush2.bf16.xpose.msra.mxu0 0
    %6635 = vmatprep.subr.bf16.mxu0 0
    %6636 = vmatpush2.bf16.xpose.msra.mxu0 0
    %6637 = vmatprep.subr.bf16.mxu0 0
    %6638 = vmatpush2.bf16.xpose.msra.mxu0 0
    %6639 = vmatprep.mubr.bf16.mxu0 %v1322
    %6640 = vmatmul.mubr.bf16.gmra.mxu0 %v1320
    %v6641 = vpop.f32.mrf.mxu0
    %v6642 = vadd.f32 %v6602, %v6641
    %v6643 = vpop.f32.mrf.mxu0
    %v6644 = vpop.f32.mrf.mxu0
    %v6645 = vpop.f32.mrf.mxu0
    %6646 = vdwg.mxu0
    %6647 = vmatprep.subr.bf16.mxu0 0
    %6648 = vmatpush1.bf16.xpose.msra.mxu0 0
    %6649 = vmatprep.subr.bf16.mxu0 0
    %6650 = vmatpush1.bf16.xpose.msra.mxu0 0
    %6651 = vmatprep.subr.bf16.mxu0 0
    %6652 = vmatpush1.bf16.xpose.msra.mxu0 0
    %6653 = vmatprep.subr.bf16.mxu0 0
    %6654 = vmatpush1.bf16.xpose.msra.mxu0 0
    %6655 = vmatprep.subr.bf16.mxu0 0
    %6656 = vmatpush1.bf16.xpose.msra.mxu0 0
    %6657 = vmatprep.subr.bf16.mxu0 0
    %6658 = vmatpush1.bf16.xpose.msra.mxu0 0
    %6659 = vmatprep.subr.bf16.mxu0 0
    %6660 = vmatpush1.bf16.xpose.msra.mxu0 0
    %6661 = vmatprep.subr.bf16.mxu0 %v3096
    %6662 = vmatpush1.bf16.xpose.msra.mxu0 %v3095
    %6663 = vmatprep.subr.bf16.mxu0 0
    %6664 = vmatpush2.bf16.xpose.msra.mxu0 0
    %6665 = vmatprep.subr.bf16.mxu0 0
    %6666 = vmatpush2.bf16.xpose.msra.mxu0 0
    %6667 = vmatprep.subr.bf16.mxu0 0
    %6668 = vmatpush2.bf16.xpose.msra.mxu0 0
    %6669 = vmatprep.subr.bf16.mxu0 0
    %6670 = vmatpush2.bf16.xpose.msra.mxu0 0
    %6671 = vmatprep.subr.bf16.mxu0 0
    %6672 = vmatpush2.bf16.xpose.msra.mxu0 0
    %6673 = vmatprep.subr.bf16.mxu0 0
    %6674 = vmatpush2.bf16.xpose.msra.mxu0 0
    %6675 = vmatprep.subr.bf16.mxu0 0
    %6676 = vmatpush2.bf16.xpose.msra.mxu0 0
    %6677 = vmatprep.subr.bf16.mxu0 0
    %6678 = vmatpush2.bf16.xpose.msra.mxu0 0
    %6679 = vmatprep.mubr.bf16.mxu0 %v1360
    %6680 = vmatmul.mubr.bf16.gmra.mxu0 %v1346
    %v6681 = vpop.f32.mrf.mxu0
    %v6682 = vadd.f32 %v6642, %v6681
    %v6683 = vpop.f32.mrf.mxu0
    %v6684 = vpop.f32.mrf.mxu0
    %v6685 = vpop.f32.mrf.mxu0
    %6686 = vdwg.mxu0
    %6687 = vmatprep.subr.bf16.mxu0 0
    %6688 = vmatpush1.bf16.xpose.msra.mxu0 0
    %6689 = vmatprep.subr.bf16.mxu0 0
    %6690 = vmatpush1.bf16.xpose.msra.mxu0 0
    %6691 = vmatprep.subr.bf16.mxu0 0
    %6692 = vmatpush1.bf16.xpose.msra.mxu0 0
    %6693 = vmatprep.subr.bf16.mxu0 0
    %6694 = vmatpush1.bf16.xpose.msra.mxu0 0
    %6695 = vmatprep.subr.bf16.mxu0 0
    %6696 = vmatpush1.bf16.xpose.msra.mxu0 0
    %6697 = vmatprep.subr.bf16.mxu0 0
    %6698 = vmatpush1.bf16.xpose.msra.mxu0 0
    %6699 = vmatprep.subr.bf16.mxu0 0
    %6700 = vmatpush1.bf16.xpose.msra.mxu0 0
    %6701 = vmatprep.subr.bf16.mxu0 %v3098
    %6702 = vmatpush1.bf16.xpose.msra.mxu0 %v3097
    %6703 = vmatprep.subr.bf16.mxu0 0
    %6704 = vmatpush2.bf16.xpose.msra.mxu0 0
    %6705 = vmatprep.subr.bf16.mxu0 0
    %6706 = vmatpush2.bf16.xpose.msra.mxu0 0
    %6707 = vmatprep.subr.bf16.mxu0 0
    %6708 = vmatpush2.bf16.xpose.msra.mxu0 0
    %6709 = vmatprep.subr.bf16.mxu0 0
    %6710 = vmatpush2.bf16.xpose.msra.mxu0 0
    %6711 = vmatprep.subr.bf16.mxu0 0
    %6712 = vmatpush2.bf16.xpose.msra.mxu0 0
    %6713 = vmatprep.subr.bf16.mxu0 0
    %6714 = vmatpush2.bf16.xpose.msra.mxu0 0
    %6715 = vmatprep.subr.bf16.mxu0 0
    %6716 = vmatpush2.bf16.xpose.msra.mxu0 0
    %6717 = vmatprep.subr.bf16.mxu0 0
    %6718 = vmatpush2.bf16.xpose.msra.mxu0 0
    %6719 = vmatprep.mubr.bf16.mxu0 %v1370
    %6720 = vmatmul.mubr.bf16.gmra.mxu0 %v1368
    %v6721 = vpop.f32.mrf.mxu0
    %v6722 = vadd.f32 %v6682, %v6721
    %v6723 = vpop.f32.mrf.mxu0
    %v6724 = vpop.f32.mrf.mxu0
    %v6725 = vpop.f32.mrf.mxu0
    %6726 = vdwg.mxu0
    %6727 = vmatprep.subr.bf16.mxu0 0
    %6728 = vmatpush1.bf16.xpose.msra.mxu0 0
    %6729 = vmatprep.subr.bf16.mxu0 0
    %6730 = vmatpush1.bf16.xpose.msra.mxu0 0
    %6731 = vmatprep.subr.bf16.mxu0 0
    %6732 = vmatpush1.bf16.xpose.msra.mxu0 0
    %6733 = vmatprep.subr.bf16.mxu0 0
    %6734 = vmatpush1.bf16.xpose.msra.mxu0 0
    %6735 = vmatprep.subr.bf16.mxu0 0
    %6736 = vmatpush1.bf16.xpose.msra.mxu0 0
    %6737 = vmatprep.subr.bf16.mxu0 0
    %6738 = vmatpush1.bf16.xpose.msra.mxu0 0
    %6739 = vmatprep.subr.bf16.mxu0 0
    %6740 = vmatpush1.bf16.xpose.msra.mxu0 0
    %6741 = vmatprep.subr.bf16.mxu0 %v3100
    %6742 = vmatpush1.bf16.xpose.msra.mxu0 %v3099
    %6743 = vmatprep.subr.bf16.mxu0 0
    %6744 = vmatpush2.bf16.xpose.msra.mxu0 0
    %6745 = vmatprep.subr.bf16.mxu0 0
    %6746 = vmatpush2.bf16.xpose.msra.mxu0 0
    %6747 = vmatprep.subr.bf16.mxu0 0
    %6748 = vmatpush2.bf16.xpose.msra.mxu0 0
    %6749 = vmatprep.subr.bf16.mxu0 0
    %6750 = vmatpush2.bf16.xpose.msra.mxu0 0
    %6751 = vmatprep.subr.bf16.mxu0 0
    %6752 = vmatpush2.bf16.xpose.msra.mxu0 0
    %6753 = vmatprep.subr.bf16.mxu0 0
    %6754 = vmatpush2.bf16.xpose.msra.mxu0 0
    %6755 = vmatprep.subr.bf16.mxu0 0
    %6756 = vmatpush2.bf16.xpose.msra.mxu0 0
    %6757 = vmatprep.subr.bf16.mxu0 0
    %6758 = vmatpush2.bf16.xpose.msra.mxu0 0
    %6759 = vmatprep.mubr.bf16.mxu0 %v1367
    %6760 = vmatmul.mubr.bf16.gmra.mxu0 %v1353
    %v6761 = vpop.f32.mrf.mxu0
    %v6762 = vadd.f32 %v6722, %v6761
    %v6763 = vpop.f32.mrf.mxu0
    %v6764 = vpop.f32.mrf.mxu0
    %v6765 = vpop.f32.mrf.mxu0
    %6766 = vdwg.mxu0
    %6767 = vmatprep.subr.bf16.mxu0 0
    %6768 = vmatpush1.bf16.xpose.msra.mxu0 0
    %6769 = vmatprep.subr.bf16.mxu0 0
    %6770 = vmatpush1.bf16.xpose.msra.mxu0 0
    %6771 = vmatprep.subr.bf16.mxu0 0
    %6772 = vmatpush1.bf16.xpose.msra.mxu0 0
    %6773 = vmatprep.subr.bf16.mxu0 0
    %6774 = vmatpush1.bf16.xpose.msra.mxu0 0
    %6775 = vmatprep.subr.bf16.mxu0 0
    %6776 = vmatpush1.bf16.xpose.msra.mxu0 0
    %6777 = vmatprep.subr.bf16.mxu0 0
    %6778 = vmatpush1.bf16.xpose.msra.mxu0 0
    %6779 = vmatprep.subr.bf16.mxu0 0
    %6780 = vmatpush1.bf16.xpose.msra.mxu0 0
    %6781 = vmatprep.subr.bf16.mxu0 %v3102
    %6782 = vmatpush1.bf16.xpose.msra.mxu0 %v3101
    %6783 = vmatprep.subr.bf16.mxu0 0
    %6784 = vmatpush2.bf16.xpose.msra.mxu0 0
    %6785 = vmatprep.subr.bf16.mxu0 0
    %6786 = vmatpush2.bf16.xpose.msra.mxu0 0
    %6787 = vmatprep.subr.bf16.mxu0 0
    %6788 = vmatpush2.bf16.xpose.msra.mxu0 0
    %6789 = vmatprep.subr.bf16.mxu0 0
    %6790 = vmatpush2.bf16.xpose.msra.mxu0 0
    %6791 = vmatprep.subr.bf16.mxu0 0
    %6792 = vmatpush2.bf16.xpose.msra.mxu0 0
    %6793 = vmatprep.subr.bf16.mxu0 0
    %6794 = vmatpush2.bf16.xpose.msra.mxu0 0
    %6795 = vmatprep.subr.bf16.mxu0 0
    %6796 = vmatpush2.bf16.xpose.msra.mxu0 0
    %6797 = vmatprep.subr.bf16.mxu0 0
    %6798 = vmatpush2.bf16.xpose.msra.mxu0 0
    %6799 = vmatprep.mubr.bf16.mxu0 %v1371
    %6800 = vmatmul.mubr.bf16.gmra.mxu0 %v1369
    %v6801 = vpop.f32.mrf.mxu0
    %v6802 = vadd.f32 %v6762, %v6801
    %v6803 = vpop.f32.mrf.mxu0
    %v6804 = vpop.f32.mrf.mxu0
    %v6805 = vpop.f32.mrf.mxu0
    %6806 = vdwg.mxu0
    %6807 = vmatprep.subr.bf16.mxu0 0
    %6808 = vmatpush1.bf16.xpose.msra.mxu0 0
    %6809 = vmatprep.subr.bf16.mxu0 0
    %6810 = vmatpush1.bf16.xpose.msra.mxu0 0
    %6811 = vmatprep.subr.bf16.mxu0 0
    %6812 = vmatpush1.bf16.xpose.msra.mxu0 0
    %6813 = vmatprep.subr.bf16.mxu0 0
    %6814 = vmatpush1.bf16.xpose.msra.mxu0 0
    %6815 = vmatprep.subr.bf16.mxu0 0
    %6816 = vmatpush1.bf16.xpose.msra.mxu0 0
    %6817 = vmatprep.subr.bf16.mxu0 0
    %6818 = vmatpush1.bf16.xpose.msra.mxu0 0
    %6819 = vmatprep.subr.bf16.mxu0 0
    %6820 = vmatpush1.bf16.xpose.msra.mxu0 0
    %6821 = vmatprep.subr.bf16.mxu0 %v3104
    %6822 = vmatpush1.bf16.xpose.msra.mxu0 %v3103
    %6823 = vmatprep.subr.bf16.mxu0 0
    %6824 = vmatpush2.bf16.xpose.msra.mxu0 0
    %6825 = vmatprep.subr.bf16.mxu0 0
    %6826 = vmatpush2.bf16.xpose.msra.mxu0 0
    %6827 = vmatprep.subr.bf16.mxu0 0
    %6828 = vmatpush2.bf16.xpose.msra.mxu0 0
    %6829 = vmatprep.subr.bf16.mxu0 0
    %6830 = vmatpush2.bf16.xpose.msra.mxu0 0
    %6831 = vmatprep.subr.bf16.mxu0 0
    %6832 = vmatpush2.bf16.xpose.msra.mxu0 0
    %6833 = vmatprep.subr.bf16.mxu0 0
    %6834 = vmatpush2.bf16.xpose.msra.mxu0 0
    %6835 = vmatprep.subr.bf16.mxu0 0
    %6836 = vmatpush2.bf16.xpose.msra.mxu0 0
    %6837 = vmatprep.subr.bf16.mxu0 0
    %6838 = vmatpush2.bf16.xpose.msra.mxu0 0
    %6839 = vmatprep.mubr.bf16.mxu0 %v1409
    %6840 = vmatmul.mubr.bf16.gmra.mxu0 %v1395
    %v6841 = vpop.f32.mrf.mxu0
    %v6842 = vadd.f32 %v6802, %v6841
    %v6843 = vpop.f32.mrf.mxu0
    %v6844 = vpop.f32.mrf.mxu0
    %v6845 = vpop.f32.mrf.mxu0
    %6846 = vdwg.mxu0
    %6847 = vmatprep.subr.bf16.mxu0 0
    %6848 = vmatpush1.bf16.xpose.msra.mxu0 0
    %6849 = vmatprep.subr.bf16.mxu0 0
    %6850 = vmatpush1.bf16.xpose.msra.mxu0 0
    %6851 = vmatprep.subr.bf16.mxu0 0
    %6852 = vmatpush1.bf16.xpose.msra.mxu0 0
    %6853 = vmatprep.subr.bf16.mxu0 0
    %6854 = vmatpush1.bf16.xpose.msra.mxu0 0
    %6855 = vmatprep.subr.bf16.mxu0 0
    %6856 = vmatpush1.bf16.xpose.msra.mxu0 0
    %6857 = vmatprep.subr.bf16.mxu0 0
    %6858 = vmatpush1.bf16.xpose.msra.mxu0 0
    %6859 = vmatprep.subr.bf16.mxu0 0
    %6860 = vmatpush1.bf16.xpose.msra.mxu0 0
    %6861 = vmatprep.subr.bf16.mxu0 %v3106
    %6862 = vmatpush1.bf16.xpose.msra.mxu0 %v3105
    %6863 = vmatprep.subr.bf16.mxu0 0
    %6864 = vmatpush2.bf16.xpose.msra.mxu0 0
    %6865 = vmatprep.subr.bf16.mxu0 0
    %6866 = vmatpush2.bf16.xpose.msra.mxu0 0
    %6867 = vmatprep.subr.bf16.mxu0 0
    %6868 = vmatpush2.bf16.xpose.msra.mxu0 0
    %6869 = vmatprep.subr.bf16.mxu0 0
    %6870 = vmatpush2.bf16.xpose.msra.mxu0 0
    %6871 = vmatprep.subr.bf16.mxu0 0
    %6872 = vmatpush2.bf16.xpose.msra.mxu0 0
    %6873 = vmatprep.subr.bf16.mxu0 0
    %6874 = vmatpush2.bf16.xpose.msra.mxu0 0
    %6875 = vmatprep.subr.bf16.mxu0 0
    %6876 = vmatpush2.bf16.xpose.msra.mxu0 0
    %6877 = vmatprep.subr.bf16.mxu0 0
    %6878 = vmatpush2.bf16.xpose.msra.mxu0 0
    %6879 = vmatprep.mubr.bf16.mxu0 %v1419
    %6880 = vmatmul.mubr.bf16.gmra.mxu0 %v1417
    %v6881 = vpop.f32.mrf.mxu0
    %v6882 = vadd.f32 %v6842, %v6881
    %v6883 = vpop.f32.mrf.mxu0
    %v6884 = vpop.f32.mrf.mxu0
    %v6885 = vpop.f32.mrf.mxu0
    %6886 = vdwg.mxu0
    %6887 = vmatprep.subr.bf16.mxu0 0
    %6888 = vmatpush1.bf16.xpose.msra.mxu0 0
    %6889 = vmatprep.subr.bf16.mxu0 0
    %6890 = vmatpush1.bf16.xpose.msra.mxu0 0
    %6891 = vmatprep.subr.bf16.mxu0 0
    %6892 = vmatpush1.bf16.xpose.msra.mxu0 0
    %6893 = vmatprep.subr.bf16.mxu0 0
    %6894 = vmatpush1.bf16.xpose.msra.mxu0 0
    %6895 = vmatprep.subr.bf16.mxu0 0
    %6896 = vmatpush1.bf16.xpose.msra.mxu0 0
    %6897 = vmatprep.subr.bf16.mxu0 0
    %6898 = vmatpush1.bf16.xpose.msra.mxu0 0
    %6899 = vmatprep.subr.bf16.mxu0 0
    %6900 = vmatpush1.bf16.xpose.msra.mxu0 0
    %6901 = vmatprep.subr.bf16.mxu0 %v3108
    %6902 = vmatpush1.bf16.xpose.msra.mxu0 %v3107
    %6903 = vmatprep.subr.bf16.mxu0 0
    %6904 = vmatpush2.bf16.xpose.msra.mxu0 0
    %6905 = vmatprep.subr.bf16.mxu0 0
    %6906 = vmatpush2.bf16.xpose.msra.mxu0 0
    %6907 = vmatprep.subr.bf16.mxu0 0
    %6908 = vmatpush2.bf16.xpose.msra.mxu0 0
    %6909 = vmatprep.subr.bf16.mxu0 0
    %6910 = vmatpush2.bf16.xpose.msra.mxu0 0
    %6911 = vmatprep.subr.bf16.mxu0 0
    %6912 = vmatpush2.bf16.xpose.msra.mxu0 0
    %6913 = vmatprep.subr.bf16.mxu0 0
    %6914 = vmatpush2.bf16.xpose.msra.mxu0 0
    %6915 = vmatprep.subr.bf16.mxu0 0
    %6916 = vmatpush2.bf16.xpose.msra.mxu0 0
    %6917 = vmatprep.subr.bf16.mxu0 0
    %6918 = vmatpush2.bf16.xpose.msra.mxu0 0
    %6919 = vmatprep.mubr.bf16.mxu0 %v1416
    %6920 = vmatmul.mubr.bf16.gmra.mxu0 %v1402
    %v6921 = vpop.f32.mrf.mxu0
    %v6922 = vadd.f32 %v6882, %v6921
    %v6923 = vpop.f32.mrf.mxu0
    %v6924 = vpop.f32.mrf.mxu0
    %v6925 = vpop.f32.mrf.mxu0
    %6926 = vdwg.mxu0
    %6927 = vmatprep.subr.bf16.mxu0 0
    %6928 = vmatpush1.bf16.xpose.msra.mxu0 0
    %6929 = vmatprep.subr.bf16.mxu0 0
    %6930 = vmatpush1.bf16.xpose.msra.mxu0 0
    %6931 = vmatprep.subr.bf16.mxu0 0
    %6932 = vmatpush1.bf16.xpose.msra.mxu0 0
    %6933 = vmatprep.subr.bf16.mxu0 0
    %6934 = vmatpush1.bf16.xpose.msra.mxu0 0
    %6935 = vmatprep.subr.bf16.mxu0 0
    %6936 = vmatpush1.bf16.xpose.msra.mxu0 0
    %6937 = vmatprep.subr.bf16.mxu0 0
    %6938 = vmatpush1.bf16.xpose.msra.mxu0 0
    %6939 = vmatprep.subr.bf16.mxu0 0
    %6940 = vmatpush1.bf16.xpose.msra.mxu0 0
    %6941 = vmatprep.subr.bf16.mxu0 %v3110
    %6942 = vmatpush1.bf16.xpose.msra.mxu0 %v3109
    %6943 = vmatprep.subr.bf16.mxu0 0
    %6944 = vmatpush2.bf16.xpose.msra.mxu0 0
    %6945 = vmatprep.subr.bf16.mxu0 0
    %6946 = vmatpush2.bf16.xpose.msra.mxu0 0
    %6947 = vmatprep.subr.bf16.mxu0 0
    %6948 = vmatpush2.bf16.xpose.msra.mxu0 0
    %6949 = vmatprep.subr.bf16.mxu0 0
    %6950 = vmatpush2.bf16.xpose.msra.mxu0 0
    %6951 = vmatprep.subr.bf16.mxu0 0
    %6952 = vmatpush2.bf16.xpose.msra.mxu0 0
    %6953 = vmatprep.subr.bf16.mxu0 0
    %6954 = vmatpush2.bf16.xpose.msra.mxu0 0
    %6955 = vmatprep.subr.bf16.mxu0 0
    %6956 = vmatpush2.bf16.xpose.msra.mxu0 0
    %6957 = vmatprep.subr.bf16.mxu0 0
    %6958 = vmatpush2.bf16.xpose.msra.mxu0 0
    %6959 = vmatprep.mubr.bf16.mxu0 %v1420
    %6960 = vmatmul.mubr.bf16.gmra.mxu0 %v1418
    %v6961 = vpop.f32.mrf.mxu0
    %v6962 = vadd.f32 %v6922, %v6961
    %v6963 = vpop.f32.mrf.mxu0
    %v6964 = vpop.f32.mrf.mxu0
    %v6965 = vpop.f32.mrf.mxu0
    %6966 = vdwg.mxu0
    %6967 = vmatprep.subr.bf16.mxu0 0
    %6968 = vmatpush1.bf16.xpose.msra.mxu0 0
    %6969 = vmatprep.subr.bf16.mxu0 0
    %6970 = vmatpush1.bf16.xpose.msra.mxu0 0
    %6971 = vmatprep.subr.bf16.mxu0 0
    %6972 = vmatpush1.bf16.xpose.msra.mxu0 0
    %6973 = vmatprep.subr.bf16.mxu0 0
    %6974 = vmatpush1.bf16.xpose.msra.mxu0 0
    %6975 = vmatprep.subr.bf16.mxu0 0
    %6976 = vmatpush1.bf16.xpose.msra.mxu0 0
    %6977 = vmatprep.subr.bf16.mxu0 0
    %6978 = vmatpush1.bf16.xpose.msra.mxu0 0
    %6979 = vmatprep.subr.bf16.mxu0 0
    %6980 = vmatpush1.bf16.xpose.msra.mxu0 0
    %6981 = vmatprep.subr.bf16.mxu0 %v3112
    %6982 = vmatpush1.bf16.xpose.msra.mxu0 %v3111
    %6983 = vmatprep.subr.bf16.mxu0 0
    %6984 = vmatpush2.bf16.xpose.msra.mxu0 0
    %6985 = vmatprep.subr.bf16.mxu0 0
    %6986 = vmatpush2.bf16.xpose.msra.mxu0 0
    %6987 = vmatprep.subr.bf16.mxu0 0
    %6988 = vmatpush2.bf16.xpose.msra.mxu0 0
    %6989 = vmatprep.subr.bf16.mxu0 0
    %6990 = vmatpush2.bf16.xpose.msra.mxu0 0
    %6991 = vmatprep.subr.bf16.mxu0 0
    %6992 = vmatpush2.bf16.xpose.msra.mxu0 0
    %6993 = vmatprep.subr.bf16.mxu0 0
    %6994 = vmatpush2.bf16.xpose.msra.mxu0 0
    %6995 = vmatprep.subr.bf16.mxu0 0
    %6996 = vmatpush2.bf16.xpose.msra.mxu0 0
    %6997 = vmatprep.subr.bf16.mxu0 0
    %6998 = vmatpush2.bf16.xpose.msra.mxu0 0
    %6999 = vmatprep.mubr.bf16.mxu0 %v1458
    %7000 = vmatmul.mubr.bf16.gmra.mxu0 %v1444
    %v7001 = vpop.f32.mrf.mxu0
    %v7002 = vadd.f32 %v6962, %v7001
    %v7003 = vpop.f32.mrf.mxu0
    %v7004 = vpop.f32.mrf.mxu0
    %v7005 = vpop.f32.mrf.mxu0
    %7006 = vdwg.mxu0
    %7007 = vmatprep.subr.bf16.mxu0 0
    %7008 = vmatpush1.bf16.xpose.msra.mxu0 0
    %7009 = vmatprep.subr.bf16.mxu0 0
    %7010 = vmatpush1.bf16.xpose.msra.mxu0 0
    %7011 = vmatprep.subr.bf16.mxu0 0
    %7012 = vmatpush1.bf16.xpose.msra.mxu0 0
    %7013 = vmatprep.subr.bf16.mxu0 0
    %7014 = vmatpush1.bf16.xpose.msra.mxu0 0
    %7015 = vmatprep.subr.bf16.mxu0 0
    %7016 = vmatpush1.bf16.xpose.msra.mxu0 0
    %7017 = vmatprep.subr.bf16.mxu0 0
    %7018 = vmatpush1.bf16.xpose.msra.mxu0 0
    %7019 = vmatprep.subr.bf16.mxu0 0
    %7020 = vmatpush1.bf16.xpose.msra.mxu0 0
    %7021 = vmatprep.subr.bf16.mxu0 %v3114
    %7022 = vmatpush1.bf16.xpose.msra.mxu0 %v3113
    %7023 = vmatprep.subr.bf16.mxu0 0
    %7024 = vmatpush2.bf16.xpose.msra.mxu0 0
    %7025 = vmatprep.subr.bf16.mxu0 0
    %7026 = vmatpush2.bf16.xpose.msra.mxu0 0
    %7027 = vmatprep.subr.bf16.mxu0 0
    %7028 = vmatpush2.bf16.xpose.msra.mxu0 0
    %7029 = vmatprep.subr.bf16.mxu0 0
    %7030 = vmatpush2.bf16.xpose.msra.mxu0 0
    %7031 = vmatprep.subr.bf16.mxu0 0
    %7032 = vmatpush2.bf16.xpose.msra.mxu0 0
    %7033 = vmatprep.subr.bf16.mxu0 0
    %7034 = vmatpush2.bf16.xpose.msra.mxu0 0
    %7035 = vmatprep.subr.bf16.mxu0 0
    %7036 = vmatpush2.bf16.xpose.msra.mxu0 0
    %7037 = vmatprep.subr.bf16.mxu0 0
    %7038 = vmatpush2.bf16.xpose.msra.mxu0 0
    %7039 = vmatprep.mubr.bf16.mxu0 %v1468
    %7040 = vmatmul.mubr.bf16.gmra.mxu0 %v1466
    %v7041 = vpop.f32.mrf.mxu0
    %v7042 = vadd.f32 %v7002, %v7041
    %v7043 = vpop.f32.mrf.mxu0
    %v7044 = vpop.f32.mrf.mxu0
    %v7045 = vpop.f32.mrf.mxu0
    %7046 = vdwg.mxu0
    %7047 = vmatprep.subr.bf16.mxu0 0
    %7048 = vmatpush1.bf16.xpose.msra.mxu0 0
    %7049 = vmatprep.subr.bf16.mxu0 0
    %7050 = vmatpush1.bf16.xpose.msra.mxu0 0
    %7051 = vmatprep.subr.bf16.mxu0 0
    %7052 = vmatpush1.bf16.xpose.msra.mxu0 0
    %7053 = vmatprep.subr.bf16.mxu0 0
    %7054 = vmatpush1.bf16.xpose.msra.mxu0 0
    %7055 = vmatprep.subr.bf16.mxu0 0
    %7056 = vmatpush1.bf16.xpose.msra.mxu0 0
    %7057 = vmatprep.subr.bf16.mxu0 0
    %7058 = vmatpush1.bf16.xpose.msra.mxu0 0
    %7059 = vmatprep.subr.bf16.mxu0 0
    %7060 = vmatpush1.bf16.xpose.msra.mxu0 0
    %7061 = vmatprep.subr.bf16.mxu0 %v3116
    %7062 = vmatpush1.bf16.xpose.msra.mxu0 %v3115
    %7063 = vmatprep.subr.bf16.mxu0 0
    %7064 = vmatpush2.bf16.xpose.msra.mxu0 0
    %7065 = vmatprep.subr.bf16.mxu0 0
    %7066 = vmatpush2.bf16.xpose.msra.mxu0 0
    %7067 = vmatprep.subr.bf16.mxu0 0
    %7068 = vmatpush2.bf16.xpose.msra.mxu0 0
    %7069 = vmatprep.subr.bf16.mxu0 0
    %7070 = vmatpush2.bf16.xpose.msra.mxu0 0
    %7071 = vmatprep.subr.bf16.mxu0 0
    %7072 = vmatpush2.bf16.xpose.msra.mxu0 0
    %7073 = vmatprep.subr.bf16.mxu0 0
    %7074 = vmatpush2.bf16.xpose.msra.mxu0 0
    %7075 = vmatprep.subr.bf16.mxu0 0
    %7076 = vmatpush2.bf16.xpose.msra.mxu0 0
    %7077 = vmatprep.subr.bf16.mxu0 0
    %7078 = vmatpush2.bf16.xpose.msra.mxu0 0
    %7079 = vmatprep.mubr.bf16.mxu0 %v1465
    %7080 = vmatmul.mubr.bf16.gmra.mxu0 %v1451
    %v7081 = vpop.f32.mrf.mxu0
    %v7082 = vadd.f32 %v7042, %v7081
    %v7083 = vpop.f32.mrf.mxu0
    %v7084 = vpop.f32.mrf.mxu0
    %v7085 = vpop.f32.mrf.mxu0
    %7086 = vdwg.mxu0
    %7087 = vmatprep.subr.bf16.mxu0 0
    %7088 = vmatpush1.bf16.xpose.msra.mxu0 0
    %7089 = vmatprep.subr.bf16.mxu0 0
    %7090 = vmatpush1.bf16.xpose.msra.mxu0 0
    %7091 = vmatprep.subr.bf16.mxu0 0
    %7092 = vmatpush1.bf16.xpose.msra.mxu0 0
    %7093 = vmatprep.subr.bf16.mxu0 0
    %7094 = vmatpush1.bf16.xpose.msra.mxu0 0
    %7095 = vmatprep.subr.bf16.mxu0 0
    %7096 = vmatpush1.bf16.xpose.msra.mxu0 0
    %7097 = vmatprep.subr.bf16.mxu0 0
    %7098 = vmatpush1.bf16.xpose.msra.mxu0 0
    %7099 = vmatprep.subr.bf16.mxu0 0
    %7100 = vmatpush1.bf16.xpose.msra.mxu0 0
    %7101 = vmatprep.subr.bf16.mxu0 %v3118
    %7102 = vmatpush1.bf16.xpose.msra.mxu0 %v3117
    %7103 = vmatprep.subr.bf16.mxu0 0
    %7104 = vmatpush2.bf16.xpose.msra.mxu0 0
    %7105 = vmatprep.subr.bf16.mxu0 0
    %7106 = vmatpush2.bf16.xpose.msra.mxu0 0
    %7107 = vmatprep.subr.bf16.mxu0 0
    %7108 = vmatpush2.bf16.xpose.msra.mxu0 0
    %7109 = vmatprep.subr.bf16.mxu0 0
    %7110 = vmatpush2.bf16.xpose.msra.mxu0 0
    %7111 = vmatprep.subr.bf16.mxu0 0
    %7112 = vmatpush2.bf16.xpose.msra.mxu0 0
    %7113 = vmatprep.subr.bf16.mxu0 0
    %7114 = vmatpush2.bf16.xpose.msra.mxu0 0
    %7115 = vmatprep.subr.bf16.mxu0 0
    %7116 = vmatpush2.bf16.xpose.msra.mxu0 0
    %7117 = vmatprep.subr.bf16.mxu0 0
    %7118 = vmatpush2.bf16.xpose.msra.mxu0 0
    %7119 = vmatprep.mubr.bf16.mxu0 %v1469
    %7120 = vmatmul.mubr.bf16.gmra.mxu0 %v1467
    %v7121 = vpop.f32.mrf.mxu0
    %v7122 = vadd.f32 %v7082, %v7121
    %v7123 = vpop.f32.mrf.mxu0
    %v7124 = vpop.f32.mrf.mxu0
    %v7125 = vpop.f32.mrf.mxu0
    %7126 = vdwg.mxu0
    %7127 = vmatprep.subr.bf16.mxu0 0
    %7128 = vmatpush1.bf16.xpose.msra.mxu0 0
    %7129 = vmatprep.subr.bf16.mxu0 0
    %7130 = vmatpush1.bf16.xpose.msra.mxu0 0
    %7131 = vmatprep.subr.bf16.mxu0 0
    %7132 = vmatpush1.bf16.xpose.msra.mxu0 0
    %7133 = vmatprep.subr.bf16.mxu0 0
    %7134 = vmatpush1.bf16.xpose.msra.mxu0 0
    %7135 = vmatprep.subr.bf16.mxu0 0
    %7136 = vmatpush1.bf16.xpose.msra.mxu0 0
    %7137 = vmatprep.subr.bf16.mxu0 0
    %7138 = vmatpush1.bf16.xpose.msra.mxu0 0
    %7139 = vmatprep.subr.bf16.mxu0 0
    %7140 = vmatpush1.bf16.xpose.msra.mxu0 0
    %7141 = vmatprep.subr.bf16.mxu0 %v3120
    %7142 = vmatpush1.bf16.xpose.msra.mxu0 %v3119
    %7143 = vmatprep.subr.bf16.mxu0 0
    %7144 = vmatpush2.bf16.xpose.msra.mxu0 0
    %7145 = vmatprep.subr.bf16.mxu0 0
    %7146 = vmatpush2.bf16.xpose.msra.mxu0 0
    %7147 = vmatprep.subr.bf16.mxu0 0
    %7148 = vmatpush2.bf16.xpose.msra.mxu0 0
    %7149 = vmatprep.subr.bf16.mxu0 0
    %7150 = vmatpush2.bf16.xpose.msra.mxu0 0
    %7151 = vmatprep.subr.bf16.mxu0 0
    %7152 = vmatpush2.bf16.xpose.msra.mxu0 0
    %7153 = vmatprep.subr.bf16.mxu0 0
    %7154 = vmatpush2.bf16.xpose.msra.mxu0 0
    %7155 = vmatprep.subr.bf16.mxu0 0
    %7156 = vmatpush2.bf16.xpose.msra.mxu0 0
    %7157 = vmatprep.subr.bf16.mxu0 0
    %7158 = vmatpush2.bf16.xpose.msra.mxu0 0
    %7159 = vmatprep.mubr.bf16.mxu0 %v1507
    %7160 = vmatmul.mubr.bf16.gmra.mxu0 %v1493
    %v7161 = vpop.f32.mrf.mxu0
    %v7162 = vadd.f32 %v7122, %v7161
    %v7163 = vpop.f32.mrf.mxu0
    %v7164 = vpop.f32.mrf.mxu0
    %v7165 = vpop.f32.mrf.mxu0
    %7166 = vdwg.mxu0
    %7167 = vmatprep.subr.bf16.mxu0 0
    %7168 = vmatpush1.bf16.xpose.msra.mxu0 0
    %7169 = vmatprep.subr.bf16.mxu0 0
    %7170 = vmatpush1.bf16.xpose.msra.mxu0 0
    %7171 = vmatprep.subr.bf16.mxu0 0
    %7172 = vmatpush1.bf16.xpose.msra.mxu0 0
    %7173 = vmatprep.subr.bf16.mxu0 0
    %7174 = vmatpush1.bf16.xpose.msra.mxu0 0
    %7175 = vmatprep.subr.bf16.mxu0 0
    %7176 = vmatpush1.bf16.xpose.msra.mxu0 0
    %7177 = vmatprep.subr.bf16.mxu0 0
    %7178 = vmatpush1.bf16.xpose.msra.mxu0 0
    %7179 = vmatprep.subr.bf16.mxu0 0
    %7180 = vmatpush1.bf16.xpose.msra.mxu0 0
    %7181 = vmatprep.subr.bf16.mxu0 %v3122
    %7182 = vmatpush1.bf16.xpose.msra.mxu0 %v3121
    %7183 = vmatprep.subr.bf16.mxu0 0
    %7184 = vmatpush2.bf16.xpose.msra.mxu0 0
    %7185 = vmatprep.subr.bf16.mxu0 0
    %7186 = vmatpush2.bf16.xpose.msra.mxu0 0
    %7187 = vmatprep.subr.bf16.mxu0 0
    %7188 = vmatpush2.bf16.xpose.msra.mxu0 0
    %7189 = vmatprep.subr.bf16.mxu0 0
    %7190 = vmatpush2.bf16.xpose.msra.mxu0 0
    %7191 = vmatprep.subr.bf16.mxu0 0
    %7192 = vmatpush2.bf16.xpose.msra.mxu0 0
    %7193 = vmatprep.subr.bf16.mxu0 0
    %7194 = vmatpush2.bf16.xpose.msra.mxu0 0
    %7195 = vmatprep.subr.bf16.mxu0 0
    %7196 = vmatpush2.bf16.xpose.msra.mxu0 0
    %7197 = vmatprep.subr.bf16.mxu0 0
    %7198 = vmatpush2.bf16.xpose.msra.mxu0 0
    %7199 = vmatprep.mubr.bf16.mxu0 %v1517
    %7200 = vmatmul.mubr.bf16.gmra.mxu0 %v1515
    %v7201 = vpop.f32.mrf.mxu0
    %v7202 = vadd.f32 %v7162, %v7201
    %v7203 = vpop.f32.mrf.mxu0
    %v7204 = vpop.f32.mrf.mxu0
    %v7205 = vpop.f32.mrf.mxu0
    %7206 = vdwg.mxu0
    %7207 = vmatprep.subr.bf16.mxu0 0
    %7208 = vmatpush1.bf16.xpose.msra.mxu0 0
    %7209 = vmatprep.subr.bf16.mxu0 0
    %7210 = vmatpush1.bf16.xpose.msra.mxu0 0
    %7211 = vmatprep.subr.bf16.mxu0 0
    %7212 = vmatpush1.bf16.xpose.msra.mxu0 0
    %7213 = vmatprep.subr.bf16.mxu0 0
    %7214 = vmatpush1.bf16.xpose.msra.mxu0 0
    %7215 = vmatprep.subr.bf16.mxu0 0
    %7216 = vmatpush1.bf16.xpose.msra.mxu0 0
    %7217 = vmatprep.subr.bf16.mxu0 0
    %7218 = vmatpush1.bf16.xpose.msra.mxu0 0
    %7219 = vmatprep.subr.bf16.mxu0 0
    %7220 = vmatpush1.bf16.xpose.msra.mxu0 0
    %7221 = vmatprep.subr.bf16.mxu0 %v3124
    %7222 = vmatpush1.bf16.xpose.msra.mxu0 %v3123
    %7223 = vmatprep.subr.bf16.mxu0 0
    %7224 = vmatpush2.bf16.xpose.msra.mxu0 0
    %7225 = vmatprep.subr.bf16.mxu0 0
    %7226 = vmatpush2.bf16.xpose.msra.mxu0 0
    %7227 = vmatprep.subr.bf16.mxu0 0
    %7228 = vmatpush2.bf16.xpose.msra.mxu0 0
    %7229 = vmatprep.subr.bf16.mxu0 0
    %7230 = vmatpush2.bf16.xpose.msra.mxu0 0
    %7231 = vmatprep.subr.bf16.mxu0 0
    %7232 = vmatpush2.bf16.xpose.msra.mxu0 0
    %7233 = vmatprep.subr.bf16.mxu0 0
    %7234 = vmatpush2.bf16.xpose.msra.mxu0 0
    %7235 = vmatprep.subr.bf16.mxu0 0
    %7236 = vmatpush2.bf16.xpose.msra.mxu0 0
    %7237 = vmatprep.subr.bf16.mxu0 0
    %7238 = vmatpush2.bf16.xpose.msra.mxu0 0
    %7239 = vmatprep.mubr.bf16.mxu0 %v1514
    %7240 = vmatmul.mubr.bf16.gmra.mxu0 %v1500
    %v7241 = vpop.f32.mrf.mxu0
    %v7242 = vadd.f32 %v7202, %v7241
    %v7243 = vpop.f32.mrf.mxu0
    %v7244 = vpop.f32.mrf.mxu0
    %v7245 = vpop.f32.mrf.mxu0
    %7246 = vdwg.mxu0
    %7247 = vmatprep.subr.bf16.mxu0 0
    %7248 = vmatpush1.bf16.xpose.msra.mxu0 0
    %7249 = vmatprep.subr.bf16.mxu0 0
    %7250 = vmatpush1.bf16.xpose.msra.mxu0 0
    %7251 = vmatprep.subr.bf16.mxu0 0
    %7252 = vmatpush1.bf16.xpose.msra.mxu0 0
    %7253 = vmatprep.subr.bf16.mxu0 0
    %7254 = vmatpush1.bf16.xpose.msra.mxu0 0
    %7255 = vmatprep.subr.bf16.mxu0 0
    %7256 = vmatpush1.bf16.xpose.msra.mxu0 0
    %7257 = vmatprep.subr.bf16.mxu0 0
    %7258 = vmatpush1.bf16.xpose.msra.mxu0 0
    %7259 = vmatprep.subr.bf16.mxu0 0
    %7260 = vmatpush1.bf16.xpose.msra.mxu0 0
    %7261 = vmatprep.subr.bf16.mxu0 %v3126
    %7262 = vmatpush1.bf16.xpose.msra.mxu0 %v3125
    %7263 = vmatprep.subr.bf16.mxu0 0
    %7264 = vmatpush2.bf16.xpose.msra.mxu0 0
    %7265 = vmatprep.subr.bf16.mxu0 0
    %7266 = vmatpush2.bf16.xpose.msra.mxu0 0
    %7267 = vmatprep.subr.bf16.mxu0 0
    %7268 = vmatpush2.bf16.xpose.msra.mxu0 0
    %7269 = vmatprep.subr.bf16.mxu0 0
    %7270 = vmatpush2.bf16.xpose.msra.mxu0 0
    %7271 = vmatprep.subr.bf16.mxu0 0
    %7272 = vmatpush2.bf16.xpose.msra.mxu0 0
    %7273 = vmatprep.subr.bf16.mxu0 0
    %7274 = vmatpush2.bf16.xpose.msra.mxu0 0
    %7275 = vmatprep.subr.bf16.mxu0 0
    %7276 = vmatpush2.bf16.xpose.msra.mxu0 0
    %7277 = vmatprep.subr.bf16.mxu0 0
    %7278 = vmatpush2.bf16.xpose.msra.mxu0 0
    %7279 = vmatprep.mubr.bf16.mxu0 %v1518
    %7280 = vmatmul.mubr.bf16.gmra.mxu0 %v1516
    %v7281 = vpop.f32.mrf.mxu0
    %v7282 = vadd.f32 %v7242, %v7281
    %v7283 = vpop.f32.mrf.mxu0
    %v7284 = vpop.f32.mrf.mxu0
    %v7285 = vpop.f32.mrf.mxu0
    %7286 = vdwg.mxu0
    %7287 = vmatprep.subr.bf16.mxu0 0
    %7288 = vmatpush1.bf16.xpose.msra.mxu0 0
    %7289 = vmatprep.subr.bf16.mxu0 0
    %7290 = vmatpush1.bf16.xpose.msra.mxu0 0
    %7291 = vmatprep.subr.bf16.mxu0 0
    %7292 = vmatpush1.bf16.xpose.msra.mxu0 0
    %7293 = vmatprep.subr.bf16.mxu0 0
    %7294 = vmatpush1.bf16.xpose.msra.mxu0 0
    %7295 = vmatprep.subr.bf16.mxu0 0
    %7296 = vmatpush1.bf16.xpose.msra.mxu0 0
    %7297 = vmatprep.subr.bf16.mxu0 0
    %7298 = vmatpush1.bf16.xpose.msra.mxu0 0
    %7299 = vmatprep.subr.bf16.mxu0 0
    %7300 = vmatpush1.bf16.xpose.msra.mxu0 0
    %7301 = vmatprep.subr.bf16.mxu0 %v3128
    %7302 = vmatpush1.bf16.xpose.msra.mxu0 %v3127
    %7303 = vmatprep.subr.bf16.mxu0 0
    %7304 = vmatpush2.bf16.xpose.msra.mxu0 0
    %7305 = vmatprep.subr.bf16.mxu0 0
    %7306 = vmatpush2.bf16.xpose.msra.mxu0 0
    %7307 = vmatprep.subr.bf16.mxu0 0
    %7308 = vmatpush2.bf16.xpose.msra.mxu0 0
    %7309 = vmatprep.subr.bf16.mxu0 0
    %7310 = vmatpush2.bf16.xpose.msra.mxu0 0
    %7311 = vmatprep.subr.bf16.mxu0 0
    %7312 = vmatpush2.bf16.xpose.msra.mxu0 0
    %7313 = vmatprep.subr.bf16.mxu0 0
    %7314 = vmatpush2.bf16.xpose.msra.mxu0 0
    %7315 = vmatprep.subr.bf16.mxu0 0
    %7316 = vmatpush2.bf16.xpose.msra.mxu0 0
    %7317 = vmatprep.subr.bf16.mxu0 0
    %7318 = vmatpush2.bf16.xpose.msra.mxu0 0
    %7319 = vmatprep.mubr.bf16.mxu0 %v1556
    %7320 = vmatmul.mubr.bf16.gmra.mxu0 %v1542
    %v7321 = vpop.f32.mrf.mxu0
    %v7322 = vadd.f32 %v7282, %v7321
    %v7323 = vpop.f32.mrf.mxu0
    %v7324 = vpop.f32.mrf.mxu0
    %v7325 = vpop.f32.mrf.mxu0
    %7326 = vdwg.mxu0
    %7327 = vmatprep.subr.bf16.mxu0 0
    %7328 = vmatpush1.bf16.xpose.msra.mxu0 0
    %7329 = vmatprep.subr.bf16.mxu0 0
    %7330 = vmatpush1.bf16.xpose.msra.mxu0 0
    %7331 = vmatprep.subr.bf16.mxu0 0
    %7332 = vmatpush1.bf16.xpose.msra.mxu0 0
    %7333 = vmatprep.subr.bf16.mxu0 0
    %7334 = vmatpush1.bf16.xpose.msra.mxu0 0
    %7335 = vmatprep.subr.bf16.mxu0 0
    %7336 = vmatpush1.bf16.xpose.msra.mxu0 0
    %7337 = vmatprep.subr.bf16.mxu0 0
    %7338 = vmatpush1.bf16.xpose.msra.mxu0 0
    %7339 = vmatprep.subr.bf16.mxu0 0
    %7340 = vmatpush1.bf16.xpose.msra.mxu0 0
    %7341 = vmatprep.subr.bf16.mxu0 %v3130
    %7342 = vmatpush1.bf16.xpose.msra.mxu0 %v3129
    %7343 = vmatprep.subr.bf16.mxu0 0
    %7344 = vmatpush2.bf16.xpose.msra.mxu0 0
    %7345 = vmatprep.subr.bf16.mxu0 0
    %7346 = vmatpush2.bf16.xpose.msra.mxu0 0
    %7347 = vmatprep.subr.bf16.mxu0 0
    %7348 = vmatpush2.bf16.xpose.msra.mxu0 0
    %7349 = vmatprep.subr.bf16.mxu0 0
    %7350 = vmatpush2.bf16.xpose.msra.mxu0 0
    %7351 = vmatprep.subr.bf16.mxu0 0
    %7352 = vmatpush2.bf16.xpose.msra.mxu0 0
    %7353 = vmatprep.subr.bf16.mxu0 0
    %7354 = vmatpush2.bf16.xpose.msra.mxu0 0
    %7355 = vmatprep.subr.bf16.mxu0 0
    %7356 = vmatpush2.bf16.xpose.msra.mxu0 0
    %7357 = vmatprep.subr.bf16.mxu0 0
    %7358 = vmatpush2.bf16.xpose.msra.mxu0 0
    %7359 = vmatprep.mubr.bf16.mxu0 %v1566
    %7360 = vmatmul.mubr.bf16.gmra.mxu0 %v1564
    %v7361 = vpop.f32.mrf.mxu0
    %v7362 = vadd.f32 %v7322, %v7361
    %v7363 = vpop.f32.mrf.mxu0
    %v7364 = vpop.f32.mrf.mxu0
    %v7365 = vpop.f32.mrf.mxu0
    %7366 = vdwg.mxu0
    %7367 = vmatprep.subr.bf16.mxu0 0
    %7368 = vmatpush1.bf16.xpose.msra.mxu0 0
    %7369 = vmatprep.subr.bf16.mxu0 0
    %7370 = vmatpush1.bf16.xpose.msra.mxu0 0
    %7371 = vmatprep.subr.bf16.mxu0 0
    %7372 = vmatpush1.bf16.xpose.msra.mxu0 0
    %7373 = vmatprep.subr.bf16.mxu0 0
    %7374 = vmatpush1.bf16.xpose.msra.mxu0 0
    %7375 = vmatprep.subr.bf16.mxu0 0
    %7376 = vmatpush1.bf16.xpose.msra.mxu0 0
    %7377 = vmatprep.subr.bf16.mxu0 0
    %7378 = vmatpush1.bf16.xpose.msra.mxu0 0
    %7379 = vmatprep.subr.bf16.mxu0 0
    %7380 = vmatpush1.bf16.xpose.msra.mxu0 0
    %7381 = vmatprep.subr.bf16.mxu0 %v3132
    %7382 = vmatpush1.bf16.xpose.msra.mxu0 %v3131
    %7383 = vmatprep.subr.bf16.mxu0 0
    %7384 = vmatpush2.bf16.xpose.msra.mxu0 0
    %7385 = vmatprep.subr.bf16.mxu0 0
    %7386 = vmatpush2.bf16.xpose.msra.mxu0 0
    %7387 = vmatprep.subr.bf16.mxu0 0
    %7388 = vmatpush2.bf16.xpose.msra.mxu0 0
    %7389 = vmatprep.subr.bf16.mxu0 0
    %7390 = vmatpush2.bf16.xpose.msra.mxu0 0
    %7391 = vmatprep.subr.bf16.mxu0 0
    %7392 = vmatpush2.bf16.xpose.msra.mxu0 0
    %7393 = vmatprep.subr.bf16.mxu0 0
    %7394 = vmatpush2.bf16.xpose.msra.mxu0 0
    %7395 = vmatprep.subr.bf16.mxu0 0
    %7396 = vmatpush2.bf16.xpose.msra.mxu0 0
    %7397 = vmatprep.subr.bf16.mxu0 0
    %7398 = vmatpush2.bf16.xpose.msra.mxu0 0
    %7399 = vmatprep.mubr.bf16.mxu0 %v1563
    %7400 = vmatmul.mubr.bf16.gmra.mxu0 %v1549
    %v7401 = vpop.f32.mrf.mxu0
    %v7402 = vadd.f32 %v7362, %v7401
    %v7403 = vpop.f32.mrf.mxu0
    %v7404 = vpop.f32.mrf.mxu0
    %v7405 = vpop.f32.mrf.mxu0
    %7406 = vdwg.mxu0
    %7407 = vmatprep.subr.bf16.mxu0 0
    %7408 = vmatpush1.bf16.xpose.msra.mxu0 0
    %7409 = vmatprep.subr.bf16.mxu0 0
    %7410 = vmatpush1.bf16.xpose.msra.mxu0 0
    %7411 = vmatprep.subr.bf16.mxu0 0
    %7412 = vmatpush1.bf16.xpose.msra.mxu0 0
    %7413 = vmatprep.subr.bf16.mxu0 0
    %7414 = vmatpush1.bf16.xpose.msra.mxu0 0
    %7415 = vmatprep.subr.bf16.mxu0 0
    %7416 = vmatpush1.bf16.xpose.msra.mxu0 0
    %7417 = vmatprep.subr.bf16.mxu0 0
    %7418 = vmatpush1.bf16.xpose.msra.mxu0 0
    %7419 = vmatprep.subr.bf16.mxu0 0
    %7420 = vmatpush1.bf16.xpose.msra.mxu0 0
    %7421 = vmatprep.subr.bf16.mxu0 %v3134
    %7422 = vmatpush1.bf16.xpose.msra.mxu0 %v3133
    %7423 = vmatprep.subr.bf16.mxu0 0
    %7424 = vmatpush2.bf16.xpose.msra.mxu0 0
    %7425 = vmatprep.subr.bf16.mxu0 0
    %7426 = vmatpush2.bf16.xpose.msra.mxu0 0
    %7427 = vmatprep.subr.bf16.mxu0 0
    %7428 = vmatpush2.bf16.xpose.msra.mxu0 0
    %7429 = vmatprep.subr.bf16.mxu0 0
    %7430 = vmatpush2.bf16.xpose.msra.mxu0 0
    %7431 = vmatprep.subr.bf16.mxu0 0
    %7432 = vmatpush2.bf16.xpose.msra.mxu0 0
    %7433 = vmatprep.subr.bf16.mxu0 0
    %7434 = vmatpush2.bf16.xpose.msra.mxu0 0
    %7435 = vmatprep.subr.bf16.mxu0 0
    %7436 = vmatpush2.bf16.xpose.msra.mxu0 0
    %7437 = vmatprep.subr.bf16.mxu0 0
    %7438 = vmatpush2.bf16.xpose.msra.mxu0 0
    %7439 = vmatprep.mubr.bf16.mxu0 %v1567
    %7440 = vmatmul.mubr.bf16.gmra.mxu0 %v1565
    %v7441 = vpop.f32.mrf.mxu0
    %v7442 = vadd.f32 %v7402, %v7441
    %v7443 = vpop.f32.mrf.mxu0
    %v7444 = vpop.f32.mrf.mxu0
    %v7445 = vpop.f32.mrf.mxu0
    %7446 = vdwg.mxu0
    %7447 = vmatprep.subr.bf16.mxu0 0
    %7448 = vmatpush1.bf16.xpose.msra.mxu0 0
    %7449 = vmatprep.subr.bf16.mxu0 0
    %7450 = vmatpush1.bf16.xpose.msra.mxu0 0
    %7451 = vmatprep.subr.bf16.mxu0 0
    %7452 = vmatpush1.bf16.xpose.msra.mxu0 0
    %7453 = vmatprep.subr.bf16.mxu0 0
    %7454 = vmatpush1.bf16.xpose.msra.mxu0 0
    %7455 = vmatprep.subr.bf16.mxu0 0
    %7456 = vmatpush1.bf16.xpose.msra.mxu0 0
    %7457 = vmatprep.subr.bf16.mxu0 0
    %7458 = vmatpush1.bf16.xpose.msra.mxu0 0
    %7459 = vmatprep.subr.bf16.mxu0 0
    %7460 = vmatpush1.bf16.xpose.msra.mxu0 0
    %7461 = vmatprep.subr.bf16.mxu0 %v3136
    %7462 = vmatpush1.bf16.xpose.msra.mxu0 %v3135
    %7463 = vmatprep.subr.bf16.mxu0 0
    %7464 = vmatpush2.bf16.xpose.msra.mxu0 0
    %7465 = vmatprep.subr.bf16.mxu0 0
    %7466 = vmatpush2.bf16.xpose.msra.mxu0 0
    %7467 = vmatprep.subr.bf16.mxu0 0
    %7468 = vmatpush2.bf16.xpose.msra.mxu0 0
    %7469 = vmatprep.subr.bf16.mxu0 0
    %7470 = vmatpush2.bf16.xpose.msra.mxu0 0
    %7471 = vmatprep.subr.bf16.mxu0 0
    %7472 = vmatpush2.bf16.xpose.msra.mxu0 0
    %7473 = vmatprep.subr.bf16.mxu0 0
    %7474 = vmatpush2.bf16.xpose.msra.mxu0 0
    %7475 = vmatprep.subr.bf16.mxu0 0
    %7476 = vmatpush2.bf16.xpose.msra.mxu0 0
    %7477 = vmatprep.subr.bf16.mxu0 0
    %7478 = vmatpush2.bf16.xpose.msra.mxu0 0
    %7479 = vmatprep.mubr.bf16.mxu0 %v1605
    %7480 = vmatmul.mubr.bf16.gmra.mxu0 %v1591
    %v7481 = vpop.f32.mrf.mxu0
    %v7482 = vadd.f32 %v7442, %v7481
    %v7483 = vpop.f32.mrf.mxu0
    %v7484 = vpop.f32.mrf.mxu0
    %v7485 = vpop.f32.mrf.mxu0
    %7486 = vdwg.mxu0
    %7487 = vmatprep.subr.bf16.mxu0 0
    %7488 = vmatpush1.bf16.xpose.msra.mxu0 0
    %7489 = vmatprep.subr.bf16.mxu0 0
    %7490 = vmatpush1.bf16.xpose.msra.mxu0 0
    %7491 = vmatprep.subr.bf16.mxu0 0
    %7492 = vmatpush1.bf16.xpose.msra.mxu0 0
    %7493 = vmatprep.subr.bf16.mxu0 0
    %7494 = vmatpush1.bf16.xpose.msra.mxu0 0
    %7495 = vmatprep.subr.bf16.mxu0 0
    %7496 = vmatpush1.bf16.xpose.msra.mxu0 0
    %7497 = vmatprep.subr.bf16.mxu0 0
    %7498 = vmatpush1.bf16.xpose.msra.mxu0 0
    %7499 = vmatprep.subr.bf16.mxu0 0
    %7500 = vmatpush1.bf16.xpose.msra.mxu0 0
    %7501 = vmatprep.subr.bf16.mxu0 %v3138
    %7502 = vmatpush1.bf16.xpose.msra.mxu0 %v3137
    %7503 = vmatprep.subr.bf16.mxu0 0
    %7504 = vmatpush2.bf16.xpose.msra.mxu0 0
    %7505 = vmatprep.subr.bf16.mxu0 0
    %7506 = vmatpush2.bf16.xpose.msra.mxu0 0
    %7507 = vmatprep.subr.bf16.mxu0 0
    %7508 = vmatpush2.bf16.xpose.msra.mxu0 0
    %7509 = vmatprep.subr.bf16.mxu0 0
    %7510 = vmatpush2.bf16.xpose.msra.mxu0 0
    %7511 = vmatprep.subr.bf16.mxu0 0
    %7512 = vmatpush2.bf16.xpose.msra.mxu0 0
    %7513 = vmatprep.subr.bf16.mxu0 0
    %7514 = vmatpush2.bf16.xpose.msra.mxu0 0
    %7515 = vmatprep.subr.bf16.mxu0 0
    %7516 = vmatpush2.bf16.xpose.msra.mxu0 0
    %7517 = vmatprep.subr.bf16.mxu0 0
    %7518 = vmatpush2.bf16.xpose.msra.mxu0 0
    %7519 = vmatprep.mubr.bf16.mxu0 %v1615
    %7520 = vmatmul.mubr.bf16.gmra.mxu0 %v1613
    %v7521 = vpop.f32.mrf.mxu0
    %v7522 = vadd.f32 %v7482, %v7521
    %v7523 = vpop.f32.mrf.mxu0
    %v7524 = vpop.f32.mrf.mxu0
    %v7525 = vpop.f32.mrf.mxu0
    %7526 = vdwg.mxu0
    %7527 = vmatprep.subr.bf16.mxu0 0
    %7528 = vmatpush1.bf16.xpose.msra.mxu0 0
    %7529 = vmatprep.subr.bf16.mxu0 0
    %7530 = vmatpush1.bf16.xpose.msra.mxu0 0
    %7531 = vmatprep.subr.bf16.mxu0 0
    %7532 = vmatpush1.bf16.xpose.msra.mxu0 0
    %7533 = vmatprep.subr.bf16.mxu0 0
    %7534 = vmatpush1.bf16.xpose.msra.mxu0 0
    %7535 = vmatprep.subr.bf16.mxu0 0
    %7536 = vmatpush1.bf16.xpose.msra.mxu0 0
    %7537 = vmatprep.subr.bf16.mxu0 0
    %7538 = vmatpush1.bf16.xpose.msra.mxu0 0
    %7539 = vmatprep.subr.bf16.mxu0 0
    %7540 = vmatpush1.bf16.xpose.msra.mxu0 0
    %7541 = vmatprep.subr.bf16.mxu0 %v3140
    %7542 = vmatpush1.bf16.xpose.msra.mxu0 %v3139
    %7543 = vmatprep.subr.bf16.mxu0 0
    %7544 = vmatpush2.bf16.xpose.msra.mxu0 0
    %7545 = vmatprep.subr.bf16.mxu0 0
    %7546 = vmatpush2.bf16.xpose.msra.mxu0 0
    %7547 = vmatprep.subr.bf16.mxu0 0
    %7548 = vmatpush2.bf16.xpose.msra.mxu0 0
    %7549 = vmatprep.subr.bf16.mxu0 0
    %7550 = vmatpush2.bf16.xpose.msra.mxu0 0
    %7551 = vmatprep.subr.bf16.mxu0 0
    %7552 = vmatpush2.bf16.xpose.msra.mxu0 0
    %7553 = vmatprep.subr.bf16.mxu0 0
    %7554 = vmatpush2.bf16.xpose.msra.mxu0 0
    %7555 = vmatprep.subr.bf16.mxu0 0
    %7556 = vmatpush2.bf16.xpose.msra.mxu0 0
    %7557 = vmatprep.subr.bf16.mxu0 0
    %7558 = vmatpush2.bf16.xpose.msra.mxu0 0
    %7559 = vmatprep.mubr.bf16.mxu0 %v1612
    %7560 = vmatmul.mubr.bf16.gmra.mxu0 %v1598
    %v7561 = vpop.f32.mrf.mxu0
    %v7562 = vadd.f32 %v7522, %v7561
    %v7563 = vpop.f32.mrf.mxu0
    %v7564 = vpop.f32.mrf.mxu0
    %v7565 = vpop.f32.mrf.mxu0
    %7566 = vdwg.mxu0
    %7567 = vmatprep.subr.bf16.mxu0 0
    %7568 = vmatpush1.bf16.xpose.msra.mxu0 0
    %7569 = vmatprep.subr.bf16.mxu0 0
    %7570 = vmatpush1.bf16.xpose.msra.mxu0 0
    %7571 = vmatprep.subr.bf16.mxu0 0
    %7572 = vmatpush1.bf16.xpose.msra.mxu0 0
    %7573 = vmatprep.subr.bf16.mxu0 0
    %7574 = vmatpush1.bf16.xpose.msra.mxu0 0
    %7575 = vmatprep.subr.bf16.mxu0 0
    %7576 = vmatpush1.bf16.xpose.msra.mxu0 0
    %7577 = vmatprep.subr.bf16.mxu0 0
    %7578 = vmatpush1.bf16.xpose.msra.mxu0 0
    %7579 = vmatprep.subr.bf16.mxu0 0
    %7580 = vmatpush1.bf16.xpose.msra.mxu0 0
    %7581 = vmatprep.subr.bf16.mxu0 %v3142
    %7582 = vmatpush1.bf16.xpose.msra.mxu0 %v3141
    %7583 = vmatprep.subr.bf16.mxu0 0
    %7584 = vmatpush2.bf16.xpose.msra.mxu0 0
    %7585 = vmatprep.subr.bf16.mxu0 0
    %7586 = vmatpush2.bf16.xpose.msra.mxu0 0
    %7587 = vmatprep.subr.bf16.mxu0 0
    %7588 = vmatpush2.bf16.xpose.msra.mxu0 0
    %7589 = vmatprep.subr.bf16.mxu0 0
    %7590 = vmatpush2.bf16.xpose.msra.mxu0 0
    %7591 = vmatprep.subr.bf16.mxu0 0
    %7592 = vmatpush2.bf16.xpose.msra.mxu0 0
    %7593 = vmatprep.subr.bf16.mxu0 0
    %7594 = vmatpush2.bf16.xpose.msra.mxu0 0
    %7595 = vmatprep.subr.bf16.mxu0 0
    %7596 = vmatpush2.bf16.xpose.msra.mxu0 0
    %7597 = vmatprep.subr.bf16.mxu0 0
    %7598 = vmatpush2.bf16.xpose.msra.mxu0 0
    %7599 = vmatprep.mubr.bf16.mxu0 %v1616
    %7600 = vmatmul.mubr.bf16.gmra.mxu0 %v1614
    %v7601 = vpop.f32.mrf.mxu0
    %v7602 = vadd.f32 %v7562, %v7601
    %v7603 = vpop.f32.mrf.mxu0
    %v7604 = vpop.f32.mrf.mxu0
    %v7605 = vpop.f32.mrf.mxu0
    %7606 = vdwg.mxu0
    %7607 = vmatprep.subr.bf16.mxu0 0
    %7608 = vmatpush1.bf16.xpose.msra.mxu0 0
    %7609 = vmatprep.subr.bf16.mxu0 0
    %7610 = vmatpush1.bf16.xpose.msra.mxu0 0
    %7611 = vmatprep.subr.bf16.mxu0 0
    %7612 = vmatpush1.bf16.xpose.msra.mxu0 0
    %7613 = vmatprep.subr.bf16.mxu0 0
    %7614 = vmatpush1.bf16.xpose.msra.mxu0 0
    %7615 = vmatprep.subr.bf16.mxu0 0
    %7616 = vmatpush1.bf16.xpose.msra.mxu0 0
    %7617 = vmatprep.subr.bf16.mxu0 0
    %7618 = vmatpush1.bf16.xpose.msra.mxu0 0
    %7619 = vmatprep.subr.bf16.mxu0 0
    %7620 = vmatpush1.bf16.xpose.msra.mxu0 0
    %7621 = vmatprep.subr.bf16.mxu0 %v3144
    %7622 = vmatpush1.bf16.xpose.msra.mxu0 %v3143
    %7623 = vmatprep.subr.bf16.mxu0 0
    %7624 = vmatpush2.bf16.xpose.msra.mxu0 0
    %7625 = vmatprep.subr.bf16.mxu0 0
    %7626 = vmatpush2.bf16.xpose.msra.mxu0 0
    %7627 = vmatprep.subr.bf16.mxu0 0
    %7628 = vmatpush2.bf16.xpose.msra.mxu0 0
    %7629 = vmatprep.subr.bf16.mxu0 0
    %7630 = vmatpush2.bf16.xpose.msra.mxu0 0
    %7631 = vmatprep.subr.bf16.mxu0 0
    %7632 = vmatpush2.bf16.xpose.msra.mxu0 0
    %7633 = vmatprep.subr.bf16.mxu0 0
    %7634 = vmatpush2.bf16.xpose.msra.mxu0 0
    %7635 = vmatprep.subr.bf16.mxu0 0
    %7636 = vmatpush2.bf16.xpose.msra.mxu0 0
    %7637 = vmatprep.subr.bf16.mxu0 0
    %7638 = vmatpush2.bf16.xpose.msra.mxu0 0
    %7639 = vmatprep.mubr.bf16.mxu0 %v1654
    %7640 = vmatmul.mubr.bf16.gmra.mxu0 %v1640
    %v7641 = vpop.f32.mrf.mxu0
    %v7642 = vadd.f32 %v7602, %v7641
    %v7643 = vpop.f32.mrf.mxu0
    %v7644 = vpop.f32.mrf.mxu0
    %v7645 = vpop.f32.mrf.mxu0
    %7646 = vdwg.mxu0
    %7647 = vmatprep.subr.bf16.mxu0 0
    %7648 = vmatpush1.bf16.xpose.msra.mxu0 0
    %7649 = vmatprep.subr.bf16.mxu0 0
    %7650 = vmatpush1.bf16.xpose.msra.mxu0 0
    %7651 = vmatprep.subr.bf16.mxu0 0
    %7652 = vmatpush1.bf16.xpose.msra.mxu0 0
    %7653 = vmatprep.subr.bf16.mxu0 0
    %7654 = vmatpush1.bf16.xpose.msra.mxu0 0
    %7655 = vmatprep.subr.bf16.mxu0 0
    %7656 = vmatpush1.bf16.xpose.msra.mxu0 0
    %7657 = vmatprep.subr.bf16.mxu0 0
    %7658 = vmatpush1.bf16.xpose.msra.mxu0 0
    %7659 = vmatprep.subr.bf16.mxu0 0
    %7660 = vmatpush1.bf16.xpose.msra.mxu0 0
    %7661 = vmatprep.subr.bf16.mxu0 %v3146
    %7662 = vmatpush1.bf16.xpose.msra.mxu0 %v3145
    %7663 = vmatprep.subr.bf16.mxu0 0
    %7664 = vmatpush2.bf16.xpose.msra.mxu0 0
    %7665 = vmatprep.subr.bf16.mxu0 0
    %7666 = vmatpush2.bf16.xpose.msra.mxu0 0
    %7667 = vmatprep.subr.bf16.mxu0 0
    %7668 = vmatpush2.bf16.xpose.msra.mxu0 0
    %7669 = vmatprep.subr.bf16.mxu0 0
    %7670 = vmatpush2.bf16.xpose.msra.mxu0 0
    %7671 = vmatprep.subr.bf16.mxu0 0
    %7672 = vmatpush2.bf16.xpose.msra.mxu0 0
    %7673 = vmatprep.subr.bf16.mxu0 0
    %7674 = vmatpush2.bf16.xpose.msra.mxu0 0
    %7675 = vmatprep.subr.bf16.mxu0 0
    %7676 = vmatpush2.bf16.xpose.msra.mxu0 0
    %7677 = vmatprep.subr.bf16.mxu0 0
    %7678 = vmatpush2.bf16.xpose.msra.mxu0 0
    %7679 = vmatprep.mubr.bf16.mxu0 %v1664
    %7680 = vmatmul.mubr.bf16.gmra.mxu0 %v1662
    %v7681 = vpop.f32.mrf.mxu0
    %v7682 = vadd.f32 %v7642, %v7681
    %v7683 = vpop.f32.mrf.mxu0
    %v7684 = vpop.f32.mrf.mxu0
    %v7685 = vpop.f32.mrf.mxu0
    %7686 = vdwg.mxu0
    %7687 = vmatprep.subr.bf16.mxu0 0
    %7688 = vmatpush1.bf16.xpose.msra.mxu0 0
    %7689 = vmatprep.subr.bf16.mxu0 0
    %7690 = vmatpush1.bf16.xpose.msra.mxu0 0
    %7691 = vmatprep.subr.bf16.mxu0 0
    %7692 = vmatpush1.bf16.xpose.msra.mxu0 0
    %7693 = vmatprep.subr.bf16.mxu0 0
    %7694 = vmatpush1.bf16.xpose.msra.mxu0 0
    %7695 = vmatprep.subr.bf16.mxu0 0
    %7696 = vmatpush1.bf16.xpose.msra.mxu0 0
    %7697 = vmatprep.subr.bf16.mxu0 0
    %7698 = vmatpush1.bf16.xpose.msra.mxu0 0
    %7699 = vmatprep.subr.bf16.mxu0 0
    %7700 = vmatpush1.bf16.xpose.msra.mxu0 0
    %7701 = vmatprep.subr.bf16.mxu0 %v3148
    %7702 = vmatpush1.bf16.xpose.msra.mxu0 %v3147
    %7703 = vmatprep.subr.bf16.mxu0 0
    %7704 = vmatpush2.bf16.xpose.msra.mxu0 0
    %7705 = vmatprep.subr.bf16.mxu0 0
    %7706 = vmatpush2.bf16.xpose.msra.mxu0 0
    %7707 = vmatprep.subr.bf16.mxu0 0
    %7708 = vmatpush2.bf16.xpose.msra.mxu0 0
    %7709 = vmatprep.subr.bf16.mxu0 0
    %7710 = vmatpush2.bf16.xpose.msra.mxu0 0
    %7711 = vmatprep.subr.bf16.mxu0 0
    %7712 = vmatpush2.bf16.xpose.msra.mxu0 0
    %7713 = vmatprep.subr.bf16.mxu0 0
    %7714 = vmatpush2.bf16.xpose.msra.mxu0 0
    %7715 = vmatprep.subr.bf16.mxu0 0
    %7716 = vmatpush2.bf16.xpose.msra.mxu0 0
    %7717 = vmatprep.subr.bf16.mxu0 0
    %7718 = vmatpush2.bf16.xpose.msra.mxu0 0
    %7719 = vmatprep.mubr.bf16.mxu0 %v1661
    %7720 = vmatmul.mubr.bf16.gmra.mxu0 %v1647
    %v7721 = vpop.f32.mrf.mxu0
    %v7722 = vadd.f32 %v7682, %v7721
    %v7723 = vpop.f32.mrf.mxu0
    %v7724 = vpop.f32.mrf.mxu0
    %v7725 = vpop.f32.mrf.mxu0
    %7726 = vdwg.mxu0
    %7727 = vmatprep.subr.bf16.mxu0 0
    %7728 = vmatpush1.bf16.xpose.msra.mxu0 0
    %7729 = vmatprep.subr.bf16.mxu0 0
    %7730 = vmatpush1.bf16.xpose.msra.mxu0 0
    %7731 = vmatprep.subr.bf16.mxu0 0
    %7732 = vmatpush1.bf16.xpose.msra.mxu0 0
    %7733 = vmatprep.subr.bf16.mxu0 0
    %7734 = vmatpush1.bf16.xpose.msra.mxu0 0
    %7735 = vmatprep.subr.bf16.mxu0 0
    %7736 = vmatpush1.bf16.xpose.msra.mxu0 0
    %7737 = vmatprep.subr.bf16.mxu0 0
    %7738 = vmatpush1.bf16.xpose.msra.mxu0 0
    %7739 = vmatprep.subr.bf16.mxu0 0
    %7740 = vmatpush1.bf16.xpose.msra.mxu0 0
    %7741 = vmatprep.subr.bf16.mxu0 %v3150
    %7742 = vmatpush1.bf16.xpose.msra.mxu0 %v3149
    %7743 = vmatprep.subr.bf16.mxu0 0
    %7744 = vmatpush2.bf16.xpose.msra.mxu0 0
    %7745 = vmatprep.subr.bf16.mxu0 0
    %7746 = vmatpush2.bf16.xpose.msra.mxu0 0
    %7747 = vmatprep.subr.bf16.mxu0 0
    %7748 = vmatpush2.bf16.xpose.msra.mxu0 0
    %7749 = vmatprep.subr.bf16.mxu0 0
    %7750 = vmatpush2.bf16.xpose.msra.mxu0 0
    %7751 = vmatprep.subr.bf16.mxu0 0
    %7752 = vmatpush2.bf16.xpose.msra.mxu0 0
    %7753 = vmatprep.subr.bf16.mxu0 0
    %7754 = vmatpush2.bf16.xpose.msra.mxu0 0
    %7755 = vmatprep.subr.bf16.mxu0 0
    %7756 = vmatpush2.bf16.xpose.msra.mxu0 0
    %7757 = vmatprep.subr.bf16.mxu0 0
    %7758 = vmatpush2.bf16.xpose.msra.mxu0 0
    %7759 = vmatprep.mubr.bf16.mxu0 %v1665
    %7760 = vmatmul.mubr.bf16.gmra.mxu0 %v1663
    %v7761 = vpop.f32.mrf.mxu0
    %v7762 = vadd.f32 %v7722, %v7761
    %v7763 = vpop.f32.mrf.mxu0
    %v7764 = vpop.f32.mrf.mxu0
    %v7765 = vpop.f32.mrf.mxu0
    %7766 = vdwg.mxu0
    %7767 = vmatprep.subr.bf16.mxu0 0
    %7768 = vmatpush1.bf16.xpose.msra.mxu0 0
    %7769 = vmatprep.subr.bf16.mxu0 0
    %7770 = vmatpush1.bf16.xpose.msra.mxu0 0
    %7771 = vmatprep.subr.bf16.mxu0 0
    %7772 = vmatpush1.bf16.xpose.msra.mxu0 0
    %7773 = vmatprep.subr.bf16.mxu0 0
    %7774 = vmatpush1.bf16.xpose.msra.mxu0 0
    %7775 = vmatprep.subr.bf16.mxu0 0
    %7776 = vmatpush1.bf16.xpose.msra.mxu0 0
    %7777 = vmatprep.subr.bf16.mxu0 0
    %7778 = vmatpush1.bf16.xpose.msra.mxu0 0
    %7779 = vmatprep.subr.bf16.mxu0 0
    %7780 = vmatpush1.bf16.xpose.msra.mxu0 0
    %7781 = vmatprep.subr.bf16.mxu0 %v3152
    %7782 = vmatpush1.bf16.xpose.msra.mxu0 %v3151
    %7783 = vmatprep.subr.bf16.mxu0 0
    %7784 = vmatpush2.bf16.xpose.msra.mxu0 0
    %7785 = vmatprep.subr.bf16.mxu0 0
    %7786 = vmatpush2.bf16.xpose.msra.mxu0 0
    %7787 = vmatprep.subr.bf16.mxu0 0
    %7788 = vmatpush2.bf16.xpose.msra.mxu0 0
    %7789 = vmatprep.subr.bf16.mxu0 0
    %7790 = vmatpush2.bf16.xpose.msra.mxu0 0
    %7791 = vmatprep.subr.bf16.mxu0 0
    %7792 = vmatpush2.bf16.xpose.msra.mxu0 0
    %7793 = vmatprep.subr.bf16.mxu0 0
    %7794 = vmatpush2.bf16.xpose.msra.mxu0 0
    %7795 = vmatprep.subr.bf16.mxu0 0
    %7796 = vmatpush2.bf16.xpose.msra.mxu0 0
    %7797 = vmatprep.subr.bf16.mxu0 0
    %7798 = vmatpush2.bf16.xpose.msra.mxu0 0
    %7799 = vmatprep.mubr.bf16.mxu0 %v1703
    %7800 = vmatmul.mubr.bf16.gmra.mxu0 %v1689
    %v7801 = vpop.f32.mrf.mxu0
    %v7802 = vadd.f32 %v7762, %v7801
    %v7803 = vpop.f32.mrf.mxu0
    %v7804 = vpop.f32.mrf.mxu0
    %v7805 = vpop.f32.mrf.mxu0
    %7806 = vdwg.mxu0
    %7807 = vmatprep.subr.bf16.mxu0 0
    %7808 = vmatpush1.bf16.xpose.msra.mxu0 0
    %7809 = vmatprep.subr.bf16.mxu0 0
    %7810 = vmatpush1.bf16.xpose.msra.mxu0 0
    %7811 = vmatprep.subr.bf16.mxu0 0
    %7812 = vmatpush1.bf16.xpose.msra.mxu0 0
    %7813 = vmatprep.subr.bf16.mxu0 0
    %7814 = vmatpush1.bf16.xpose.msra.mxu0 0
    %7815 = vmatprep.subr.bf16.mxu0 0
    %7816 = vmatpush1.bf16.xpose.msra.mxu0 0
    %7817 = vmatprep.subr.bf16.mxu0 0
    %7818 = vmatpush1.bf16.xpose.msra.mxu0 0
    %7819 = vmatprep.subr.bf16.mxu0 0
    %7820 = vmatpush1.bf16.xpose.msra.mxu0 0
    %7821 = vmatprep.subr.bf16.mxu0 %v3154
    %7822 = vmatpush1.bf16.xpose.msra.mxu0 %v3153
    %7823 = vmatprep.subr.bf16.mxu0 0
    %7824 = vmatpush2.bf16.xpose.msra.mxu0 0
    %7825 = vmatprep.subr.bf16.mxu0 0
    %7826 = vmatpush2.bf16.xpose.msra.mxu0 0
    %7827 = vmatprep.subr.bf16.mxu0 0
    %7828 = vmatpush2.bf16.xpose.msra.mxu0 0
    %7829 = vmatprep.subr.bf16.mxu0 0
    %7830 = vmatpush2.bf16.xpose.msra.mxu0 0
    %7831 = vmatprep.subr.bf16.mxu0 0
    %7832 = vmatpush2.bf16.xpose.msra.mxu0 0
    %7833 = vmatprep.subr.bf16.mxu0 0
    %7834 = vmatpush2.bf16.xpose.msra.mxu0 0
    %7835 = vmatprep.subr.bf16.mxu0 0
    %7836 = vmatpush2.bf16.xpose.msra.mxu0 0
    %7837 = vmatprep.subr.bf16.mxu0 0
    %7838 = vmatpush2.bf16.xpose.msra.mxu0 0
    %7839 = vmatprep.mubr.bf16.mxu0 %v1713
    %7840 = vmatmul.mubr.bf16.gmra.mxu0 %v1711
    %v7841 = vpop.f32.mrf.mxu0
    %v7842 = vadd.f32 %v7802, %v7841
    %v7843 = vpop.f32.mrf.mxu0
    %v7844 = vpop.f32.mrf.mxu0
    %v7845 = vpop.f32.mrf.mxu0
    %7846 = vdwg.mxu0
    %7847 = vmatprep.subr.bf16.mxu0 0
    %7848 = vmatpush1.bf16.xpose.msra.mxu0 0
    %7849 = vmatprep.subr.bf16.mxu0 0
    %7850 = vmatpush1.bf16.xpose.msra.mxu0 0
    %7851 = vmatprep.subr.bf16.mxu0 0
    %7852 = vmatpush1.bf16.xpose.msra.mxu0 0
    %7853 = vmatprep.subr.bf16.mxu0 0
    %7854 = vmatpush1.bf16.xpose.msra.mxu0 0
    %7855 = vmatprep.subr.bf16.mxu0 0
    %7856 = vmatpush1.bf16.xpose.msra.mxu0 0
    %7857 = vmatprep.subr.bf16.mxu0 0
    %7858 = vmatpush1.bf16.xpose.msra.mxu0 0
    %7859 = vmatprep.subr.bf16.mxu0 0
    %7860 = vmatpush1.bf16.xpose.msra.mxu0 0
    %7861 = vmatprep.subr.bf16.mxu0 %v3156
    %7862 = vmatpush1.bf16.xpose.msra.mxu0 %v3155
    %7863 = vmatprep.subr.bf16.mxu0 0
    %7864 = vmatpush2.bf16.xpose.msra.mxu0 0
    %7865 = vmatprep.subr.bf16.mxu0 0
    %7866 = vmatpush2.bf16.xpose.msra.mxu0 0
    %7867 = vmatprep.subr.bf16.mxu0 0
    %7868 = vmatpush2.bf16.xpose.msra.mxu0 0
    %7869 = vmatprep.subr.bf16.mxu0 0
    %7870 = vmatpush2.bf16.xpose.msra.mxu0 0
    %7871 = vmatprep.subr.bf16.mxu0 0
    %7872 = vmatpush2.bf16.xpose.msra.mxu0 0
    %7873 = vmatprep.subr.bf16.mxu0 0
    %7874 = vmatpush2.bf16.xpose.msra.mxu0 0
    %7875 = vmatprep.subr.bf16.mxu0 0
    %7876 = vmatpush2.bf16.xpose.msra.mxu0 0
    %7877 = vmatprep.subr.bf16.mxu0 0
    %7878 = vmatpush2.bf16.xpose.msra.mxu0 0
    %7879 = vmatprep.mubr.bf16.mxu0 %v1710
    %7880 = vmatmul.mubr.bf16.gmra.mxu0 %v1696
    %v7881 = vpop.f32.mrf.mxu0
    %v7882 = vadd.f32 %v7842, %v7881
    %v7883 = vpop.f32.mrf.mxu0
    %v7884 = vpop.f32.mrf.mxu0
    %v7885 = vpop.f32.mrf.mxu0
    %7886 = vdwg.mxu0
    %7887 = vmatprep.subr.bf16.mxu0 0
    %7888 = vmatpush1.bf16.xpose.msra.mxu0 0
    %7889 = vmatprep.subr.bf16.mxu0 0
    %7890 = vmatpush1.bf16.xpose.msra.mxu0 0
    %7891 = vmatprep.subr.bf16.mxu0 0
    %7892 = vmatpush1.bf16.xpose.msra.mxu0 0
    %7893 = vmatprep.subr.bf16.mxu0 0
    %7894 = vmatpush1.bf16.xpose.msra.mxu0 0
    %7895 = vmatprep.subr.bf16.mxu0 0
    %7896 = vmatpush1.bf16.xpose.msra.mxu0 0
    %7897 = vmatprep.subr.bf16.mxu0 0
    %7898 = vmatpush1.bf16.xpose.msra.mxu0 0
    %7899 = vmatprep.subr.bf16.mxu0 0
    %7900 = vmatpush1.bf16.xpose.msra.mxu0 0
    %7901 = vmatprep.subr.bf16.mxu0 %v3158
    %7902 = vmatpush1.bf16.xpose.msra.mxu0 %v3157
    %7903 = vmatprep.subr.bf16.mxu0 0
    %7904 = vmatpush2.bf16.xpose.msra.mxu0 0
    %7905 = vmatprep.subr.bf16.mxu0 0
    %7906 = vmatpush2.bf16.xpose.msra.mxu0 0
    %7907 = vmatprep.subr.bf16.mxu0 0
    %7908 = vmatpush2.bf16.xpose.msra.mxu0 0
    %7909 = vmatprep.subr.bf16.mxu0 0
    %7910 = vmatpush2.bf16.xpose.msra.mxu0 0
    %7911 = vmatprep.subr.bf16.mxu0 0
    %7912 = vmatpush2.bf16.xpose.msra.mxu0 0
    %7913 = vmatprep.subr.bf16.mxu0 0
    %7914 = vmatpush2.bf16.xpose.msra.mxu0 0
    %7915 = vmatprep.subr.bf16.mxu0 0
    %7916 = vmatpush2.bf16.xpose.msra.mxu0 0
    %7917 = vmatprep.subr.bf16.mxu0 0
    %7918 = vmatpush2.bf16.xpose.msra.mxu0 0
    %7919 = vmatprep.mubr.bf16.mxu0 %v1714
    %7920 = vmatmul.mubr.bf16.gmra.mxu0 %v1712
    %v7921 = vpop.f32.mrf.mxu0
    %v7922 = vadd.f32 %v7882, %v7921
    %v7923 = vpop.f32.mrf.mxu0
    %v7924 = vpop.f32.mrf.mxu0
    %v7925 = vpop.f32.mrf.mxu0
    %7926 = vdwg.mxu0
    %7927 = vmatprep.subr.bf16.mxu0 0
    %7928 = vmatpush1.bf16.xpose.msra.mxu0 0
    %7929 = vmatprep.subr.bf16.mxu0 0
    %7930 = vmatpush1.bf16.xpose.msra.mxu0 0
    %7931 = vmatprep.subr.bf16.mxu0 0
    %7932 = vmatpush1.bf16.xpose.msra.mxu0 0
    %7933 = vmatprep.subr.bf16.mxu0 0
    %7934 = vmatpush1.bf16.xpose.msra.mxu0 0
    %7935 = vmatprep.subr.bf16.mxu0 0
    %7936 = vmatpush1.bf16.xpose.msra.mxu0 0
    %7937 = vmatprep.subr.bf16.mxu0 0
    %7938 = vmatpush1.bf16.xpose.msra.mxu0 0
    %7939 = vmatprep.subr.bf16.mxu0 0
    %7940 = vmatpush1.bf16.xpose.msra.mxu0 0
    %7941 = vmatprep.subr.bf16.mxu0 %v3160
    %7942 = vmatpush1.bf16.xpose.msra.mxu0 %v3159
    %7943 = vmatprep.subr.bf16.mxu0 0
    %7944 = vmatpush2.bf16.xpose.msra.mxu0 0
    %7945 = vmatprep.subr.bf16.mxu0 0
    %7946 = vmatpush2.bf16.xpose.msra.mxu0 0
    %7947 = vmatprep.subr.bf16.mxu0 0
    %7948 = vmatpush2.bf16.xpose.msra.mxu0 0
    %7949 = vmatprep.subr.bf16.mxu0 0
    %7950 = vmatpush2.bf16.xpose.msra.mxu0 0
    %7951 = vmatprep.subr.bf16.mxu0 0
    %7952 = vmatpush2.bf16.xpose.msra.mxu0 0
    %7953 = vmatprep.subr.bf16.mxu0 0
    %7954 = vmatpush2.bf16.xpose.msra.mxu0 0
    %7955 = vmatprep.subr.bf16.mxu0 0
    %7956 = vmatpush2.bf16.xpose.msra.mxu0 0
    %7957 = vmatprep.subr.bf16.mxu0 0
    %7958 = vmatpush2.bf16.xpose.msra.mxu0 0
    %7959 = vmatprep.mubr.bf16.mxu0 %v1752
    %7960 = vmatmul.mubr.bf16.gmra.mxu0 %v1738
    %v7961 = vpop.f32.mrf.mxu0
    %v7962 = vadd.f32 %v7922, %v7961
    %v7963 = vpop.f32.mrf.mxu0
    %v7964 = vpop.f32.mrf.mxu0
    %v7965 = vpop.f32.mrf.mxu0
    %7966 = vdwg.mxu0
    %7967 = vmatprep.subr.bf16.mxu0 0
    %7968 = vmatpush1.bf16.xpose.msra.mxu0 0
    %7969 = vmatprep.subr.bf16.mxu0 0
    %7970 = vmatpush1.bf16.xpose.msra.mxu0 0
    %7971 = vmatprep.subr.bf16.mxu0 0
    %7972 = vmatpush1.bf16.xpose.msra.mxu0 0
    %7973 = vmatprep.subr.bf16.mxu0 0
    %7974 = vmatpush1.bf16.xpose.msra.mxu0 0
    %7975 = vmatprep.subr.bf16.mxu0 0
    %7976 = vmatpush1.bf16.xpose.msra.mxu0 0
    %7977 = vmatprep.subr.bf16.mxu0 0
    %7978 = vmatpush1.bf16.xpose.msra.mxu0 0
    %7979 = vmatprep.subr.bf16.mxu0 0
    %7980 = vmatpush1.bf16.xpose.msra.mxu0 0
    %7981 = vmatprep.subr.bf16.mxu0 %v3162
    %7982 = vmatpush1.bf16.xpose.msra.mxu0 %v3161
    %7983 = vmatprep.subr.bf16.mxu0 0
    %7984 = vmatpush2.bf16.xpose.msra.mxu0 0
    %7985 = vmatprep.subr.bf16.mxu0 0
    %7986 = vmatpush2.bf16.xpose.msra.mxu0 0
    %7987 = vmatprep.subr.bf16.mxu0 0
    %7988 = vmatpush2.bf16.xpose.msra.mxu0 0
    %7989 = vmatprep.subr.bf16.mxu0 0
    %7990 = vmatpush2.bf16.xpose.msra.mxu0 0
    %7991 = vmatprep.subr.bf16.mxu0 0
    %7992 = vmatpush2.bf16.xpose.msra.mxu0 0
    %7993 = vmatprep.subr.bf16.mxu0 0
    %7994 = vmatpush2.bf16.xpose.msra.mxu0 0
    %7995 = vmatprep.subr.bf16.mxu0 0
    %7996 = vmatpush2.bf16.xpose.msra.mxu0 0
    %7997 = vmatprep.subr.bf16.mxu0 0
    %7998 = vmatpush2.bf16.xpose.msra.mxu0 0
    %7999 = vmatprep.mubr.bf16.mxu0 %v1762
    %8000 = vmatmul.mubr.bf16.gmra.mxu0 %v1760
    %v8001 = vpop.f32.mrf.mxu0
    %v8002 = vadd.f32 %v7962, %v8001
    %v8003 = vpop.f32.mrf.mxu0
    %v8004 = vpop.f32.mrf.mxu0
    %v8005 = vpop.f32.mrf.mxu0
    %8006 = vdwg.mxu0
    %8007 = vmatprep.subr.bf16.mxu0 0
    %8008 = vmatpush1.bf16.xpose.msra.mxu0 0
    %8009 = vmatprep.subr.bf16.mxu0 0
    %8010 = vmatpush1.bf16.xpose.msra.mxu0 0
    %8011 = vmatprep.subr.bf16.mxu0 0
    %8012 = vmatpush1.bf16.xpose.msra.mxu0 0
    %8013 = vmatprep.subr.bf16.mxu0 0
    %8014 = vmatpush1.bf16.xpose.msra.mxu0 0
    %8015 = vmatprep.subr.bf16.mxu0 0
    %8016 = vmatpush1.bf16.xpose.msra.mxu0 0
    %8017 = vmatprep.subr.bf16.mxu0 0
    %8018 = vmatpush1.bf16.xpose.msra.mxu0 0
    %8019 = vmatprep.subr.bf16.mxu0 0
    %8020 = vmatpush1.bf16.xpose.msra.mxu0 0
    %8021 = vmatprep.subr.bf16.mxu0 %v3164
    %8022 = vmatpush1.bf16.xpose.msra.mxu0 %v3163
    %8023 = vmatprep.subr.bf16.mxu0 0
    %8024 = vmatpush2.bf16.xpose.msra.mxu0 0
    %8025 = vmatprep.subr.bf16.mxu0 0
    %8026 = vmatpush2.bf16.xpose.msra.mxu0 0
    %8027 = vmatprep.subr.bf16.mxu0 0
    %8028 = vmatpush2.bf16.xpose.msra.mxu0 0
    %8029 = vmatprep.subr.bf16.mxu0 0
    %8030 = vmatpush2.bf16.xpose.msra.mxu0 0
    %8031 = vmatprep.subr.bf16.mxu0 0
    %8032 = vmatpush2.bf16.xpose.msra.mxu0 0
    %8033 = vmatprep.subr.bf16.mxu0 0
    %8034 = vmatpush2.bf16.xpose.msra.mxu0 0
    %8035 = vmatprep.subr.bf16.mxu0 0
    %8036 = vmatpush2.bf16.xpose.msra.mxu0 0
    %8037 = vmatprep.subr.bf16.mxu0 0
    %8038 = vmatpush2.bf16.xpose.msra.mxu0 0
    %8039 = vmatprep.mubr.bf16.mxu0 %v1759
    %8040 = vmatmul.mubr.bf16.gmra.mxu0 %v1745
    %v8041 = vpop.f32.mrf.mxu0
    %v8042 = vadd.f32 %v8002, %v8041
    %v8043 = vpop.f32.mrf.mxu0
    %v8044 = vpop.f32.mrf.mxu0
    %v8045 = vpop.f32.mrf.mxu0
    %8046 = vdwg.mxu0
    %8047 = vmatprep.subr.bf16.mxu0 0
    %8048 = vmatpush1.bf16.xpose.msra.mxu0 0
    %8049 = vmatprep.subr.bf16.mxu0 0
    %8050 = vmatpush1.bf16.xpose.msra.mxu0 0
    %8051 = vmatprep.subr.bf16.mxu0 0
    %8052 = vmatpush1.bf16.xpose.msra.mxu0 0
    %8053 = vmatprep.subr.bf16.mxu0 0
    %8054 = vmatpush1.bf16.xpose.msra.mxu0 0
    %8055 = vmatprep.subr.bf16.mxu0 0
    %8056 = vmatpush1.bf16.xpose.msra.mxu0 0
    %8057 = vmatprep.subr.bf16.mxu0 0
    %8058 = vmatpush1.bf16.xpose.msra.mxu0 0
    %8059 = vmatprep.subr.bf16.mxu0 0
    %8060 = vmatpush1.bf16.xpose.msra.mxu0 0
    %8061 = vmatprep.subr.bf16.mxu0 %v3166
    %8062 = vmatpush1.bf16.xpose.msra.mxu0 %v3165
    %8063 = vmatprep.subr.bf16.mxu0 0
    %8064 = vmatpush2.bf16.xpose.msra.mxu0 0
    %8065 = vmatprep.subr.bf16.mxu0 0
    %8066 = vmatpush2.bf16.xpose.msra.mxu0 0
    %8067 = vmatprep.subr.bf16.mxu0 0
    %8068 = vmatpush2.bf16.xpose.msra.mxu0 0
    %8069 = vmatprep.subr.bf16.mxu0 0
    %8070 = vmatpush2.bf16.xpose.msra.mxu0 0
    %8071 = vmatprep.subr.bf16.mxu0 0
    %8072 = vmatpush2.bf16.xpose.msra.mxu0 0
    %8073 = vmatprep.subr.bf16.mxu0 0
    %8074 = vmatpush2.bf16.xpose.msra.mxu0 0
    %8075 = vmatprep.subr.bf16.mxu0 0
    %8076 = vmatpush2.bf16.xpose.msra.mxu0 0
    %8077 = vmatprep.subr.bf16.mxu0 0
    %8078 = vmatpush2.bf16.xpose.msra.mxu0 0
    %8079 = vmatprep.mubr.bf16.mxu0 %v1763
    %8080 = vmatmul.mubr.bf16.gmra.mxu0 %v1761
    %v8081 = vpop.f32.mrf.mxu0
    %v8082 = vadd.f32 %v8042, %v8081
    %v8083 = vpop.f32.mrf.mxu0
    %v8084 = vpop.f32.mrf.mxu0
    %v8085 = vpop.f32.mrf.mxu0
    %8086 = vdwg.mxu0
    %8087 = vmatprep.subr.bf16.mxu0 0
    %8088 = vmatpush1.bf16.xpose.msra.mxu0 0
    %8089 = vmatprep.subr.bf16.mxu0 0
    %8090 = vmatpush1.bf16.xpose.msra.mxu0 0
    %8091 = vmatprep.subr.bf16.mxu0 0
    %8092 = vmatpush1.bf16.xpose.msra.mxu0 0
    %8093 = vmatprep.subr.bf16.mxu0 0
    %8094 = vmatpush1.bf16.xpose.msra.mxu0 0
    %8095 = vmatprep.subr.bf16.mxu0 0
    %8096 = vmatpush1.bf16.xpose.msra.mxu0 0
    %8097 = vmatprep.subr.bf16.mxu0 0
    %8098 = vmatpush1.bf16.xpose.msra.mxu0 0
    %8099 = vmatprep.subr.bf16.mxu0 0
    %8100 = vmatpush1.bf16.xpose.msra.mxu0 0
    %8101 = vmatprep.subr.bf16.mxu0 %v3168
    %8102 = vmatpush1.bf16.xpose.msra.mxu0 %v3167
    %8103 = vmatprep.subr.bf16.mxu0 0
    %8104 = vmatpush2.bf16.xpose.msra.mxu0 0
    %8105 = vmatprep.subr.bf16.mxu0 0
    %8106 = vmatpush2.bf16.xpose.msra.mxu0 0
    %8107 = vmatprep.subr.bf16.mxu0 0
    %8108 = vmatpush2.bf16.xpose.msra.mxu0 0
    %8109 = vmatprep.subr.bf16.mxu0 0
    %8110 = vmatpush2.bf16.xpose.msra.mxu0 0
    %8111 = vmatprep.subr.bf16.mxu0 0
    %8112 = vmatpush2.bf16.xpose.msra.mxu0 0
    %8113 = vmatprep.subr.bf16.mxu0 0
    %8114 = vmatpush2.bf16.xpose.msra.mxu0 0
    %8115 = vmatprep.subr.bf16.mxu0 0
    %8116 = vmatpush2.bf16.xpose.msra.mxu0 0
    %8117 = vmatprep.subr.bf16.mxu0 0
    %8118 = vmatpush2.bf16.xpose.msra.mxu0 0
    %8119 = vmatprep.mubr.bf16.mxu0 %v1801
    %8120 = vmatmul.mubr.bf16.gmra.mxu0 %v1787
    %v8121 = vpop.f32.mrf.mxu0
    %v8122 = vadd.f32 %v8082, %v8121
    %v8123 = vpop.f32.mrf.mxu0
    %v8124 = vpop.f32.mrf.mxu0
    %v8125 = vpop.f32.mrf.mxu0
    %8126 = vdwg.mxu0
    %8127 = vmatprep.subr.bf16.mxu0 0
    %8128 = vmatpush1.bf16.xpose.msra.mxu0 0
    %8129 = vmatprep.subr.bf16.mxu0 0
    %8130 = vmatpush1.bf16.xpose.msra.mxu0 0
    %8131 = vmatprep.subr.bf16.mxu0 0
    %8132 = vmatpush1.bf16.xpose.msra.mxu0 0
    %8133 = vmatprep.subr.bf16.mxu0 0
    %8134 = vmatpush1.bf16.xpose.msra.mxu0 0
    %8135 = vmatprep.subr.bf16.mxu0 0
    %8136 = vmatpush1.bf16.xpose.msra.mxu0 0
    %8137 = vmatprep.subr.bf16.mxu0 0
    %8138 = vmatpush1.bf16.xpose.msra.mxu0 0
    %8139 = vmatprep.subr.bf16.mxu0 0
    %8140 = vmatpush1.bf16.xpose.msra.mxu0 0
    %8141 = vmatprep.subr.bf16.mxu0 %v3170
    %8142 = vmatpush1.bf16.xpose.msra.mxu0 %v3169
    %8143 = vmatprep.subr.bf16.mxu0 0
    %8144 = vmatpush2.bf16.xpose.msra.mxu0 0
    %8145 = vmatprep.subr.bf16.mxu0 0
    %8146 = vmatpush2.bf16.xpose.msra.mxu0 0
    %8147 = vmatprep.subr.bf16.mxu0 0
    %8148 = vmatpush2.bf16.xpose.msra.mxu0 0
    %8149 = vmatprep.subr.bf16.mxu0 0
    %8150 = vmatpush2.bf16.xpose.msra.mxu0 0
    %8151 = vmatprep.subr.bf16.mxu0 0
    %8152 = vmatpush2.bf16.xpose.msra.mxu0 0
    %8153 = vmatprep.subr.bf16.mxu0 0
    %8154 = vmatpush2.bf16.xpose.msra.mxu0 0
    %8155 = vmatprep.subr.bf16.mxu0 0
    %8156 = vmatpush2.bf16.xpose.msra.mxu0 0
    %8157 = vmatprep.subr.bf16.mxu0 0
    %8158 = vmatpush2.bf16.xpose.msra.mxu0 0
    %8159 = vmatprep.mubr.bf16.mxu0 %v1811
    %8160 = vmatmul.mubr.bf16.gmra.mxu0 %v1809
    %v8161 = vpop.f32.mrf.mxu0
    %v8162 = vadd.f32 %v8122, %v8161
    %v8163 = vpop.f32.mrf.mxu0
    %v8164 = vpop.f32.mrf.mxu0
    %v8165 = vpop.f32.mrf.mxu0
    %8166 = vdwg.mxu0
    %8167 = vmatprep.subr.bf16.mxu0 0
    %8168 = vmatpush1.bf16.xpose.msra.mxu0 0
    %8169 = vmatprep.subr.bf16.mxu0 0
    %8170 = vmatpush1.bf16.xpose.msra.mxu0 0
    %8171 = vmatprep.subr.bf16.mxu0 0
    %8172 = vmatpush1.bf16.xpose.msra.mxu0 0
    %8173 = vmatprep.subr.bf16.mxu0 0
    %8174 = vmatpush1.bf16.xpose.msra.mxu0 0
    %8175 = vmatprep.subr.bf16.mxu0 0
    %8176 = vmatpush1.bf16.xpose.msra.mxu0 0
    %8177 = vmatprep.subr.bf16.mxu0 0
    %8178 = vmatpush1.bf16.xpose.msra.mxu0 0
    %8179 = vmatprep.subr.bf16.mxu0 0
    %8180 = vmatpush1.bf16.xpose.msra.mxu0 0
    %8181 = vmatprep.subr.bf16.mxu0 %v3172
    %8182 = vmatpush1.bf16.xpose.msra.mxu0 %v3171
    %8183 = vmatprep.subr.bf16.mxu0 0
    %8184 = vmatpush2.bf16.xpose.msra.mxu0 0
    %8185 = vmatprep.subr.bf16.mxu0 0
    %8186 = vmatpush2.bf16.xpose.msra.mxu0 0
    %8187 = vmatprep.subr.bf16.mxu0 0
    %8188 = vmatpush2.bf16.xpose.msra.mxu0 0
    %8189 = vmatprep.subr.bf16.mxu0 0
    %8190 = vmatpush2.bf16.xpose.msra.mxu0 0
    %8191 = vmatprep.subr.bf16.mxu0 0
    %8192 = vmatpush2.bf16.xpose.msra.mxu0 0
    %8193 = vmatprep.subr.bf16.mxu0 0
    %8194 = vmatpush2.bf16.xpose.msra.mxu0 0
    %8195 = vmatprep.subr.bf16.mxu0 0
    %8196 = vmatpush2.bf16.xpose.msra.mxu0 0
    %8197 = vmatprep.subr.bf16.mxu0 0
    %8198 = vmatpush2.bf16.xpose.msra.mxu0 0
    %8199 = vmatprep.mubr.bf16.mxu0 %v1808
    %8200 = vmatmul.mubr.bf16.gmra.mxu0 %v1794
    %v8201 = vpop.f32.mrf.mxu0
    %v8202 = vadd.f32 %v8162, %v8201
    %v8203 = vpop.f32.mrf.mxu0
    %v8204 = vpop.f32.mrf.mxu0
    %v8205 = vpop.f32.mrf.mxu0
    %8206 = vdwg.mxu0
    %8207 = vmatprep.subr.bf16.mxu0 0
    %8208 = vmatpush1.bf16.xpose.msra.mxu0 0
    %8209 = vmatprep.subr.bf16.mxu0 0
    %8210 = vmatpush1.bf16.xpose.msra.mxu0 0
    %8211 = vmatprep.subr.bf16.mxu0 0
    %8212 = vmatpush1.bf16.xpose.msra.mxu0 0
    %8213 = vmatprep.subr.bf16.mxu0 0
    %8214 = vmatpush1.bf16.xpose.msra.mxu0 0
    %8215 = vmatprep.subr.bf16.mxu0 0
    %8216 = vmatpush1.bf16.xpose.msra.mxu0 0
    %8217 = vmatprep.subr.bf16.mxu0 0
    %8218 = vmatpush1.bf16.xpose.msra.mxu0 0
    %8219 = vmatprep.subr.bf16.mxu0 0
    %8220 = vmatpush1.bf16.xpose.msra.mxu0 0
    %8221 = vmatprep.subr.bf16.mxu0 %v3174
    %8222 = vmatpush1.bf16.xpose.msra.mxu0 %v3173
    %8223 = vmatprep.subr.bf16.mxu0 0
    %8224 = vmatpush2.bf16.xpose.msra.mxu0 0
    %8225 = vmatprep.subr.bf16.mxu0 0
    %8226 = vmatpush2.bf16.xpose.msra.mxu0 0
    %8227 = vmatprep.subr.bf16.mxu0 0
    %8228 = vmatpush2.bf16.xpose.msra.mxu0 0
    %8229 = vmatprep.subr.bf16.mxu0 0
    %8230 = vmatpush2.bf16.xpose.msra.mxu0 0
    %8231 = vmatprep.subr.bf16.mxu0 0
    %8232 = vmatpush2.bf16.xpose.msra.mxu0 0
    %8233 = vmatprep.subr.bf16.mxu0 0
    %8234 = vmatpush2.bf16.xpose.msra.mxu0 0
    %8235 = vmatprep.subr.bf16.mxu0 0
    %8236 = vmatpush2.bf16.xpose.msra.mxu0 0
    %8237 = vmatprep.subr.bf16.mxu0 0
    %8238 = vmatpush2.bf16.xpose.msra.mxu0 0
    %8239 = vmatprep.mubr.bf16.mxu0 %v1812
    %8240 = vmatmul.mubr.bf16.gmra.mxu0 %v1810
    %v8241 = vpop.f32.mrf.mxu0
    %v8242 = vadd.f32 %v8202, %v8241
    %v8243 = vpop.f32.mrf.mxu0
    %v8244 = vpop.f32.mrf.mxu0
    %v8245 = vpop.f32.mrf.mxu0
    %8246 = vdwg.mxu0
    %8247 = vmatprep.subr.bf16.mxu0 0
    %8248 = vmatpush1.bf16.xpose.msra.mxu0 0
    %8249 = vmatprep.subr.bf16.mxu0 0
    %8250 = vmatpush1.bf16.xpose.msra.mxu0 0
    %8251 = vmatprep.subr.bf16.mxu0 0
    %8252 = vmatpush1.bf16.xpose.msra.mxu0 0
    %8253 = vmatprep.subr.bf16.mxu0 0
    %8254 = vmatpush1.bf16.xpose.msra.mxu0 0
    %8255 = vmatprep.subr.bf16.mxu0 0
    %8256 = vmatpush1.bf16.xpose.msra.mxu0 0
    %8257 = vmatprep.subr.bf16.mxu0 0
    %8258 = vmatpush1.bf16.xpose.msra.mxu0 0
    %8259 = vmatprep.subr.bf16.mxu0 0
    %8260 = vmatpush1.bf16.xpose.msra.mxu0 0
    %8261 = vmatprep.subr.bf16.mxu0 %v3176
    %8262 = vmatpush1.bf16.xpose.msra.mxu0 %v3175
    %8263 = vmatprep.subr.bf16.mxu0 0
    %8264 = vmatpush2.bf16.xpose.msra.mxu0 0
    %8265 = vmatprep.subr.bf16.mxu0 0
    %8266 = vmatpush2.bf16.xpose.msra.mxu0 0
    %8267 = vmatprep.subr.bf16.mxu0 0
    %8268 = vmatpush2.bf16.xpose.msra.mxu0 0
    %8269 = vmatprep.subr.bf16.mxu0 0
    %8270 = vmatpush2.bf16.xpose.msra.mxu0 0
    %8271 = vmatprep.subr.bf16.mxu0 0
    %8272 = vmatpush2.bf16.xpose.msra.mxu0 0
    %8273 = vmatprep.subr.bf16.mxu0 0
    %8274 = vmatpush2.bf16.xpose.msra.mxu0 0
    %8275 = vmatprep.subr.bf16.mxu0 0
    %8276 = vmatpush2.bf16.xpose.msra.mxu0 0
    %8277 = vmatprep.subr.bf16.mxu0 0
    %8278 = vmatpush2.bf16.xpose.msra.mxu0 0
    %8279 = vmatprep.mubr.bf16.mxu0 %v1850
    %8280 = vmatmul.mubr.bf16.gmra.mxu0 %v1836
    %v8281 = vpop.f32.mrf.mxu0
    %v8282 = vadd.f32 %v8242, %v8281
    %v8283 = vpop.f32.mrf.mxu0
    %v8284 = vpop.f32.mrf.mxu0
    %v8285 = vpop.f32.mrf.mxu0
    %8286 = vdwg.mxu0
    %8287 = vmatprep.subr.bf16.mxu0 0
    %8288 = vmatpush1.bf16.xpose.msra.mxu0 0
    %8289 = vmatprep.subr.bf16.mxu0 0
    %8290 = vmatpush1.bf16.xpose.msra.mxu0 0
    %8291 = vmatprep.subr.bf16.mxu0 0
    %8292 = vmatpush1.bf16.xpose.msra.mxu0 0
    %8293 = vmatprep.subr.bf16.mxu0 0
    %8294 = vmatpush1.bf16.xpose.msra.mxu0 0
    %8295 = vmatprep.subr.bf16.mxu0 0
    %8296 = vmatpush1.bf16.xpose.msra.mxu0 0
    %8297 = vmatprep.subr.bf16.mxu0 0
    %8298 = vmatpush1.bf16.xpose.msra.mxu0 0
    %8299 = vmatprep.subr.bf16.mxu0 0
    %8300 = vmatpush1.bf16.xpose.msra.mxu0 0
    %8301 = vmatprep.subr.bf16.mxu0 %v3178
    %8302 = vmatpush1.bf16.xpose.msra.mxu0 %v3177
    %8303 = vmatprep.subr.bf16.mxu0 0
    %8304 = vmatpush2.bf16.xpose.msra.mxu0 0
    %8305 = vmatprep.subr.bf16.mxu0 0
    %8306 = vmatpush2.bf16.xpose.msra.mxu0 0
    %8307 = vmatprep.subr.bf16.mxu0 0
    %8308 = vmatpush2.bf16.xpose.msra.mxu0 0
    %8309 = vmatprep.subr.bf16.mxu0 0
    %8310 = vmatpush2.bf16.xpose.msra.mxu0 0
    %8311 = vmatprep.subr.bf16.mxu0 0
    %8312 = vmatpush2.bf16.xpose.msra.mxu0 0
    %8313 = vmatprep.subr.bf16.mxu0 0
    %8314 = vmatpush2.bf16.xpose.msra.mxu0 0
    %8315 = vmatprep.subr.bf16.mxu0 0
    %8316 = vmatpush2.bf16.xpose.msra.mxu0 0
    %8317 = vmatprep.subr.bf16.mxu0 0
    %8318 = vmatpush2.bf16.xpose.msra.mxu0 0
    %8319 = vmatprep.mubr.bf16.mxu0 %v1860
    %8320 = vmatmul.mubr.bf16.gmra.mxu0 %v1858
    %v8321 = vpop.f32.mrf.mxu0
    %v8322 = vadd.f32 %v8282, %v8321
    %v8323 = vpop.f32.mrf.mxu0
    %v8324 = vpop.f32.mrf.mxu0
    %v8325 = vpop.f32.mrf.mxu0
    %8326 = vdwg.mxu0
    %8327 = vmatprep.subr.bf16.mxu0 0
    %8328 = vmatpush1.bf16.xpose.msra.mxu0 0
    %8329 = vmatprep.subr.bf16.mxu0 0
    %8330 = vmatpush1.bf16.xpose.msra.mxu0 0
    %8331 = vmatprep.subr.bf16.mxu0 0
    %8332 = vmatpush1.bf16.xpose.msra.mxu0 0
    %8333 = vmatprep.subr.bf16.mxu0 0
    %8334 = vmatpush1.bf16.xpose.msra.mxu0 0
    %8335 = vmatprep.subr.bf16.mxu0 0
    %8336 = vmatpush1.bf16.xpose.msra.mxu0 0
    %8337 = vmatprep.subr.bf16.mxu0 0
    %8338 = vmatpush1.bf16.xpose.msra.mxu0 0
    %8339 = vmatprep.subr.bf16.mxu0 0
    %8340 = vmatpush1.bf16.xpose.msra.mxu0 0
    %8341 = vmatprep.subr.bf16.mxu0 %v3180
    %8342 = vmatpush1.bf16.xpose.msra.mxu0 %v3179
    %8343 = vmatprep.subr.bf16.mxu0 0
    %8344 = vmatpush2.bf16.xpose.msra.mxu0 0
    %8345 = vmatprep.subr.bf16.mxu0 0
    %8346 = vmatpush2.bf16.xpose.msra.mxu0 0
    %8347 = vmatprep.subr.bf16.mxu0 0
    %8348 = vmatpush2.bf16.xpose.msra.mxu0 0
    %8349 = vmatprep.subr.bf16.mxu0 0
    %8350 = vmatpush2.bf16.xpose.msra.mxu0 0
    %8351 = vmatprep.subr.bf16.mxu0 0
    %8352 = vmatpush2.bf16.xpose.msra.mxu0 0
    %8353 = vmatprep.subr.bf16.mxu0 0
    %8354 = vmatpush2.bf16.xpose.msra.mxu0 0
    %8355 = vmatprep.subr.bf16.mxu0 0
    %8356 = vmatpush2.bf16.xpose.msra.mxu0 0
    %8357 = vmatprep.subr.bf16.mxu0 0
    %8358 = vmatpush2.bf16.xpose.msra.mxu0 0
    %8359 = vmatprep.mubr.bf16.mxu0 %v1857
    %8360 = vmatmul.mubr.bf16.gmra.mxu0 %v1843
    %v8361 = vpop.f32.mrf.mxu0
    %v8362 = vadd.f32 %v8322, %v8361
    %v8363 = vpop.f32.mrf.mxu0
    %v8364 = vpop.f32.mrf.mxu0
    %v8365 = vpop.f32.mrf.mxu0
    %8366 = vdwg.mxu0
    %8367 = vmatprep.subr.bf16.mxu0 0
    %8368 = vmatpush1.bf16.xpose.msra.mxu0 0
    %8369 = vmatprep.subr.bf16.mxu0 0
    %8370 = vmatpush1.bf16.xpose.msra.mxu0 0
    %8371 = vmatprep.subr.bf16.mxu0 0
    %8372 = vmatpush1.bf16.xpose.msra.mxu0 0
    %8373 = vmatprep.subr.bf16.mxu0 0
    %8374 = vmatpush1.bf16.xpose.msra.mxu0 0
    %8375 = vmatprep.subr.bf16.mxu0 0
    %8376 = vmatpush1.bf16.xpose.msra.mxu0 0
    %8377 = vmatprep.subr.bf16.mxu0 0
    %8378 = vmatpush1.bf16.xpose.msra.mxu0 0
    %8379 = vmatprep.subr.bf16.mxu0 0
    %8380 = vmatpush1.bf16.xpose.msra.mxu0 0
    %8381 = vmatprep.subr.bf16.mxu0 %v3182
    %8382 = vmatpush1.bf16.xpose.msra.mxu0 %v3181
    %8383 = vmatprep.subr.bf16.mxu0 0
    %8384 = vmatpush2.bf16.xpose.msra.mxu0 0
    %8385 = vmatprep.subr.bf16.mxu0 0
    %8386 = vmatpush2.bf16.xpose.msra.mxu0 0
    %8387 = vmatprep.subr.bf16.mxu0 0
    %8388 = vmatpush2.bf16.xpose.msra.mxu0 0
    %8389 = vmatprep.subr.bf16.mxu0 0
    %8390 = vmatpush2.bf16.xpose.msra.mxu0 0
    %8391 = vmatprep.subr.bf16.mxu0 0
    %8392 = vmatpush2.bf16.xpose.msra.mxu0 0
    %8393 = vmatprep.subr.bf16.mxu0 0
    %8394 = vmatpush2.bf16.xpose.msra.mxu0 0
    %8395 = vmatprep.subr.bf16.mxu0 0
    %8396 = vmatpush2.bf16.xpose.msra.mxu0 0
    %8397 = vmatprep.subr.bf16.mxu0 0
    %8398 = vmatpush2.bf16.xpose.msra.mxu0 0
    %8399 = vmatprep.mubr.bf16.mxu0 %v1861
    %8400 = vmatmul.mubr.bf16.gmra.mxu0 %v1859
    %v8401 = vpop.f32.mrf.mxu0
    %v8402 = vadd.f32 %v8362, %v8401
    %v8403 = vpop.f32.mrf.mxu0
    %v8404 = vpop.f32.mrf.mxu0
    %v8405 = vpop.f32.mrf.mxu0
    %8406 = vdwg.mxu0
    %8407 = vmatprep.subr.bf16.mxu0 0
    %8408 = vmatpush1.bf16.xpose.msra.mxu0 0
    %8409 = vmatprep.subr.bf16.mxu0 0
    %8410 = vmatpush1.bf16.xpose.msra.mxu0 0
    %8411 = vmatprep.subr.bf16.mxu0 0
    %8412 = vmatpush1.bf16.xpose.msra.mxu0 0
    %8413 = vmatprep.subr.bf16.mxu0 0
    %8414 = vmatpush1.bf16.xpose.msra.mxu0 0
    %8415 = vmatprep.subr.bf16.mxu0 0
    %8416 = vmatpush1.bf16.xpose.msra.mxu0 0
    %8417 = vmatprep.subr.bf16.mxu0 0
    %8418 = vmatpush1.bf16.xpose.msra.mxu0 0
    %8419 = vmatprep.subr.bf16.mxu0 0
    %8420 = vmatpush1.bf16.xpose.msra.mxu0 0
    %8421 = vmatprep.subr.bf16.mxu0 %v3184
    %8422 = vmatpush1.bf16.xpose.msra.mxu0 %v3183
    %8423 = vmatprep.subr.bf16.mxu0 0
    %8424 = vmatpush2.bf16.xpose.msra.mxu0 0
    %8425 = vmatprep.subr.bf16.mxu0 0
    %8426 = vmatpush2.bf16.xpose.msra.mxu0 0
    %8427 = vmatprep.subr.bf16.mxu0 0
    %8428 = vmatpush2.bf16.xpose.msra.mxu0 0
    %8429 = vmatprep.subr.bf16.mxu0 0
    %8430 = vmatpush2.bf16.xpose.msra.mxu0 0
    %8431 = vmatprep.subr.bf16.mxu0 0
    %8432 = vmatpush2.bf16.xpose.msra.mxu0 0
    %8433 = vmatprep.subr.bf16.mxu0 0
    %8434 = vmatpush2.bf16.xpose.msra.mxu0 0
    %8435 = vmatprep.subr.bf16.mxu0 0
    %8436 = vmatpush2.bf16.xpose.msra.mxu0 0
    %8437 = vmatprep.subr.bf16.mxu0 0
    %8438 = vmatpush2.bf16.xpose.msra.mxu0 0
    %8439 = vmatprep.mubr.bf16.mxu0 %v1899
    %8440 = vmatmul.mubr.bf16.gmra.mxu0 %v1885
    %v8441 = vpop.f32.mrf.mxu0
    %v8442 = vadd.f32 %v8402, %v8441
    %v8443 = vpop.f32.mrf.mxu0
    %v8444 = vpop.f32.mrf.mxu0
    %v8445 = vpop.f32.mrf.mxu0
    %8446 = vdwg.mxu0
    %8447 = vmatprep.subr.bf16.mxu0 0
    %8448 = vmatpush1.bf16.xpose.msra.mxu0 0
    %8449 = vmatprep.subr.bf16.mxu0 0
    %8450 = vmatpush1.bf16.xpose.msra.mxu0 0
    %8451 = vmatprep.subr.bf16.mxu0 0
    %8452 = vmatpush1.bf16.xpose.msra.mxu0 0
    %8453 = vmatprep.subr.bf16.mxu0 0
    %8454 = vmatpush1.bf16.xpose.msra.mxu0 0
    %8455 = vmatprep.subr.bf16.mxu0 0
    %8456 = vmatpush1.bf16.xpose.msra.mxu0 0
    %8457 = vmatprep.subr.bf16.mxu0 0
    %8458 = vmatpush1.bf16.xpose.msra.mxu0 0
    %8459 = vmatprep.subr.bf16.mxu0 0
    %8460 = vmatpush1.bf16.xpose.msra.mxu0 0
    %8461 = vmatprep.subr.bf16.mxu0 %v3186
    %8462 = vmatpush1.bf16.xpose.msra.mxu0 %v3185
    %8463 = vmatprep.subr.bf16.mxu0 0
    %8464 = vmatpush2.bf16.xpose.msra.mxu0 0
    %8465 = vmatprep.subr.bf16.mxu0 0
    %8466 = vmatpush2.bf16.xpose.msra.mxu0 0
    %8467 = vmatprep.subr.bf16.mxu0 0
    %8468 = vmatpush2.bf16.xpose.msra.mxu0 0
    %8469 = vmatprep.subr.bf16.mxu0 0
    %8470 = vmatpush2.bf16.xpose.msra.mxu0 0
    %8471 = vmatprep.subr.bf16.mxu0 0
    %8472 = vmatpush2.bf16.xpose.msra.mxu0 0
    %8473 = vmatprep.subr.bf16.mxu0 0
    %8474 = vmatpush2.bf16.xpose.msra.mxu0 0
    %8475 = vmatprep.subr.bf16.mxu0 0
    %8476 = vmatpush2.bf16.xpose.msra.mxu0 0
    %8477 = vmatprep.subr.bf16.mxu0 0
    %8478 = vmatpush2.bf16.xpose.msra.mxu0 0
    %8479 = vmatprep.mubr.bf16.mxu0 %v1909
    %8480 = vmatmul.mubr.bf16.gmra.mxu0 %v1907
    %v8481 = vpop.f32.mrf.mxu0
    %v8482 = vadd.f32 %v8442, %v8481
    %v8483 = vpop.f32.mrf.mxu0
    %v8484 = vpop.f32.mrf.mxu0
    %v8485 = vpop.f32.mrf.mxu0
    %8486 = vdwg.mxu0
    %8487 = vmatprep.subr.bf16.mxu0 0
    %8488 = vmatpush1.bf16.xpose.msra.mxu0 0
    %8489 = vmatprep.subr.bf16.mxu0 0
    %8490 = vmatpush1.bf16.xpose.msra.mxu0 0
    %8491 = vmatprep.subr.bf16.mxu0 0
    %8492 = vmatpush1.bf16.xpose.msra.mxu0 0
    %8493 = vmatprep.subr.bf16.mxu0 0
    %8494 = vmatpush1.bf16.xpose.msra.mxu0 0
    %8495 = vmatprep.subr.bf16.mxu0 0
    %8496 = vmatpush1.bf16.xpose.msra.mxu0 0
    %8497 = vmatprep.subr.bf16.mxu0 0
    %8498 = vmatpush1.bf16.xpose.msra.mxu0 0
    %8499 = vmatprep.subr.bf16.mxu0 0
    %8500 = vmatpush1.bf16.xpose.msra.mxu0 0
    %8501 = vmatprep.subr.bf16.mxu0 %v3188
    %8502 = vmatpush1.bf16.xpose.msra.mxu0 %v3187
    %8503 = vmatprep.subr.bf16.mxu0 0
    %8504 = vmatpush2.bf16.xpose.msra.mxu0 0
    %8505 = vmatprep.subr.bf16.mxu0 0
    %8506 = vmatpush2.bf16.xpose.msra.mxu0 0
    %8507 = vmatprep.subr.bf16.mxu0 0
    %8508 = vmatpush2.bf16.xpose.msra.mxu0 0
    %8509 = vmatprep.subr.bf16.mxu0 0
    %8510 = vmatpush2.bf16.xpose.msra.mxu0 0
    %8511 = vmatprep.subr.bf16.mxu0 0
    %8512 = vmatpush2.bf16.xpose.msra.mxu0 0
    %8513 = vmatprep.subr.bf16.mxu0 0
    %8514 = vmatpush2.bf16.xpose.msra.mxu0 0
    %8515 = vmatprep.subr.bf16.mxu0 0
    %8516 = vmatpush2.bf16.xpose.msra.mxu0 0
    %8517 = vmatprep.subr.bf16.mxu0 0
    %8518 = vmatpush2.bf16.xpose.msra.mxu0 0
    %8519 = vmatprep.mubr.bf16.mxu0 %v1906
    %8520 = vmatmul.mubr.bf16.gmra.mxu0 %v1892
    %v8521 = vpop.f32.mrf.mxu0
    %v8522 = vadd.f32 %v8482, %v8521
    %v8523 = vpop.f32.mrf.mxu0
    %v8524 = vpop.f32.mrf.mxu0
    %v8525 = vpop.f32.mrf.mxu0
    %8526 = vdwg.mxu0
    %8527 = vmatprep.subr.bf16.mxu0 0
    %8528 = vmatpush1.bf16.xpose.msra.mxu0 0
    %8529 = vmatprep.subr.bf16.mxu0 0
    %8530 = vmatpush1.bf16.xpose.msra.mxu0 0
    %8531 = vmatprep.subr.bf16.mxu0 0
    %8532 = vmatpush1.bf16.xpose.msra.mxu0 0
    %8533 = vmatprep.subr.bf16.mxu0 0
    %8534 = vmatpush1.bf16.xpose.msra.mxu0 0
    %8535 = vmatprep.subr.bf16.mxu0 0
    %8536 = vmatpush1.bf16.xpose.msra.mxu0 0
    %8537 = vmatprep.subr.bf16.mxu0 0
    %8538 = vmatpush1.bf16.xpose.msra.mxu0 0
    %8539 = vmatprep.subr.bf16.mxu0 0
    %8540 = vmatpush1.bf16.xpose.msra.mxu0 0
    %8541 = vmatprep.subr.bf16.mxu0 %v3190
    %8542 = vmatpush1.bf16.xpose.msra.mxu0 %v3189
    %8543 = vmatprep.subr.bf16.mxu0 0
    %8544 = vmatpush2.bf16.xpose.msra.mxu0 0
    %8545 = vmatprep.subr.bf16.mxu0 0
    %8546 = vmatpush2.bf16.xpose.msra.mxu0 0
    %8547 = vmatprep.subr.bf16.mxu0 0
    %8548 = vmatpush2.bf16.xpose.msra.mxu0 0
    %8549 = vmatprep.subr.bf16.mxu0 0
    %8550 = vmatpush2.bf16.xpose.msra.mxu0 0
    %8551 = vmatprep.subr.bf16.mxu0 0
    %8552 = vmatpush2.bf16.xpose.msra.mxu0 0
    %8553 = vmatprep.subr.bf16.mxu0 0
    %8554 = vmatpush2.bf16.xpose.msra.mxu0 0
    %8555 = vmatprep.subr.bf16.mxu0 0
    %8556 = vmatpush2.bf16.xpose.msra.mxu0 0
    %8557 = vmatprep.subr.bf16.mxu0 0
    %8558 = vmatpush2.bf16.xpose.msra.mxu0 0
    %8559 = vmatprep.mubr.bf16.mxu0 %v1910
    %8560 = vmatmul.mubr.bf16.gmra.mxu0 %v1908
    %v8561 = vpop.f32.mrf.mxu0
    %v8562 = vadd.f32 %v8522, %v8561
    %v8563 = vpop.f32.mrf.mxu0
    %v8564 = vpop.f32.mrf.mxu0
    %v8565 = vpop.f32.mrf.mxu0
    %8566 = vdwg.mxu0
    %vm8567 = vcmask 74752
    %8568 = vst.msk [vmem:[#allocation2] sm:$0x3] %vm8567, %v8562
    // Predicated region
    $region14: #{cnn_landmarks_forward.3} parent=1 // pred_check
      _
    $region15: #{cnn_landmarks_forward.3} parent=1 // pred_check_branch
      %8570 = sbr.rel (0) target = $region17
    $region16: #{cnn_landmarks_forward.3} parent=1 // pred_region
      %s8572 = ssub.s32 32, 32
      %8573 = vsyncadd [#allocation3], %s8572
      %s8575 = sshll.u32 [#allocation2], 4
      %s8576 = int_to_ptr.vmem [resolvable:$true] %s8575
      %8578 = dma.vmem_to_hbm [thread:$0]  %s8576, 32, %s3, [#allocation3]
    $region17: #{cnn_landmarks_forward.3} parent=1 // pred_fallthru
      _
    // Predicated region
    $region18: #{cnn_landmarks_forward.3} parent=1 // pred_check
      _
    $region19: #{cnn_landmarks_forward.3} parent=1 // pred_check_branch
      %8580 = sbr.rel (0) target = $region21
    $region20: #{cnn_landmarks_forward.3} parent=1 // pred_region
      %8581 = dma.done [#allocation3], 32
    $region21: #{cnn_landmarks_forward.3} parent=1 // pred_fallthru
      _
    %8582 = vsyncpa [#allocation3], 1

</llo_original>
